<compile_context>
chip_gen: v5e
topology: v5e:2x2
jax: 0.10.0
libtpu: 0.0.40
codegen_flags: <defaults>
</compile_context>

<pallas_src>
import numpy as np
import jax
import jax.numpy as jnp
from jax.experimental import pallas as pl
from jax.experimental.pallas import tpu as pltpu

# ----------------------------- small config (stands in for `c`) --------------
N = 2          # batch
X_DIM = 3      # c.n_channels
V_DIM = 4      # c.v_dim
R_DIM = 8      # c.r_dim
Z_DIM = 8      # c.z_dim
H_DIM = 16     # c.h_dim
IMG_W = 16     # c.img_width
SCALE = 4      # self.SCALE
L = 3          # generative steps (small; module default is 12)
K5 = 5

HS = IMG_W // SCALE           # low-res spatial size (4)
PS = HS * HS                  # low-res pixels per channel (16)
PF = IMG_W * IMG_W            # full-res pixels per channel (256)
G = H_DIM * PS                # flattened width of one hidden map (256)
ZW = Z_DIM * PS               # flattened width of one z map (128)
VRW = (V_DIM + R_DIM) * PS    # flattened width of [v | r] (192)


# ----------------------------- conv -> dense matrix builders (host glue) -----
def conv5x5_matrix(w):
    """w: (Cout, Cin, 5, 5) PyTorch Conv2d weight; stride 1, pad 2, on HSxHS grid."""
    cout, cin, k, _ = w.shape
    m = np.zeros((cin * PS, cout * PS), dtype=np.float32)
    pad = k // 2
    ci = np.arange(cin) * PS
    co = np.arange(cout) * PS
    for i in range(HS):
        for j in range(HS):
            p_out = i * HS + j
            for dy in range(k):
                for dx in range(k):
                    ii, jj = i + dy - pad, j + dx - pad
                    if 0 <= ii < HS and 0 <= jj < HS:
                        p_in = ii * HS + jj
                        m[np.ix_(ci + p_in, co + p_out)] = w[:, :, dy, dx].T
    return m


def downsample_matrix(w):
    """w: (Cout, Cin, 4, 4) Conv2d weight; stride 4, pad 0, no bias."""
    cout, cin, k, _ = w.shape
    m = np.zeros((cin * PF, cout * PS), dtype=np.float32)
    ci = np.arange(cin) * PF
    co = np.arange(cout) * PS
    for i in range(HS):
        for j in range(HS):
            p_out = i * HS + j
            for a in range(k):
                for b in range(k):
                    p_in = (SCALE * i + a) * IMG_W + (SCALE * j + b)
                    m[np.ix_(ci + p_in, co + p_out)] = w[:, :, a, b].T
    return m


def upsample_obs_matrix(w_up, w_obs):
    """Fused (ConvTranspose2d k=4,s=4,no-bias) -> (1x1 Conv2d) matrix.
    w_up: (Cin=H_DIM, Cmid=H_DIM, 4, 4); w_obs: (X_DIM, H_DIM).
    Because stride == kernel (no overlap) the upsample is block-diagonal per
    output 4x4 tile, so u/obs compose into a single (H_DIM*PS, X_DIM*PF) map."""
    cin, _, k, _ = w_up.shape
    cx = w_obs.shape[0]
    # F[ci, x, a, b] = sum_co w_up[ci, co, a, b] * w_obs[x, co]
    F = np.einsum('ioab,xo->ixab', w_up, w_obs).astype(np.float32)
    m = np.zeros((cin * PS, cx * PF), dtype=np.float32)
    ci_idx = np.arange(cin) * PS
    cx_idx = np.arange(cx) * PF
    for i in range(HS):
        for j in range(HS):
            p_in = i * HS + j
            for a in range(k):
                for b in range(k):
                    p_out = (SCALE * i + a) * IMG_W + (SCALE * j + b)
                    m[np.ix_(ci_idx + p_in, cx_idx + p_out)] = F[:, :, a, b]
    return m


def flat_bias(b, pixels):
    """(C,) -> (1, C*pixels): per-channel bias broadcast over pixels (channel-major)."""
    return np.repeat(np.asarray(b, np.float32), pixels)[None, :]


# ----------------------------- fused Pallas kernel ---------------------------
def gen_kernel(xq_ref, vr_ref, eps_ref,
               mdn_ref, mix_ref, mvr_ref, mh_ref, mq_ref, mgz_ref, muo_ref,
               bi_ref, bg_ref, bp_ref, bq_ref, bobs_ref,
               xmu_ref, kl_ref):
    f32 = jnp.float32

    def dotr(a, m_ref):
        # bf16 operands -> native MXU path; accumulate in f32.
        return jnp.dot(a.astype(jnp.bfloat16), m_ref[...],
                       preferred_element_type=f32)

    def softplus(t):
        return jnp.logaddexp(t, 0.0)

    def lstm(gates, cell):
        fg = jax.nn.sigmoid(gates[:, 0 * G:1 * G])
        ig = jax.nn.sigmoid(gates[:, 1 * G:2 * G])
        og = jax.nn.sigmoid(gates[:, 2 * G:3 * G])
        sg = jnp.tanh(gates[:, 3 * G:4 * G])
        cell = fg * cell + ig * sg
        return og * jnp.tanh(cell), cell

    # ---- once-only preamble: downsample + loop-invariant gate contributions
    x = dotr(xq_ref[...], mdn_ref)                         # (N, X_DIM*PS)
    vr = vr_ref[...]                                       # (N, (V+R)*PS)
    both = dotr(vr, mvr_ref)                               # (N, 8G): [inf | gen] vr-contrib
    const_i = dotr(x, mix_ref) + both[:, :4 * G] + bi_ref[...]
    const_g = both[:, 4 * G:] + bg_ref[...]

    h_i = jnp.zeros((N, G), f32)
    c_i = jnp.zeros((N, G), f32)
    h_g = jnp.zeros((N, G), f32)
    c_g = jnp.zeros((N, G), f32)
    h_sum = jnp.zeros((N, G), f32)                         # sum_l h_g (upsample hoisted)
    kl = jnp.zeros((N, ZW), f32)

    # ---- L-step generative loop: 3 matmuls / step --------------------------
    # TODO(synk): if L grows beyond ~4, switch to lax.fori_loop (carry =
    # h/c/h_sum/kl, eps_ref indexed by the loop counter) to bound code size.
    for l in range(L):
        hp = dotr(h_g, mh_ref)                             # [gates_i(h_g) | prior]
        gates_i = hp[:, :4 * G] + const_i
        p_out = hp[:, 4 * G:] + bp_ref[...]
        p_mu, p_std = p_out[:, :ZW], softplus(p_out[:, ZW:])

        h_i, c_i = lstm(gates_i, c_i)                      # inference core

        q_out = dotr(h_i, mq_ref) + bq_ref[...]            # posterior density
        q_mu, q_std = q_out[:, :ZW], softplus(q_out[:, ZW:])
        z = q_mu + q_std * eps_ref[l]                      # reparameterized sample

        gates_g = dotr(z, mgz_ref) + const_g
        h_g, c_g = lstm(gates_g, c_g)                      # generator core

        h_sum = h_sum + h_g
        kl = kl + (jnp.log(p_std) - jnp.log(q_std) +
                   (q_std * q_std + (q_mu - p_mu) ** 2) / (2.0 * p_std * p_std) -
                   0.5)

    # ---- fused upsample + 1x1 observation conv + sigmoid (NCHW-flat output)
    xmu_ref[...] = jax.nn.sigmoid(dotr(h_sum, muo_ref) + bobs_ref[...])
    kl_ref[...] = kl


# ----------------------------- pallas_call wrapper ----------------------------
_NUM_GEN_IN = 15
_gen_call = pl.pallas_call(
    gen_kernel,
    out_shape=(jax.ShapeDtypeStruct((N, X_DIM * PF), jnp.float32),
               jax.ShapeDtypeStruct((N, ZW), jnp.float32)),
    in_specs=[pl.BlockSpec(memory_space=pltpu.MemorySpace.VMEM)] * _NUM_GEN_IN,
    out_specs=(pl.BlockSpec(memory_space=pltpu.MemorySpace.VMEM),
               pl.BlockSpec(memory_space=pltpu.MemorySpace.VMEM)),
)


def build_params():
    rng = np.random.default_rng(0)

    def w(*shape, scale=0.05):
        return (rng.standard_normal(shape) * scale).astype(np.float32)

    # inference Conv2dLSTM: 4 gate 5x5 convs over concat([hidden_g, x, v, r])
    cin_i = H_DIM + X_DIM + V_DIM + R_DIM
    Wi = w(4 * H_DIM, cin_i, K5, K5)
    bi = w(4 * H_DIM)
    Wi_h, Wi_x, Wi_v, Wi_r = np.split(Wi, np.cumsum([H_DIM, X_DIM, V_DIM]), axis=1)

    # generator Conv2dLSTM: 4 gate 5x5 convs over concat([z, v, r])
    cin_g = Z_DIM + V_DIM + R_DIM
    Wg = w(4 * H_DIM, cin_g, K5, K5)
    bg = w(4 * H_DIM)
    Wg_z, Wg_v, Wg_r = np.split(Wg, np.cumsum([Z_DIM, V_DIM]), axis=1)

    Wp = w(2 * Z_DIM, H_DIM, K5, K5); bp = w(2 * Z_DIM)   # prior_density
    Wq = w(2 * Z_DIM, H_DIM, K5, K5); bq = w(2 * Z_DIM)   # posterior_density
    Wup = w(H_DIM, H_DIM, SCALE, SCALE)                   # upsample (no bias)
    Wdn = w(X_DIM, X_DIM, SCALE, SCALE)                   # downsample (no bias)
    Wobs = w(X_DIM, H_DIM, 1, 1); bobs = w(X_DIM)         # observation_density

    # host-side weight packing / fusion
    m_dn = downsample_matrix(Wdn)                                   # (X*PF, X*PS)
    m_ix = conv5x5_matrix(Wi_x)                                     # (X*PS, 4G)
    m_vr = np.hstack([
        np.vstack([conv5x5_matrix(Wi_v), conv5x5_matrix(Wi_r)]),    # -> inference gates
        np.vstack([conv5x5_matrix(Wg_v), conv5x5_matrix(Wg_r)]),    # -> generator gates
    ])                                                              # (VRW, 8G)
    m_h = np.hstack([conv5x5_matrix(Wi_h), conv5x5_matrix(Wp)])     # (G, 4G + 2ZW)
    m_q = conv5x5_matrix(Wq)                                        # (G, 2ZW)
    m_gz = conv5x5_matrix(Wg_z)                                     # (ZW, 4G)
    m_uo = upsample_obs_matrix(Wup, Wobs[:, :, 0, 0])               # (G, X*PF)

    bf = lambda a: jnp.asarray(a, jnp.bfloat16)   # matmul weights -> bf16 MXU path
    f = lambda a: jnp.asarray(a, jnp.float32)     # biases stay f32

    weights = tuple(bf(m) for m in (m_dn, m_ix, m_vr, m_h, m_q, m_gz, m_uo))
    biases = (f(flat_bias(bi, PS)), f(flat_bias(bg, PS)),
              f(flat_bias(bp, PS)), f(flat_bias(bq, PS)),
              f(flat_bias(bobs, PF)))
    return weights + biases


def generator_forward(x_q, v_q, r, params, eps):
    """x_q: (N, X_DIM, IMG_W, IMG_W) NCHW; v_q: (N, V_DIM); r: (N, R_DIM, 1, 1)
    or (N, R_DIM, HS, HS); eps: (L, N, Z_DIM*PS) standard-normal draws.
    Returns (x_mu (N, X_DIM, IMG_W, IMG_W), kl (N, Z_DIM, HS, HS))."""
    b = x_q.shape[0]
    xq_flat = x_q.reshape(b, X_DIM * PF)
    v_map = jnp.broadcast_to(v_q.reshape(b, V_DIM, 1, 1), (b, V_DIM, HS, HS))
    if r.shape[2] != HS:                           # torch .repeat(1,1,HS,HS)
        r = jnp.broadcast_to(r, (b, R_DIM, HS, HS))
    vr_flat = jnp.concatenate(
        [v_map.reshape(b, V_DIM * PS), r.reshape(b, R_DIM * PS)], axis=1)

    x_mu_flat, kl_flat = _gen_call(xq_flat, vr_flat, eps, *params)

    x_mu = x_mu_flat.reshape(b, X_DIM, IMG_W, IMG_W)   # free reshape (NCHW-flat output)
    kl = kl_flat.reshape(b, Z_DIM, HS, HS)
    return x_mu, kl


if __name__ == "__main__":
    key = jax.random.PRNGKey(0)
    k1, k2, k3, k4 = jax.random.split(key, 4)
    x_q = jax.random.uniform(k1, (N, X_DIM, IMG_W, IMG_W), jnp.float32)
    v_q = jax.random.normal(k2, (N, V_DIM), jnp.float32)
    r = jax.random.normal(k3, (N, R_DIM, 1, 1), jnp.float32)
    # TODO(synk): torch's Normal.rsample RNG has no in-kernel equivalent with the
    # same stream; reparameterization noise is drawn here and fed to the kernel.
    eps = jax.random.normal(k4, (L, N, ZW), jnp.float32)

    params = build_params()
    x_mu, kl = generator_forward(x_q, v_q, r, params, eps)
    jax.block_until_ready((x_mu, kl))

    assert x_mu.shape == (N, X_DIM, IMG_W, IMG_W)
    assert kl.shape == (N, Z_DIM, HS, HS)
    assert bool(jnp.all(jnp.isfinite(x_mu))) and bool(jnp.all(jnp.isfinite(kl)))
    print("KERNEL_OK")
</pallas_src>

<mosaic_0001>
module attributes {stable_mosaic.version = 11 : i64} {
  func.func @gen_kernel(%arg0: memref<2x768xf32, #tpu.memory_space<vmem>>, %arg1: memref<2x192xf32, #tpu.memory_space<vmem>>, %arg2: memref<3x2x128xf32, #tpu.memory_space<vmem>>, %arg3: memref<768x48xbf16, #tpu.memory_space<vmem>>, %arg4: memref<48x1024xbf16, #tpu.memory_space<vmem>>, %arg5: memref<192x2048xbf16, #tpu.memory_space<vmem>>, %arg6: memref<256x1280xbf16, #tpu.memory_space<vmem>>, %arg7: memref<256x256xbf16, #tpu.memory_space<vmem>>, %arg8: memref<128x1024xbf16, #tpu.memory_space<vmem>>, %arg9: memref<256x768xbf16, #tpu.memory_space<vmem>>, %arg10: memref<1x1024xf32, #tpu.memory_space<vmem>>, %arg11: memref<1x1024xf32, #tpu.memory_space<vmem>>, %arg12: memref<1x256xf32, #tpu.memory_space<vmem>>, %arg13: memref<1x256xf32, #tpu.memory_space<vmem>>, %arg14: memref<1x768xf32, #tpu.memory_space<vmem>>, %arg15: memref<2x768xf32, #tpu.memory_space<vmem>>, %arg16: memref<2x128xf32, #tpu.memory_space<vmem>>) attributes {dimension_semantics = [], scalar_prefetch = 0 : i64, scratch_operands = 0 : i64, tpu.core_type = #tpu.core_type<tc>} {
    %c0 = arith.constant 0 : index
    %c0_0 = arith.constant 0 : index
    %0 = vector.load %arg0[%c0, %c0_0] : memref<2x768xf32, #tpu.memory_space<vmem>>, vector<2x768xf32>
    %1 = arith.truncf %0 : vector<2x768xf32> to vector<2x768xbf16>
    %c0_1 = arith.constant 0 : index
    %c0_2 = arith.constant 0 : index
    %2 = vector.load %arg3[%c0_1, %c0_2] : memref<768x48xbf16, #tpu.memory_space<vmem>>, vector<768x48xbf16>
    %cst = arith.constant dense<0.000000e+00> : vector<2x48xf32>
    %3 = tpu.matmul %1, %2, %cst {dimension_numbers = #tpu.dot_dimension_numbers<[1], [0], [0], [1], [0, 0, 1, 1], [], []>} : vector<2x768xbf16>, vector<768x48xbf16>, vector<2x48xf32> -> vector<2x48xf32>
    %c0_3 = arith.constant 0 : index
    %c0_4 = arith.constant 0 : index
    %4 = vector.load %arg1[%c0_3, %c0_4] : memref<2x192xf32, #tpu.memory_space<vmem>>, vector<2x192xf32>
    %5 = arith.truncf %4 : vector<2x192xf32> to vector<2x192xbf16>
    %c0_5 = arith.constant 0 : index
    %c0_6 = arith.constant 0 : index
    %6 = vector.load %arg5[%c0_5, %c0_6] : memref<192x2048xbf16, #tpu.memory_space<vmem>>, vector<192x2048xbf16>
    %cst_7 = arith.constant dense<0.000000e+00> : vector<2x2048xf32>
    %7 = tpu.matmul %5, %6, %cst_7 {dimension_numbers = #tpu.dot_dimension_numbers<[1], [0], [0], [1], [0, 0, 1, 1], [], []>} : vector<2x192xbf16>, vector<192x2048xbf16>, vector<2x2048xf32> -> vector<2x2048xf32>
    %8 = arith.truncf %3 : vector<2x48xf32> to vector<2x48xbf16>
    %c0_8 = arith.constant 0 : index
    %c0_9 = arith.constant 0 : index
    %9 = vector.load %arg4[%c0_8, %c0_9] : memref<48x1024xbf16, #tpu.memory_space<vmem>>, vector<48x1024xbf16>
    %cst_10 = arith.constant dense<0.000000e+00> : vector<2x1024xf32>
    %10 = tpu.matmul %8, %9, %cst_10 {dimension_numbers = #tpu.dot_dimension_numbers<[1], [0], [0], [1], [0, 0, 1, 1], [], []>} : vector<2x48xbf16>, vector<48x1024xbf16>, vector<2x1024xf32> -> vector<2x1024xf32>
    %11 = vector.extract_strided_slice %7 {offsets = [0, 0], sizes = [2, 1024], strides = [1, 1]} : vector<2x2048xf32> to vector<2x1024xf32>
    %12 = arith.addf %10, %11 : vector<2x1024xf32>
    %c0_11 = arith.constant 0 : index
    %c0_12 = arith.constant 0 : index
    %13 = vector.load %arg10[%c0_11, %c0_12] : memref<1x1024xf32, #tpu.memory_space<vmem>>, vector<1x1024xf32>
    %14 = vector.broadcast %13 : vector<1x1024xf32> to vector<2x1024xf32>
    %15 = arith.addf %12, %14 : vector<2x1024xf32>
    %16 = vector.extract_strided_slice %7 {offsets = [0, 1024], sizes = [2, 1024], strides = [1, 1]} : vector<2x2048xf32> to vector<2x1024xf32>
    %c0_13 = arith.constant 0 : index
    %c0_14 = arith.constant 0 : index
    %17 = vector.load %arg11[%c0_13, %c0_14] : memref<1x1024xf32, #tpu.memory_space<vmem>>, vector<1x1024xf32>
    %18 = vector.broadcast %17 : vector<1x1024xf32> to vector<2x1024xf32>
    %19 = arith.addf %16, %18 : vector<2x1024xf32>
    %cst_15 = arith.constant 0.000000e+00 : f32
    %20 = vector.broadcast %cst_15 : f32 to vector<2x256xf32>
    %cst_16 = arith.constant 0.000000e+00 : f32
    %21 = vector.broadcast %cst_16 : f32 to vector<2x256xf32>
    %cst_17 = arith.constant 0.000000e+00 : f32
    %22 = vector.broadcast %cst_17 : f32 to vector<2x256xf32>
    %cst_18 = arith.constant 0.000000e+00 : f32
    %23 = vector.broadcast %cst_18 : f32 to vector<2x256xf32>
    %cst_19 = arith.constant 0.000000e+00 : f32
    %24 = vector.broadcast %cst_19 : f32 to vector<2x128xf32>
    %25 = arith.truncf %21 : vector<2x256xf32> to vector<2x256xbf16>
    %c0_20 = arith.constant 0 : index
    %c0_21 = arith.constant 0 : index
    %26 = vector.load %arg6[%c0_20, %c0_21] : memref<256x1280xbf16, #tpu.memory_space<vmem>>, vector<256x1280xbf16>
    %cst_22 = arith.constant dense<0.000000e+00> : vector<2x1280xf32>
    %27 = tpu.matmul %25, %26, %cst_22 {dimension_numbers = #tpu.dot_dimension_numbers<[1], [0], [0], [1], [0, 0, 1, 1], [], []>} : vector<2x256xbf16>, vector<256x1280xbf16>, vector<2x1280xf32> -> vector<2x1280xf32>
    %28 = vector.extract_strided_slice %27 {offsets = [0, 0], sizes = [2, 1024], strides = [1, 1]} : vector<2x1280xf32> to vector<2x1024xf32>
    %29 = arith.addf %28, %15 : vector<2x1024xf32>
    %30 = vector.extract_strided_slice %27 {offsets = [0, 1024], sizes = [2, 256], strides = [1, 1]} : vector<2x1280xf32> to vector<2x256xf32>
    %c0_23 = arith.constant 0 : index
    %c0_24 = arith.constant 0 : index
    %31 = vector.load %arg12[%c0_23, %c0_24] : memref<1x256xf32, #tpu.memory_space<vmem>>, vector<1x256xf32>
    %32 = vector.broadcast %31 : vector<1x256xf32> to vector<2x256xf32>
    %33 = arith.addf %30, %32 : vector<2x256xf32>
    %34 = vector.extract_strided_slice %33 {offsets = [0, 0], sizes = [2, 128], strides = [1, 1]} : vector<2x256xf32> to vector<2x128xf32>
    %35 = vector.extract_strided_slice %33 {offsets = [0, 128], sizes = [2, 128], strides = [1, 1]} : vector<2x256xf32> to vector<2x128xf32>
    %cst_25 = arith.constant 0.000000e+00 : f32
    %36 = vector.broadcast %cst_25 : f32 to vector<2x128xf32>
    %37 = arith.maximumf %35, %36 : vector<2x128xf32>
    %38 = vector.broadcast %cst_25 : f32 to vector<2x128xf32>
    %39 = arith.subf %35, %38 : vector<2x128xf32>
    %40 = arith.cmpf one, %39, %39 : vector<2x128xf32>
    %41 = vector.broadcast %cst_25 : f32 to vector<2x128xf32>
    %42 = arith.addf %35, %41 : vector<2x128xf32>
    %43 = math.absf %39 : vector<2x128xf32>
    %cst_26 = arith.constant 0.000000e+00 : f32
    %44 = vector.broadcast %cst_26 : f32 to vector<2x128xf32>
    %45 = arith.subf %44, %43 : vector<2x128xf32>
    %46 = math.exp %45 : vector<2x128xf32>
    %47 = math.log1p %46 : vector<2x128xf32>
    %48 = arith.addf %37, %47 : vector<2x128xf32>
    %49 = arith.select %40, %42, %48 : vector<2x128xi1>, vector<2x128xf32>
    %50 = vector.extract_strided_slice %29 {offsets = [0, 0], sizes = [2, 256], strides = [1, 1]} : vector<2x1024xf32> to vector<2x256xf32>
    %51 = arith.negf %50 : vector<2x256xf32>
    %52 = math.exp %51 : vector<2x256xf32>
    %cst_27 = arith.constant 1.000000e+00 : f32
    %53 = vector.broadcast %cst_27 : f32 to vector<2x256xf32>
    %54 = arith.addf %53, %52 : vector<2x256xf32>
    %55 = arith.divf %53, %54 : vector<2x256xf32>
    %56 = vector.extract_strided_slice %29 {offsets = [0, 256], sizes = [2, 256], strides = [1, 1]} : vector<2x1024xf32> to vector<2x256xf32>
    %57 = arith.negf %56 : vector<2x256xf32>
    %58 = math.exp %57 : vector<2x256xf32>
    %cst_28 = arith.constant 1.000000e+00 : f32
    %59 = vector.broadcast %cst_28 : f32 to vector<2x256xf32>
    %60 = arith.addf %59, %58 : vector<2x256xf32>
    %61 = arith.divf %59, %60 : vector<2x256xf32>
    %62 = vector.extract_strided_slice %29 {offsets = [0, 512], sizes = [2, 256], strides = [1, 1]} : vector<2x1024xf32> to vector<2x256xf32>
    %63 = arith.negf %62 : vector<2x256xf32>
    %64 = math.exp %63 : vector<2x256xf32>
    %cst_29 = arith.constant 1.000000e+00 : f32
    %65 = vector.broadcast %cst_29 : f32 to vector<2x256xf32>
    %66 = arith.addf %65, %64 : vector<2x256xf32>
    %67 = arith.divf %65, %66 : vector<2x256xf32>
    %68 = vector.extract_strided_slice %29 {offsets = [0, 768], sizes = [2, 256], strides = [1, 1]} : vector<2x1024xf32> to vector<2x256xf32>
    %69 = math.tanh %68 : vector<2x256xf32>
    %70 = arith.mulf %55, %20 : vector<2x256xf32>
    %71 = arith.mulf %61, %69 : vector<2x256xf32>
    %72 = arith.addf %70, %71 : vector<2x256xf32>
    %73 = math.tanh %72 : vector<2x256xf32>
    %74 = arith.mulf %67, %73 : vector<2x256xf32>
    %75 = arith.truncf %74 : vector<2x256xf32> to vector<2x256xbf16>
    %c0_30 = arith.constant 0 : index
    %c0_31 = arith.constant 0 : index
    %76 = vector.load %arg7[%c0_30, %c0_31] : memref<256x256xbf16, #tpu.memory_space<vmem>>, vector<256x256xbf16>
    %cst_32 = arith.constant dense<0.000000e+00> : vector<2x256xf32>
    %77 = tpu.matmul %75, %76, %cst_32 {dimension_numbers = #tpu.dot_dimension_numbers<[1], [0], [0], [1], [0, 0, 1, 1], [], []>} : vector<2x256xbf16>, vector<256x256xbf16>, vector<2x256xf32> -> vector<2x256xf32>
    %c0_33 = arith.constant 0 : index
    %c0_34 = arith.constant 0 : index
    %78 = vector.load %arg13[%c0_33, %c0_34] : memref<1x256xf32, #tpu.memory_space<vmem>>, vector<1x256xf32>
    %79 = vector.broadcast %78 : vector<1x256xf32> to vector<2x256xf32>
    %80 = arith.addf %77, %79 : vector<2x256xf32>
    %81 = vector.extract_strided_slice %80 {offsets = [0, 0], sizes = [2, 128], strides = [1, 1]} : vector<2x256xf32> to vector<2x128xf32>
    %82 = vector.extract_strided_slice %80 {offsets = [0, 128], sizes = [2, 128], strides = [1, 1]} : vector<2x256xf32> to vector<2x128xf32>
    %cst_35 = arith.constant 0.000000e+00 : f32
    %83 = vector.broadcast %cst_35 : f32 to vector<2x128xf32>
    %84 = arith.maximumf %82, %83 : vector<2x128xf32>
    %85 = vector.broadcast %cst_35 : f32 to vector<2x128xf32>
    %86 = arith.subf %82, %85 : vector<2x128xf32>
    %87 = arith.cmpf one, %86, %86 : vector<2x128xf32>
    %88 = vector.broadcast %cst_35 : f32 to vector<2x128xf32>
    %89 = arith.addf %82, %88 : vector<2x128xf32>
    %90 = math.absf %86 : vector<2x128xf32>
    %cst_36 = arith.constant 0.000000e+00 : f32
    %91 = vector.broadcast %cst_36 : f32 to vector<2x128xf32>
    %92 = arith.subf %91, %90 : vector<2x128xf32>
    %93 = math.exp %92 : vector<2x128xf32>
    %94 = math.log1p %93 : vector<2x128xf32>
    %95 = arith.addf %84, %94 : vector<2x128xf32>
    %96 = arith.select %87, %89, %95 : vector<2x128xi1>, vector<2x128xf32>
    %c0_37 = arith.constant 0 : index
    %c0_38 = arith.constant 0 : index
    %c0_39 = arith.constant 0 : index
    %97 = vector.load %arg2[%c0_37, %c0_38, %c0_39] : memref<3x2x128xf32, #tpu.memory_space<vmem>>, vector<1x2x128xf32>
    %98 = vector.shape_cast %97 : vector<1x2x128xf32> to vector<2x128xf32>
    %99 = arith.mulf %96, %98 : vector<2x128xf32>
    %100 = arith.addf %81, %99 : vector<2x128xf32>
    %101 = arith.truncf %100 : vector<2x128xf32> to vector<2x128xbf16>
    %c0_40 = arith.constant 0 : index
    %c0_41 = arith.constant 0 : index
    %102 = vector.load %arg8[%c0_40, %c0_41] : memref<128x1024xbf16, #tpu.memory_space<vmem>>, vector<128x1024xbf16>
    %cst_42 = arith.constant dense<0.000000e+00> : vector<2x1024xf32>
    %103 = tpu.matmul %101, %102, %cst_42 {dimension_numbers = #tpu.dot_dimension_numbers<[1], [0], [0], [1], [0, 0, 1, 1], [], []>} : vector<2x128xbf16>, vector<128x1024xbf16>, vector<2x1024xf32> -> vector<2x1024xf32>
    %104 = arith.addf %103, %19 : vector<2x1024xf32>
    %105 = vector.extract_strided_slice %104 {offsets = [0, 0], sizes = [2, 256], strides = [1, 1]} : vector<2x1024xf32> to vector<2x256xf32>
    %106 = arith.negf %105 : vector<2x256xf32>
    %107 = math.exp %106 : vector<2x256xf32>
    %cst_43 = arith.constant 1.000000e+00 : f32
    %108 = vector.broadcast %cst_43 : f32 to vector<2x256xf32>
    %109 = arith.addf %108, %107 : vector<2x256xf32>
    %110 = arith.divf %108, %109 : vector<2x256xf32>
    %111 = vector.extract_strided_slice %104 {offsets = [0, 256], sizes = [2, 256], strides = [1, 1]} : vector<2x1024xf32> to vector<2x256xf32>
    %112 = arith.negf %111 : vector<2x256xf32>
    %113 = math.exp %112 : vector<2x256xf32>
    %cst_44 = arith.constant 1.000000e+00 : f32
    %114 = vector.broadcast %cst_44 : f32 to vector<2x256xf32>
    %115 = arith.addf %114, %113 : vector<2x256xf32>
    %116 = arith.divf %114, %115 : vector<2x256xf32>
    %117 = vector.extract_strided_slice %104 {offsets = [0, 512], sizes = [2, 256], strides = [1, 1]} : vector<2x1024xf32> to vector<2x256xf32>
    %118 = arith.negf %117 : vector<2x256xf32>
    %119 = math.exp %118 : vector<2x256xf32>
    %cst_45 = arith.constant 1.000000e+00 : f32
    %120 = vector.broadcast %cst_45 : f32 to vector<2x256xf32>
    %121 = arith.addf %120, %119 : vector<2x256xf32>
    %122 = arith.divf %120, %121 : vector<2x256xf32>
    %123 = vector.extract_strided_slice %104 {offsets = [0, 768], sizes = [2, 256], strides = [1, 1]} : vector<2x1024xf32> to vector<2x256xf32>
    %124 = math.tanh %123 : vector<2x256xf32>
    %125 = arith.mulf %110, %22 : vector<2x256xf32>
    %126 = arith.mulf %116, %124 : vector<2x256xf32>
    %127 = arith.addf %125, %126 : vector<2x256xf32>
    %128 = math.tanh %127 : vector<2x256xf32>
    %129 = arith.mulf %122, %128 : vector<2x256xf32>
    %130 = arith.addf %23, %129 : vector<2x256xf32>
    %131 = math.log %49 : vector<2x128xf32>
    %132 = math.log %96 : vector<2x128xf32>
    %133 = arith.subf %131, %132 : vector<2x128xf32>
    %134 = arith.mulf %96, %96 : vector<2x128xf32>
    %135 = arith.subf %81, %34 : vector<2x128xf32>
    %136 = arith.mulf %135, %135 : vector<2x128xf32>
    %137 = arith.addf %134, %136 : vector<2x128xf32>
    %cst_46 = arith.constant 2.000000e+00 : f32
    %138 = vector.broadcast %cst_46 : f32 to vector<2x128xf32>
    %139 = arith.mulf %138, %49 : vector<2x128xf32>
    %140 = arith.mulf %139, %49 : vector<2x128xf32>
    %141 = arith.divf %137, %140 : vector<2x128xf32>
    %142 = arith.addf %133, %141 : vector<2x128xf32>
    %cst_47 = arith.constant 5.000000e-01 : f32
    %143 = vector.broadcast %cst_47 : f32 to vector<2x128xf32>
    %144 = arith.subf %142, %143 : vector<2x128xf32>
    %145 = arith.addf %24, %144 : vector<2x128xf32>
    %146 = arith.truncf %129 : vector<2x256xf32> to vector<2x256xbf16>
    %c0_48 = arith.constant 0 : index
    %c0_49 = arith.constant 0 : index
    %147 = vector.load %arg6[%c0_48, %c0_49] : memref<256x1280xbf16, #tpu.memory_space<vmem>>, vector<256x1280xbf16>
    %cst_50 = arith.constant dense<0.000000e+00> : vector<2x1280xf32>
    %148 = tpu.matmul %146, %147, %cst_50 {dimension_numbers = #tpu.dot_dimension_numbers<[1], [0], [0], [1], [0, 0, 1, 1], [], []>} : vector<2x256xbf16>, vector<256x1280xbf16>, vector<2x1280xf32> -> vector<2x1280xf32>
    %149 = vector.extract_strided_slice %148 {offsets = [0, 0], sizes = [2, 1024], strides = [1, 1]} : vector<2x1280xf32> to vector<2x1024xf32>
    %150 = arith.addf %149, %15 : vector<2x1024xf32>
    %151 = vector.extract_strided_slice %148 {offsets = [0, 1024], sizes = [2, 256], strides = [1, 1]} : vector<2x1280xf32> to vector<2x256xf32>
    %c0_51 = arith.constant 0 : index
    %c0_52 = arith.constant 0 : index
    %152 = vector.load %arg12[%c0_51, %c0_52] : memref<1x256xf32, #tpu.memory_space<vmem>>, vector<1x256xf32>
    %153 = vector.broadcast %152 : vector<1x256xf32> to vector<2x256xf32>
    %154 = arith.addf %151, %153 : vector<2x256xf32>
    %155 = vector.extract_strided_slice %154 {offsets = [0, 0], sizes = [2, 128], strides = [1, 1]} : vector<2x256xf32> to vector<2x128xf32>
    %156 = vector.extract_strided_slice %154 {offsets = [0, 128], sizes = [2, 128], strides = [1, 1]} : vector<2x256xf32> to vector<2x128xf32>
    %cst_53 = arith.constant 0.000000e+00 : f32
    %157 = vector.broadcast %cst_53 : f32 to vector<2x128xf32>
    %158 = arith.maximumf %156, %157 : vector<2x128xf32>
    %159 = vector.broadcast %cst_53 : f32 to vector<2x128xf32>
    %160 = arith.subf %156, %159 : vector<2x128xf32>
    %161 = arith.cmpf one, %160, %160 : vector<2x128xf32>
    %162 = vector.broadcast %cst_53 : f32 to vector<2x128xf32>
    %163 = arith.addf %156, %162 : vector<2x128xf32>
    %164 = math.absf %160 : vector<2x128xf32>
    %cst_54 = arith.constant 0.000000e+00 : f32
    %165 = vector.broadcast %cst_54 : f32 to vector<2x128xf32>
    %166 = arith.subf %165, %164 : vector<2x128xf32>
    %167 = math.exp %166 : vector<2x128xf32>
    %168 = math.log1p %167 : vector<2x128xf32>
    %169 = arith.addf %158, %168 : vector<2x128xf32>
    %170 = arith.select %161, %163, %169 : vector<2x128xi1>, vector<2x128xf32>
    %171 = vector.extract_strided_slice %150 {offsets = [0, 0], sizes = [2, 256], strides = [1, 1]} : vector<2x1024xf32> to vector<2x256xf32>
    %172 = arith.negf %171 : vector<2x256xf32>
    %173 = math.exp %172 : vector<2x256xf32>
    %cst_55 = arith.constant 1.000000e+00 : f32
    %174 = vector.broadcast %cst_55 : f32 to vector<2x256xf32>
    %175 = arith.addf %174, %173 : vector<2x256xf32>
    %176 = arith.divf %174, %175 : vector<2x256xf32>
    %177 = vector.extract_strided_slice %150 {offsets = [0, 256], sizes = [2, 256], strides = [1, 1]} : vector<2x1024xf32> to vector<2x256xf32>
    %178 = arith.negf %177 : vector<2x256xf32>
    %179 = math.exp %178 : vector<2x256xf32>
    %cst_56 = arith.constant 1.000000e+00 : f32
    %180 = vector.broadcast %cst_56 : f32 to vector<2x256xf32>
    %181 = arith.addf %180, %179 : vector<2x256xf32>
    %182 = arith.divf %180, %181 : vector<2x256xf32>
    %183 = vector.extract_strided_slice %150 {offsets = [0, 512], sizes = [2, 256], strides = [1, 1]} : vector<2x1024xf32> to vector<2x256xf32>
    %184 = arith.negf %183 : vector<2x256xf32>
    %185 = math.exp %184 : vector<2x256xf32>
    %cst_57 = arith.constant 1.000000e+00 : f32
    %186 = vector.broadcast %cst_57 : f32 to vector<2x256xf32>
    %187 = arith.addf %186, %185 : vector<2x256xf32>
    %188 = arith.divf %186, %187 : vector<2x256xf32>
    %189 = vector.extract_strided_slice %150 {offsets = [0, 768], sizes = [2, 256], strides = [1, 1]} : vector<2x1024xf32> to vector<2x256xf32>
    %190 = math.tanh %189 : vector<2x256xf32>
    %191 = arith.mulf %176, %72 : vector<2x256xf32>
    %192 = arith.mulf %182, %190 : vector<2x256xf32>
    %193 = arith.addf %191, %192 : vector<2x256xf32>
    %194 = math.tanh %193 : vector<2x256xf32>
    %195 = arith.mulf %188, %194 : vector<2x256xf32>
    %196 = arith.truncf %195 : vector<2x256xf32> to vector<2x256xbf16>
    %c0_58 = arith.constant 0 : index
    %c0_59 = arith.constant 0 : index
    %197 = vector.load %arg7[%c0_58, %c0_59] : memref<256x256xbf16, #tpu.memory_space<vmem>>, vector<256x256xbf16>
    %cst_60 = arith.constant dense<0.000000e+00> : vector<2x256xf32>
    %198 = tpu.matmul %196, %197, %cst_60 {dimension_numbers = #tpu.dot_dimension_numbers<[1], [0], [0], [1], [0, 0, 1, 1], [], []>} : vector<2x256xbf16>, vector<256x256xbf16>, vector<2x256xf32> -> vector<2x256xf32>
    %c0_61 = arith.constant 0 : index
    %c0_62 = arith.constant 0 : index
    %199 = vector.load %arg13[%c0_61, %c0_62] : memref<1x256xf32, #tpu.memory_space<vmem>>, vector<1x256xf32>
    %200 = vector.broadcast %199 : vector<1x256xf32> to vector<2x256xf32>
    %201 = arith.addf %198, %200 : vector<2x256xf32>
    %202 = vector.extract_strided_slice %201 {offsets = [0, 0], sizes = [2, 128], strides = [1, 1]} : vector<2x256xf32> to vector<2x128xf32>
    %203 = vector.extract_strided_slice %201 {offsets = [0, 128], sizes = [2, 128], strides = [1, 1]} : vector<2x256xf32> to vector<2x128xf32>
    %cst_63 = arith.constant 0.000000e+00 : f32
    %204 = vector.broadcast %cst_63 : f32 to vector<2x128xf32>
    %205 = arith.maximumf %203, %204 : vector<2x128xf32>
    %206 = vector.broadcast %cst_63 : f32 to vector<2x128xf32>
    %207 = arith.subf %203, %206 : vector<2x128xf32>
    %208 = arith.cmpf one, %207, %207 : vector<2x128xf32>
    %209 = vector.broadcast %cst_63 : f32 to vector<2x128xf32>
    %210 = arith.addf %203, %209 : vector<2x128xf32>
    %211 = math.absf %207 : vector<2x128xf32>
    %cst_64 = arith.constant 0.000000e+00 : f32
    %212 = vector.broadcast %cst_64 : f32 to vector<2x128xf32>
    %213 = arith.subf %212, %211 : vector<2x128xf32>
    %214 = math.exp %213 : vector<2x128xf32>
    %215 = math.log1p %214 : vector<2x128xf32>
    %216 = arith.addf %205, %215 : vector<2x128xf32>
    %217 = arith.select %208, %210, %216 : vector<2x128xi1>, vector<2x128xf32>
    %c1 = arith.constant 1 : index
    %c0_65 = arith.constant 0 : index
    %c0_66 = arith.constant 0 : index
    %218 = vector.load %arg2[%c1, %c0_65, %c0_66] : memref<3x2x128xf32, #tpu.memory_space<vmem>>, vector<1x2x128xf32>
    %219 = vector.shape_cast %218 : vector<1x2x128xf32> to vector<2x128xf32>
    %220 = arith.mulf %217, %219 : vector<2x128xf32>
    %221 = arith.addf %202, %220 : vector<2x128xf32>
    %222 = arith.truncf %221 : vector<2x128xf32> to vector<2x128xbf16>
    %c0_67 = arith.constant 0 : index
    %c0_68 = arith.constant 0 : index
    %223 = vector.load %arg8[%c0_67, %c0_68] : memref<128x1024xbf16, #tpu.memory_space<vmem>>, vector<128x1024xbf16>
    %cst_69 = arith.constant dense<0.000000e+00> : vector<2x1024xf32>
    %224 = tpu.matmul %222, %223, %cst_69 {dimension_numbers = #tpu.dot_dimension_numbers<[1], [0], [0], [1], [0, 0, 1, 1], [], []>} : vector<2x128xbf16>, vector<128x1024xbf16>, vector<2x1024xf32> -> vector<2x1024xf32>
    %225 = arith.addf %224, %19 : vector<2x1024xf32>
    %226 = vector.extract_strided_slice %225 {offsets = [0, 0], sizes = [2, 256], strides = [1, 1]} : vector<2x1024xf32> to vector<2x256xf32>
    %227 = arith.negf %226 : vector<2x256xf32>
    %228 = math.exp %227 : vector<2x256xf32>
    %cst_70 = arith.constant 1.000000e+00 : f32
    %229 = vector.broadcast %cst_70 : f32 to vector<2x256xf32>
    %230 = arith.addf %229, %228 : vector<2x256xf32>
    %231 = arith.divf %229, %230 : vector<2x256xf32>
    %232 = vector.extract_strided_slice %225 {offsets = [0, 256], sizes = [2, 256], strides = [1, 1]} : vector<2x1024xf32> to vector<2x256xf32>
    %233 = arith.negf %232 : vector<2x256xf32>
    %234 = math.exp %233 : vector<2x256xf32>
    %cst_71 = arith.constant 1.000000e+00 : f32
    %235 = vector.broadcast %cst_71 : f32 to vector<2x256xf32>
    %236 = arith.addf %235, %234 : vector<2x256xf32>
    %237 = arith.divf %235, %236 : vector<2x256xf32>
    %238 = vector.extract_strided_slice %225 {offsets = [0, 512], sizes = [2, 256], strides = [1, 1]} : vector<2x1024xf32> to vector<2x256xf32>
    %239 = arith.negf %238 : vector<2x256xf32>
    %240 = math.exp %239 : vector<2x256xf32>
    %cst_72 = arith.constant 1.000000e+00 : f32
    %241 = vector.broadcast %cst_72 : f32 to vector<2x256xf32>
    %242 = arith.addf %241, %240 : vector<2x256xf32>
    %243 = arith.divf %241, %242 : vector<2x256xf32>
    %244 = vector.extract_strided_slice %225 {offsets = [0, 768], sizes = [2, 256], strides = [1, 1]} : vector<2x1024xf32> to vector<2x256xf32>
    %245 = math.tanh %244 : vector<2x256xf32>
    %246 = arith.mulf %231, %127 : vector<2x256xf32>
    %247 = arith.mulf %237, %245 : vector<2x256xf32>
    %248 = arith.addf %246, %247 : vector<2x256xf32>
    %249 = math.tanh %248 : vector<2x256xf32>
    %250 = arith.mulf %243, %249 : vector<2x256xf32>
    %251 = arith.addf %130, %250 : vector<2x256xf32>
    %252 = math.log %170 : vector<2x128xf32>
    %253 = math.log %217 : vector<2x128xf32>
    %254 = arith.subf %252, %253 : vector<2x128xf32>
    %255 = arith.mulf %217, %217 : vector<2x128xf32>
    %256 = arith.subf %202, %155 : vector<2x128xf32>
    %257 = arith.mulf %256, %256 : vector<2x128xf32>
    %258 = arith.addf %255, %257 : vector<2x128xf32>
    %cst_73 = arith.constant 2.000000e+00 : f32
    %259 = vector.broadcast %cst_73 : f32 to vector<2x128xf32>
    %260 = arith.mulf %259, %170 : vector<2x128xf32>
    %261 = arith.mulf %260, %170 : vector<2x128xf32>
    %262 = arith.divf %258, %261 : vector<2x128xf32>
    %263 = arith.addf %254, %262 : vector<2x128xf32>
    %cst_74 = arith.constant 5.000000e-01 : f32
    %264 = vector.broadcast %cst_74 : f32 to vector<2x128xf32>
    %265 = arith.subf %263, %264 : vector<2x128xf32>
    %266 = arith.addf %145, %265 : vector<2x128xf32>
    %267 = arith.truncf %250 : vector<2x256xf32> to vector<2x256xbf16>
    %c0_75 = arith.constant 0 : index
    %c0_76 = arith.constant 0 : index
    %268 = vector.load %arg6[%c0_75, %c0_76] : memref<256x1280xbf16, #tpu.memory_space<vmem>>, vector<256x1280xbf16>
    %cst_77 = arith.constant dense<0.000000e+00> : vector<2x1280xf32>
    %269 = tpu.matmul %267, %268, %cst_77 {dimension_numbers = #tpu.dot_dimension_numbers<[1], [0], [0], [1], [0, 0, 1, 1], [], []>} : vector<2x256xbf16>, vector<256x1280xbf16>, vector<2x1280xf32> -> vector<2x1280xf32>
    %270 = vector.extract_strided_slice %269 {offsets = [0, 0], sizes = [2, 1024], strides = [1, 1]} : vector<2x1280xf32> to vector<2x1024xf32>
    %271 = arith.addf %270, %15 : vector<2x1024xf32>
    %272 = vector.extract_strided_slice %269 {offsets = [0, 1024], sizes = [2, 256], strides = [1, 1]} : vector<2x1280xf32> to vector<2x256xf32>
    %c0_78 = arith.constant 0 : index
    %c0_79 = arith.constant 0 : index
    %273 = vector.load %arg12[%c0_78, %c0_79] : memref<1x256xf32, #tpu.memory_space<vmem>>, vector<1x256xf32>
    %274 = vector.broadcast %273 : vector<1x256xf32> to vector<2x256xf32>
    %275 = arith.addf %272, %274 : vector<2x256xf32>
    %276 = vector.extract_strided_slice %275 {offsets = [0, 0], sizes = [2, 128], strides = [1, 1]} : vector<2x256xf32> to vector<2x128xf32>
    %277 = vector.extract_strided_slice %275 {offsets = [0, 128], sizes = [2, 128], strides = [1, 1]} : vector<2x256xf32> to vector<2x128xf32>
    %cst_80 = arith.constant 0.000000e+00 : f32
    %278 = vector.broadcast %cst_80 : f32 to vector<2x128xf32>
    %279 = arith.maximumf %277, %278 : vector<2x128xf32>
    %280 = vector.broadcast %cst_80 : f32 to vector<2x128xf32>
    %281 = arith.subf %277, %280 : vector<2x128xf32>
    %282 = arith.cmpf one, %281, %281 : vector<2x128xf32>
    %283 = vector.broadcast %cst_80 : f32 to vector<2x128xf32>
    %284 = arith.addf %277, %283 : vector<2x128xf32>
    %285 = math.absf %281 : vector<2x128xf32>
    %cst_81 = arith.constant 0.000000e+00 : f32
    %286 = vector.broadcast %cst_81 : f32 to vector<2x128xf32>
    %287 = arith.subf %286, %285 : vector<2x128xf32>
    %288 = math.exp %287 : vector<2x128xf32>
    %289 = math.log1p %288 : vector<2x128xf32>
    %290 = arith.addf %279, %289 : vector<2x128xf32>
    %291 = arith.select %282, %284, %290 : vector<2x128xi1>, vector<2x128xf32>
    %292 = vector.extract_strided_slice %271 {offsets = [0, 0], sizes = [2, 256], strides = [1, 1]} : vector<2x1024xf32> to vector<2x256xf32>
    %293 = arith.negf %292 : vector<2x256xf32>
    %294 = math.exp %293 : vector<2x256xf32>
    %cst_82 = arith.constant 1.000000e+00 : f32
    %295 = vector.broadcast %cst_82 : f32 to vector<2x256xf32>
    %296 = arith.addf %295, %294 : vector<2x256xf32>
    %297 = arith.divf %295, %296 : vector<2x256xf32>
    %298 = vector.extract_strided_slice %271 {offsets = [0, 256], sizes = [2, 256], strides = [1, 1]} : vector<2x1024xf32> to vector<2x256xf32>
    %299 = arith.negf %298 : vector<2x256xf32>
    %300 = math.exp %299 : vector<2x256xf32>
    %cst_83 = arith.constant 1.000000e+00 : f32
    %301 = vector.broadcast %cst_83 : f32 to vector<2x256xf32>
    %302 = arith.addf %301, %300 : vector<2x256xf32>
    %303 = arith.divf %301, %302 : vector<2x256xf32>
    %304 = vector.extract_strided_slice %271 {offsets = [0, 512], sizes = [2, 256], strides = [1, 1]} : vector<2x1024xf32> to vector<2x256xf32>
    %305 = arith.negf %304 : vector<2x256xf32>
    %306 = math.exp %305 : vector<2x256xf32>
    %cst_84 = arith.constant 1.000000e+00 : f32
    %307 = vector.broadcast %cst_84 : f32 to vector<2x256xf32>
    %308 = arith.addf %307, %306 : vector<2x256xf32>
    %309 = arith.divf %307, %308 : vector<2x256xf32>
    %310 = vector.extract_strided_slice %271 {offsets = [0, 768], sizes = [2, 256], strides = [1, 1]} : vector<2x1024xf32> to vector<2x256xf32>
    %311 = math.tanh %310 : vector<2x256xf32>
    %312 = arith.mulf %297, %193 : vector<2x256xf32>
    %313 = arith.mulf %303, %311 : vector<2x256xf32>
    %314 = arith.addf %312, %313 : vector<2x256xf32>
    %315 = math.tanh %314 : vector<2x256xf32>
    %316 = arith.mulf %309, %315 : vector<2x256xf32>
    %317 = arith.truncf %316 : vector<2x256xf32> to vector<2x256xbf16>
    %c0_85 = arith.constant 0 : index
    %c0_86 = arith.constant 0 : index
    %318 = vector.load %arg7[%c0_85, %c0_86] : memref<256x256xbf16, #tpu.memory_space<vmem>>, vector<256x256xbf16>
    %cst_87 = arith.constant dense<0.000000e+00> : vector<2x256xf32>
    %319 = tpu.matmul %317, %318, %cst_87 {dimension_numbers = #tpu.dot_dimension_numbers<[1], [0], [0], [1], [0, 0, 1, 1], [], []>} : vector<2x256xbf16>, vector<256x256xbf16>, vector<2x256xf32> -> vector<2x256xf32>
    %c0_88 = arith.constant 0 : index
    %c0_89 = arith.constant 0 : index
    %320 = vector.load %arg13[%c0_88, %c0_89] : memref<1x256xf32, #tpu.memory_space<vmem>>, vector<1x256xf32>
    %321 = vector.broadcast %320 : vector<1x256xf32> to vector<2x256xf32>
    %322 = arith.addf %319, %321 : vector<2x256xf32>
    %323 = vector.extract_strided_slice %322 {offsets = [0, 0], sizes = [2, 128], strides = [1, 1]} : vector<2x256xf32> to vector<2x128xf32>
    %324 = vector.extract_strided_slice %322 {offsets = [0, 128], sizes = [2, 128], strides = [1, 1]} : vector<2x256xf32> to vector<2x128xf32>
    %cst_90 = arith.constant 0.000000e+00 : f32
    %325 = vector.broadcast %cst_90 : f32 to vector<2x128xf32>
    %326 = arith.maximumf %324, %325 : vector<2x128xf32>
    %327 = vector.broadcast %cst_90 : f32 to vector<2x128xf32>
    %328 = arith.subf %324, %327 : vector<2x128xf32>
    %329 = arith.cmpf one, %328, %328 : vector<2x128xf32>
    %330 = vector.broadcast %cst_90 : f32 to vector<2x128xf32>
    %331 = arith.addf %324, %330 : vector<2x128xf32>
    %332 = math.absf %328 : vector<2x128xf32>
    %cst_91 = arith.constant 0.000000e+00 : f32
    %333 = vector.broadcast %cst_91 : f32 to vector<2x128xf32>
    %334 = arith.subf %333, %332 : vector<2x128xf32>
    %335 = math.exp %334 : vector<2x128xf32>
    %336 = math.log1p %335 : vector<2x128xf32>
    %337 = arith.addf %326, %336 : vector<2x128xf32>
    %338 = arith.select %329, %331, %337 : vector<2x128xi1>, vector<2x128xf32>
    %c2 = arith.constant 2 : index
    %c0_92 = arith.constant 0 : index
    %c0_93 = arith.constant 0 : index
    %339 = vector.load %arg2[%c2, %c0_92, %c0_93] : memref<3x2x128xf32, #tpu.memory_space<vmem>>, vector<1x2x128xf32>
    %340 = vector.shape_cast %339 : vector<1x2x128xf32> to vector<2x128xf32>
    %341 = arith.mulf %338, %340 : vector<2x128xf32>
    %342 = arith.addf %323, %341 : vector<2x128xf32>
    %343 = arith.truncf %342 : vector<2x128xf32> to vector<2x128xbf16>
    %c0_94 = arith.constant 0 : index
    %c0_95 = arith.constant 0 : index
    %344 = vector.load %arg8[%c0_94, %c0_95] : memref<128x1024xbf16, #tpu.memory_space<vmem>>, vector<128x1024xbf16>
    %cst_96 = arith.constant dense<0.000000e+00> : vector<2x1024xf32>
    %345 = tpu.matmul %343, %344, %cst_96 {dimension_numbers = #tpu.dot_dimension_numbers<[1], [0], [0], [1], [0, 0, 1, 1], [], []>} : vector<2x128xbf16>, vector<128x1024xbf16>, vector<2x1024xf32> -> vector<2x1024xf32>
    %346 = arith.addf %345, %19 : vector<2x1024xf32>
    %347 = vector.extract_strided_slice %346 {offsets = [0, 0], sizes = [2, 256], strides = [1, 1]} : vector<2x1024xf32> to vector<2x256xf32>
    %348 = arith.negf %347 : vector<2x256xf32>
    %349 = math.exp %348 : vector<2x256xf32>
    %cst_97 = arith.constant 1.000000e+00 : f32
    %350 = vector.broadcast %cst_97 : f32 to vector<2x256xf32>
    %351 = arith.addf %350, %349 : vector<2x256xf32>
    %352 = arith.divf %350, %351 : vector<2x256xf32>
    %353 = vector.extract_strided_slice %346 {offsets = [0, 256], sizes = [2, 256], strides = [1, 1]} : vector<2x1024xf32> to vector<2x256xf32>
    %354 = arith.negf %353 : vector<2x256xf32>
    %355 = math.exp %354 : vector<2x256xf32>
    %cst_98 = arith.constant 1.000000e+00 : f32
    %356 = vector.broadcast %cst_98 : f32 to vector<2x256xf32>
    %357 = arith.addf %356, %355 : vector<2x256xf32>
    %358 = arith.divf %356, %357 : vector<2x256xf32>
    %359 = vector.extract_strided_slice %346 {offsets = [0, 512], sizes = [2, 256], strides = [1, 1]} : vector<2x1024xf32> to vector<2x256xf32>
    %360 = arith.negf %359 : vector<2x256xf32>
    %361 = math.exp %360 : vector<2x256xf32>
    %cst_99 = arith.constant 1.000000e+00 : f32
    %362 = vector.broadcast %cst_99 : f32 to vector<2x256xf32>
    %363 = arith.addf %362, %361 : vector<2x256xf32>
    %364 = arith.divf %362, %363 : vector<2x256xf32>
    %365 = vector.extract_strided_slice %346 {offsets = [0, 768], sizes = [2, 256], strides = [1, 1]} : vector<2x1024xf32> to vector<2x256xf32>
    %366 = math.tanh %365 : vector<2x256xf32>
    %367 = arith.mulf %352, %248 : vector<2x256xf32>
    %368 = arith.mulf %358, %366 : vector<2x256xf32>
    %369 = arith.addf %367, %368 : vector<2x256xf32>
    %370 = math.tanh %369 : vector<2x256xf32>
    %371 = arith.mulf %364, %370 : vector<2x256xf32>
    %372 = arith.addf %251, %371 : vector<2x256xf32>
    %373 = math.log %291 : vector<2x128xf32>
    %374 = math.log %338 : vector<2x128xf32>
    %375 = arith.subf %373, %374 : vector<2x128xf32>
    %376 = arith.mulf %338, %338 : vector<2x128xf32>
    %377 = arith.subf %323, %276 : vector<2x128xf32>
    %378 = arith.mulf %377, %377 : vector<2x128xf32>
    %379 = arith.addf %376, %378 : vector<2x128xf32>
    %cst_100 = arith.constant 2.000000e+00 : f32
    %380 = vector.broadcast %cst_100 : f32 to vector<2x128xf32>
    %381 = arith.mulf %380, %291 : vector<2x128xf32>
    %382 = arith.mulf %381, %291 : vector<2x128xf32>
    %383 = arith.divf %379, %382 : vector<2x128xf32>
    %384 = arith.addf %375, %383 : vector<2x128xf32>
    %cst_101 = arith.constant 5.000000e-01 : f32
    %385 = vector.broadcast %cst_101 : f32 to vector<2x128xf32>
    %386 = arith.subf %384, %385 : vector<2x128xf32>
    %387 = arith.addf %266, %386 : vector<2x128xf32>
    %388 = arith.truncf %372 : vector<2x256xf32> to vector<2x256xbf16>
    %c0_102 = arith.constant 0 : index
    %c0_103 = arith.constant 0 : index
    %389 = vector.load %arg9[%c0_102, %c0_103] : memref<256x768xbf16, #tpu.memory_space<vmem>>, vector<256x768xbf16>
    %cst_104 = arith.constant dense<0.000000e+00> : vector<2x768xf32>
    %390 = tpu.matmul %388, %389, %cst_104 {dimension_numbers = #tpu.dot_dimension_numbers<[1], [0], [0], [1], [0, 0, 1, 1], [], []>} : vector<2x256xbf16>, vector<256x768xbf16>, vector<2x768xf32> -> vector<2x768xf32>
    %c0_105 = arith.constant 0 : index
    %c0_106 = arith.constant 0 : index
    %391 = vector.load %arg14[%c0_105, %c0_106] : memref<1x768xf32, #tpu.memory_space<vmem>>, vector<1x768xf32>
    %392 = vector.broadcast %391 : vector<1x768xf32> to vector<2x768xf32>
    %393 = arith.addf %390, %392 : vector<2x768xf32>
    %394 = arith.negf %393 : vector<2x768xf32>
    %395 = math.exp %394 : vector<2x768xf32>
    %cst_107 = arith.constant 1.000000e+00 : f32
    %396 = vector.broadcast %cst_107 : f32 to vector<2x768xf32>
    %397 = arith.addf %396, %395 : vector<2x768xf32>
    %398 = arith.divf %396, %397 : vector<2x768xf32>
    %c0_108 = arith.constant 0 : index
    %c0_109 = arith.constant 0 : index
    %399 = vector.load %arg15[%c0_108, %c0_109] : memref<2x768xf32, #tpu.memory_space<vmem>>, vector<2x768xf32>
    tpu.vector_store %arg15[%c0_108, %c0_109], %398 {strides = array<i32>} : memref<2x768xf32, #tpu.memory_space<vmem>>, vector<2x768xf32>,
    %c0_110 = arith.constant 0 : index
    %c0_111 = arith.constant 0 : index
    %400 = vector.load %arg16[%c0_110, %c0_111] : memref<2x128xf32, #tpu.memory_space<vmem>>, vector<2x128xf32>
    tpu.vector_store %arg16[%c0_110, %c0_111], %387 {strides = array<i32>} : memref<2x128xf32, #tpu.memory_space<vmem>>, vector<2x128xf32>,
    return
  }
}

</mosaic_0001>

<llo_original>
// kernel: tpu_custom_call.1
$region0: #{tpu_custom_call.1}
  #allocation0 [shape = 'u32[]', space=smem, size = 0x4, offset = 0x4, fixed_abs, tag = 'smem constant byte address 0x4 - core index']
  #allocation1 [shape = 'u32[72,128]{1,0:T(1,128)}', space=vmem, size = 0x9000, scoped, tag = 'internal scratch']
  %s0 = inlined_call_operand.vmem [shape: f32[2,768], index: 0, kind: input, shape index: {}]
  %s1 = inlined_call_operand.hbm [shape: f32[2,192], index: 1, kind: input, shape index: {}]
  %s2 = inlined_call_operand.hbm [shape: f32[3,2,128], index: 2, kind: input, shape index: {}]
  %s3 = inlined_call_operand.vmem [shape: bf16[768,48], index: 3, kind: input, shape index: {}]
  %s4 = inlined_call_operand.hbm [shape: bf16[48,1024], index: 4, kind: input, shape index: {}]
  %s5 = inlined_call_operand.hbm [shape: bf16[192,2048], index: 5, kind: input, shape index: {}]
  %s6 = inlined_call_operand.hbm [shape: bf16[256,1280], index: 6, kind: input, shape index: {}]
  %s7 = inlined_call_operand.hbm [shape: bf16[256,256], index: 7, kind: input, shape index: {}]
  %s8 = inlined_call_operand.vmem [shape: bf16[128,1024], index: 8, kind: input, shape index: {}]
  %s9 = inlined_call_operand.hbm [shape: bf16[256,768], index: 9, kind: input, shape index: {}]
  %s10 = inlined_call_operand.vmem [shape: f32[1,1024], index: 10, kind: input, shape index: {}]
  %s11 = inlined_call_operand.hbm [shape: f32[1,1024], index: 11, kind: input, shape index: {}]
  %s12 = inlined_call_operand.hbm [shape: f32[1,256], index: 12, kind: input, shape index: {}]
  %s13 = inlined_call_operand.hbm [shape: f32[1,256], index: 13, kind: input, shape index: {}]
  %s14 = inlined_call_operand.vmem [shape: f32[1,768], index: 14, kind: input, shape index: {}]
  %s15 = inlined_call_operand.hbm [shape: f32[2,768], index: 15, kind: output, shape index: {0}]
  %s16 = inlined_call_operand.hbm [shape: f32[2,128], index: 16, kind: output, shape index: {1}]
  %17 = xla_tuple %s15, %s16
  %s18 = sld [smem:[#allocation0]]
  $region118: #{tpu_custom_call.1} parent=0
    _
  %s20 = ssub.s32 1, %s18
  %s21 = scalar_select 0, %s20, %s18
  $region1: #{tpu_custom_call.1} parent=0
    #allocation2 [shape = 'u8[2048]{0}', space=vmem, size = 0x800, scoped, tag = 'input window, operand 1, single buffered']
    #allocation3 [shape = 's32[1]{0}', space=sflag, size = 0x4, scoped, tag = 'scoped memory for tpu_custom_call.1']
    #allocation4 [shape = 's32[1]{0}', space=sflag, size = 0x4, scoped, tag = 'scoped memory for tpu_custom_call.1']
    #allocation5 [shape = 'u8[3072]{0}', space=vmem, size = 0xc00, scoped, tag = 'input window, operand 2, single buffered']
    #allocation6 [shape = 's32[1]{0}', space=sflag, size = 0x4, scoped, tag = 'scoped memory for tpu_custom_call.1']
    #allocation7 [shape = 'u8[98304]{0}', space=vmem, size = 0x18000, scoped, tag = 'input window, operand 4, single buffered']
    #allocation8 [shape = 'u8[786432]{0}', space=vmem, size = 0xc0000, scoped, tag = 'input window, operand 5, single buffered']
    #allocation9 [shape = 's32[1]{0}', space=sflag, size = 0x4, scoped, tag = 'scoped memory for tpu_custom_call.1']
    #allocation10 [shape = 'u8[655360]{0}', space=vmem, size = 0xa0000, scoped, tag = 'input window, operand 6, single buffered']
    #allocation11 [shape = 'u8[131072]{0}', space=vmem, size = 0x20000, scoped, tag = 'input window, operand 7, single buffered']
    #allocation12 [shape = 's32[1]{0}', space=sflag, size = 0x4, scoped, tag = 'scoped memory for tpu_custom_call.1']
    #allocation13 [shape = 'u8[393216]{0}', space=vmem, size = 0x60000, scoped, tag = 'input window, operand 9, single buffered']
    #allocation14 [shape = 'u8[4096]{0}', space=vmem, size = 0x1000, scoped, tag = 'input window, operand 11, single buffered']
    #allocation15 [shape = 's32[1]{0}', space=sflag, size = 0x4, scoped, tag = 'scoped memory for tpu_custom_call.1']
    #allocation16 [shape = 'u8[1024]{0}', space=vmem, size = 0x400, scoped, tag = 'input window, operand 12, single buffered']
    #allocation17 [shape = 'u8[1024]{0}', space=vmem, size = 0x400, scoped, tag = 'input window, operand 13, single buffered']
    #allocation18 [shape = 's32[1]{0}', space=sflag, size = 0x4, scoped, tag = 'scoped memory for tpu_custom_call.1']
    #allocation19 [shape = 'u8[6144]{0}', space=vmem, size = 0x1800, scoped, tag = 'output window, operand 0, single buffered']
    #allocation20 [shape = 'u8[1024]{0}', space=vmem, size = 0x400, scoped, tag = 'output window, operand 1, single buffered']
    #allocation21 [shape = 's32[1]{0}', space=sflag, size = 0x4, scoped, tag = 'scoped memory for tpu_custom_call.1']
    %22 = vsyncpa [#allocation3], 0
    %23 = vsyncpa [#allocation6], 0
    %24 = vsyncpa [#allocation9], 0
    %25 = vsyncpa [#allocation12], 0
    %26 = vsyncpa [#allocation15], 0
    %27 = vsyncpa [#allocation18], 0
    %28 = vsyncpa [#allocation4], 0
    %29 = vsyncpa [#allocation21], 0
    // Predicated region
    $region2: #{tpu_custom_call.1} parent=1 // pred_check
      _
    $region3: #{tpu_custom_call.1} parent=1 // pred_check_branch
      %31 = sbr.rel (0) target = $region5
    $region4: #{tpu_custom_call.1} parent=1 // pred_region
      _
    $region5: #{tpu_custom_call.1} parent=1 // pred_fallthru
      _
    // Predicated region
    $region6: #{tpu_custom_call.1} parent=1 // pred_check
      _
    $region7: #{tpu_custom_call.1} parent=1 // pred_check_branch
      %33 = sbr.rel (0) target = $region9
    $region8: #{tpu_custom_call.1} parent=1 // pred_region
      %35 = vsyncadd [#allocation3], 0
      %s37 = sshll.u32 %s1, 4
      %s38 = int_to_ptr.hbm [resolvable:$true] %s37
      %s39 = sshll.u32 [#allocation2], 4
      %s40 = int_to_ptr.vmem [resolvable:$true] %s39
      %42 = dma.hbm_to_vmem [thread:$0]  %s38, 64, %s40, [#allocation3]
    $region9: #{tpu_custom_call.1} parent=1 // pred_fallthru
      _
    // Predicated region
    $region10: #{tpu_custom_call.1} parent=1 // pred_check
      _
    $region11: #{tpu_custom_call.1} parent=1 // pred_check_branch
      %44 = sbr.rel (0) target = $region13
    $region12: #{tpu_custom_call.1} parent=1 // pred_region
      %46 = vsyncadd [#allocation6], 0
      %s47 = sshll.u32 %s2, 4
      %s48 = int_to_ptr.hbm [resolvable:$true] %s47
      %s49 = sshll.u32 [#allocation5], 4
      %s50 = int_to_ptr.vmem [resolvable:$true] %s49
      %55 = dma.hbm_to_vmem [thread:$0]  %s48, 96, %s50, [#allocation6], 32, 32, 2
    $region13: #{tpu_custom_call.1} parent=1 // pred_fallthru
      _
    // Predicated region
    $region14: #{tpu_custom_call.1} parent=1 // pred_check
      _
    $region15: #{tpu_custom_call.1} parent=1 // pred_check_branch
      %57 = sbr.rel (0) target = $region17
    $region16: #{tpu_custom_call.1} parent=1 // pred_region
      _
    $region17: #{tpu_custom_call.1} parent=1 // pred_fallthru
      _
    // Predicated region
    $region18: #{tpu_custom_call.1} parent=1 // pred_check
      _
    $region19: #{tpu_custom_call.1} parent=1 // pred_check_branch
      %59 = sbr.rel (0) target = $region21
    $region20: #{tpu_custom_call.1} parent=1 // pred_region
      %61 = vsyncadd [#allocation6], 0
      %s62 = sshll.u32 %s4, 4
      %s63 = int_to_ptr.hbm [resolvable:$true] %s62
      %s64 = sshll.u32 [#allocation7], 4
      %s65 = int_to_ptr.vmem [resolvable:$true] %s64
      %70 = dma.hbm_to_vmem [thread:$0]  %s63, 3072, %s65, [#allocation6], 512, 512, 32
    $region21: #{tpu_custom_call.1} parent=1 // pred_fallthru
      _
    // Predicated region
    $region22: #{tpu_custom_call.1} parent=1 // pred_check
      _
    $region23: #{tpu_custom_call.1} parent=1 // pred_check_branch
      %72 = sbr.rel (0) target = $region25
    $region24: #{tpu_custom_call.1} parent=1 // pred_region
      %74 = vsyncadd [#allocation9], 0
      %s75 = sshll.u32 %s5, 4
      %s76 = int_to_ptr.hbm [resolvable:$true] %s75
      %s77 = sshll.u32 [#allocation8], 4
      %s78 = int_to_ptr.vmem [resolvable:$true] %s77
      %83 = dma.hbm_to_vmem [thread:$0]  %s76, 24576, %s78, [#allocation9], 1024, 1024, 64
    $region25: #{tpu_custom_call.1} parent=1 // pred_fallthru
      _
    // Predicated region
    $region26: #{tpu_custom_call.1} parent=1 // pred_check
      _
    $region27: #{tpu_custom_call.1} parent=1 // pred_check_branch
      %85 = sbr.rel (0) target = $region29
    $region28: #{tpu_custom_call.1} parent=1 // pred_region
      %87 = vsyncadd [#allocation9], 0
      %s88 = sshll.u32 %s6, 4
      %s89 = int_to_ptr.hbm [resolvable:$true] %s88
      %s90 = sshll.u32 [#allocation10], 4
      %s91 = int_to_ptr.vmem [resolvable:$true] %s90
      %96 = dma.hbm_to_vmem [thread:$0]  %s89, 20480, %s91, [#allocation9], 640, 640, 40
    $region29: #{tpu_custom_call.1} parent=1 // pred_fallthru
      _
    // Predicated region
    $region30: #{tpu_custom_call.1} parent=1 // pred_check
      _
    $region31: #{tpu_custom_call.1} parent=1 // pred_check_branch
      %98 = sbr.rel (0) target = $region33
    $region32: #{tpu_custom_call.1} parent=1 // pred_region
      %100 = vsyncadd [#allocation12], 0
      %s101 = sshll.u32 %s7, 4
      %s102 = int_to_ptr.hbm [resolvable:$true] %s101
      %s103 = sshll.u32 [#allocation11], 4
      %s104 = int_to_ptr.vmem [resolvable:$true] %s103
      %109 = dma.hbm_to_vmem [thread:$0]  %s102, 4096, %s104, [#allocation12], 128, 128, 8
    $region33: #{tpu_custom_call.1} parent=1 // pred_fallthru
      _
    // Predicated region
    $region34: #{tpu_custom_call.1} parent=1 // pred_check
      _
    $region35: #{tpu_custom_call.1} parent=1 // pred_check_branch
      %111 = sbr.rel (0) target = $region37
    $region36: #{tpu_custom_call.1} parent=1 // pred_region
      _
    $region37: #{tpu_custom_call.1} parent=1 // pred_fallthru
      _
    // Predicated region
    $region38: #{tpu_custom_call.1} parent=1 // pred_check
      _
    $region39: #{tpu_custom_call.1} parent=1 // pred_check_branch
      %113 = sbr.rel (0) target = $region41
    $region40: #{tpu_custom_call.1} parent=1 // pred_region
      %115 = vsyncadd [#allocation12], 0
      %s116 = sshll.u32 %s9, 4
      %s117 = int_to_ptr.hbm [resolvable:$true] %s116
      %s118 = sshll.u32 [#allocation13], 4
      %s119 = int_to_ptr.vmem [resolvable:$true] %s118
      %124 = dma.hbm_to_vmem [thread:$0]  %s117, 12288, %s119, [#allocation12], 384, 384, 24
    $region41: #{tpu_custom_call.1} parent=1 // pred_fallthru
      _
    // Predicated region
    $region42: #{tpu_custom_call.1} parent=1 // pred_check
      _
    $region43: #{tpu_custom_call.1} parent=1 // pred_check_branch
      %126 = sbr.rel (0) target = $region45
    $region44: #{tpu_custom_call.1} parent=1 // pred_region
      _
    $region45: #{tpu_custom_call.1} parent=1 // pred_fallthru
      _
    // Predicated region
    $region46: #{tpu_custom_call.1} parent=1 // pred_check
      _
    $region47: #{tpu_custom_call.1} parent=1 // pred_check_branch
      %128 = sbr.rel (0) target = $region49
    $region48: #{tpu_custom_call.1} parent=1 // pred_region
      %130 = vsyncadd [#allocation15], 0
      %s132 = sshll.u32 %s11, 4
      %s133 = int_to_ptr.hbm [resolvable:$true] %s132
      %s134 = sshll.u32 [#allocation14], 4
      %s135 = int_to_ptr.vmem [resolvable:$true] %s134
      %137 = dma.hbm_to_vmem [thread:$0]  %s133, 128, %s135, [#allocation15]
    $region49: #{tpu_custom_call.1} parent=1 // pred_fallthru
      _
    // Predicated region
    $region50: #{tpu_custom_call.1} parent=1 // pred_check
      _
    $region51: #{tpu_custom_call.1} parent=1 // pred_check_branch
      %139 = sbr.rel (0) target = $region53
    $region52: #{tpu_custom_call.1} parent=1 // pred_region
      %141 = vsyncadd [#allocation15], 0
      %s143 = sshll.u32 %s12, 4
      %s144 = int_to_ptr.hbm [resolvable:$true] %s143
      %s145 = sshll.u32 [#allocation16], 4
      %s146 = int_to_ptr.vmem [resolvable:$true] %s145
      %148 = dma.hbm_to_vmem [thread:$0]  %s144, 32, %s146, [#allocation15]
    $region53: #{tpu_custom_call.1} parent=1 // pred_fallthru
      _
    // Predicated region
    $region54: #{tpu_custom_call.1} parent=1 // pred_check
      _
    $region55: #{tpu_custom_call.1} parent=1 // pred_check_branch
      %150 = sbr.rel (0) target = $region57
    $region56: #{tpu_custom_call.1} parent=1 // pred_region
      %152 = vsyncadd [#allocation18], 0
      %s154 = sshll.u32 %s13, 4
      %s155 = int_to_ptr.hbm [resolvable:$true] %s154
      %s156 = sshll.u32 [#allocation17], 4
      %s157 = int_to_ptr.vmem [resolvable:$true] %s156
      %159 = dma.hbm_to_vmem [thread:$0]  %s155, 32, %s157, [#allocation18]
    $region57: #{tpu_custom_call.1} parent=1 // pred_fallthru
      _
    // Predicated region
    $region58: #{tpu_custom_call.1} parent=1 // pred_check
      _
    $region59: #{tpu_custom_call.1} parent=1 // pred_check_branch
      %161 = sbr.rel (0) target = $region61
    $region60: #{tpu_custom_call.1} parent=1 // pred_region
      _
    $region61: #{tpu_custom_call.1} parent=1 // pred_fallthru
      _
    // Predicated region
    $region62: #{tpu_custom_call.1} parent=1 // pred_check
      _
    $region63: #{tpu_custom_call.1} parent=1 // pred_check_branch
      %163 = sbr.rel (0) target = $region65
    $region64: #{tpu_custom_call.1} parent=1 // pred_region
      %165 = dma.done [#allocation3], 64
    $region65: #{tpu_custom_call.1} parent=1 // pred_fallthru
      _
    // Predicated region
    $region66: #{tpu_custom_call.1} parent=1 // pred_check
      _
    $region67: #{tpu_custom_call.1} parent=1 // pred_check_branch
      %167 = sbr.rel (0) target = $region69
    $region68: #{tpu_custom_call.1} parent=1 // pred_region
      %169 = dma.done [#allocation6], 96
    $region69: #{tpu_custom_call.1} parent=1 // pred_fallthru
      _
    // Predicated region
    $region70: #{tpu_custom_call.1} parent=1 // pred_check
      _
    $region71: #{tpu_custom_call.1} parent=1 // pred_check_branch
      %171 = sbr.rel (0) target = $region73
    $region72: #{tpu_custom_call.1} parent=1 // pred_region
      %173 = dma.done [#allocation6], 3072
    $region73: #{tpu_custom_call.1} parent=1 // pred_fallthru
      _
    // Predicated region
    $region74: #{tpu_custom_call.1} parent=1 // pred_check
      _
    $region75: #{tpu_custom_call.1} parent=1 // pred_check_branch
      %175 = sbr.rel (0) target = $region77
    $region76: #{tpu_custom_call.1} parent=1 // pred_region
      %177 = dma.done [#allocation9], 24576
    $region77: #{tpu_custom_call.1} parent=1 // pred_fallthru
      _
    // Predicated region
    $region78: #{tpu_custom_call.1} parent=1 // pred_check
      _
    $region79: #{tpu_custom_call.1} parent=1 // pred_check_branch
      %179 = sbr.rel (0) target = $region81
    $region80: #{tpu_custom_call.1} parent=1 // pred_region
      %181 = dma.done [#allocation9], 20480
    $region81: #{tpu_custom_call.1} parent=1 // pred_fallthru
      _
    // Predicated region
    $region82: #{tpu_custom_call.1} parent=1 // pred_check
      _
    $region83: #{tpu_custom_call.1} parent=1 // pred_check_branch
      %183 = sbr.rel (0) target = $region85
    $region84: #{tpu_custom_call.1} parent=1 // pred_region
      %185 = dma.done [#allocation12], 4096
    $region85: #{tpu_custom_call.1} parent=1 // pred_fallthru
      _
    // Predicated region
    $region86: #{tpu_custom_call.1} parent=1 // pred_check
      _
    $region87: #{tpu_custom_call.1} parent=1 // pred_check_branch
      %187 = sbr.rel (0) target = $region89
    $region88: #{tpu_custom_call.1} parent=1 // pred_region
      %189 = dma.done [#allocation12], 12288
    $region89: #{tpu_custom_call.1} parent=1 // pred_fallthru
      _
    // Predicated region
    $region90: #{tpu_custom_call.1} parent=1 // pred_check
      _
    $region91: #{tpu_custom_call.1} parent=1 // pred_check_branch
      %191 = sbr.rel (0) target = $region93
    $region92: #{tpu_custom_call.1} parent=1 // pred_region
      %193 = dma.done [#allocation15], 128
    $region93: #{tpu_custom_call.1} parent=1 // pred_fallthru
      _
    // Predicated region
    $region94: #{tpu_custom_call.1} parent=1 // pred_check
      _
    $region95: #{tpu_custom_call.1} parent=1 // pred_check_branch
      %195 = sbr.rel (0) target = $region97
    $region96: #{tpu_custom_call.1} parent=1 // pred_region
      %197 = dma.done [#allocation15], 32
    $region97: #{tpu_custom_call.1} parent=1 // pred_fallthru
      _
    // Predicated region
    $region98: #{tpu_custom_call.1} parent=1 // pred_check
      _
    $region99: #{tpu_custom_call.1} parent=1 // pred_check_branch
      %199 = sbr.rel (0) target = $region101
    $region100: #{tpu_custom_call.1} parent=1 // pred_region
      %201 = dma.done [#allocation18], 32
    $region101: #{tpu_custom_call.1} parent=1 // pred_fallthru
      _
    %v203 = vld [vmem:[%s0] sm:$0xff]
    %v204 = vld [vmem:[%s0 + $0x8] sm:$0xf]
    %207 = vst [vmem:[#allocation1] ss:$4 sm:$0xff] %v203
    %s208 = scalar_lea.vmem [#allocation1], 32
    %209 = vst [vmem:[%s208] ss:$4 sm:$0xff] %v204
    %v210 = vld.sshfl [vmem:[#allocation1] sm:$0xff pattern:$0x73625140]
    %v211 = vld.sshfl [vmem:[#allocation1 + $0x8] sm:$0xff pattern:$0x73625140]
    %v212 = vld.sshfl [vmem:[#allocation1 + $0x10] sm:$0xff pattern:$0x73625140]
    %v213 = vld.sshfl [vmem:[#allocation1 + $0x18] sm:$0xff pattern:$0x73625140]
    %v214 = vld.sshfl [vmem:[#allocation1 + $0x20] sm:$0xff pattern:$0x73625140]
    %v215 = vld.sshfl [vmem:[#allocation1 + $0x28] sm:$0xff pattern:$0x73625140]
    %v222 = vpack.c.bf16 %v210, %v210
    %v223 = vpack.c.bf16 %v211, %v211
    %v224 = vpack.c.bf16 %v212, %v212
    %v225 = vpack.c.bf16 %v213, %v213
    %v226 = vpack.c.bf16 %v214, %v214
    %v227 = vpack.c.bf16 %v215, %v215
    %v228 = vld [vmem:[%s3] sm:$0xf]
    %v229 = vld [vmem:[%s3 + $0x4] sm:$0xf]
    %v230 = vld [vmem:[%s3 + $0x8] sm:$0xf]
    %v231 = vld [vmem:[%s3 + $0xc] sm:$0xf]
    %v232 = vld [vmem:[%s3 + $0x10] sm:$0xf]
    %v233 = vld [vmem:[%s3 + $0x14] sm:$0xf]
    %v234 = vld [vmem:[%s3 + $0x18] sm:$0xf]
    %v235 = vld [vmem:[%s3 + $0x1c] sm:$0xf]
    %v236 = vld [vmem:[%s3 + $0x20] sm:$0xf]
    %v237 = vld [vmem:[%s3 + $0x24] sm:$0xf]
    %v238 = vld [vmem:[%s3 + $0x28] sm:$0xf]
    %v239 = vld [vmem:[%s3 + $0x2c] sm:$0xf]
    %v240 = vld [vmem:[%s3 + $0x30] sm:$0xf]
    %v241 = vld [vmem:[%s3 + $0x34] sm:$0xf]
    %v242 = vld [vmem:[%s3 + $0x38] sm:$0xf]
    %v243 = vld [vmem:[%s3 + $0x3c] sm:$0xf]
    %v244 = vld [vmem:[%s3 + $0x40] sm:$0xf]
    %v245 = vld [vmem:[%s3 + $0x44] sm:$0xf]
    %v246 = vld [vmem:[%s3 + $0x48] sm:$0xf]
    %v247 = vld [vmem:[%s3 + $0x4c] sm:$0xf]
    %v248 = vld [vmem:[%s3 + $0x50] sm:$0xf]
    %v249 = vld [vmem:[%s3 + $0x54] sm:$0xf]
    %v250 = vld [vmem:[%s3 + $0x58] sm:$0xf]
    %v251 = vld [vmem:[%s3 + $0x5c] sm:$0xf]
    %v252 = vld [vmem:[%s3 + $0x60] sm:$0xf]
    %v253 = vld [vmem:[%s3 + $0x64] sm:$0xf]
    %v254 = vld [vmem:[%s3 + $0x68] sm:$0xf]
    %v255 = vld [vmem:[%s3 + $0x6c] sm:$0xf]
    %v256 = vld [vmem:[%s3 + $0x70] sm:$0xf]
    %v257 = vld [vmem:[%s3 + $0x74] sm:$0xf]
    %v258 = vld [vmem:[%s3 + $0x78] sm:$0xf]
    %v259 = vld [vmem:[%s3 + $0x7c] sm:$0xf]
    %v260 = vld [vmem:[%s3 + $0x80] sm:$0xf]
    %v261 = vld [vmem:[%s3 + $0x84] sm:$0xf]
    %v262 = vld [vmem:[%s3 + $0x88] sm:$0xf]
    %v263 = vld [vmem:[%s3 + $0x8c] sm:$0xf]
    %v264 = vld [vmem:[%s3 + $0x90] sm:$0xf]
    %v265 = vld [vmem:[%s3 + $0x94] sm:$0xf]
    %v266 = vld [vmem:[%s3 + $0x98] sm:$0xf]
    %v267 = vld [vmem:[%s3 + $0x9c] sm:$0xf]
    %v268 = vld [vmem:[%s3 + $0xa0] sm:$0xf]
    %v269 = vld [vmem:[%s3 + $0xa4] sm:$0xf]
    %v270 = vld [vmem:[%s3 + $0xa8] sm:$0xf]
    %v271 = vld [vmem:[%s3 + $0xac] sm:$0xf]
    %v272 = vld [vmem:[%s3 + $0xb0] sm:$0xf]
    %v273 = vld [vmem:[%s3 + $0xb4] sm:$0xf]
    %v274 = vld [vmem:[%s3 + $0xb8] sm:$0xf]
    %v275 = vld [vmem:[%s3 + $0xbc] sm:$0xf]
    %v276 = vld [vmem:[%s3 + $0xc0] sm:$0xf]
    %v277 = vld [vmem:[%s3 + $0xc4] sm:$0xf]
    %v278 = vld [vmem:[%s3 + $0xc8] sm:$0xf]
    %v279 = vld [vmem:[%s3 + $0xcc] sm:$0xf]
    %v280 = vld [vmem:[%s3 + $0xd0] sm:$0xf]
    %v281 = vld [vmem:[%s3 + $0xd4] sm:$0xf]
    %v282 = vld [vmem:[%s3 + $0xd8] sm:$0xf]
    %v283 = vld [vmem:[%s3 + $0xdc] sm:$0xf]
    %v284 = vld [vmem:[%s3 + $0xe0] sm:$0xf]
    %v285 = vld [vmem:[%s3 + $0xe4] sm:$0xf]
    %v286 = vld [vmem:[%s3 + $0xe8] sm:$0xf]
    %v287 = vld [vmem:[%s3 + $0xec] sm:$0xf]
    %v288 = vld [vmem:[%s3 + $0xf0] sm:$0xf]
    %v289 = vld [vmem:[%s3 + $0xf4] sm:$0xf]
    %v290 = vld [vmem:[%s3 + $0xf8] sm:$0xf]
    %v291 = vld [vmem:[%s3 + $0xfc] sm:$0xf]
    %v292 = vld [vmem:[%s3 + $0x100] sm:$0xf]
    %v293 = vld [vmem:[%s3 + $0x104] sm:$0xf]
    %v294 = vld [vmem:[%s3 + $0x108] sm:$0xf]
    %v295 = vld [vmem:[%s3 + $0x10c] sm:$0xf]
    %v296 = vld [vmem:[%s3 + $0x110] sm:$0xf]
    %v297 = vld [vmem:[%s3 + $0x114] sm:$0xf]
    %v298 = vld [vmem:[%s3 + $0x118] sm:$0xf]
    %v299 = vld [vmem:[%s3 + $0x11c] sm:$0xf]
    %v300 = vld [vmem:[%s3 + $0x120] sm:$0xf]
    %v301 = vld [vmem:[%s3 + $0x124] sm:$0xf]
    %v302 = vld [vmem:[%s3 + $0x128] sm:$0xf]
    %v303 = vld [vmem:[%s3 + $0x12c] sm:$0xf]
    %v304 = vld [vmem:[%s3 + $0x130] sm:$0xf]
    %v305 = vld [vmem:[%s3 + $0x134] sm:$0xf]
    %v306 = vld [vmem:[%s3 + $0x138] sm:$0xf]
    %v307 = vld [vmem:[%s3 + $0x13c] sm:$0xf]
    %v308 = vld [vmem:[%s3 + $0x140] sm:$0xf]
    %v309 = vld [vmem:[%s3 + $0x144] sm:$0xf]
    %v310 = vld [vmem:[%s3 + $0x148] sm:$0xf]
    %v311 = vld [vmem:[%s3 + $0x14c] sm:$0xf]
    %v312 = vld [vmem:[%s3 + $0x150] sm:$0xf]
    %v313 = vld [vmem:[%s3 + $0x154] sm:$0xf]
    %v314 = vld [vmem:[%s3 + $0x158] sm:$0xf]
    %v315 = vld [vmem:[%s3 + $0x15c] sm:$0xf]
    %v316 = vld [vmem:[%s3 + $0x160] sm:$0xf]
    %v317 = vld [vmem:[%s3 + $0x164] sm:$0xf]
    %v318 = vld [vmem:[%s3 + $0x168] sm:$0xf]
    %v319 = vld [vmem:[%s3 + $0x16c] sm:$0xf]
    %v320 = vld [vmem:[%s3 + $0x170] sm:$0xf]
    %v321 = vld [vmem:[%s3 + $0x174] sm:$0xf]
    %v322 = vld [vmem:[%s3 + $0x178] sm:$0xf]
    %v323 = vld [vmem:[%s3 + $0x17c] sm:$0xf]
    %v420 = vunpack.c.l.b16 %v228
    %v421 = vunpack.c.l.b16 %v229
    %v422 = vunpack.c.l.b16 %v230
    %v423 = vunpack.c.l.b16 %v231
    %v424 = vunpack.c.l.b16 %v232
    %v425 = vunpack.c.l.b16 %v233
    %v426 = vunpack.c.l.b16 %v234
    %v427 = vunpack.c.l.b16 %v235
    %v428 = vunpack.c.l.b16 %v236
    %v429 = vunpack.c.l.b16 %v237
    %v430 = vunpack.c.l.b16 %v238
    %v431 = vunpack.c.l.b16 %v239
    %v432 = vunpack.c.l.b16 %v240
    %v433 = vunpack.c.l.b16 %v241
    %v434 = vunpack.c.l.b16 %v242
    %v435 = vunpack.c.l.b16 %v243
    %v436 = vunpack.c.l.b16 %v244
    %v437 = vunpack.c.l.b16 %v245
    %v438 = vunpack.c.l.b16 %v246
    %v439 = vunpack.c.l.b16 %v247
    %v440 = vunpack.c.l.b16 %v248
    %v441 = vunpack.c.l.b16 %v249
    %v442 = vunpack.c.l.b16 %v250
    %v443 = vunpack.c.l.b16 %v251
    %v444 = vunpack.c.l.b16 %v252
    %v445 = vunpack.c.l.b16 %v253
    %v446 = vunpack.c.l.b16 %v254
    %v447 = vunpack.c.l.b16 %v255
    %v448 = vunpack.c.l.b16 %v256
    %v449 = vunpack.c.l.b16 %v257
    %v450 = vunpack.c.l.b16 %v258
    %v451 = vunpack.c.l.b16 %v259
    %v452 = vunpack.c.l.b16 %v260
    %v453 = vunpack.c.l.b16 %v261
    %v454 = vunpack.c.l.b16 %v262
    %v455 = vunpack.c.l.b16 %v263
    %v456 = vunpack.c.l.b16 %v264
    %v457 = vunpack.c.l.b16 %v265
    %v458 = vunpack.c.l.b16 %v266
    %v459 = vunpack.c.l.b16 %v267
    %v460 = vunpack.c.l.b16 %v268
    %v461 = vunpack.c.l.b16 %v269
    %v462 = vunpack.c.l.b16 %v270
    %v463 = vunpack.c.l.b16 %v271
    %v464 = vunpack.c.l.b16 %v272
    %v465 = vunpack.c.l.b16 %v273
    %v466 = vunpack.c.l.b16 %v274
    %v467 = vunpack.c.l.b16 %v275
    %v468 = vunpack.c.l.b16 %v276
    %v469 = vunpack.c.l.b16 %v277
    %v470 = vunpack.c.l.b16 %v278
    %v471 = vunpack.c.l.b16 %v279
    %v472 = vunpack.c.l.b16 %v280
    %v473 = vunpack.c.l.b16 %v281
    %v474 = vunpack.c.l.b16 %v282
    %v475 = vunpack.c.l.b16 %v283
    %v476 = vunpack.c.l.b16 %v284
    %v477 = vunpack.c.l.b16 %v285
    %v478 = vunpack.c.l.b16 %v286
    %v479 = vunpack.c.l.b16 %v287
    %v480 = vunpack.c.l.b16 %v288
    %v481 = vunpack.c.l.b16 %v289
    %v482 = vunpack.c.l.b16 %v290
    %v483 = vunpack.c.l.b16 %v291
    %v484 = vunpack.c.l.b16 %v292
    %v485 = vunpack.c.l.b16 %v293
    %v486 = vunpack.c.l.b16 %v294
    %v487 = vunpack.c.l.b16 %v295
    %v488 = vunpack.c.l.b16 %v296
    %v489 = vunpack.c.l.b16 %v297
    %v490 = vunpack.c.l.b16 %v298
    %v491 = vunpack.c.l.b16 %v299
    %v492 = vunpack.c.l.b16 %v300
    %v493 = vunpack.c.l.b16 %v301
    %v494 = vunpack.c.l.b16 %v302
    %v495 = vunpack.c.l.b16 %v303
    %v496 = vunpack.c.l.b16 %v304
    %v497 = vunpack.c.l.b16 %v305
    %v498 = vunpack.c.l.b16 %v306
    %v499 = vunpack.c.l.b16 %v307
    %v500 = vunpack.c.l.b16 %v308
    %v501 = vunpack.c.l.b16 %v309
    %v502 = vunpack.c.l.b16 %v310
    %v503 = vunpack.c.l.b16 %v311
    %v504 = vunpack.c.l.b16 %v312
    %v505 = vunpack.c.l.b16 %v313
    %v506 = vunpack.c.l.b16 %v314
    %v507 = vunpack.c.l.b16 %v315
    %v508 = vunpack.c.l.b16 %v316
    %v509 = vunpack.c.l.b16 %v317
    %v510 = vunpack.c.l.b16 %v318
    %v511 = vunpack.c.l.b16 %v319
    %v512 = vunpack.c.l.b16 %v320
    %v513 = vunpack.c.l.b16 %v321
    %v514 = vunpack.c.l.b16 %v322
    %v515 = vunpack.c.l.b16 %v323
    %v516 = vpack.c.b16 %v421, %v420
    %v517 = vpack.c.b16 %v423, %v422
    %v518 = vpack.c.b16 %v425, %v424
    %v519 = vpack.c.b16 %v427, %v426
    %v520 = vpack.c.b16 %v429, %v428
    %v521 = vpack.c.b16 %v431, %v430
    %v522 = vpack.c.b16 %v433, %v432
    %v523 = vpack.c.b16 %v435, %v434
    %v524 = vpack.c.b16 %v437, %v436
    %v525 = vpack.c.b16 %v439, %v438
    %v526 = vpack.c.b16 %v441, %v440
    %v527 = vpack.c.b16 %v443, %v442
    %v528 = vpack.c.b16 %v445, %v444
    %v529 = vpack.c.b16 %v447, %v446
    %v530 = vpack.c.b16 %v449, %v448
    %v531 = vpack.c.b16 %v451, %v450
    %v532 = vpack.c.b16 %v453, %v452
    %v533 = vpack.c.b16 %v455, %v454
    %v534 = vpack.c.b16 %v457, %v456
    %v535 = vpack.c.b16 %v459, %v458
    %v536 = vpack.c.b16 %v461, %v460
    %v537 = vpack.c.b16 %v463, %v462
    %v538 = vpack.c.b16 %v465, %v464
    %v539 = vpack.c.b16 %v467, %v466
    %v540 = vpack.c.b16 %v469, %v468
    %v541 = vpack.c.b16 %v471, %v470
    %v542 = vpack.c.b16 %v473, %v472
    %v543 = vpack.c.b16 %v475, %v474
    %v544 = vpack.c.b16 %v477, %v476
    %v545 = vpack.c.b16 %v479, %v478
    %v546 = vpack.c.b16 %v481, %v480
    %v547 = vpack.c.b16 %v483, %v482
    %v548 = vpack.c.b16 %v485, %v484
    %v549 = vpack.c.b16 %v487, %v486
    %v550 = vpack.c.b16 %v489, %v488
    %v551 = vpack.c.b16 %v491, %v490
    %v552 = vpack.c.b16 %v493, %v492
    %v553 = vpack.c.b16 %v495, %v494
    %v554 = vpack.c.b16 %v497, %v496
    %v555 = vpack.c.b16 %v499, %v498
    %v556 = vpack.c.b16 %v501, %v500
    %v557 = vpack.c.b16 %v503, %v502
    %v558 = vpack.c.b16 %v505, %v504
    %v559 = vpack.c.b16 %v507, %v506
    %v560 = vpack.c.b16 %v509, %v508
    %v561 = vpack.c.b16 %v511, %v510
    %v562 = vpack.c.b16 %v513, %v512
    %v563 = vpack.c.b16 %v515, %v514
    %612 = vmatpush.bf16.msra.mxu0 %v523
    %613 = vmatpush.bf16.msra.mxu0 %v522
    %614 = vmatpush.bf16.msra.mxu0 %v521
    %615 = vmatpush.bf16.msra.mxu0 %v520
    %616 = vmatpush.bf16.msra.mxu0 %v519
    %617 = vmatpush.bf16.msra.mxu0 %v518
    %618 = vmatpush.bf16.msra.mxu0 %v517
    %619 = vmatpush.bf16.msra.mxu0 %v516
    %620 = vmatmul.bf16.gmra.mxu0 %v222
    %v621 = vpop.f32.mrf.mxu0
    %v622 = vadd.f32 0.0, %v621
    %v623 = vpop.f32.mrf.mxu0
    %624 = vdwg.mxu0
    %625 = vmatpush.bf16.msra.mxu0 %v531
    %626 = vmatpush.bf16.msra.mxu0 %v530
    %627 = vmatpush.bf16.msra.mxu0 %v529
    %628 = vmatpush.bf16.msra.mxu0 %v528
    %629 = vmatpush.bf16.msra.mxu0 %v527
    %630 = vmatpush.bf16.msra.mxu0 %v526
    %631 = vmatpush.bf16.msra.mxu0 %v525
    %632 = vmatpush.bf16.msra.mxu0 %v524
    %633 = vmatmul.bf16.gmra.mxu0 %v223
    %v634 = vpop.f32.mrf.mxu0
    %v635 = vadd.f32 %v622, %v634
    %v636 = vpop.f32.mrf.mxu0
    %637 = vdwg.mxu0
    %638 = vmatpush.bf16.msra.mxu0 %v539
    %639 = vmatpush.bf16.msra.mxu0 %v538
    %640 = vmatpush.bf16.msra.mxu0 %v537
    %641 = vmatpush.bf16.msra.mxu0 %v536
    %642 = vmatpush.bf16.msra.mxu0 %v535
    %643 = vmatpush.bf16.msra.mxu0 %v534
    %644 = vmatpush.bf16.msra.mxu0 %v533
    %645 = vmatpush.bf16.msra.mxu0 %v532
    %646 = vmatmul.bf16.gmra.mxu0 %v224
    %v647 = vpop.f32.mrf.mxu0
    %v648 = vadd.f32 %v635, %v647
    %v649 = vpop.f32.mrf.mxu0
    %650 = vdwg.mxu0
    %651 = vmatpush.bf16.msra.mxu0 %v547
    %652 = vmatpush.bf16.msra.mxu0 %v546
    %653 = vmatpush.bf16.msra.mxu0 %v545
    %654 = vmatpush.bf16.msra.mxu0 %v544
    %655 = vmatpush.bf16.msra.mxu0 %v543
    %656 = vmatpush.bf16.msra.mxu0 %v542
    %657 = vmatpush.bf16.msra.mxu0 %v541
    %658 = vmatpush.bf16.msra.mxu0 %v540
    %659 = vmatmul.bf16.gmra.mxu0 %v225
    %v660 = vpop.f32.mrf.mxu0
    %v661 = vadd.f32 %v648, %v660
    %v662 = vpop.f32.mrf.mxu0
    %663 = vdwg.mxu0
    %664 = vmatpush.bf16.msra.mxu0 %v555
    %665 = vmatpush.bf16.msra.mxu0 %v554
    %666 = vmatpush.bf16.msra.mxu0 %v553
    %667 = vmatpush.bf16.msra.mxu0 %v552
    %668 = vmatpush.bf16.msra.mxu0 %v551
    %669 = vmatpush.bf16.msra.mxu0 %v550
    %670 = vmatpush.bf16.msra.mxu0 %v549
    %671 = vmatpush.bf16.msra.mxu0 %v548
    %672 = vmatmul.bf16.gmra.mxu0 %v226
    %v673 = vpop.f32.mrf.mxu0
    %v674 = vadd.f32 %v661, %v673
    %v675 = vpop.f32.mrf.mxu0
    %676 = vdwg.mxu0
    %677 = vmatpush.bf16.msra.mxu0 %v563
    %678 = vmatpush.bf16.msra.mxu0 %v562
    %679 = vmatpush.bf16.msra.mxu0 %v561
    %680 = vmatpush.bf16.msra.mxu0 %v560
    %681 = vmatpush.bf16.msra.mxu0 %v559
    %682 = vmatpush.bf16.msra.mxu0 %v558
    %683 = vmatpush.bf16.msra.mxu0 %v557
    %684 = vmatpush.bf16.msra.mxu0 %v556
    %685 = vmatmul.bf16.gmra.mxu0 %v227
    %v686 = vpop.f32.mrf.mxu0
    %v687 = vadd.f32 %v674, %v686
    %v688 = vpop.f32.mrf.mxu0
    %689 = vdwg.mxu0
    %v690 = vld [vmem:[#allocation2] sm:$0xf]
    %692 = vst [vmem:[#allocation1] ss:$4 sm:$0xff] %v690
    %v693 = vld.sshfl [vmem:[#allocation1] sm:$0xff pattern:$0x73625140]
    %v694 = vld.sshfl [vmem:[#allocation1 + $0x8] sm:$0xff pattern:$0x73625140]
    %v697 = vpack.c.bf16 %v693, %v693
    %v698 = vpack.c.bf16 %v694, %v694
    %v699 = vld [vmem:[#allocation8] sm:$0xff]
    %v700 = vld [vmem:[#allocation8 + $0x8] sm:$0xff]
    %v701 = vld [vmem:[#allocation8 + $0x10] sm:$0xff]
    %v702 = vld [vmem:[#allocation8 + $0x18] sm:$0xff]
    %v703 = vld [vmem:[#allocation8 + $0x20] sm:$0xff]
    %v704 = vld [vmem:[#allocation8 + $0x28] sm:$0xff]
    %v705 = vld [vmem:[#allocation8 + $0x30] sm:$0xff]
    %v706 = vld [vmem:[#allocation8 + $0x38] sm:$0xff]
    %v707 = vld [vmem:[#allocation8 + $0x40] sm:$0xff]
    %v708 = vld [vmem:[#allocation8 + $0x48] sm:$0xff]
    %v709 = vld [vmem:[#allocation8 + $0x50] sm:$0xff]
    %v710 = vld [vmem:[#allocation8 + $0x58] sm:$0xff]
    %v711 = vld [vmem:[#allocation8 + $0x60] sm:$0xff]
    %v712 = vld [vmem:[#allocation8 + $0x68] sm:$0xff]
    %v713 = vld [vmem:[#allocation8 + $0x70] sm:$0xff]
    %v714 = vld [vmem:[#allocation8 + $0x78] sm:$0xff]
    %v715 = vld [vmem:[#allocation8 + $0x80] sm:$0xff]
    %v716 = vld [vmem:[#allocation8 + $0x88] sm:$0xff]
    %v717 = vld [vmem:[#allocation8 + $0x90] sm:$0xff]
    %v718 = vld [vmem:[#allocation8 + $0x98] sm:$0xff]
    %v719 = vld [vmem:[#allocation8 + $0xa0] sm:$0xff]
    %v720 = vld [vmem:[#allocation8 + $0xa8] sm:$0xff]
    %v721 = vld [vmem:[#allocation8 + $0xb0] sm:$0xff]
    %v722 = vld [vmem:[#allocation8 + $0xb8] sm:$0xff]
    %v723 = vld [vmem:[#allocation8 + $0xc0] sm:$0xff]
    %v724 = vld [vmem:[#allocation8 + $0xc8] sm:$0xff]
    %v725 = vld [vmem:[#allocation8 + $0xd0] sm:$0xff]
    %v726 = vld [vmem:[#allocation8 + $0xd8] sm:$0xff]
    %v727 = vld [vmem:[#allocation8 + $0xe0] sm:$0xff]
    %v728 = vld [vmem:[#allocation8 + $0xe8] sm:$0xff]
    %v729 = vld [vmem:[#allocation8 + $0xf0] sm:$0xff]
    %v730 = vld [vmem:[#allocation8 + $0xf8] sm:$0xff]
    %v731 = vld [vmem:[#allocation8 + $0x100] sm:$0xff]
    %v732 = vld [vmem:[#allocation8 + $0x108] sm:$0xff]
    %v733 = vld [vmem:[#allocation8 + $0x110] sm:$0xff]
    %v734 = vld [vmem:[#allocation8 + $0x118] sm:$0xff]
    %v735 = vld [vmem:[#allocation8 + $0x120] sm:$0xff]
    %v736 = vld [vmem:[#allocation8 + $0x128] sm:$0xff]
    %v737 = vld [vmem:[#allocation8 + $0x130] sm:$0xff]
    %v738 = vld [vmem:[#allocation8 + $0x138] sm:$0xff]
    %v739 = vld [vmem:[#allocation8 + $0x140] sm:$0xff]
    %v740 = vld [vmem:[#allocation8 + $0x148] sm:$0xff]
    %v741 = vld [vmem:[#allocation8 + $0x150] sm:$0xff]
    %v742 = vld [vmem:[#allocation8 + $0x158] sm:$0xff]
    %v743 = vld [vmem:[#allocation8 + $0x160] sm:$0xff]
    %v744 = vld [vmem:[#allocation8 + $0x168] sm:$0xff]
    %v745 = vld [vmem:[#allocation8 + $0x170] sm:$0xff]
    %v746 = vld [vmem:[#allocation8 + $0x178] sm:$0xff]
    %v747 = vld [vmem:[#allocation8 + $0x180] sm:$0xff]
    %v748 = vld [vmem:[#allocation8 + $0x188] sm:$0xff]
    %v749 = vld [vmem:[#allocation8 + $0x190] sm:$0xff]
    %v750 = vld [vmem:[#allocation8 + $0x198] sm:$0xff]
    %v751 = vld [vmem:[#allocation8 + $0x1a0] sm:$0xff]
    %v752 = vld [vmem:[#allocation8 + $0x1a8] sm:$0xff]
    %v753 = vld [vmem:[#allocation8 + $0x1b0] sm:$0xff]
    %v754 = vld [vmem:[#allocation8 + $0x1b8] sm:$0xff]
    %v755 = vld [vmem:[#allocation8 + $0x1c0] sm:$0xff]
    %v756 = vld [vmem:[#allocation8 + $0x1c8] sm:$0xff]
    %v757 = vld [vmem:[#allocation8 + $0x1d0] sm:$0xff]
    %v758 = vld [vmem:[#allocation8 + $0x1d8] sm:$0xff]
    %v759 = vld [vmem:[#allocation8 + $0x1e0] sm:$0xff]
    %v760 = vld [vmem:[#allocation8 + $0x1e8] sm:$0xff]
    %v761 = vld [vmem:[#allocation8 + $0x1f0] sm:$0xff]
    %v762 = vld [vmem:[#allocation8 + $0x1f8] sm:$0xff]
    %v763 = vld [vmem:[#allocation8 + $0x200] sm:$0xff]
    %v764 = vld [vmem:[#allocation8 + $0x208] sm:$0xff]
    %v765 = vld [vmem:[#allocation8 + $0x210] sm:$0xff]
    %v766 = vld [vmem:[#allocation8 + $0x218] sm:$0xff]
    %v767 = vld [vmem:[#allocation8 + $0x220] sm:$0xff]
    %v768 = vld [vmem:[#allocation8 + $0x228] sm:$0xff]
    %v769 = vld [vmem:[#allocation8 + $0x230] sm:$0xff]
    %v770 = vld [vmem:[#allocation8 + $0x238] sm:$0xff]
    %v771 = vld [vmem:[#allocation8 + $0x240] sm:$0xff]
    %v772 = vld [vmem:[#allocation8 + $0x248] sm:$0xff]
    %v773 = vld [vmem:[#allocation8 + $0x250] sm:$0xff]
    %v774 = vld [vmem:[#allocation8 + $0x258] sm:$0xff]
    %v775 = vld [vmem:[#allocation8 + $0x260] sm:$0xff]
    %v776 = vld [vmem:[#allocation8 + $0x268] sm:$0xff]
    %v777 = vld [vmem:[#allocation8 + $0x270] sm:$0xff]
    %v778 = vld [vmem:[#allocation8 + $0x278] sm:$0xff]
    %v779 = vld [vmem:[#allocation8 + $0x280] sm:$0xff]
    %v780 = vld [vmem:[#allocation8 + $0x288] sm:$0xff]
    %v781 = vld [vmem:[#allocation8 + $0x290] sm:$0xff]
    %v782 = vld [vmem:[#allocation8 + $0x298] sm:$0xff]
    %v783 = vld [vmem:[#allocation8 + $0x2a0] sm:$0xff]
    %v784 = vld [vmem:[#allocation8 + $0x2a8] sm:$0xff]
    %v785 = vld [vmem:[#allocation8 + $0x2b0] sm:$0xff]
    %v786 = vld [vmem:[#allocation8 + $0x2b8] sm:$0xff]
    %v787 = vld [vmem:[#allocation8 + $0x2c0] sm:$0xff]
    %v788 = vld [vmem:[#allocation8 + $0x2c8] sm:$0xff]
    %v789 = vld [vmem:[#allocation8 + $0x2d0] sm:$0xff]
    %v790 = vld [vmem:[#allocation8 + $0x2d8] sm:$0xff]
    %v791 = vld [vmem:[#allocation8 + $0x2e0] sm:$0xff]
    %v792 = vld [vmem:[#allocation8 + $0x2e8] sm:$0xff]
    %v793 = vld [vmem:[#allocation8 + $0x2f0] sm:$0xff]
    %v794 = vld [vmem:[#allocation8 + $0x2f8] sm:$0xff]
    %v795 = vld [vmem:[#allocation8 + $0x300] sm:$0xff]
    %v796 = vld [vmem:[#allocation8 + $0x308] sm:$0xff]
    %v797 = vld [vmem:[#allocation8 + $0x310] sm:$0xff]
    %v798 = vld [vmem:[#allocation8 + $0x318] sm:$0xff]
    %v799 = vld [vmem:[#allocation8 + $0x320] sm:$0xff]
    %v800 = vld [vmem:[#allocation8 + $0x328] sm:$0xff]
    %v801 = vld [vmem:[#allocation8 + $0x330] sm:$0xff]
    %v802 = vld [vmem:[#allocation8 + $0x338] sm:$0xff]
    %v803 = vld [vmem:[#allocation8 + $0x340] sm:$0xff]
    %v804 = vld [vmem:[#allocation8 + $0x348] sm:$0xff]
    %v805 = vld [vmem:[#allocation8 + $0x350] sm:$0xff]
    %v806 = vld [vmem:[#allocation8 + $0x358] sm:$0xff]
    %v807 = vld [vmem:[#allocation8 + $0x360] sm:$0xff]
    %v808 = vld [vmem:[#allocation8 + $0x368] sm:$0xff]
    %v809 = vld [vmem:[#allocation8 + $0x370] sm:$0xff]
    %v810 = vld [vmem:[#allocation8 + $0x378] sm:$0xff]
    %v811 = vld [vmem:[#allocation8 + $0x380] sm:$0xff]
    %v812 = vld [vmem:[#allocation8 + $0x388] sm:$0xff]
    %v813 = vld [vmem:[#allocation8 + $0x390] sm:$0xff]
    %v814 = vld [vmem:[#allocation8 + $0x398] sm:$0xff]
    %v815 = vld [vmem:[#allocation8 + $0x3a0] sm:$0xff]
    %v816 = vld [vmem:[#allocation8 + $0x3a8] sm:$0xff]
    %v817 = vld [vmem:[#allocation8 + $0x3b0] sm:$0xff]
    %v818 = vld [vmem:[#allocation8 + $0x3b8] sm:$0xff]
    %v819 = vld [vmem:[#allocation8 + $0x3c0] sm:$0xff]
    %v820 = vld [vmem:[#allocation8 + $0x3c8] sm:$0xff]
    %v821 = vld [vmem:[#allocation8 + $0x3d0] sm:$0xff]
    %v822 = vld [vmem:[#allocation8 + $0x3d8] sm:$0xff]
    %v823 = vld [vmem:[#allocation8 + $0x3e0] sm:$0xff]
    %v824 = vld [vmem:[#allocation8 + $0x3e8] sm:$0xff]
    %v825 = vld [vmem:[#allocation8 + $0x3f0] sm:$0xff]
    %v826 = vld [vmem:[#allocation8 + $0x3f8] sm:$0xff]
    %v827 = vld [vmem:[#allocation8 + $0x400] sm:$0xff]
    %v828 = vld [vmem:[#allocation8 + $0x408] sm:$0xff]
    %v829 = vld [vmem:[#allocation8 + $0x410] sm:$0xff]
    %v830 = vld [vmem:[#allocation8 + $0x418] sm:$0xff]
    %v831 = vld [vmem:[#allocation8 + $0x420] sm:$0xff]
    %v832 = vld [vmem:[#allocation8 + $0x428] sm:$0xff]
    %v833 = vld [vmem:[#allocation8 + $0x430] sm:$0xff]
    %v834 = vld [vmem:[#allocation8 + $0x438] sm:$0xff]
    %v835 = vld [vmem:[#allocation8 + $0x440] sm:$0xff]
    %v836 = vld [vmem:[#allocation8 + $0x448] sm:$0xff]
    %v837 = vld [vmem:[#allocation8 + $0x450] sm:$0xff]
    %v838 = vld [vmem:[#allocation8 + $0x458] sm:$0xff]
    %v839 = vld [vmem:[#allocation8 + $0x460] sm:$0xff]
    %v840 = vld [vmem:[#allocation8 + $0x468] sm:$0xff]
    %v841 = vld [vmem:[#allocation8 + $0x470] sm:$0xff]
    %v842 = vld [vmem:[#allocation8 + $0x478] sm:$0xff]
    %v843 = vld [vmem:[#allocation8 + $0x480] sm:$0xff]
    %v844 = vld [vmem:[#allocation8 + $0x488] sm:$0xff]
    %v845 = vld [vmem:[#allocation8 + $0x490] sm:$0xff]
    %v846 = vld [vmem:[#allocation8 + $0x498] sm:$0xff]
    %v847 = vld [vmem:[#allocation8 + $0x4a0] sm:$0xff]
    %v848 = vld [vmem:[#allocation8 + $0x4a8] sm:$0xff]
    %v849 = vld [vmem:[#allocation8 + $0x4b0] sm:$0xff]
    %v850 = vld [vmem:[#allocation8 + $0x4b8] sm:$0xff]
    %v851 = vld [vmem:[#allocation8 + $0x4c0] sm:$0xff]
    %v852 = vld [vmem:[#allocation8 + $0x4c8] sm:$0xff]
    %v853 = vld [vmem:[#allocation8 + $0x4d0] sm:$0xff]
    %v854 = vld [vmem:[#allocation8 + $0x4d8] sm:$0xff]
    %v855 = vld [vmem:[#allocation8 + $0x4e0] sm:$0xff]
    %v856 = vld [vmem:[#allocation8 + $0x4e8] sm:$0xff]
    %v857 = vld [vmem:[#allocation8 + $0x4f0] sm:$0xff]
    %v858 = vld [vmem:[#allocation8 + $0x4f8] sm:$0xff]
    %v859 = vld [vmem:[#allocation8 + $0x500] sm:$0xff]
    %v860 = vld [vmem:[#allocation8 + $0x508] sm:$0xff]
    %v861 = vld [vmem:[#allocation8 + $0x510] sm:$0xff]
    %v862 = vld [vmem:[#allocation8 + $0x518] sm:$0xff]
    %v863 = vld [vmem:[#allocation8 + $0x520] sm:$0xff]
    %v864 = vld [vmem:[#allocation8 + $0x528] sm:$0xff]
    %v865 = vld [vmem:[#allocation8 + $0x530] sm:$0xff]
    %v866 = vld [vmem:[#allocation8 + $0x538] sm:$0xff]
    %v867 = vld [vmem:[#allocation8 + $0x540] sm:$0xff]
    %v868 = vld [vmem:[#allocation8 + $0x548] sm:$0xff]
    %v869 = vld [vmem:[#allocation8 + $0x550] sm:$0xff]
    %v870 = vld [vmem:[#allocation8 + $0x558] sm:$0xff]
    %v871 = vld [vmem:[#allocation8 + $0x560] sm:$0xff]
    %v872 = vld [vmem:[#allocation8 + $0x568] sm:$0xff]
    %v873 = vld [vmem:[#allocation8 + $0x570] sm:$0xff]
    %v874 = vld [vmem:[#allocation8 + $0x578] sm:$0xff]
    %v875 = vld [vmem:[#allocation8 + $0x580] sm:$0xff]
    %v876 = vld [vmem:[#allocation8 + $0x588] sm:$0xff]
    %v877 = vld [vmem:[#allocation8 + $0x590] sm:$0xff]
    %v878 = vld [vmem:[#allocation8 + $0x598] sm:$0xff]
    %v879 = vld [vmem:[#allocation8 + $0x5a0] sm:$0xff]
    %v880 = vld [vmem:[#allocation8 + $0x5a8] sm:$0xff]
    %v881 = vld [vmem:[#allocation8 + $0x5b0] sm:$0xff]
    %v882 = vld [vmem:[#allocation8 + $0x5b8] sm:$0xff]
    %v883 = vld [vmem:[#allocation8 + $0x5c0] sm:$0xff]
    %v884 = vld [vmem:[#allocation8 + $0x5c8] sm:$0xff]
    %v885 = vld [vmem:[#allocation8 + $0x5d0] sm:$0xff]
    %v886 = vld [vmem:[#allocation8 + $0x5d8] sm:$0xff]
    %v887 = vld [vmem:[#allocation8 + $0x5e0] sm:$0xff]
    %v888 = vld [vmem:[#allocation8 + $0x5e8] sm:$0xff]
    %v889 = vld [vmem:[#allocation8 + $0x5f0] sm:$0xff]
    %v890 = vld [vmem:[#allocation8 + $0x5f8] sm:$0xff]
    %v1083 = vunpack.c.l.b16 %v699
    %v1084 = vunpack.c.h.b16 %v699
    %v1085 = vunpack.c.l.b16 %v700
    %v1086 = vunpack.c.h.b16 %v700
    %v1087 = vunpack.c.l.b16 %v701
    %v1088 = vunpack.c.h.b16 %v701
    %v1089 = vunpack.c.l.b16 %v702
    %v1090 = vunpack.c.h.b16 %v702
    %v1091 = vunpack.c.l.b16 %v703
    %v1092 = vunpack.c.h.b16 %v703
    %v1093 = vunpack.c.l.b16 %v704
    %v1094 = vunpack.c.h.b16 %v704
    %v1095 = vunpack.c.l.b16 %v705
    %v1096 = vunpack.c.h.b16 %v705
    %v1097 = vunpack.c.l.b16 %v706
    %v1098 = vunpack.c.h.b16 %v706
    %v1099 = vunpack.c.l.b16 %v707
    %v1100 = vunpack.c.h.b16 %v707
    %v1101 = vunpack.c.l.b16 %v708
    %v1102 = vunpack.c.h.b16 %v708
    %v1103 = vunpack.c.l.b16 %v709
    %v1104 = vunpack.c.h.b16 %v709
    %v1105 = vunpack.c.l.b16 %v710
    %v1106 = vunpack.c.h.b16 %v710
    %v1107 = vunpack.c.l.b16 %v711
    %v1108 = vunpack.c.h.b16 %v711
    %v1109 = vunpack.c.l.b16 %v712
    %v1110 = vunpack.c.h.b16 %v712
    %v1111 = vunpack.c.l.b16 %v713
    %v1112 = vunpack.c.h.b16 %v713
    %v1113 = vunpack.c.l.b16 %v714
    %v1114 = vunpack.c.h.b16 %v714
    %v1115 = vunpack.c.l.b16 %v715
    %v1116 = vunpack.c.h.b16 %v715
    %v1117 = vunpack.c.l.b16 %v716
    %v1118 = vunpack.c.h.b16 %v716
    %v1119 = vunpack.c.l.b16 %v717
    %v1120 = vunpack.c.h.b16 %v717
    %v1121 = vunpack.c.l.b16 %v718
    %v1122 = vunpack.c.h.b16 %v718
    %v1123 = vunpack.c.l.b16 %v719
    %v1124 = vunpack.c.h.b16 %v719
    %v1125 = vunpack.c.l.b16 %v720
    %v1126 = vunpack.c.h.b16 %v720
    %v1127 = vunpack.c.l.b16 %v721
    %v1128 = vunpack.c.h.b16 %v721
    %v1129 = vunpack.c.l.b16 %v722
    %v1130 = vunpack.c.h.b16 %v722
    %v1131 = vunpack.c.l.b16 %v723
    %v1132 = vunpack.c.h.b16 %v723
    %v1133 = vunpack.c.l.b16 %v724
    %v1134 = vunpack.c.h.b16 %v724
    %v1135 = vunpack.c.l.b16 %v725
    %v1136 = vunpack.c.h.b16 %v725
    %v1137 = vunpack.c.l.b16 %v726
    %v1138 = vunpack.c.h.b16 %v726
    %v1139 = vunpack.c.l.b16 %v727
    %v1140 = vunpack.c.h.b16 %v727
    %v1141 = vunpack.c.l.b16 %v728
    %v1142 = vunpack.c.h.b16 %v728
    %v1143 = vunpack.c.l.b16 %v729
    %v1144 = vunpack.c.h.b16 %v729
    %v1145 = vunpack.c.l.b16 %v730
    %v1146 = vunpack.c.h.b16 %v730
    %v1147 = vunpack.c.l.b16 %v731
    %v1148 = vunpack.c.h.b16 %v731
    %v1149 = vunpack.c.l.b16 %v732
    %v1150 = vunpack.c.h.b16 %v732
    %v1151 = vunpack.c.l.b16 %v733
    %v1152 = vunpack.c.h.b16 %v733
    %v1153 = vunpack.c.l.b16 %v734
    %v1154 = vunpack.c.h.b16 %v734
    %v1155 = vunpack.c.l.b16 %v735
    %v1156 = vunpack.c.h.b16 %v735
    %v1157 = vunpack.c.l.b16 %v736
    %v1158 = vunpack.c.h.b16 %v736
    %v1159 = vunpack.c.l.b16 %v737
    %v1160 = vunpack.c.h.b16 %v737
    %v1161 = vunpack.c.l.b16 %v738
    %v1162 = vunpack.c.h.b16 %v738
    %v1163 = vunpack.c.l.b16 %v739
    %v1164 = vunpack.c.h.b16 %v739
    %v1165 = vunpack.c.l.b16 %v740
    %v1166 = vunpack.c.h.b16 %v740
    %v1167 = vunpack.c.l.b16 %v741
    %v1168 = vunpack.c.h.b16 %v741
    %v1169 = vunpack.c.l.b16 %v742
    %v1170 = vunpack.c.h.b16 %v742
    %v1171 = vunpack.c.l.b16 %v743
    %v1172 = vunpack.c.h.b16 %v743
    %v1173 = vunpack.c.l.b16 %v744
    %v1174 = vunpack.c.h.b16 %v744
    %v1175 = vunpack.c.l.b16 %v745
    %v1176 = vunpack.c.h.b16 %v745
    %v1177 = vunpack.c.l.b16 %v746
    %v1178 = vunpack.c.h.b16 %v746
    %v1179 = vunpack.c.l.b16 %v747
    %v1180 = vunpack.c.h.b16 %v747
    %v1181 = vunpack.c.l.b16 %v748
    %v1182 = vunpack.c.h.b16 %v748
    %v1183 = vunpack.c.l.b16 %v749
    %v1184 = vunpack.c.h.b16 %v749
    %v1185 = vunpack.c.l.b16 %v750
    %v1186 = vunpack.c.h.b16 %v750
    %v1187 = vunpack.c.l.b16 %v751
    %v1188 = vunpack.c.h.b16 %v751
    %v1189 = vunpack.c.l.b16 %v752
    %v1190 = vunpack.c.h.b16 %v752
    %v1191 = vunpack.c.l.b16 %v753
    %v1192 = vunpack.c.h.b16 %v753
    %v1193 = vunpack.c.l.b16 %v754
    %v1194 = vunpack.c.h.b16 %v754
    %v1195 = vunpack.c.l.b16 %v755
    %v1196 = vunpack.c.h.b16 %v755
    %v1197 = vunpack.c.l.b16 %v756
    %v1198 = vunpack.c.h.b16 %v756
    %v1199 = vunpack.c.l.b16 %v757
    %v1200 = vunpack.c.h.b16 %v757
    %v1201 = vunpack.c.l.b16 %v758
    %v1202 = vunpack.c.h.b16 %v758
    %v1203 = vunpack.c.l.b16 %v759
    %v1204 = vunpack.c.h.b16 %v759
    %v1205 = vunpack.c.l.b16 %v760
    %v1206 = vunpack.c.h.b16 %v760
    %v1207 = vunpack.c.l.b16 %v761
    %v1208 = vunpack.c.h.b16 %v761
    %v1209 = vunpack.c.l.b16 %v762
    %v1210 = vunpack.c.h.b16 %v762
    %v1211 = vunpack.c.l.b16 %v763
    %v1212 = vunpack.c.h.b16 %v763
    %v1213 = vunpack.c.l.b16 %v764
    %v1214 = vunpack.c.h.b16 %v764
    %v1215 = vunpack.c.l.b16 %v765
    %v1216 = vunpack.c.h.b16 %v765
    %v1217 = vunpack.c.l.b16 %v766
    %v1218 = vunpack.c.h.b16 %v766
    %v1219 = vunpack.c.l.b16 %v767
    %v1220 = vunpack.c.h.b16 %v767
    %v1221 = vunpack.c.l.b16 %v768
    %v1222 = vunpack.c.h.b16 %v768
    %v1223 = vunpack.c.l.b16 %v769
    %v1224 = vunpack.c.h.b16 %v769
    %v1225 = vunpack.c.l.b16 %v770
    %v1226 = vunpack.c.h.b16 %v770
    %v1227 = vunpack.c.l.b16 %v771
    %v1228 = vunpack.c.h.b16 %v771
    %v1229 = vunpack.c.l.b16 %v772
    %v1230 = vunpack.c.h.b16 %v772
    %v1231 = vunpack.c.l.b16 %v773
    %v1232 = vunpack.c.h.b16 %v773
    %v1233 = vunpack.c.l.b16 %v774
    %v1234 = vunpack.c.h.b16 %v774
    %v1235 = vunpack.c.l.b16 %v775
    %v1236 = vunpack.c.h.b16 %v775
    %v1237 = vunpack.c.l.b16 %v776
    %v1238 = vunpack.c.h.b16 %v776
    %v1239 = vunpack.c.l.b16 %v777
    %v1240 = vunpack.c.h.b16 %v777
    %v1241 = vunpack.c.l.b16 %v778
    %v1242 = vunpack.c.h.b16 %v778
    %v1243 = vunpack.c.l.b16 %v779
    %v1244 = vunpack.c.h.b16 %v779
    %v1245 = vunpack.c.l.b16 %v780
    %v1246 = vunpack.c.h.b16 %v780
    %v1247 = vunpack.c.l.b16 %v781
    %v1248 = vunpack.c.h.b16 %v781
    %v1249 = vunpack.c.l.b16 %v782
    %v1250 = vunpack.c.h.b16 %v782
    %v1251 = vunpack.c.l.b16 %v783
    %v1252 = vunpack.c.h.b16 %v783
    %v1253 = vunpack.c.l.b16 %v784
    %v1254 = vunpack.c.h.b16 %v784
    %v1255 = vunpack.c.l.b16 %v785
    %v1256 = vunpack.c.h.b16 %v785
    %v1257 = vunpack.c.l.b16 %v786
    %v1258 = vunpack.c.h.b16 %v786
    %v1259 = vunpack.c.l.b16 %v787
    %v1260 = vunpack.c.h.b16 %v787
    %v1261 = vunpack.c.l.b16 %v788
    %v1262 = vunpack.c.h.b16 %v788
    %v1263 = vunpack.c.l.b16 %v789
    %v1264 = vunpack.c.h.b16 %v789
    %v1265 = vunpack.c.l.b16 %v790
    %v1266 = vunpack.c.h.b16 %v790
    %v1267 = vunpack.c.l.b16 %v791
    %v1268 = vunpack.c.h.b16 %v791
    %v1269 = vunpack.c.l.b16 %v792
    %v1270 = vunpack.c.h.b16 %v792
    %v1271 = vunpack.c.l.b16 %v793
    %v1272 = vunpack.c.h.b16 %v793
    %v1273 = vunpack.c.l.b16 %v794
    %v1274 = vunpack.c.h.b16 %v794
    %v1275 = vunpack.c.l.b16 %v795
    %v1276 = vunpack.c.h.b16 %v795
    %v1277 = vunpack.c.l.b16 %v796
    %v1278 = vunpack.c.h.b16 %v796
    %v1279 = vunpack.c.l.b16 %v797
    %v1280 = vunpack.c.h.b16 %v797
    %v1281 = vunpack.c.l.b16 %v798
    %v1282 = vunpack.c.h.b16 %v798
    %v1283 = vunpack.c.l.b16 %v799
    %v1284 = vunpack.c.h.b16 %v799
    %v1285 = vunpack.c.l.b16 %v800
    %v1286 = vunpack.c.h.b16 %v800
    %v1287 = vunpack.c.l.b16 %v801
    %v1288 = vunpack.c.h.b16 %v801
    %v1289 = vunpack.c.l.b16 %v802
    %v1290 = vunpack.c.h.b16 %v802
    %v1291 = vunpack.c.l.b16 %v803
    %v1292 = vunpack.c.h.b16 %v803
    %v1293 = vunpack.c.l.b16 %v804
    %v1294 = vunpack.c.h.b16 %v804
    %v1295 = vunpack.c.l.b16 %v805
    %v1296 = vunpack.c.h.b16 %v805
    %v1297 = vunpack.c.l.b16 %v806
    %v1298 = vunpack.c.h.b16 %v806
    %v1299 = vunpack.c.l.b16 %v807
    %v1300 = vunpack.c.h.b16 %v807
    %v1301 = vunpack.c.l.b16 %v808
    %v1302 = vunpack.c.h.b16 %v808
    %v1303 = vunpack.c.l.b16 %v809
    %v1304 = vunpack.c.h.b16 %v809
    %v1305 = vunpack.c.l.b16 %v810
    %v1306 = vunpack.c.h.b16 %v810
    %v1307 = vunpack.c.l.b16 %v811
    %v1308 = vunpack.c.h.b16 %v811
    %v1309 = vunpack.c.l.b16 %v812
    %v1310 = vunpack.c.h.b16 %v812
    %v1311 = vunpack.c.l.b16 %v813
    %v1312 = vunpack.c.h.b16 %v813
    %v1313 = vunpack.c.l.b16 %v814
    %v1314 = vunpack.c.h.b16 %v814
    %v1315 = vunpack.c.l.b16 %v815
    %v1316 = vunpack.c.h.b16 %v815
    %v1317 = vunpack.c.l.b16 %v816
    %v1318 = vunpack.c.h.b16 %v816
    %v1319 = vunpack.c.l.b16 %v817
    %v1320 = vunpack.c.h.b16 %v817
    %v1321 = vunpack.c.l.b16 %v818
    %v1322 = vunpack.c.h.b16 %v818
    %v1323 = vunpack.c.l.b16 %v819
    %v1324 = vunpack.c.h.b16 %v819
    %v1325 = vunpack.c.l.b16 %v820
    %v1326 = vunpack.c.h.b16 %v820
    %v1327 = vunpack.c.l.b16 %v821
    %v1328 = vunpack.c.h.b16 %v821
    %v1329 = vunpack.c.l.b16 %v822
    %v1330 = vunpack.c.h.b16 %v822
    %v1331 = vunpack.c.l.b16 %v823
    %v1332 = vunpack.c.h.b16 %v823
    %v1333 = vunpack.c.l.b16 %v824
    %v1334 = vunpack.c.h.b16 %v824
    %v1335 = vunpack.c.l.b16 %v825
    %v1336 = vunpack.c.h.b16 %v825
    %v1337 = vunpack.c.l.b16 %v826
    %v1338 = vunpack.c.h.b16 %v826
    %v1339 = vunpack.c.l.b16 %v827
    %v1340 = vunpack.c.h.b16 %v827
    %v1341 = vunpack.c.l.b16 %v828
    %v1342 = vunpack.c.h.b16 %v828
    %v1343 = vunpack.c.l.b16 %v829
    %v1344 = vunpack.c.h.b16 %v829
    %v1345 = vunpack.c.l.b16 %v830
    %v1346 = vunpack.c.h.b16 %v830
    %v1347 = vunpack.c.l.b16 %v831
    %v1348 = vunpack.c.h.b16 %v831
    %v1349 = vunpack.c.l.b16 %v832
    %v1350 = vunpack.c.h.b16 %v832
    %v1351 = vunpack.c.l.b16 %v833
    %v1352 = vunpack.c.h.b16 %v833
    %v1353 = vunpack.c.l.b16 %v834
    %v1354 = vunpack.c.h.b16 %v834
    %v1355 = vunpack.c.l.b16 %v835
    %v1356 = vunpack.c.h.b16 %v835
    %v1357 = vunpack.c.l.b16 %v836
    %v1358 = vunpack.c.h.b16 %v836
    %v1359 = vunpack.c.l.b16 %v837
    %v1360 = vunpack.c.h.b16 %v837
    %v1361 = vunpack.c.l.b16 %v838
    %v1362 = vunpack.c.h.b16 %v838
    %v1363 = vunpack.c.l.b16 %v839
    %v1364 = vunpack.c.h.b16 %v839
    %v1365 = vunpack.c.l.b16 %v840
    %v1366 = vunpack.c.h.b16 %v840
    %v1367 = vunpack.c.l.b16 %v841
    %v1368 = vunpack.c.h.b16 %v841
    %v1369 = vunpack.c.l.b16 %v842
    %v1370 = vunpack.c.h.b16 %v842
    %v1371 = vunpack.c.l.b16 %v843
    %v1372 = vunpack.c.h.b16 %v843
    %v1373 = vunpack.c.l.b16 %v844
    %v1374 = vunpack.c.h.b16 %v844
    %v1375 = vunpack.c.l.b16 %v845
    %v1376 = vunpack.c.h.b16 %v845
    %v1377 = vunpack.c.l.b16 %v846
    %v1378 = vunpack.c.h.b16 %v846
    %v1379 = vunpack.c.l.b16 %v847
    %v1380 = vunpack.c.h.b16 %v847
    %v1381 = vunpack.c.l.b16 %v848
    %v1382 = vunpack.c.h.b16 %v848
    %v1383 = vunpack.c.l.b16 %v849
    %v1384 = vunpack.c.h.b16 %v849
    %v1385 = vunpack.c.l.b16 %v850
    %v1386 = vunpack.c.h.b16 %v850
    %v1387 = vunpack.c.l.b16 %v851
    %v1388 = vunpack.c.h.b16 %v851
    %v1389 = vunpack.c.l.b16 %v852
    %v1390 = vunpack.c.h.b16 %v852
    %v1391 = vunpack.c.l.b16 %v853
    %v1392 = vunpack.c.h.b16 %v853
    %v1393 = vunpack.c.l.b16 %v854
    %v1394 = vunpack.c.h.b16 %v854
    %v1395 = vunpack.c.l.b16 %v855
    %v1396 = vunpack.c.h.b16 %v855
    %v1397 = vunpack.c.l.b16 %v856
    %v1398 = vunpack.c.h.b16 %v856
    %v1399 = vunpack.c.l.b16 %v857
    %v1400 = vunpack.c.h.b16 %v857
    %v1401 = vunpack.c.l.b16 %v858
    %v1402 = vunpack.c.h.b16 %v858
    %v1403 = vunpack.c.l.b16 %v859
    %v1404 = vunpack.c.h.b16 %v859
    %v1405 = vunpack.c.l.b16 %v860
    %v1406 = vunpack.c.h.b16 %v860
    %v1407 = vunpack.c.l.b16 %v861
    %v1408 = vunpack.c.h.b16 %v861
    %v1409 = vunpack.c.l.b16 %v862
    %v1410 = vunpack.c.h.b16 %v862
    %v1411 = vunpack.c.l.b16 %v863
    %v1412 = vunpack.c.h.b16 %v863
    %v1413 = vunpack.c.l.b16 %v864
    %v1414 = vunpack.c.h.b16 %v864
    %v1415 = vunpack.c.l.b16 %v865
    %v1416 = vunpack.c.h.b16 %v865
    %v1417 = vunpack.c.l.b16 %v866
    %v1418 = vunpack.c.h.b16 %v866
    %v1419 = vunpack.c.l.b16 %v867
    %v1420 = vunpack.c.h.b16 %v867
    %v1421 = vunpack.c.l.b16 %v868
    %v1422 = vunpack.c.h.b16 %v868
    %v1423 = vunpack.c.l.b16 %v869
    %v1424 = vunpack.c.h.b16 %v869
    %v1425 = vunpack.c.l.b16 %v870
    %v1426 = vunpack.c.h.b16 %v870
    %v1427 = vunpack.c.l.b16 %v871
    %v1428 = vunpack.c.h.b16 %v871
    %v1429 = vunpack.c.l.b16 %v872
    %v1430 = vunpack.c.h.b16 %v872
    %v1431 = vunpack.c.l.b16 %v873
    %v1432 = vunpack.c.h.b16 %v873
    %v1433 = vunpack.c.l.b16 %v874
    %v1434 = vunpack.c.h.b16 %v874
    %v1435 = vunpack.c.l.b16 %v875
    %v1436 = vunpack.c.h.b16 %v875
    %v1437 = vunpack.c.l.b16 %v876
    %v1438 = vunpack.c.h.b16 %v876
    %v1439 = vunpack.c.l.b16 %v877
    %v1440 = vunpack.c.h.b16 %v877
    %v1441 = vunpack.c.l.b16 %v878
    %v1442 = vunpack.c.h.b16 %v878
    %v1443 = vunpack.c.l.b16 %v879
    %v1444 = vunpack.c.h.b16 %v879
    %v1445 = vunpack.c.l.b16 %v880
    %v1446 = vunpack.c.h.b16 %v880
    %v1447 = vunpack.c.l.b16 %v881
    %v1448 = vunpack.c.h.b16 %v881
    %v1449 = vunpack.c.l.b16 %v882
    %v1450 = vunpack.c.h.b16 %v882
    %v1451 = vunpack.c.l.b16 %v883
    %v1452 = vunpack.c.h.b16 %v883
    %v1453 = vunpack.c.l.b16 %v884
    %v1454 = vunpack.c.h.b16 %v884
    %v1455 = vunpack.c.l.b16 %v885
    %v1456 = vunpack.c.h.b16 %v885
    %v1457 = vunpack.c.l.b16 %v886
    %v1458 = vunpack.c.h.b16 %v886
    %v1459 = vunpack.c.l.b16 %v887
    %v1460 = vunpack.c.h.b16 %v887
    %v1461 = vunpack.c.l.b16 %v888
    %v1462 = vunpack.c.h.b16 %v888
    %v1463 = vunpack.c.l.b16 %v889
    %v1464 = vunpack.c.h.b16 %v889
    %v1465 = vunpack.c.l.b16 %v890
    %v1466 = vunpack.c.h.b16 %v890
    %v1467 = vpack.c.b16 %v1099, %v1083
    %v1468 = vpack.c.b16 %v1100, %v1084
    %v1469 = vpack.c.b16 %v1101, %v1085
    %v1470 = vpack.c.b16 %v1102, %v1086
    %v1471 = vpack.c.b16 %v1103, %v1087
    %v1472 = vpack.c.b16 %v1104, %v1088
    %v1473 = vpack.c.b16 %v1105, %v1089
    %v1474 = vpack.c.b16 %v1106, %v1090
    %v1475 = vpack.c.b16 %v1107, %v1091
    %v1476 = vpack.c.b16 %v1108, %v1092
    %v1477 = vpack.c.b16 %v1109, %v1093
    %v1478 = vpack.c.b16 %v1110, %v1094
    %v1479 = vpack.c.b16 %v1111, %v1095
    %v1480 = vpack.c.b16 %v1112, %v1096
    %v1481 = vpack.c.b16 %v1113, %v1097
    %v1482 = vpack.c.b16 %v1114, %v1098
    %v1483 = vpack.c.b16 %v1131, %v1115
    %v1484 = vpack.c.b16 %v1132, %v1116
    %v1485 = vpack.c.b16 %v1133, %v1117
    %v1486 = vpack.c.b16 %v1134, %v1118
    %v1487 = vpack.c.b16 %v1135, %v1119
    %v1488 = vpack.c.b16 %v1136, %v1120
    %v1489 = vpack.c.b16 %v1137, %v1121
    %v1490 = vpack.c.b16 %v1138, %v1122
    %v1491 = vpack.c.b16 %v1139, %v1123
    %v1492 = vpack.c.b16 %v1140, %v1124
    %v1493 = vpack.c.b16 %v1141, %v1125
    %v1494 = vpack.c.b16 %v1142, %v1126
    %v1495 = vpack.c.b16 %v1143, %v1127
    %v1496 = vpack.c.b16 %v1144, %v1128
    %v1497 = vpack.c.b16 %v1145, %v1129
    %v1498 = vpack.c.b16 %v1146, %v1130
    %v1499 = vpack.c.b16 %v1163, %v1147
    %v1500 = vpack.c.b16 %v1164, %v1148
    %v1501 = vpack.c.b16 %v1165, %v1149
    %v1502 = vpack.c.b16 %v1166, %v1150
    %v1503 = vpack.c.b16 %v1167, %v1151
    %v1504 = vpack.c.b16 %v1168, %v1152
    %v1505 = vpack.c.b16 %v1169, %v1153
    %v1506 = vpack.c.b16 %v1170, %v1154
    %v1507 = vpack.c.b16 %v1171, %v1155
    %v1508 = vpack.c.b16 %v1172, %v1156
    %v1509 = vpack.c.b16 %v1173, %v1157
    %v1510 = vpack.c.b16 %v1174, %v1158
    %v1511 = vpack.c.b16 %v1175, %v1159
    %v1512 = vpack.c.b16 %v1176, %v1160
    %v1513 = vpack.c.b16 %v1177, %v1161
    %v1514 = vpack.c.b16 %v1178, %v1162
    %v1515 = vpack.c.b16 %v1195, %v1179
    %v1516 = vpack.c.b16 %v1196, %v1180
    %v1517 = vpack.c.b16 %v1197, %v1181
    %v1518 = vpack.c.b16 %v1198, %v1182
    %v1519 = vpack.c.b16 %v1199, %v1183
    %v1520 = vpack.c.b16 %v1200, %v1184
    %v1521 = vpack.c.b16 %v1201, %v1185
    %v1522 = vpack.c.b16 %v1202, %v1186
    %v1523 = vpack.c.b16 %v1203, %v1187
    %v1524 = vpack.c.b16 %v1204, %v1188
    %v1525 = vpack.c.b16 %v1205, %v1189
    %v1526 = vpack.c.b16 %v1206, %v1190
    %v1527 = vpack.c.b16 %v1207, %v1191
    %v1528 = vpack.c.b16 %v1208, %v1192
    %v1529 = vpack.c.b16 %v1209, %v1193
    %v1530 = vpack.c.b16 %v1210, %v1194
    %v1531 = vpack.c.b16 %v1227, %v1211
    %v1532 = vpack.c.b16 %v1228, %v1212
    %v1533 = vpack.c.b16 %v1229, %v1213
    %v1534 = vpack.c.b16 %v1230, %v1214
    %v1535 = vpack.c.b16 %v1231, %v1215
    %v1536 = vpack.c.b16 %v1232, %v1216
    %v1537 = vpack.c.b16 %v1233, %v1217
    %v1538 = vpack.c.b16 %v1234, %v1218
    %v1539 = vpack.c.b16 %v1235, %v1219
    %v1540 = vpack.c.b16 %v1236, %v1220
    %v1541 = vpack.c.b16 %v1237, %v1221
    %v1542 = vpack.c.b16 %v1238, %v1222
    %v1543 = vpack.c.b16 %v1239, %v1223
    %v1544 = vpack.c.b16 %v1240, %v1224
    %v1545 = vpack.c.b16 %v1241, %v1225
    %v1546 = vpack.c.b16 %v1242, %v1226
    %v1547 = vpack.c.b16 %v1259, %v1243
    %v1548 = vpack.c.b16 %v1260, %v1244
    %v1549 = vpack.c.b16 %v1261, %v1245
    %v1550 = vpack.c.b16 %v1262, %v1246
    %v1551 = vpack.c.b16 %v1263, %v1247
    %v1552 = vpack.c.b16 %v1264, %v1248
    %v1553 = vpack.c.b16 %v1265, %v1249
    %v1554 = vpack.c.b16 %v1266, %v1250
    %v1555 = vpack.c.b16 %v1267, %v1251
    %v1556 = vpack.c.b16 %v1268, %v1252
    %v1557 = vpack.c.b16 %v1269, %v1253
    %v1558 = vpack.c.b16 %v1270, %v1254
    %v1559 = vpack.c.b16 %v1271, %v1255
    %v1560 = vpack.c.b16 %v1272, %v1256
    %v1561 = vpack.c.b16 %v1273, %v1257
    %v1562 = vpack.c.b16 %v1274, %v1258
    %v1563 = vpack.c.b16 %v1291, %v1275
    %v1564 = vpack.c.b16 %v1292, %v1276
    %v1565 = vpack.c.b16 %v1293, %v1277
    %v1566 = vpack.c.b16 %v1294, %v1278
    %v1567 = vpack.c.b16 %v1295, %v1279
    %v1568 = vpack.c.b16 %v1296, %v1280
    %v1569 = vpack.c.b16 %v1297, %v1281
    %v1570 = vpack.c.b16 %v1298, %v1282
    %v1571 = vpack.c.b16 %v1299, %v1283
    %v1572 = vpack.c.b16 %v1300, %v1284
    %v1573 = vpack.c.b16 %v1301, %v1285
    %v1574 = vpack.c.b16 %v1302, %v1286
    %v1575 = vpack.c.b16 %v1303, %v1287
    %v1576 = vpack.c.b16 %v1304, %v1288
    %v1577 = vpack.c.b16 %v1305, %v1289
    %v1578 = vpack.c.b16 %v1306, %v1290
    %v1579 = vpack.c.b16 %v1323, %v1307
    %v1580 = vpack.c.b16 %v1324, %v1308
    %v1581 = vpack.c.b16 %v1325, %v1309
    %v1582 = vpack.c.b16 %v1326, %v1310
    %v1583 = vpack.c.b16 %v1327, %v1311
    %v1584 = vpack.c.b16 %v1328, %v1312
    %v1585 = vpack.c.b16 %v1329, %v1313
    %v1586 = vpack.c.b16 %v1330, %v1314
    %v1587 = vpack.c.b16 %v1331, %v1315
    %v1588 = vpack.c.b16 %v1332, %v1316
    %v1589 = vpack.c.b16 %v1333, %v1317
    %v1590 = vpack.c.b16 %v1334, %v1318
    %v1591 = vpack.c.b16 %v1335, %v1319
    %v1592 = vpack.c.b16 %v1336, %v1320
    %v1593 = vpack.c.b16 %v1337, %v1321
    %v1594 = vpack.c.b16 %v1338, %v1322
    %v1595 = vpack.c.b16 %v1355, %v1339
    %v1596 = vpack.c.b16 %v1356, %v1340
    %v1597 = vpack.c.b16 %v1357, %v1341
    %v1598 = vpack.c.b16 %v1358, %v1342
    %v1599 = vpack.c.b16 %v1359, %v1343
    %v1600 = vpack.c.b16 %v1360, %v1344
    %v1601 = vpack.c.b16 %v1361, %v1345
    %v1602 = vpack.c.b16 %v1362, %v1346
    %v1603 = vpack.c.b16 %v1363, %v1347
    %v1604 = vpack.c.b16 %v1364, %v1348
    %v1605 = vpack.c.b16 %v1365, %v1349
    %v1606 = vpack.c.b16 %v1366, %v1350
    %v1607 = vpack.c.b16 %v1367, %v1351
    %v1608 = vpack.c.b16 %v1368, %v1352
    %v1609 = vpack.c.b16 %v1369, %v1353
    %v1610 = vpack.c.b16 %v1370, %v1354
    %v1611 = vpack.c.b16 %v1387, %v1371
    %v1612 = vpack.c.b16 %v1388, %v1372
    %v1613 = vpack.c.b16 %v1389, %v1373
    %v1614 = vpack.c.b16 %v1390, %v1374
    %v1615 = vpack.c.b16 %v1391, %v1375
    %v1616 = vpack.c.b16 %v1392, %v1376
    %v1617 = vpack.c.b16 %v1393, %v1377
    %v1618 = vpack.c.b16 %v1394, %v1378
    %v1619 = vpack.c.b16 %v1395, %v1379
    %v1620 = vpack.c.b16 %v1396, %v1380
    %v1621 = vpack.c.b16 %v1397, %v1381
    %v1622 = vpack.c.b16 %v1398, %v1382
    %v1623 = vpack.c.b16 %v1399, %v1383
    %v1624 = vpack.c.b16 %v1400, %v1384
    %v1625 = vpack.c.b16 %v1401, %v1385
    %v1626 = vpack.c.b16 %v1402, %v1386
    %v1627 = vpack.c.b16 %v1419, %v1403
    %v1628 = vpack.c.b16 %v1420, %v1404
    %v1629 = vpack.c.b16 %v1421, %v1405
    %v1630 = vpack.c.b16 %v1422, %v1406
    %v1631 = vpack.c.b16 %v1423, %v1407
    %v1632 = vpack.c.b16 %v1424, %v1408
    %v1633 = vpack.c.b16 %v1425, %v1409
    %v1634 = vpack.c.b16 %v1426, %v1410
    %v1635 = vpack.c.b16 %v1427, %v1411
    %v1636 = vpack.c.b16 %v1428, %v1412
    %v1637 = vpack.c.b16 %v1429, %v1413
    %v1638 = vpack.c.b16 %v1430, %v1414
    %v1639 = vpack.c.b16 %v1431, %v1415
    %v1640 = vpack.c.b16 %v1432, %v1416
    %v1641 = vpack.c.b16 %v1433, %v1417
    %v1642 = vpack.c.b16 %v1434, %v1418
    %v1643 = vpack.c.b16 %v1451, %v1435
    %v1644 = vpack.c.b16 %v1452, %v1436
    %v1645 = vpack.c.b16 %v1453, %v1437
    %v1646 = vpack.c.b16 %v1454, %v1438
    %v1647 = vpack.c.b16 %v1455, %v1439
    %v1648 = vpack.c.b16 %v1456, %v1440
    %v1649 = vpack.c.b16 %v1457, %v1441
    %v1650 = vpack.c.b16 %v1458, %v1442
    %v1651 = vpack.c.b16 %v1459, %v1443
    %v1652 = vpack.c.b16 %v1460, %v1444
    %v1653 = vpack.c.b16 %v1461, %v1445
    %v1654 = vpack.c.b16 %v1462, %v1446
    %v1655 = vpack.c.b16 %v1463, %v1447
    %v1656 = vpack.c.b16 %v1464, %v1448
    %v1657 = vpack.c.b16 %v1465, %v1449
    %v1658 = vpack.c.b16 %v1466, %v1450
    %vm1851 = vcmask 523264
    %v1853 = vsel %vm1851, %v698, 0
    %1855 = vmatpush.bf16.msra.mxu0 %v1579
    %1856 = vmatpush.bf16.msra.mxu0 %v1563
    %1857 = vmatpush.bf16.msra.mxu0 %v1547
    %1858 = vmatpush.bf16.msra.mxu0 %v1531
    %1859 = vmatpush.bf16.msra.mxu0 %v1515
    %1860 = vmatpush.bf16.msra.mxu0 %v1499
    %1861 = vmatpush.bf16.msra.mxu0 %v1483
    %1862 = vmatpush.bf16.msra.mxu0 %v1467
    %1863 = vmatmul.bf16.gmra.mxu0 %v697
    %v1864 = vpop.f32.mrf.mxu0
    %v1865 = vadd.f32 0.0, %v1864
    %v1866 = vpop.f32.mrf.mxu0
    %1867 = vdwg.mxu0
    %1868 = vmatpush.bf16.msra.mxu0 0
    %1869 = vmatpush.bf16.msra.mxu0 0
    %1870 = vmatpush.bf16.msra.mxu0 0
    %1871 = vmatpush.bf16.msra.mxu0 0
    %1872 = vmatpush.bf16.msra.mxu0 %v1643
    %1873 = vmatpush.bf16.msra.mxu0 %v1627
    %1874 = vmatpush.bf16.msra.mxu0 %v1611
    %1875 = vmatpush.bf16.msra.mxu0 %v1595
    %1876 = vmatmul.bf16.gmra.mxu0 %v1853
    %v1877 = vpop.f32.mrf.mxu0
    %v1878 = vadd.f32 %v1865, %v1877
    %v1879 = vpop.f32.mrf.mxu0
    %1880 = vdwg.mxu0
    %1881 = vmatpush.bf16.msra.mxu0 %v1580
    %1882 = vmatpush.bf16.msra.mxu0 %v1564
    %1883 = vmatpush.bf16.msra.mxu0 %v1548
    %1884 = vmatpush.bf16.msra.mxu0 %v1532
    %1885 = vmatpush.bf16.msra.mxu0 %v1516
    %1886 = vmatpush.bf16.msra.mxu0 %v1500
    %1887 = vmatpush.bf16.msra.mxu0 %v1484
    %1888 = vmatpush.bf16.msra.mxu0 %v1468
    %1889 = vmatmul.bf16.gmra.mxu0 %v697
    %v1890 = vpop.f32.mrf.mxu0
    %v1891 = vadd.f32 0.0, %v1890
    %v1892 = vpop.f32.mrf.mxu0
    %1893 = vdwg.mxu0
    %1894 = vmatpush.bf16.msra.mxu0 0
    %1895 = vmatpush.bf16.msra.mxu0 0
    %1896 = vmatpush.bf16.msra.mxu0 0
    %1897 = vmatpush.bf16.msra.mxu0 0
    %1898 = vmatpush.bf16.msra.mxu0 %v1644
    %1899 = vmatpush.bf16.msra.mxu0 %v1628
    %1900 = vmatpush.bf16.msra.mxu0 %v1612
    %1901 = vmatpush.bf16.msra.mxu0 %v1596
    %1902 = vmatmul.bf16.gmra.mxu0 %v1853
    %v1903 = vpop.f32.mrf.mxu0
    %v1904 = vadd.f32 %v1891, %v1903
    %v1905 = vpop.f32.mrf.mxu0
    %1906 = vdwg.mxu0
    %1907 = vmatpush.bf16.msra.mxu0 %v1581
    %1908 = vmatpush.bf16.msra.mxu0 %v1565
    %1909 = vmatpush.bf16.msra.mxu0 %v1549
    %1910 = vmatpush.bf16.msra.mxu0 %v1533
    %1911 = vmatpush.bf16.msra.mxu0 %v1517
    %1912 = vmatpush.bf16.msra.mxu0 %v1501
    %1913 = vmatpush.bf16.msra.mxu0 %v1485
    %1914 = vmatpush.bf16.msra.mxu0 %v1469
    %1915 = vmatmul.bf16.gmra.mxu0 %v697
    %v1916 = vpop.f32.mrf.mxu0
    %v1917 = vadd.f32 0.0, %v1916
    %v1918 = vpop.f32.mrf.mxu0
    %1919 = vdwg.mxu0
    %1920 = vmatpush.bf16.msra.mxu0 0
    %1921 = vmatpush.bf16.msra.mxu0 0
    %1922 = vmatpush.bf16.msra.mxu0 0
    %1923 = vmatpush.bf16.msra.mxu0 0
    %1924 = vmatpush.bf16.msra.mxu0 %v1645
    %1925 = vmatpush.bf16.msra.mxu0 %v1629
    %1926 = vmatpush.bf16.msra.mxu0 %v1613
    %1927 = vmatpush.bf16.msra.mxu0 %v1597
    %1928 = vmatmul.bf16.gmra.mxu0 %v1853
    %v1929 = vpop.f32.mrf.mxu0
    %v1930 = vadd.f32 %v1917, %v1929
    %v1931 = vpop.f32.mrf.mxu0
    %1932 = vdwg.mxu0
    %1933 = vmatpush.bf16.msra.mxu0 %v1582
    %1934 = vmatpush.bf16.msra.mxu0 %v1566
    %1935 = vmatpush.bf16.msra.mxu0 %v1550
    %1936 = vmatpush.bf16.msra.mxu0 %v1534
    %1937 = vmatpush.bf16.msra.mxu0 %v1518
    %1938 = vmatpush.bf16.msra.mxu0 %v1502
    %1939 = vmatpush.bf16.msra.mxu0 %v1486
    %1940 = vmatpush.bf16.msra.mxu0 %v1470
    %1941 = vmatmul.bf16.gmra.mxu0 %v697
    %v1942 = vpop.f32.mrf.mxu0
    %v1943 = vadd.f32 0.0, %v1942
    %v1944 = vpop.f32.mrf.mxu0
    %1945 = vdwg.mxu0
    %1946 = vmatpush.bf16.msra.mxu0 0
    %1947 = vmatpush.bf16.msra.mxu0 0
    %1948 = vmatpush.bf16.msra.mxu0 0
    %1949 = vmatpush.bf16.msra.mxu0 0
    %1950 = vmatpush.bf16.msra.mxu0 %v1646
    %1951 = vmatpush.bf16.msra.mxu0 %v1630
    %1952 = vmatpush.bf16.msra.mxu0 %v1614
    %1953 = vmatpush.bf16.msra.mxu0 %v1598
    %1954 = vmatmul.bf16.gmra.mxu0 %v1853
    %v1955 = vpop.f32.mrf.mxu0
    %v1956 = vadd.f32 %v1943, %v1955
    %v1957 = vpop.f32.mrf.mxu0
    %1958 = vdwg.mxu0
    %1959 = vmatpush.bf16.msra.mxu0 %v1583
    %1960 = vmatpush.bf16.msra.mxu0 %v1567
    %1961 = vmatpush.bf16.msra.mxu0 %v1551
    %1962 = vmatpush.bf16.msra.mxu0 %v1535
    %1963 = vmatpush.bf16.msra.mxu0 %v1519
    %1964 = vmatpush.bf16.msra.mxu0 %v1503
    %1965 = vmatpush.bf16.msra.mxu0 %v1487
    %1966 = vmatpush.bf16.msra.mxu0 %v1471
    %1967 = vmatmul.bf16.gmra.mxu0 %v697
    %v1968 = vpop.f32.mrf.mxu0
    %v1969 = vadd.f32 0.0, %v1968
    %v1970 = vpop.f32.mrf.mxu0
    %1971 = vdwg.mxu0
    %1972 = vmatpush.bf16.msra.mxu0 0
    %1973 = vmatpush.bf16.msra.mxu0 0
    %1974 = vmatpush.bf16.msra.mxu0 0
    %1975 = vmatpush.bf16.msra.mxu0 0
    %1976 = vmatpush.bf16.msra.mxu0 %v1647
    %1977 = vmatpush.bf16.msra.mxu0 %v1631
    %1978 = vmatpush.bf16.msra.mxu0 %v1615
    %1979 = vmatpush.bf16.msra.mxu0 %v1599
    %1980 = vmatmul.bf16.gmra.mxu0 %v1853
    %v1981 = vpop.f32.mrf.mxu0
    %v1982 = vadd.f32 %v1969, %v1981
    %v1983 = vpop.f32.mrf.mxu0
    %1984 = vdwg.mxu0
    %1985 = vmatpush.bf16.msra.mxu0 %v1584
    %1986 = vmatpush.bf16.msra.mxu0 %v1568
    %1987 = vmatpush.bf16.msra.mxu0 %v1552
    %1988 = vmatpush.bf16.msra.mxu0 %v1536
    %1989 = vmatpush.bf16.msra.mxu0 %v1520
    %1990 = vmatpush.bf16.msra.mxu0 %v1504
    %1991 = vmatpush.bf16.msra.mxu0 %v1488
    %1992 = vmatpush.bf16.msra.mxu0 %v1472
    %1993 = vmatmul.bf16.gmra.mxu0 %v697
    %v1994 = vpop.f32.mrf.mxu0
    %v1995 = vadd.f32 0.0, %v1994
    %v1996 = vpop.f32.mrf.mxu0
    %1997 = vdwg.mxu0
    %1998 = vmatpush.bf16.msra.mxu0 0
    %1999 = vmatpush.bf16.msra.mxu0 0
    %2000 = vmatpush.bf16.msra.mxu0 0
    %2001 = vmatpush.bf16.msra.mxu0 0
    %2002 = vmatpush.bf16.msra.mxu0 %v1648
    %2003 = vmatpush.bf16.msra.mxu0 %v1632
    %2004 = vmatpush.bf16.msra.mxu0 %v1616
    %2005 = vmatpush.bf16.msra.mxu0 %v1600
    %2006 = vmatmul.bf16.gmra.mxu0 %v1853
    %v2007 = vpop.f32.mrf.mxu0
    %v2008 = vadd.f32 %v1995, %v2007
    %v2009 = vpop.f32.mrf.mxu0
    %2010 = vdwg.mxu0
    %2011 = vmatpush.bf16.msra.mxu0 %v1585
    %2012 = vmatpush.bf16.msra.mxu0 %v1569
    %2013 = vmatpush.bf16.msra.mxu0 %v1553
    %2014 = vmatpush.bf16.msra.mxu0 %v1537
    %2015 = vmatpush.bf16.msra.mxu0 %v1521
    %2016 = vmatpush.bf16.msra.mxu0 %v1505
    %2017 = vmatpush.bf16.msra.mxu0 %v1489
    %2018 = vmatpush.bf16.msra.mxu0 %v1473
    %2019 = vmatmul.bf16.gmra.mxu0 %v697
    %v2020 = vpop.f32.mrf.mxu0
    %v2021 = vadd.f32 0.0, %v2020
    %v2022 = vpop.f32.mrf.mxu0
    %2023 = vdwg.mxu0
    %2024 = vmatpush.bf16.msra.mxu0 0
    %2025 = vmatpush.bf16.msra.mxu0 0
    %2026 = vmatpush.bf16.msra.mxu0 0
    %2027 = vmatpush.bf16.msra.mxu0 0
    %2028 = vmatpush.bf16.msra.mxu0 %v1649
    %2029 = vmatpush.bf16.msra.mxu0 %v1633
    %2030 = vmatpush.bf16.msra.mxu0 %v1617
    %2031 = vmatpush.bf16.msra.mxu0 %v1601
    %2032 = vmatmul.bf16.gmra.mxu0 %v1853
    %v2033 = vpop.f32.mrf.mxu0
    %v2034 = vadd.f32 %v2021, %v2033
    %v2035 = vpop.f32.mrf.mxu0
    %2036 = vdwg.mxu0
    %2037 = vmatpush.bf16.msra.mxu0 %v1586
    %2038 = vmatpush.bf16.msra.mxu0 %v1570
    %2039 = vmatpush.bf16.msra.mxu0 %v1554
    %2040 = vmatpush.bf16.msra.mxu0 %v1538
    %2041 = vmatpush.bf16.msra.mxu0 %v1522
    %2042 = vmatpush.bf16.msra.mxu0 %v1506
    %2043 = vmatpush.bf16.msra.mxu0 %v1490
    %2044 = vmatpush.bf16.msra.mxu0 %v1474
    %2045 = vmatmul.bf16.gmra.mxu0 %v697
    %v2046 = vpop.f32.mrf.mxu0
    %v2047 = vadd.f32 0.0, %v2046
    %v2048 = vpop.f32.mrf.mxu0
    %2049 = vdwg.mxu0
    %2050 = vmatpush.bf16.msra.mxu0 0
    %2051 = vmatpush.bf16.msra.mxu0 0
    %2052 = vmatpush.bf16.msra.mxu0 0
    %2053 = vmatpush.bf16.msra.mxu0 0
    %2054 = vmatpush.bf16.msra.mxu0 %v1650
    %2055 = vmatpush.bf16.msra.mxu0 %v1634
    %2056 = vmatpush.bf16.msra.mxu0 %v1618
    %2057 = vmatpush.bf16.msra.mxu0 %v1602
    %2058 = vmatmul.bf16.gmra.mxu0 %v1853
    %v2059 = vpop.f32.mrf.mxu0
    %v2060 = vadd.f32 %v2047, %v2059
    %v2061 = vpop.f32.mrf.mxu0
    %2062 = vdwg.mxu0
    %2063 = vmatpush.bf16.msra.mxu0 %v1587
    %2064 = vmatpush.bf16.msra.mxu0 %v1571
    %2065 = vmatpush.bf16.msra.mxu0 %v1555
    %2066 = vmatpush.bf16.msra.mxu0 %v1539
    %2067 = vmatpush.bf16.msra.mxu0 %v1523
    %2068 = vmatpush.bf16.msra.mxu0 %v1507
    %2069 = vmatpush.bf16.msra.mxu0 %v1491
    %2070 = vmatpush.bf16.msra.mxu0 %v1475
    %2071 = vmatmul.bf16.gmra.mxu0 %v697
    %v2072 = vpop.f32.mrf.mxu0
    %v2073 = vadd.f32 0.0, %v2072
    %v2074 = vpop.f32.mrf.mxu0
    %2075 = vdwg.mxu0
    %2076 = vmatpush.bf16.msra.mxu0 0
    %2077 = vmatpush.bf16.msra.mxu0 0
    %2078 = vmatpush.bf16.msra.mxu0 0
    %2079 = vmatpush.bf16.msra.mxu0 0
    %2080 = vmatpush.bf16.msra.mxu0 %v1651
    %2081 = vmatpush.bf16.msra.mxu0 %v1635
    %2082 = vmatpush.bf16.msra.mxu0 %v1619
    %2083 = vmatpush.bf16.msra.mxu0 %v1603
    %2084 = vmatmul.bf16.gmra.mxu0 %v1853
    %v2085 = vpop.f32.mrf.mxu0
    %v2086 = vadd.f32 %v2073, %v2085
    %v2087 = vpop.f32.mrf.mxu0
    %2088 = vdwg.mxu0
    %2089 = vmatpush.bf16.msra.mxu0 %v1588
    %2090 = vmatpush.bf16.msra.mxu0 %v1572
    %2091 = vmatpush.bf16.msra.mxu0 %v1556
    %2092 = vmatpush.bf16.msra.mxu0 %v1540
    %2093 = vmatpush.bf16.msra.mxu0 %v1524
    %2094 = vmatpush.bf16.msra.mxu0 %v1508
    %2095 = vmatpush.bf16.msra.mxu0 %v1492
    %2096 = vmatpush.bf16.msra.mxu0 %v1476
    %2097 = vmatmul.bf16.gmra.mxu0 %v697
    %v2098 = vpop.f32.mrf.mxu0
    %v2099 = vadd.f32 0.0, %v2098
    %v2100 = vpop.f32.mrf.mxu0
    %2101 = vdwg.mxu0
    %2102 = vmatpush.bf16.msra.mxu0 0
    %2103 = vmatpush.bf16.msra.mxu0 0
    %2104 = vmatpush.bf16.msra.mxu0 0
    %2105 = vmatpush.bf16.msra.mxu0 0
    %2106 = vmatpush.bf16.msra.mxu0 %v1652
    %2107 = vmatpush.bf16.msra.mxu0 %v1636
    %2108 = vmatpush.bf16.msra.mxu0 %v1620
    %2109 = vmatpush.bf16.msra.mxu0 %v1604
    %2110 = vmatmul.bf16.gmra.mxu0 %v1853
    %v2111 = vpop.f32.mrf.mxu0
    %v2112 = vadd.f32 %v2099, %v2111
    %v2113 = vpop.f32.mrf.mxu0
    %2114 = vdwg.mxu0
    %2115 = vmatpush.bf16.msra.mxu0 %v1589
    %2116 = vmatpush.bf16.msra.mxu0 %v1573
    %2117 = vmatpush.bf16.msra.mxu0 %v1557
    %2118 = vmatpush.bf16.msra.mxu0 %v1541
    %2119 = vmatpush.bf16.msra.mxu0 %v1525
    %2120 = vmatpush.bf16.msra.mxu0 %v1509
    %2121 = vmatpush.bf16.msra.mxu0 %v1493
    %2122 = vmatpush.bf16.msra.mxu0 %v1477
    %2123 = vmatmul.bf16.gmra.mxu0 %v697
    %v2124 = vpop.f32.mrf.mxu0
    %v2125 = vadd.f32 0.0, %v2124
    %v2126 = vpop.f32.mrf.mxu0
    %2127 = vdwg.mxu0
    %2128 = vmatpush.bf16.msra.mxu0 0
    %2129 = vmatpush.bf16.msra.mxu0 0
    %2130 = vmatpush.bf16.msra.mxu0 0
    %2131 = vmatpush.bf16.msra.mxu0 0
    %2132 = vmatpush.bf16.msra.mxu0 %v1653
    %2133 = vmatpush.bf16.msra.mxu0 %v1637
    %2134 = vmatpush.bf16.msra.mxu0 %v1621
    %2135 = vmatpush.bf16.msra.mxu0 %v1605
    %2136 = vmatmul.bf16.gmra.mxu0 %v1853
    %v2137 = vpop.f32.mrf.mxu0
    %v2138 = vadd.f32 %v2125, %v2137
    %v2139 = vpop.f32.mrf.mxu0
    %2140 = vdwg.mxu0
    %2141 = vmatpush.bf16.msra.mxu0 %v1590
    %2142 = vmatpush.bf16.msra.mxu0 %v1574
    %2143 = vmatpush.bf16.msra.mxu0 %v1558
    %2144 = vmatpush.bf16.msra.mxu0 %v1542
    %2145 = vmatpush.bf16.msra.mxu0 %v1526
    %2146 = vmatpush.bf16.msra.mxu0 %v1510
    %2147 = vmatpush.bf16.msra.mxu0 %v1494
    %2148 = vmatpush.bf16.msra.mxu0 %v1478
    %2149 = vmatmul.bf16.gmra.mxu0 %v697
    %v2150 = vpop.f32.mrf.mxu0
    %v2151 = vadd.f32 0.0, %v2150
    %v2152 = vpop.f32.mrf.mxu0
    %2153 = vdwg.mxu0
    %2154 = vmatpush.bf16.msra.mxu0 0
    %2155 = vmatpush.bf16.msra.mxu0 0
    %2156 = vmatpush.bf16.msra.mxu0 0
    %2157 = vmatpush.bf16.msra.mxu0 0
    %2158 = vmatpush.bf16.msra.mxu0 %v1654
    %2159 = vmatpush.bf16.msra.mxu0 %v1638
    %2160 = vmatpush.bf16.msra.mxu0 %v1622
    %2161 = vmatpush.bf16.msra.mxu0 %v1606
    %2162 = vmatmul.bf16.gmra.mxu0 %v1853
    %v2163 = vpop.f32.mrf.mxu0
    %v2164 = vadd.f32 %v2151, %v2163
    %v2165 = vpop.f32.mrf.mxu0
    %2166 = vdwg.mxu0
    %2167 = vmatpush.bf16.msra.mxu0 %v1591
    %2168 = vmatpush.bf16.msra.mxu0 %v1575
    %2169 = vmatpush.bf16.msra.mxu0 %v1559
    %2170 = vmatpush.bf16.msra.mxu0 %v1543
    %2171 = vmatpush.bf16.msra.mxu0 %v1527
    %2172 = vmatpush.bf16.msra.mxu0 %v1511
    %2173 = vmatpush.bf16.msra.mxu0 %v1495
    %2174 = vmatpush.bf16.msra.mxu0 %v1479
    %2175 = vmatmul.bf16.gmra.mxu0 %v697
    %v2176 = vpop.f32.mrf.mxu0
    %v2177 = vadd.f32 0.0, %v2176
    %v2178 = vpop.f32.mrf.mxu0
    %2179 = vdwg.mxu0
    %2180 = vmatpush.bf16.msra.mxu0 0
    %2181 = vmatpush.bf16.msra.mxu0 0
    %2182 = vmatpush.bf16.msra.mxu0 0
    %2183 = vmatpush.bf16.msra.mxu0 0
    %2184 = vmatpush.bf16.msra.mxu0 %v1655
    %2185 = vmatpush.bf16.msra.mxu0 %v1639
    %2186 = vmatpush.bf16.msra.mxu0 %v1623
    %2187 = vmatpush.bf16.msra.mxu0 %v1607
    %2188 = vmatmul.bf16.gmra.mxu0 %v1853
    %v2189 = vpop.f32.mrf.mxu0
    %v2190 = vadd.f32 %v2177, %v2189
    %v2191 = vpop.f32.mrf.mxu0
    %2192 = vdwg.mxu0
    %2193 = vmatpush.bf16.msra.mxu0 %v1592
    %2194 = vmatpush.bf16.msra.mxu0 %v1576
    %2195 = vmatpush.bf16.msra.mxu0 %v1560
    %2196 = vmatpush.bf16.msra.mxu0 %v1544
    %2197 = vmatpush.bf16.msra.mxu0 %v1528
    %2198 = vmatpush.bf16.msra.mxu0 %v1512
    %2199 = vmatpush.bf16.msra.mxu0 %v1496
    %2200 = vmatpush.bf16.msra.mxu0 %v1480
    %2201 = vmatmul.bf16.gmra.mxu0 %v697
    %v2202 = vpop.f32.mrf.mxu0
    %v2203 = vadd.f32 0.0, %v2202
    %v2204 = vpop.f32.mrf.mxu0
    %2205 = vdwg.mxu0
    %2206 = vmatpush.bf16.msra.mxu0 0
    %2207 = vmatpush.bf16.msra.mxu0 0
    %2208 = vmatpush.bf16.msra.mxu0 0
    %2209 = vmatpush.bf16.msra.mxu0 0
    %2210 = vmatpush.bf16.msra.mxu0 %v1656
    %2211 = vmatpush.bf16.msra.mxu0 %v1640
    %2212 = vmatpush.bf16.msra.mxu0 %v1624
    %2213 = vmatpush.bf16.msra.mxu0 %v1608
    %2214 = vmatmul.bf16.gmra.mxu0 %v1853
    %v2215 = vpop.f32.mrf.mxu0
    %v2216 = vadd.f32 %v2203, %v2215
    %v2217 = vpop.f32.mrf.mxu0
    %2218 = vdwg.mxu0
    %2219 = vmatpush.bf16.msra.mxu0 %v1593
    %2220 = vmatpush.bf16.msra.mxu0 %v1577
    %2221 = vmatpush.bf16.msra.mxu0 %v1561
    %2222 = vmatpush.bf16.msra.mxu0 %v1545
    %2223 = vmatpush.bf16.msra.mxu0 %v1529
    %2224 = vmatpush.bf16.msra.mxu0 %v1513
    %2225 = vmatpush.bf16.msra.mxu0 %v1497
    %2226 = vmatpush.bf16.msra.mxu0 %v1481
    %2227 = vmatmul.bf16.gmra.mxu0 %v697
    %v2228 = vpop.f32.mrf.mxu0
    %v2229 = vadd.f32 0.0, %v2228
    %v2230 = vpop.f32.mrf.mxu0
    %2231 = vdwg.mxu0
    %2232 = vmatpush.bf16.msra.mxu0 0
    %2233 = vmatpush.bf16.msra.mxu0 0
    %2234 = vmatpush.bf16.msra.mxu0 0
    %2235 = vmatpush.bf16.msra.mxu0 0
    %2236 = vmatpush.bf16.msra.mxu0 %v1657
    %2237 = vmatpush.bf16.msra.mxu0 %v1641
    %2238 = vmatpush.bf16.msra.mxu0 %v1625
    %2239 = vmatpush.bf16.msra.mxu0 %v1609
    %2240 = vmatmul.bf16.gmra.mxu0 %v1853
    %v2241 = vpop.f32.mrf.mxu0
    %v2242 = vadd.f32 %v2229, %v2241
    %v2243 = vpop.f32.mrf.mxu0
    %2244 = vdwg.mxu0
    %2245 = vmatpush.bf16.msra.mxu0 %v1594
    %2246 = vmatpush.bf16.msra.mxu0 %v1578
    %2247 = vmatpush.bf16.msra.mxu0 %v1562
    %2248 = vmatpush.bf16.msra.mxu0 %v1546
    %2249 = vmatpush.bf16.msra.mxu0 %v1530
    %2250 = vmatpush.bf16.msra.mxu0 %v1514
    %2251 = vmatpush.bf16.msra.mxu0 %v1498
    %2252 = vmatpush.bf16.msra.mxu0 %v1482
    %2253 = vmatmul.bf16.gmra.mxu0 %v697
    %v2254 = vpop.f32.mrf.mxu0
    %v2255 = vadd.f32 0.0, %v2254
    %v2256 = vpop.f32.mrf.mxu0
    %2257 = vdwg.mxu0
    %2258 = vmatpush.bf16.msra.mxu0 0
    %2259 = vmatpush.bf16.msra.mxu0 0
    %2260 = vmatpush.bf16.msra.mxu0 0
    %2261 = vmatpush.bf16.msra.mxu0 0
    %2262 = vmatpush.bf16.msra.mxu0 %v1658
    %2263 = vmatpush.bf16.msra.mxu0 %v1642
    %2264 = vmatpush.bf16.msra.mxu0 %v1626
    %2265 = vmatpush.bf16.msra.mxu0 %v1610
    %2266 = vmatmul.bf16.gmra.mxu0 %v1853
    %v2267 = vpop.f32.mrf.mxu0
    %v2268 = vadd.f32 %v2255, %v2267
    %v2269 = vpop.f32.mrf.mxu0
    %2270 = vdwg.mxu0
    %v2271 = vpack.c.bf16 %v687, %v687
    %v2272 = vld [vmem:[#allocation7] sm:$0xff]
    %v2273 = vld [vmem:[#allocation7 + $0x8] sm:$0xff]
    %v2274 = vld [vmem:[#allocation7 + $0x10] sm:$0xff]
    %v2275 = vld [vmem:[#allocation7 + $0x18] sm:$0xff]
    %v2276 = vld [vmem:[#allocation7 + $0x20] sm:$0xff]
    %v2277 = vld [vmem:[#allocation7 + $0x28] sm:$0xff]
    %v2278 = vld [vmem:[#allocation7 + $0x30] sm:$0xff]
    %v2279 = vld [vmem:[#allocation7 + $0x38] sm:$0xff]
    %v2280 = vld [vmem:[#allocation7 + $0x40] sm:$0xff]
    %v2281 = vld [vmem:[#allocation7 + $0x48] sm:$0xff]
    %v2282 = vld [vmem:[#allocation7 + $0x50] sm:$0xff]
    %v2283 = vld [vmem:[#allocation7 + $0x58] sm:$0xff]
    %v2284 = vld [vmem:[#allocation7 + $0x60] sm:$0xff]
    %v2285 = vld [vmem:[#allocation7 + $0x68] sm:$0xff]
    %v2286 = vld [vmem:[#allocation7 + $0x70] sm:$0xff]
    %v2287 = vld [vmem:[#allocation7 + $0x78] sm:$0xff]
    %v2288 = vld [vmem:[#allocation7 + $0x80] sm:$0xff]
    %v2289 = vld [vmem:[#allocation7 + $0x88] sm:$0xff]
    %v2290 = vld [vmem:[#allocation7 + $0x90] sm:$0xff]
    %v2291 = vld [vmem:[#allocation7 + $0x98] sm:$0xff]
    %v2292 = vld [vmem:[#allocation7 + $0xa0] sm:$0xff]
    %v2293 = vld [vmem:[#allocation7 + $0xa8] sm:$0xff]
    %v2294 = vld [vmem:[#allocation7 + $0xb0] sm:$0xff]
    %v2295 = vld [vmem:[#allocation7 + $0xb8] sm:$0xff]
    %v2320 = vunpack.c.l.b16 %v2272
    %v2321 = vunpack.c.h.b16 %v2272
    %v2322 = vunpack.c.l.b16 %v2273
    %v2323 = vunpack.c.h.b16 %v2273
    %v2324 = vunpack.c.l.b16 %v2274
    %v2325 = vunpack.c.h.b16 %v2274
    %v2326 = vunpack.c.l.b16 %v2275
    %v2327 = vunpack.c.h.b16 %v2275
    %v2328 = vunpack.c.l.b16 %v2276
    %v2329 = vunpack.c.h.b16 %v2276
    %v2330 = vunpack.c.l.b16 %v2277
    %v2331 = vunpack.c.h.b16 %v2277
    %v2332 = vunpack.c.l.b16 %v2278
    %v2333 = vunpack.c.h.b16 %v2278
    %v2334 = vunpack.c.l.b16 %v2279
    %v2335 = vunpack.c.h.b16 %v2279
    %v2336 = vunpack.c.l.b16 %v2280
    %v2337 = vunpack.c.h.b16 %v2280
    %v2338 = vunpack.c.l.b16 %v2281
    %v2339 = vunpack.c.h.b16 %v2281
    %v2340 = vunpack.c.l.b16 %v2282
    %v2341 = vunpack.c.h.b16 %v2282
    %v2342 = vunpack.c.l.b16 %v2283
    %v2343 = vunpack.c.h.b16 %v2283
    %v2344 = vunpack.c.l.b16 %v2284
    %v2345 = vunpack.c.h.b16 %v2284
    %v2346 = vunpack.c.l.b16 %v2285
    %v2347 = vunpack.c.h.b16 %v2285
    %v2348 = vunpack.c.l.b16 %v2286
    %v2349 = vunpack.c.h.b16 %v2286
    %v2350 = vunpack.c.l.b16 %v2287
    %v2351 = vunpack.c.h.b16 %v2287
    %v2352 = vunpack.c.l.b16 %v2288
    %v2353 = vunpack.c.h.b16 %v2288
    %v2354 = vunpack.c.l.b16 %v2289
    %v2355 = vunpack.c.h.b16 %v2289
    %v2356 = vunpack.c.l.b16 %v2290
    %v2357 = vunpack.c.h.b16 %v2290
    %v2358 = vunpack.c.l.b16 %v2291
    %v2359 = vunpack.c.h.b16 %v2291
    %v2360 = vunpack.c.l.b16 %v2292
    %v2361 = vunpack.c.h.b16 %v2292
    %v2362 = vunpack.c.l.b16 %v2293
    %v2363 = vunpack.c.h.b16 %v2293
    %v2364 = vunpack.c.l.b16 %v2294
    %v2365 = vunpack.c.h.b16 %v2294
    %v2366 = vunpack.c.l.b16 %v2295
    %v2367 = vunpack.c.h.b16 %v2295
    %v2368 = vpack.c.b16 %v2328, %v2320
    %v2369 = vpack.c.b16 %v2329, %v2321
    %v2370 = vpack.c.b16 %v2330, %v2322
    %v2371 = vpack.c.b16 %v2331, %v2323
    %v2372 = vpack.c.b16 %v2332, %v2324
    %v2373 = vpack.c.b16 %v2333, %v2325
    %v2374 = vpack.c.b16 %v2334, %v2326
    %v2375 = vpack.c.b16 %v2335, %v2327
    %v2376 = vpack.c.b16 %v2344, %v2336
    %v2377 = vpack.c.b16 %v2345, %v2337
    %v2378 = vpack.c.b16 %v2346, %v2338
    %v2379 = vpack.c.b16 %v2347, %v2339
    %v2380 = vpack.c.b16 %v2348, %v2340
    %v2381 = vpack.c.b16 %v2349, %v2341
    %v2382 = vpack.c.b16 %v2350, %v2342
    %v2383 = vpack.c.b16 %v2351, %v2343
    %v2384 = vpack.c.b16 %v2360, %v2352
    %v2385 = vpack.c.b16 %v2361, %v2353
    %v2386 = vpack.c.b16 %v2362, %v2354
    %v2387 = vpack.c.b16 %v2363, %v2355
    %v2388 = vpack.c.b16 %v2364, %v2356
    %v2389 = vpack.c.b16 %v2365, %v2357
    %v2390 = vpack.c.b16 %v2366, %v2358
    %v2391 = vpack.c.b16 %v2367, %v2359
    %vm2416 = vcmask 392192
    %v2418 = vsel %vm2416, %v2271, 0
    %2420 = vmatpush.bf16.msra.mxu0 0
    %2421 = vmatpush.bf16.msra.mxu0 0
    %2422 = vmatpush.bf16.msra.mxu0 0
    %2423 = vmatpush.bf16.msra.mxu0 0
    %2424 = vmatpush.bf16.msra.mxu0 0
    %2425 = vmatpush.bf16.msra.mxu0 %v2384
    %2426 = vmatpush.bf16.msra.mxu0 %v2376
    %2427 = vmatpush.bf16.msra.mxu0 %v2368
    %2428 = vmatmul.bf16.gmra.mxu0 %v2418
    %v2429 = vpop.f32.mrf.mxu0
    %v2430 = vadd.f32 %v1878, %v2429
    %v2431 = vpop.f32.mrf.mxu0
    %2432 = vdwg.mxu0
    %2433 = vmatpush.bf16.msra.mxu0 0
    %2434 = vmatpush.bf16.msra.mxu0 0
    %2435 = vmatpush.bf16.msra.mxu0 0
    %2436 = vmatpush.bf16.msra.mxu0 0
    %2437 = vmatpush.bf16.msra.mxu0 0
    %2438 = vmatpush.bf16.msra.mxu0 %v2385
    %2439 = vmatpush.bf16.msra.mxu0 %v2377
    %2440 = vmatpush.bf16.msra.mxu0 %v2369
    %2441 = vmatmul.bf16.gmra.mxu0 %v2418
    %v2442 = vpop.f32.mrf.mxu0
    %v2443 = vadd.f32 %v1904, %v2442
    %v2444 = vpop.f32.mrf.mxu0
    %2445 = vdwg.mxu0
    %2446 = vmatpush.bf16.msra.mxu0 0
    %2447 = vmatpush.bf16.msra.mxu0 0
    %2448 = vmatpush.bf16.msra.mxu0 0
    %2449 = vmatpush.bf16.msra.mxu0 0
    %2450 = vmatpush.bf16.msra.mxu0 0
    %2451 = vmatpush.bf16.msra.mxu0 %v2386
    %2452 = vmatpush.bf16.msra.mxu0 %v2378
    %2453 = vmatpush.bf16.msra.mxu0 %v2370
    %2454 = vmatmul.bf16.gmra.mxu0 %v2418
    %v2455 = vpop.f32.mrf.mxu0
    %v2456 = vadd.f32 %v1930, %v2455
    %v2457 = vpop.f32.mrf.mxu0
    %2458 = vdwg.mxu0
    %2459 = vmatpush.bf16.msra.mxu0 0
    %2460 = vmatpush.bf16.msra.mxu0 0
    %2461 = vmatpush.bf16.msra.mxu0 0
    %2462 = vmatpush.bf16.msra.mxu0 0
    %2463 = vmatpush.bf16.msra.mxu0 0
    %2464 = vmatpush.bf16.msra.mxu0 %v2387
    %2465 = vmatpush.bf16.msra.mxu0 %v2379
    %2466 = vmatpush.bf16.msra.mxu0 %v2371
    %2467 = vmatmul.bf16.gmra.mxu0 %v2418
    %v2468 = vpop.f32.mrf.mxu0
    %v2469 = vadd.f32 %v1956, %v2468
    %v2470 = vpop.f32.mrf.mxu0
    %2471 = vdwg.mxu0
    %2472 = vmatpush.bf16.msra.mxu0 0
    %2473 = vmatpush.bf16.msra.mxu0 0
    %2474 = vmatpush.bf16.msra.mxu0 0
    %2475 = vmatpush.bf16.msra.mxu0 0
    %2476 = vmatpush.bf16.msra.mxu0 0
    %2477 = vmatpush.bf16.msra.mxu0 %v2388
    %2478 = vmatpush.bf16.msra.mxu0 %v2380
    %2479 = vmatpush.bf16.msra.mxu0 %v2372
    %2480 = vmatmul.bf16.gmra.mxu0 %v2418
    %v2481 = vpop.f32.mrf.mxu0
    %v2482 = vadd.f32 %v1982, %v2481
    %v2483 = vpop.f32.mrf.mxu0
    %2484 = vdwg.mxu0
    %2485 = vmatpush.bf16.msra.mxu0 0
    %2486 = vmatpush.bf16.msra.mxu0 0
    %2487 = vmatpush.bf16.msra.mxu0 0
    %2488 = vmatpush.bf16.msra.mxu0 0
    %2489 = vmatpush.bf16.msra.mxu0 0
    %2490 = vmatpush.bf16.msra.mxu0 %v2389
    %2491 = vmatpush.bf16.msra.mxu0 %v2381
    %2492 = vmatpush.bf16.msra.mxu0 %v2373
    %2493 = vmatmul.bf16.gmra.mxu0 %v2418
    %v2494 = vpop.f32.mrf.mxu0
    %v2495 = vadd.f32 %v2008, %v2494
    %v2496 = vpop.f32.mrf.mxu0
    %2497 = vdwg.mxu0
    %2498 = vmatpush.bf16.msra.mxu0 0
    %2499 = vmatpush.bf16.msra.mxu0 0
    %2500 = vmatpush.bf16.msra.mxu0 0
    %2501 = vmatpush.bf16.msra.mxu0 0
    %2502 = vmatpush.bf16.msra.mxu0 0
    %2503 = vmatpush.bf16.msra.mxu0 %v2390
    %2504 = vmatpush.bf16.msra.mxu0 %v2382
    %2505 = vmatpush.bf16.msra.mxu0 %v2374
    %2506 = vmatmul.bf16.gmra.mxu0 %v2418
    %v2507 = vpop.f32.mrf.mxu0
    %v2508 = vadd.f32 %v2034, %v2507
    %v2509 = vpop.f32.mrf.mxu0
    %2510 = vdwg.mxu0
    %2511 = vmatpush.bf16.msra.mxu0 0
    %2512 = vmatpush.bf16.msra.mxu0 0
    %2513 = vmatpush.bf16.msra.mxu0 0
    %2514 = vmatpush.bf16.msra.mxu0 0
    %2515 = vmatpush.bf16.msra.mxu0 0
    %2516 = vmatpush.bf16.msra.mxu0 %v2391
    %2517 = vmatpush.bf16.msra.mxu0 %v2383
    %2518 = vmatpush.bf16.msra.mxu0 %v2375
    %2519 = vmatmul.bf16.gmra.mxu0 %v2418
    %v2520 = vpop.f32.mrf.mxu0
    %v2521 = vadd.f32 %v2060, %v2520
    %v2522 = vpop.f32.mrf.mxu0
    %2523 = vdwg.mxu0
    %v2524 = vld [vmem:[%s10] sm:$0xff]
    %v2526 = vperm.slane %v2524, 0
    %v2527 = vperm.slane %v2524, 1
    %v2528 = vperm.slane %v2524, 2
    %v2529 = vperm.slane %v2524, 3
    %v2530 = vperm.slane %v2524, 4
    %v2531 = vperm.slane %v2524, 5
    %v2532 = vperm.slane %v2524, 6
    %v2533 = vperm.slane %v2524, 7
    %v2542 = vadd.f32 %v2430, %v2526
    %v2543 = vadd.f32 %v2443, %v2527
    %v2544 = vadd.f32 %v2456, %v2528
    %v2545 = vadd.f32 %v2469, %v2529
    %v2546 = vadd.f32 %v2482, %v2530
    %v2547 = vadd.f32 %v2495, %v2531
    %v2548 = vadd.f32 %v2508, %v2532
    %v2549 = vadd.f32 %v2521, %v2533
    %v2550 = vld [vmem:[#allocation14] sm:$0xff]
    %v2552 = vperm.slane %v2550, 0
    %v2553 = vperm.slane %v2550, 1
    %v2554 = vperm.slane %v2550, 2
    %v2555 = vperm.slane %v2550, 3
    %v2556 = vperm.slane %v2550, 4
    %v2557 = vperm.slane %v2550, 5
    %v2558 = vperm.slane %v2550, 6
    %v2559 = vperm.slane %v2550, 7
    %v2568 = vadd.f32 %v2086, %v2552
    %v2569 = vadd.f32 %v2112, %v2553
    %v2570 = vadd.f32 %v2138, %v2554
    %v2571 = vadd.f32 %v2164, %v2555
    %v2572 = vadd.f32 %v2190, %v2556
    %v2573 = vadd.f32 %v2216, %v2557
    %v2574 = vadd.f32 %v2242, %v2558
    %v2575 = vadd.f32 %v2268, %v2559
    %v2576 = vld [vmem:[#allocation10] sm:$0xff]
    %v2577 = vld [vmem:[#allocation10 + $0x8] sm:$0xff]
    %v2578 = vld [vmem:[#allocation10 + $0x10] sm:$0xff]
    %v2579 = vld [vmem:[#allocation10 + $0x18] sm:$0xff]
    %v2580 = vld [vmem:[#allocation10 + $0x20] sm:$0xff]
    %v2581 = vld [vmem:[#allocation10 + $0x28] sm:$0xff]
    %v2582 = vld [vmem:[#allocation10 + $0x30] sm:$0xff]
    %v2583 = vld [vmem:[#allocation10 + $0x38] sm:$0xff]
    %v2584 = vld [vmem:[#allocation10 + $0x40] sm:$0xff]
    %v2585 = vld [vmem:[#allocation10 + $0x48] sm:$0xff]
    %v2586 = vld [vmem:[#allocation10 + $0x50] sm:$0xff]
    %v2587 = vld [vmem:[#allocation10 + $0x58] sm:$0xff]
    %v2588 = vld [vmem:[#allocation10 + $0x60] sm:$0xff]
    %v2589 = vld [vmem:[#allocation10 + $0x68] sm:$0xff]
    %v2590 = vld [vmem:[#allocation10 + $0x70] sm:$0xff]
    %v2591 = vld [vmem:[#allocation10 + $0x78] sm:$0xff]
    %v2592 = vld [vmem:[#allocation10 + $0x80] sm:$0xff]
    %v2593 = vld [vmem:[#allocation10 + $0x88] sm:$0xff]
    %v2594 = vld [vmem:[#allocation10 + $0x90] sm:$0xff]
    %v2595 = vld [vmem:[#allocation10 + $0x98] sm:$0xff]
    %v2596 = vld [vmem:[#allocation10 + $0xa0] sm:$0xff]
    %v2597 = vld [vmem:[#allocation10 + $0xa8] sm:$0xff]
    %v2598 = vld [vmem:[#allocation10 + $0xb0] sm:$0xff]
    %v2599 = vld [vmem:[#allocation10 + $0xb8] sm:$0xff]
    %v2600 = vld [vmem:[#allocation10 + $0xc0] sm:$0xff]
    %v2601 = vld [vmem:[#allocation10 + $0xc8] sm:$0xff]
    %v2602 = vld [vmem:[#allocation10 + $0xd0] sm:$0xff]
    %v2603 = vld [vmem:[#allocation10 + $0xd8] sm:$0xff]
    %v2604 = vld [vmem:[#allocation10 + $0xe0] sm:$0xff]
    %v2605 = vld [vmem:[#allocation10 + $0xe8] sm:$0xff]
    %v2606 = vld [vmem:[#allocation10 + $0xf0] sm:$0xff]
    %v2607 = vld [vmem:[#allocation10 + $0xf8] sm:$0xff]
    %v2608 = vld [vmem:[#allocation10 + $0x100] sm:$0xff]
    %v2609 = vld [vmem:[#allocation10 + $0x108] sm:$0xff]
    %v2610 = vld [vmem:[#allocation10 + $0x110] sm:$0xff]
    %v2611 = vld [vmem:[#allocation10 + $0x118] sm:$0xff]
    %v2612 = vld [vmem:[#allocation10 + $0x120] sm:$0xff]
    %v2613 = vld [vmem:[#allocation10 + $0x128] sm:$0xff]
    %v2614 = vld [vmem:[#allocation10 + $0x130] sm:$0xff]
    %v2615 = vld [vmem:[#allocation10 + $0x138] sm:$0xff]
    %v2616 = vld [vmem:[#allocation10 + $0x140] sm:$0xff]
    %v2617 = vld [vmem:[#allocation10 + $0x148] sm:$0xff]
    %v2618 = vld [vmem:[#allocation10 + $0x150] sm:$0xff]
    %v2619 = vld [vmem:[#allocation10 + $0x158] sm:$0xff]
    %v2620 = vld [vmem:[#allocation10 + $0x160] sm:$0xff]
    %v2621 = vld [vmem:[#allocation10 + $0x168] sm:$0xff]
    %v2622 = vld [vmem:[#allocation10 + $0x170] sm:$0xff]
    %v2623 = vld [vmem:[#allocation10 + $0x178] sm:$0xff]
    %v2624 = vld [vmem:[#allocation10 + $0x180] sm:$0xff]
    %v2625 = vld [vmem:[#allocation10 + $0x188] sm:$0xff]
    %v2626 = vld [vmem:[#allocation10 + $0x190] sm:$0xff]
    %v2627 = vld [vmem:[#allocation10 + $0x198] sm:$0xff]
    %v2628 = vld [vmem:[#allocation10 + $0x1a0] sm:$0xff]
    %v2629 = vld [vmem:[#allocation10 + $0x1a8] sm:$0xff]
    %v2630 = vld [vmem:[#allocation10 + $0x1b0] sm:$0xff]
    %v2631 = vld [vmem:[#allocation10 + $0x1b8] sm:$0xff]
    %v2632 = vld [vmem:[#allocation10 + $0x1c0] sm:$0xff]
    %v2633 = vld [vmem:[#allocation10 + $0x1c8] sm:$0xff]
    %v2634 = vld [vmem:[#allocation10 + $0x1d0] sm:$0xff]
    %v2635 = vld [vmem:[#allocation10 + $0x1d8] sm:$0xff]
    %v2636 = vld [vmem:[#allocation10 + $0x1e0] sm:$0xff]
    %v2637 = vld [vmem:[#allocation10 + $0x1e8] sm:$0xff]
    %v2638 = vld [vmem:[#allocation10 + $0x1f0] sm:$0xff]
    %v2639 = vld [vmem:[#allocation10 + $0x1f8] sm:$0xff]
    %v2640 = vld [vmem:[#allocation10 + $0x200] sm:$0xff]
    %v2641 = vld [vmem:[#allocation10 + $0x208] sm:$0xff]
    %v2642 = vld [vmem:[#allocation10 + $0x210] sm:$0xff]
    %v2643 = vld [vmem:[#allocation10 + $0x218] sm:$0xff]
    %v2644 = vld [vmem:[#allocation10 + $0x220] sm:$0xff]
    %v2645 = vld [vmem:[#allocation10 + $0x228] sm:$0xff]
    %v2646 = vld [vmem:[#allocation10 + $0x230] sm:$0xff]
    %v2647 = vld [vmem:[#allocation10 + $0x238] sm:$0xff]
    %v2648 = vld [vmem:[#allocation10 + $0x240] sm:$0xff]
    %v2649 = vld [vmem:[#allocation10 + $0x248] sm:$0xff]
    %v2650 = vld [vmem:[#allocation10 + $0x250] sm:$0xff]
    %v2651 = vld [vmem:[#allocation10 + $0x258] sm:$0xff]
    %v2652 = vld [vmem:[#allocation10 + $0x260] sm:$0xff]
    %v2653 = vld [vmem:[#allocation10 + $0x268] sm:$0xff]
    %v2654 = vld [vmem:[#allocation10 + $0x270] sm:$0xff]
    %v2655 = vld [vmem:[#allocation10 + $0x278] sm:$0xff]
    %v2656 = vld [vmem:[#allocation10 + $0x280] sm:$0xff]
    %v2657 = vld [vmem:[#allocation10 + $0x288] sm:$0xff]
    %v2658 = vld [vmem:[#allocation10 + $0x290] sm:$0xff]
    %v2659 = vld [vmem:[#allocation10 + $0x298] sm:$0xff]
    %v2660 = vld [vmem:[#allocation10 + $0x2a0] sm:$0xff]
    %v2661 = vld [vmem:[#allocation10 + $0x2a8] sm:$0xff]
    %v2662 = vld [vmem:[#allocation10 + $0x2b0] sm:$0xff]
    %v2663 = vld [vmem:[#allocation10 + $0x2b8] sm:$0xff]
    %v2664 = vld [vmem:[#allocation10 + $0x2c0] sm:$0xff]
    %v2665 = vld [vmem:[#allocation10 + $0x2c8] sm:$0xff]
    %v2666 = vld [vmem:[#allocation10 + $0x2d0] sm:$0xff]
    %v2667 = vld [vmem:[#allocation10 + $0x2d8] sm:$0xff]
    %v2668 = vld [vmem:[#allocation10 + $0x2e0] sm:$0xff]
    %v2669 = vld [vmem:[#allocation10 + $0x2e8] sm:$0xff]
    %v2670 = vld [vmem:[#allocation10 + $0x2f0] sm:$0xff]
    %v2671 = vld [vmem:[#allocation10 + $0x2f8] sm:$0xff]
    %v2672 = vld [vmem:[#allocation10 + $0x300] sm:$0xff]
    %v2673 = vld [vmem:[#allocation10 + $0x308] sm:$0xff]
    %v2674 = vld [vmem:[#allocation10 + $0x310] sm:$0xff]
    %v2675 = vld [vmem:[#allocation10 + $0x318] sm:$0xff]
    %v2676 = vld [vmem:[#allocation10 + $0x320] sm:$0xff]
    %v2677 = vld [vmem:[#allocation10 + $0x328] sm:$0xff]
    %v2678 = vld [vmem:[#allocation10 + $0x330] sm:$0xff]
    %v2679 = vld [vmem:[#allocation10 + $0x338] sm:$0xff]
    %v2680 = vld [vmem:[#allocation10 + $0x340] sm:$0xff]
    %v2681 = vld [vmem:[#allocation10 + $0x348] sm:$0xff]
    %v2682 = vld [vmem:[#allocation10 + $0x350] sm:$0xff]
    %v2683 = vld [vmem:[#allocation10 + $0x358] sm:$0xff]
    %v2684 = vld [vmem:[#allocation10 + $0x360] sm:$0xff]
    %v2685 = vld [vmem:[#allocation10 + $0x368] sm:$0xff]
    %v2686 = vld [vmem:[#allocation10 + $0x370] sm:$0xff]
    %v2687 = vld [vmem:[#allocation10 + $0x378] sm:$0xff]
    %v2688 = vld [vmem:[#allocation10 + $0x380] sm:$0xff]
    %v2689 = vld [vmem:[#allocation10 + $0x388] sm:$0xff]
    %v2690 = vld [vmem:[#allocation10 + $0x390] sm:$0xff]
    %v2691 = vld [vmem:[#allocation10 + $0x398] sm:$0xff]
    %v2692 = vld [vmem:[#allocation10 + $0x3a0] sm:$0xff]
    %v2693 = vld [vmem:[#allocation10 + $0x3a8] sm:$0xff]
    %v2694 = vld [vmem:[#allocation10 + $0x3b0] sm:$0xff]
    %v2695 = vld [vmem:[#allocation10 + $0x3b8] sm:$0xff]
    %v2696 = vld [vmem:[#allocation10 + $0x3c0] sm:$0xff]
    %v2697 = vld [vmem:[#allocation10 + $0x3c8] sm:$0xff]
    %v2698 = vld [vmem:[#allocation10 + $0x3d0] sm:$0xff]
    %v2699 = vld [vmem:[#allocation10 + $0x3d8] sm:$0xff]
    %v2700 = vld [vmem:[#allocation10 + $0x3e0] sm:$0xff]
    %v2701 = vld [vmem:[#allocation10 + $0x3e8] sm:$0xff]
    %v2702 = vld [vmem:[#allocation10 + $0x3f0] sm:$0xff]
    %v2703 = vld [vmem:[#allocation10 + $0x3f8] sm:$0xff]
    %v2704 = vld [vmem:[#allocation10 + $0x400] sm:$0xff]
    %v2705 = vld [vmem:[#allocation10 + $0x408] sm:$0xff]
    %v2706 = vld [vmem:[#allocation10 + $0x410] sm:$0xff]
    %v2707 = vld [vmem:[#allocation10 + $0x418] sm:$0xff]
    %v2708 = vld [vmem:[#allocation10 + $0x420] sm:$0xff]
    %v2709 = vld [vmem:[#allocation10 + $0x428] sm:$0xff]
    %v2710 = vld [vmem:[#allocation10 + $0x430] sm:$0xff]
    %v2711 = vld [vmem:[#allocation10 + $0x438] sm:$0xff]
    %v2712 = vld [vmem:[#allocation10 + $0x440] sm:$0xff]
    %v2713 = vld [vmem:[#allocation10 + $0x448] sm:$0xff]
    %v2714 = vld [vmem:[#allocation10 + $0x450] sm:$0xff]
    %v2715 = vld [vmem:[#allocation10 + $0x458] sm:$0xff]
    %v2716 = vld [vmem:[#allocation10 + $0x460] sm:$0xff]
    %v2717 = vld [vmem:[#allocation10 + $0x468] sm:$0xff]
    %v2718 = vld [vmem:[#allocation10 + $0x470] sm:$0xff]
    %v2719 = vld [vmem:[#allocation10 + $0x478] sm:$0xff]
    %v2720 = vld [vmem:[#allocation10 + $0x480] sm:$0xff]
    %v2721 = vld [vmem:[#allocation10 + $0x488] sm:$0xff]
    %v2722 = vld [vmem:[#allocation10 + $0x490] sm:$0xff]
    %v2723 = vld [vmem:[#allocation10 + $0x498] sm:$0xff]
    %v2724 = vld [vmem:[#allocation10 + $0x4a0] sm:$0xff]
    %v2725 = vld [vmem:[#allocation10 + $0x4a8] sm:$0xff]
    %v2726 = vld [vmem:[#allocation10 + $0x4b0] sm:$0xff]
    %v2727 = vld [vmem:[#allocation10 + $0x4b8] sm:$0xff]
    %v2728 = vld [vmem:[#allocation10 + $0x4c0] sm:$0xff]
    %v2729 = vld [vmem:[#allocation10 + $0x4c8] sm:$0xff]
    %v2730 = vld [vmem:[#allocation10 + $0x4d0] sm:$0xff]
    %v2731 = vld [vmem:[#allocation10 + $0x4d8] sm:$0xff]
    %v2732 = vld [vmem:[#allocation10 + $0x4e0] sm:$0xff]
    %v2733 = vld [vmem:[#allocation10 + $0x4e8] sm:$0xff]
    %v2734 = vld [vmem:[#allocation10 + $0x4f0] sm:$0xff]
    %v2735 = vld [vmem:[#allocation10 + $0x4f8] sm:$0xff]
    %v2896 = vunpack.c.l.b16 %v2576
    %v2897 = vunpack.c.h.b16 %v2576
    %v2898 = vunpack.c.l.b16 %v2577
    %v2899 = vunpack.c.h.b16 %v2577
    %v2900 = vunpack.c.l.b16 %v2578
    %v2901 = vunpack.c.h.b16 %v2578
    %v2902 = vunpack.c.l.b16 %v2579
    %v2903 = vunpack.c.h.b16 %v2579
    %v2904 = vunpack.c.l.b16 %v2580
    %v2905 = vunpack.c.h.b16 %v2580
    %v2906 = vunpack.c.l.b16 %v2581
    %v2907 = vunpack.c.h.b16 %v2581
    %v2908 = vunpack.c.l.b16 %v2582
    %v2909 = vunpack.c.h.b16 %v2582
    %v2910 = vunpack.c.l.b16 %v2583
    %v2911 = vunpack.c.h.b16 %v2583
    %v2912 = vunpack.c.l.b16 %v2584
    %v2913 = vunpack.c.h.b16 %v2584
    %v2914 = vunpack.c.l.b16 %v2585
    %v2915 = vunpack.c.h.b16 %v2585
    %v2916 = vunpack.c.l.b16 %v2586
    %v2917 = vunpack.c.h.b16 %v2586
    %v2918 = vunpack.c.l.b16 %v2587
    %v2919 = vunpack.c.h.b16 %v2587
    %v2920 = vunpack.c.l.b16 %v2588
    %v2921 = vunpack.c.h.b16 %v2588
    %v2922 = vunpack.c.l.b16 %v2589
    %v2923 = vunpack.c.h.b16 %v2589
    %v2924 = vunpack.c.l.b16 %v2590
    %v2925 = vunpack.c.h.b16 %v2590
    %v2926 = vunpack.c.l.b16 %v2591
    %v2927 = vunpack.c.h.b16 %v2591
    %v2928 = vunpack.c.l.b16 %v2592
    %v2929 = vunpack.c.h.b16 %v2592
    %v2930 = vunpack.c.l.b16 %v2593
    %v2931 = vunpack.c.h.b16 %v2593
    %v2932 = vunpack.c.l.b16 %v2594
    %v2933 = vunpack.c.h.b16 %v2594
    %v2934 = vunpack.c.l.b16 %v2595
    %v2935 = vunpack.c.h.b16 %v2595
    %v2936 = vunpack.c.l.b16 %v2596
    %v2937 = vunpack.c.h.b16 %v2596
    %v2938 = vunpack.c.l.b16 %v2597
    %v2939 = vunpack.c.h.b16 %v2597
    %v2940 = vunpack.c.l.b16 %v2598
    %v2941 = vunpack.c.h.b16 %v2598
    %v2942 = vunpack.c.l.b16 %v2599
    %v2943 = vunpack.c.h.b16 %v2599
    %v2944 = vunpack.c.l.b16 %v2600
    %v2945 = vunpack.c.h.b16 %v2600
    %v2946 = vunpack.c.l.b16 %v2601
    %v2947 = vunpack.c.h.b16 %v2601
    %v2948 = vunpack.c.l.b16 %v2602
    %v2949 = vunpack.c.h.b16 %v2602
    %v2950 = vunpack.c.l.b16 %v2603
    %v2951 = vunpack.c.h.b16 %v2603
    %v2952 = vunpack.c.l.b16 %v2604
    %v2953 = vunpack.c.h.b16 %v2604
    %v2954 = vunpack.c.l.b16 %v2605
    %v2955 = vunpack.c.h.b16 %v2605
    %v2956 = vunpack.c.l.b16 %v2606
    %v2957 = vunpack.c.h.b16 %v2606
    %v2958 = vunpack.c.l.b16 %v2607
    %v2959 = vunpack.c.h.b16 %v2607
    %v2960 = vunpack.c.l.b16 %v2608
    %v2961 = vunpack.c.h.b16 %v2608
    %v2962 = vunpack.c.l.b16 %v2609
    %v2963 = vunpack.c.h.b16 %v2609
    %v2964 = vunpack.c.l.b16 %v2610
    %v2965 = vunpack.c.h.b16 %v2610
    %v2966 = vunpack.c.l.b16 %v2611
    %v2967 = vunpack.c.h.b16 %v2611
    %v2968 = vunpack.c.l.b16 %v2612
    %v2969 = vunpack.c.h.b16 %v2612
    %v2970 = vunpack.c.l.b16 %v2613
    %v2971 = vunpack.c.h.b16 %v2613
    %v2972 = vunpack.c.l.b16 %v2614
    %v2973 = vunpack.c.h.b16 %v2614
    %v2974 = vunpack.c.l.b16 %v2615
    %v2975 = vunpack.c.h.b16 %v2615
    %v2976 = vunpack.c.l.b16 %v2616
    %v2977 = vunpack.c.h.b16 %v2616
    %v2978 = vunpack.c.l.b16 %v2617
    %v2979 = vunpack.c.h.b16 %v2617
    %v2980 = vunpack.c.l.b16 %v2618
    %v2981 = vunpack.c.h.b16 %v2618
    %v2982 = vunpack.c.l.b16 %v2619
    %v2983 = vunpack.c.h.b16 %v2619
    %v2984 = vunpack.c.l.b16 %v2620
    %v2985 = vunpack.c.h.b16 %v2620
    %v2986 = vunpack.c.l.b16 %v2621
    %v2987 = vunpack.c.h.b16 %v2621
    %v2988 = vunpack.c.l.b16 %v2622
    %v2989 = vunpack.c.h.b16 %v2622
    %v2990 = vunpack.c.l.b16 %v2623
    %v2991 = vunpack.c.h.b16 %v2623
    %v2992 = vunpack.c.l.b16 %v2624
    %v2993 = vunpack.c.h.b16 %v2624
    %v2994 = vunpack.c.l.b16 %v2625
    %v2995 = vunpack.c.h.b16 %v2625
    %v2996 = vunpack.c.l.b16 %v2626
    %v2997 = vunpack.c.h.b16 %v2626
    %v2998 = vunpack.c.l.b16 %v2627
    %v2999 = vunpack.c.h.b16 %v2627
    %v3000 = vunpack.c.l.b16 %v2628
    %v3001 = vunpack.c.h.b16 %v2628
    %v3002 = vunpack.c.l.b16 %v2629
    %v3003 = vunpack.c.h.b16 %v2629
    %v3004 = vunpack.c.l.b16 %v2630
    %v3005 = vunpack.c.h.b16 %v2630
    %v3006 = vunpack.c.l.b16 %v2631
    %v3007 = vunpack.c.h.b16 %v2631
    %v3008 = vunpack.c.l.b16 %v2632
    %v3009 = vunpack.c.h.b16 %v2632
    %v3010 = vunpack.c.l.b16 %v2633
    %v3011 = vunpack.c.h.b16 %v2633
    %v3012 = vunpack.c.l.b16 %v2634
    %v3013 = vunpack.c.h.b16 %v2634
    %v3014 = vunpack.c.l.b16 %v2635
    %v3015 = vunpack.c.h.b16 %v2635
    %v3016 = vunpack.c.l.b16 %v2636
    %v3017 = vunpack.c.h.b16 %v2636
    %v3018 = vunpack.c.l.b16 %v2637
    %v3019 = vunpack.c.h.b16 %v2637
    %v3020 = vunpack.c.l.b16 %v2638
    %v3021 = vunpack.c.h.b16 %v2638
    %v3022 = vunpack.c.l.b16 %v2639
    %v3023 = vunpack.c.h.b16 %v2639
    %v3024 = vunpack.c.l.b16 %v2640
    %v3025 = vunpack.c.h.b16 %v2640
    %v3026 = vunpack.c.l.b16 %v2641
    %v3027 = vunpack.c.h.b16 %v2641
    %v3028 = vunpack.c.l.b16 %v2642
    %v3029 = vunpack.c.h.b16 %v2642
    %v3030 = vunpack.c.l.b16 %v2643
    %v3031 = vunpack.c.h.b16 %v2643
    %v3032 = vunpack.c.l.b16 %v2644
    %v3033 = vunpack.c.h.b16 %v2644
    %v3034 = vunpack.c.l.b16 %v2645
    %v3035 = vunpack.c.h.b16 %v2645
    %v3036 = vunpack.c.l.b16 %v2646
    %v3037 = vunpack.c.h.b16 %v2646
    %v3038 = vunpack.c.l.b16 %v2647
    %v3039 = vunpack.c.h.b16 %v2647
    %v3040 = vunpack.c.l.b16 %v2648
    %v3041 = vunpack.c.h.b16 %v2648
    %v3042 = vunpack.c.l.b16 %v2649
    %v3043 = vunpack.c.h.b16 %v2649
    %v3044 = vunpack.c.l.b16 %v2650
    %v3045 = vunpack.c.h.b16 %v2650
    %v3046 = vunpack.c.l.b16 %v2651
    %v3047 = vunpack.c.h.b16 %v2651
    %v3048 = vunpack.c.l.b16 %v2652
    %v3049 = vunpack.c.h.b16 %v2652
    %v3050 = vunpack.c.l.b16 %v2653
    %v3051 = vunpack.c.h.b16 %v2653
    %v3052 = vunpack.c.l.b16 %v2654
    %v3053 = vunpack.c.h.b16 %v2654
    %v3054 = vunpack.c.l.b16 %v2655
    %v3055 = vunpack.c.h.b16 %v2655
    %v3056 = vunpack.c.l.b16 %v2656
    %v3057 = vunpack.c.h.b16 %v2656
    %v3058 = vunpack.c.l.b16 %v2657
    %v3059 = vunpack.c.h.b16 %v2657
    %v3060 = vunpack.c.l.b16 %v2658
    %v3061 = vunpack.c.h.b16 %v2658
    %v3062 = vunpack.c.l.b16 %v2659
    %v3063 = vunpack.c.h.b16 %v2659
    %v3064 = vunpack.c.l.b16 %v2660
    %v3065 = vunpack.c.h.b16 %v2660
    %v3066 = vunpack.c.l.b16 %v2661
    %v3067 = vunpack.c.h.b16 %v2661
    %v3068 = vunpack.c.l.b16 %v2662
    %v3069 = vunpack.c.h.b16 %v2662
    %v3070 = vunpack.c.l.b16 %v2663
    %v3071 = vunpack.c.h.b16 %v2663
    %v3072 = vunpack.c.l.b16 %v2664
    %v3073 = vunpack.c.h.b16 %v2664
    %v3074 = vunpack.c.l.b16 %v2665
    %v3075 = vunpack.c.h.b16 %v2665
    %v3076 = vunpack.c.l.b16 %v2666
    %v3077 = vunpack.c.h.b16 %v2666
    %v3078 = vunpack.c.l.b16 %v2667
    %v3079 = vunpack.c.h.b16 %v2667
    %v3080 = vunpack.c.l.b16 %v2668
    %v3081 = vunpack.c.h.b16 %v2668
    %v3082 = vunpack.c.l.b16 %v2669
    %v3083 = vunpack.c.h.b16 %v2669
    %v3084 = vunpack.c.l.b16 %v2670
    %v3085 = vunpack.c.h.b16 %v2670
    %v3086 = vunpack.c.l.b16 %v2671
    %v3087 = vunpack.c.h.b16 %v2671
    %v3088 = vunpack.c.l.b16 %v2672
    %v3089 = vunpack.c.h.b16 %v2672
    %v3090 = vunpack.c.l.b16 %v2673
    %v3091 = vunpack.c.h.b16 %v2673
    %v3092 = vunpack.c.l.b16 %v2674
    %v3093 = vunpack.c.h.b16 %v2674
    %v3094 = vunpack.c.l.b16 %v2675
    %v3095 = vunpack.c.h.b16 %v2675
    %v3096 = vunpack.c.l.b16 %v2676
    %v3097 = vunpack.c.h.b16 %v2676
    %v3098 = vunpack.c.l.b16 %v2677
    %v3099 = vunpack.c.h.b16 %v2677
    %v3100 = vunpack.c.l.b16 %v2678
    %v3101 = vunpack.c.h.b16 %v2678
    %v3102 = vunpack.c.l.b16 %v2679
    %v3103 = vunpack.c.h.b16 %v2679
    %v3104 = vunpack.c.l.b16 %v2680
    %v3105 = vunpack.c.h.b16 %v2680
    %v3106 = vunpack.c.l.b16 %v2681
    %v3107 = vunpack.c.h.b16 %v2681
    %v3108 = vunpack.c.l.b16 %v2682
    %v3109 = vunpack.c.h.b16 %v2682
    %v3110 = vunpack.c.l.b16 %v2683
    %v3111 = vunpack.c.h.b16 %v2683
    %v3112 = vunpack.c.l.b16 %v2684
    %v3113 = vunpack.c.h.b16 %v2684
    %v3114 = vunpack.c.l.b16 %v2685
    %v3115 = vunpack.c.h.b16 %v2685
    %v3116 = vunpack.c.l.b16 %v2686
    %v3117 = vunpack.c.h.b16 %v2686
    %v3118 = vunpack.c.l.b16 %v2687
    %v3119 = vunpack.c.h.b16 %v2687
    %v3120 = vunpack.c.l.b16 %v2688
    %v3121 = vunpack.c.h.b16 %v2688
    %v3122 = vunpack.c.l.b16 %v2689
    %v3123 = vunpack.c.h.b16 %v2689
    %v3124 = vunpack.c.l.b16 %v2690
    %v3125 = vunpack.c.h.b16 %v2690
    %v3126 = vunpack.c.l.b16 %v2691
    %v3127 = vunpack.c.h.b16 %v2691
    %v3128 = vunpack.c.l.b16 %v2692
    %v3129 = vunpack.c.h.b16 %v2692
    %v3130 = vunpack.c.l.b16 %v2693
    %v3131 = vunpack.c.h.b16 %v2693
    %v3132 = vunpack.c.l.b16 %v2694
    %v3133 = vunpack.c.h.b16 %v2694
    %v3134 = vunpack.c.l.b16 %v2695
    %v3135 = vunpack.c.h.b16 %v2695
    %v3136 = vunpack.c.l.b16 %v2696
    %v3137 = vunpack.c.h.b16 %v2696
    %v3138 = vunpack.c.l.b16 %v2697
    %v3139 = vunpack.c.h.b16 %v2697
    %v3140 = vunpack.c.l.b16 %v2698
    %v3141 = vunpack.c.h.b16 %v2698
    %v3142 = vunpack.c.l.b16 %v2699
    %v3143 = vunpack.c.h.b16 %v2699
    %v3144 = vunpack.c.l.b16 %v2700
    %v3145 = vunpack.c.h.b16 %v2700
    %v3146 = vunpack.c.l.b16 %v2701
    %v3147 = vunpack.c.h.b16 %v2701
    %v3148 = vunpack.c.l.b16 %v2702
    %v3149 = vunpack.c.h.b16 %v2702
    %v3150 = vunpack.c.l.b16 %v2703
    %v3151 = vunpack.c.h.b16 %v2703
    %v3152 = vunpack.c.l.b16 %v2704
    %v3153 = vunpack.c.h.b16 %v2704
    %v3154 = vunpack.c.l.b16 %v2705
    %v3155 = vunpack.c.h.b16 %v2705
    %v3156 = vunpack.c.l.b16 %v2706
    %v3157 = vunpack.c.h.b16 %v2706
    %v3158 = vunpack.c.l.b16 %v2707
    %v3159 = vunpack.c.h.b16 %v2707
    %v3160 = vunpack.c.l.b16 %v2708
    %v3161 = vunpack.c.h.b16 %v2708
    %v3162 = vunpack.c.l.b16 %v2709
    %v3163 = vunpack.c.h.b16 %v2709
    %v3164 = vunpack.c.l.b16 %v2710
    %v3165 = vunpack.c.h.b16 %v2710
    %v3166 = vunpack.c.l.b16 %v2711
    %v3167 = vunpack.c.h.b16 %v2711
    %v3168 = vunpack.c.l.b16 %v2712
    %v3169 = vunpack.c.h.b16 %v2712
    %v3170 = vunpack.c.l.b16 %v2713
    %v3171 = vunpack.c.h.b16 %v2713
    %v3172 = vunpack.c.l.b16 %v2714
    %v3173 = vunpack.c.h.b16 %v2714
    %v3174 = vunpack.c.l.b16 %v2715
    %v3175 = vunpack.c.h.b16 %v2715
    %v3176 = vunpack.c.l.b16 %v2716
    %v3177 = vunpack.c.h.b16 %v2716
    %v3178 = vunpack.c.l.b16 %v2717
    %v3179 = vunpack.c.h.b16 %v2717
    %v3180 = vunpack.c.l.b16 %v2718
    %v3181 = vunpack.c.h.b16 %v2718
    %v3182 = vunpack.c.l.b16 %v2719
    %v3183 = vunpack.c.h.b16 %v2719
    %v3184 = vunpack.c.l.b16 %v2720
    %v3185 = vunpack.c.h.b16 %v2720
    %v3186 = vunpack.c.l.b16 %v2721
    %v3187 = vunpack.c.h.b16 %v2721
    %v3188 = vunpack.c.l.b16 %v2722
    %v3189 = vunpack.c.h.b16 %v2722
    %v3190 = vunpack.c.l.b16 %v2723
    %v3191 = vunpack.c.h.b16 %v2723
    %v3192 = vunpack.c.l.b16 %v2724
    %v3193 = vunpack.c.h.b16 %v2724
    %v3194 = vunpack.c.l.b16 %v2725
    %v3195 = vunpack.c.h.b16 %v2725
    %v3196 = vunpack.c.l.b16 %v2726
    %v3197 = vunpack.c.h.b16 %v2726
    %v3198 = vunpack.c.l.b16 %v2727
    %v3199 = vunpack.c.h.b16 %v2727
    %v3200 = vunpack.c.l.b16 %v2728
    %v3201 = vunpack.c.h.b16 %v2728
    %v3202 = vunpack.c.l.b16 %v2729
    %v3203 = vunpack.c.h.b16 %v2729
    %v3204 = vunpack.c.l.b16 %v2730
    %v3205 = vunpack.c.h.b16 %v2730
    %v3206 = vunpack.c.l.b16 %v2731
    %v3207 = vunpack.c.h.b16 %v2731
    %v3208 = vunpack.c.l.b16 %v2732
    %v3209 = vunpack.c.h.b16 %v2732
    %v3210 = vunpack.c.l.b16 %v2733
    %v3211 = vunpack.c.h.b16 %v2733
    %v3212 = vunpack.c.l.b16 %v2734
    %v3213 = vunpack.c.h.b16 %v2734
    %v3214 = vunpack.c.l.b16 %v2735
    %v3215 = vunpack.c.h.b16 %v2735
    %v3216 = vpack.c.b16 %v2906, %v2896
    %v3217 = vpack.c.b16 %v2907, %v2897
    %v3218 = vpack.c.b16 %v2908, %v2898
    %v3219 = vpack.c.b16 %v2909, %v2899
    %v3220 = vpack.c.b16 %v2910, %v2900
    %v3221 = vpack.c.b16 %v2911, %v2901
    %v3222 = vpack.c.b16 %v2912, %v2902
    %v3223 = vpack.c.b16 %v2913, %v2903
    %v3224 = vpack.c.b16 %v2914, %v2904
    %v3225 = vpack.c.b16 %v2915, %v2905
    %v3226 = vpack.c.b16 %v2926, %v2916
    %v3227 = vpack.c.b16 %v2927, %v2917
    %v3228 = vpack.c.b16 %v2928, %v2918
    %v3229 = vpack.c.b16 %v2929, %v2919
    %v3230 = vpack.c.b16 %v2930, %v2920
    %v3231 = vpack.c.b16 %v2931, %v2921
    %v3232 = vpack.c.b16 %v2932, %v2922
    %v3233 = vpack.c.b16 %v2933, %v2923
    %v3234 = vpack.c.b16 %v2934, %v2924
    %v3235 = vpack.c.b16 %v2935, %v2925
    %v3236 = vpack.c.b16 %v2946, %v2936
    %v3237 = vpack.c.b16 %v2947, %v2937
    %v3238 = vpack.c.b16 %v2948, %v2938
    %v3239 = vpack.c.b16 %v2949, %v2939
    %v3240 = vpack.c.b16 %v2950, %v2940
    %v3241 = vpack.c.b16 %v2951, %v2941
    %v3242 = vpack.c.b16 %v2952, %v2942
    %v3243 = vpack.c.b16 %v2953, %v2943
    %v3244 = vpack.c.b16 %v2954, %v2944
    %v3245 = vpack.c.b16 %v2955, %v2945
    %v3246 = vpack.c.b16 %v2966, %v2956
    %v3247 = vpack.c.b16 %v2967, %v2957
    %v3248 = vpack.c.b16 %v2968, %v2958
    %v3249 = vpack.c.b16 %v2969, %v2959
    %v3250 = vpack.c.b16 %v2970, %v2960
    %v3251 = vpack.c.b16 %v2971, %v2961
    %v3252 = vpack.c.b16 %v2972, %v2962
    %v3253 = vpack.c.b16 %v2973, %v2963
    %v3254 = vpack.c.b16 %v2974, %v2964
    %v3255 = vpack.c.b16 %v2975, %v2965
    %v3256 = vpack.c.b16 %v2986, %v2976
    %v3257 = vpack.c.b16 %v2987, %v2977
    %v3258 = vpack.c.b16 %v2988, %v2978
    %v3259 = vpack.c.b16 %v2989, %v2979
    %v3260 = vpack.c.b16 %v2990, %v2980
    %v3261 = vpack.c.b16 %v2991, %v2981
    %v3262 = vpack.c.b16 %v2992, %v2982
    %v3263 = vpack.c.b16 %v2993, %v2983
    %v3264 = vpack.c.b16 %v2994, %v2984
    %v3265 = vpack.c.b16 %v2995, %v2985
    %v3266 = vpack.c.b16 %v3006, %v2996
    %v3267 = vpack.c.b16 %v3007, %v2997
    %v3268 = vpack.c.b16 %v3008, %v2998
    %v3269 = vpack.c.b16 %v3009, %v2999
    %v3270 = vpack.c.b16 %v3010, %v3000
    %v3271 = vpack.c.b16 %v3011, %v3001
    %v3272 = vpack.c.b16 %v3012, %v3002
    %v3273 = vpack.c.b16 %v3013, %v3003
    %v3274 = vpack.c.b16 %v3014, %v3004
    %v3275 = vpack.c.b16 %v3015, %v3005
    %v3276 = vpack.c.b16 %v3026, %v3016
    %v3277 = vpack.c.b16 %v3027, %v3017
    %v3278 = vpack.c.b16 %v3028, %v3018
    %v3279 = vpack.c.b16 %v3029, %v3019
    %v3280 = vpack.c.b16 %v3030, %v3020
    %v3281 = vpack.c.b16 %v3031, %v3021
    %v3282 = vpack.c.b16 %v3032, %v3022
    %v3283 = vpack.c.b16 %v3033, %v3023
    %v3284 = vpack.c.b16 %v3034, %v3024
    %v3285 = vpack.c.b16 %v3035, %v3025
    %v3286 = vpack.c.b16 %v3046, %v3036
    %v3287 = vpack.c.b16 %v3047, %v3037
    %v3288 = vpack.c.b16 %v3048, %v3038
    %v3289 = vpack.c.b16 %v3049, %v3039
    %v3290 = vpack.c.b16 %v3050, %v3040
    %v3291 = vpack.c.b16 %v3051, %v3041
    %v3292 = vpack.c.b16 %v3052, %v3042
    %v3293 = vpack.c.b16 %v3053, %v3043
    %v3294 = vpack.c.b16 %v3054, %v3044
    %v3295 = vpack.c.b16 %v3055, %v3045
    %v3296 = vpack.c.b16 %v3066, %v3056
    %v3297 = vpack.c.b16 %v3067, %v3057
    %v3298 = vpack.c.b16 %v3068, %v3058
    %v3299 = vpack.c.b16 %v3069, %v3059
    %v3300 = vpack.c.b16 %v3070, %v3060
    %v3301 = vpack.c.b16 %v3071, %v3061
    %v3302 = vpack.c.b16 %v3072, %v3062
    %v3303 = vpack.c.b16 %v3073, %v3063
    %v3304 = vpack.c.b16 %v3074, %v3064
    %v3305 = vpack.c.b16 %v3075, %v3065
    %v3306 = vpack.c.b16 %v3086, %v3076
    %v3307 = vpack.c.b16 %v3087, %v3077
    %v3308 = vpack.c.b16 %v3088, %v3078
    %v3309 = vpack.c.b16 %v3089, %v3079
    %v3310 = vpack.c.b16 %v3090, %v3080
    %v3311 = vpack.c.b16 %v3091, %v3081
    %v3312 = vpack.c.b16 %v3092, %v3082
    %v3313 = vpack.c.b16 %v3093, %v3083
    %v3314 = vpack.c.b16 %v3094, %v3084
    %v3315 = vpack.c.b16 %v3095, %v3085
    %v3316 = vpack.c.b16 %v3106, %v3096
    %v3317 = vpack.c.b16 %v3107, %v3097
    %v3318 = vpack.c.b16 %v3108, %v3098
    %v3319 = vpack.c.b16 %v3109, %v3099
    %v3320 = vpack.c.b16 %v3110, %v3100
    %v3321 = vpack.c.b16 %v3111, %v3101
    %v3322 = vpack.c.b16 %v3112, %v3102
    %v3323 = vpack.c.b16 %v3113, %v3103
    %v3324 = vpack.c.b16 %v3114, %v3104
    %v3325 = vpack.c.b16 %v3115, %v3105
    %v3326 = vpack.c.b16 %v3126, %v3116
    %v3327 = vpack.c.b16 %v3127, %v3117
    %v3328 = vpack.c.b16 %v3128, %v3118
    %v3329 = vpack.c.b16 %v3129, %v3119
    %v3330 = vpack.c.b16 %v3130, %v3120
    %v3331 = vpack.c.b16 %v3131, %v3121
    %v3332 = vpack.c.b16 %v3132, %v3122
    %v3333 = vpack.c.b16 %v3133, %v3123
    %v3334 = vpack.c.b16 %v3134, %v3124
    %v3335 = vpack.c.b16 %v3135, %v3125
    %v3336 = vpack.c.b16 %v3146, %v3136
    %v3337 = vpack.c.b16 %v3147, %v3137
    %v3338 = vpack.c.b16 %v3148, %v3138
    %v3339 = vpack.c.b16 %v3149, %v3139
    %v3340 = vpack.c.b16 %v3150, %v3140
    %v3341 = vpack.c.b16 %v3151, %v3141
    %v3342 = vpack.c.b16 %v3152, %v3142
    %v3343 = vpack.c.b16 %v3153, %v3143
    %v3344 = vpack.c.b16 %v3154, %v3144
    %v3345 = vpack.c.b16 %v3155, %v3145
    %v3346 = vpack.c.b16 %v3166, %v3156
    %v3347 = vpack.c.b16 %v3167, %v3157
    %v3348 = vpack.c.b16 %v3168, %v3158
    %v3349 = vpack.c.b16 %v3169, %v3159
    %v3350 = vpack.c.b16 %v3170, %v3160
    %v3351 = vpack.c.b16 %v3171, %v3161
    %v3352 = vpack.c.b16 %v3172, %v3162
    %v3353 = vpack.c.b16 %v3173, %v3163
    %v3354 = vpack.c.b16 %v3174, %v3164
    %v3355 = vpack.c.b16 %v3175, %v3165
    %v3356 = vpack.c.b16 %v3186, %v3176
    %v3357 = vpack.c.b16 %v3187, %v3177
    %v3358 = vpack.c.b16 %v3188, %v3178
    %v3359 = vpack.c.b16 %v3189, %v3179
    %v3360 = vpack.c.b16 %v3190, %v3180
    %v3361 = vpack.c.b16 %v3191, %v3181
    %v3362 = vpack.c.b16 %v3192, %v3182
    %v3363 = vpack.c.b16 %v3193, %v3183
    %v3364 = vpack.c.b16 %v3194, %v3184
    %v3365 = vpack.c.b16 %v3195, %v3185
    %v3366 = vpack.c.b16 %v3206, %v3196
    %v3367 = vpack.c.b16 %v3207, %v3197
    %v3368 = vpack.c.b16 %v3208, %v3198
    %v3369 = vpack.c.b16 %v3209, %v3199
    %v3370 = vpack.c.b16 %v3210, %v3200
    %v3371 = vpack.c.b16 %v3211, %v3201
    %v3372 = vpack.c.b16 %v3212, %v3202
    %v3373 = vpack.c.b16 %v3213, %v3203
    %v3374 = vpack.c.b16 %v3214, %v3204
    %v3375 = vpack.c.b16 %v3215, %v3205
    %3536 = vmatpush.bf16.msra.mxu0 %v3286
    %3537 = vmatpush.bf16.msra.mxu0 %v3276
    %3538 = vmatpush.bf16.msra.mxu0 %v3266
    %3539 = vmatpush.bf16.msra.mxu0 %v3256
    %3540 = vmatpush.bf16.msra.mxu0 %v3246
    %3541 = vmatpush.bf16.msra.mxu0 %v3236
    %3542 = vmatpush.bf16.msra.mxu0 %v3226
    %3543 = vmatpush.bf16.msra.mxu0 %v3216
    %3544 = vmatmul.bf16.gmra.mxu0 0
    %v3545 = vpop.f32.mrf.mxu0
    %v3546 = vadd.f32 0.0, %v3545
    %v3547 = vpop.f32.mrf.mxu0
    %3548 = vdwg.mxu0
    %3549 = vmatpush.bf16.msra.mxu0 %v3366
    %3550 = vmatpush.bf16.msra.mxu0 %v3356
    %3551 = vmatpush.bf16.msra.mxu0 %v3346
    %3552 = vmatpush.bf16.msra.mxu0 %v3336
    %3553 = vmatpush.bf16.msra.mxu0 %v3326
    %3554 = vmatpush.bf16.msra.mxu0 %v3316
    %3555 = vmatpush.bf16.msra.mxu0 %v3306
    %3556 = vmatpush.bf16.msra.mxu0 %v3296
    %3557 = vmatmul.bf16.gmra.mxu0 0
    %v3558 = vpop.f32.mrf.mxu0
    %v3559 = vadd.f32 %v3546, %v3558
    %v3560 = vpop.f32.mrf.mxu0
    %3561 = vdwg.mxu0
    %3562 = vmatpush.bf16.msra.mxu0 %v3287
    %3563 = vmatpush.bf16.msra.mxu0 %v3277
    %3564 = vmatpush.bf16.msra.mxu0 %v3267
    %3565 = vmatpush.bf16.msra.mxu0 %v3257
    %3566 = vmatpush.bf16.msra.mxu0 %v3247
    %3567 = vmatpush.bf16.msra.mxu0 %v3237
    %3568 = vmatpush.bf16.msra.mxu0 %v3227
    %3569 = vmatpush.bf16.msra.mxu0 %v3217
    %3570 = vmatmul.bf16.gmra.mxu0 0
    %v3571 = vpop.f32.mrf.mxu0
    %v3572 = vadd.f32 0.0, %v3571
    %v3573 = vpop.f32.mrf.mxu0
    %3574 = vdwg.mxu0
    %3575 = vmatpush.bf16.msra.mxu0 %v3367
    %3576 = vmatpush.bf16.msra.mxu0 %v3357
    %3577 = vmatpush.bf16.msra.mxu0 %v3347
    %3578 = vmatpush.bf16.msra.mxu0 %v3337
    %3579 = vmatpush.bf16.msra.mxu0 %v3327
    %3580 = vmatpush.bf16.msra.mxu0 %v3317
    %3581 = vmatpush.bf16.msra.mxu0 %v3307
    %3582 = vmatpush.bf16.msra.mxu0 %v3297
    %3583 = vmatmul.bf16.gmra.mxu0 0
    %v3584 = vpop.f32.mrf.mxu0
    %v3585 = vadd.f32 %v3572, %v3584
    %v3586 = vpop.f32.mrf.mxu0
    %3587 = vdwg.mxu0
    %3588 = vmatpush.bf16.msra.mxu0 %v3288
    %3589 = vmatpush.bf16.msra.mxu0 %v3278
    %3590 = vmatpush.bf16.msra.mxu0 %v3268
    %3591 = vmatpush.bf16.msra.mxu0 %v3258
    %3592 = vmatpush.bf16.msra.mxu0 %v3248
    %3593 = vmatpush.bf16.msra.mxu0 %v3238
    %3594 = vmatpush.bf16.msra.mxu0 %v3228
    %3595 = vmatpush.bf16.msra.mxu0 %v3218
    %3596 = vmatmul.bf16.gmra.mxu0 0
    %v3597 = vpop.f32.mrf.mxu0
    %v3598 = vadd.f32 0.0, %v3597
    %v3599 = vpop.f32.mrf.mxu0
    %3600 = vdwg.mxu0
    %3601 = vmatpush.bf16.msra.mxu0 %v3368
    %3602 = vmatpush.bf16.msra.mxu0 %v3358
    %3603 = vmatpush.bf16.msra.mxu0 %v3348
    %3604 = vmatpush.bf16.msra.mxu0 %v3338
    %3605 = vmatpush.bf16.msra.mxu0 %v3328
    %3606 = vmatpush.bf16.msra.mxu0 %v3318
    %3607 = vmatpush.bf16.msra.mxu0 %v3308
    %3608 = vmatpush.bf16.msra.mxu0 %v3298
    %3609 = vmatmul.bf16.gmra.mxu0 0
    %v3610 = vpop.f32.mrf.mxu0
    %v3611 = vadd.f32 %v3598, %v3610
    %v3612 = vpop.f32.mrf.mxu0
    %3613 = vdwg.mxu0
    %3614 = vmatpush.bf16.msra.mxu0 %v3289
    %3615 = vmatpush.bf16.msra.mxu0 %v3279
    %3616 = vmatpush.bf16.msra.mxu0 %v3269
    %3617 = vmatpush.bf16.msra.mxu0 %v3259
    %3618 = vmatpush.bf16.msra.mxu0 %v3249
    %3619 = vmatpush.bf16.msra.mxu0 %v3239
    %3620 = vmatpush.bf16.msra.mxu0 %v3229
    %3621 = vmatpush.bf16.msra.mxu0 %v3219
    %3622 = vmatmul.bf16.gmra.mxu0 0
    %v3623 = vpop.f32.mrf.mxu0
    %v3624 = vadd.f32 0.0, %v3623
    %v3625 = vpop.f32.mrf.mxu0
    %3626 = vdwg.mxu0
    %3627 = vmatpush.bf16.msra.mxu0 %v3369
    %3628 = vmatpush.bf16.msra.mxu0 %v3359
    %3629 = vmatpush.bf16.msra.mxu0 %v3349
    %3630 = vmatpush.bf16.msra.mxu0 %v3339
    %3631 = vmatpush.bf16.msra.mxu0 %v3329
    %3632 = vmatpush.bf16.msra.mxu0 %v3319
    %3633 = vmatpush.bf16.msra.mxu0 %v3309
    %3634 = vmatpush.bf16.msra.mxu0 %v3299
    %3635 = vmatmul.bf16.gmra.mxu0 0
    %v3636 = vpop.f32.mrf.mxu0
    %v3637 = vadd.f32 %v3624, %v3636
    %v3638 = vpop.f32.mrf.mxu0
    %3639 = vdwg.mxu0
    %3640 = vmatpush.bf16.msra.mxu0 %v3290
    %3641 = vmatpush.bf16.msra.mxu0 %v3280
    %3642 = vmatpush.bf16.msra.mxu0 %v3270
    %3643 = vmatpush.bf16.msra.mxu0 %v3260
    %3644 = vmatpush.bf16.msra.mxu0 %v3250
    %3645 = vmatpush.bf16.msra.mxu0 %v3240
    %3646 = vmatpush.bf16.msra.mxu0 %v3230
    %3647 = vmatpush.bf16.msra.mxu0 %v3220
    %3648 = vmatmul.bf16.gmra.mxu0 0
    %v3649 = vpop.f32.mrf.mxu0
    %v3650 = vadd.f32 0.0, %v3649
    %v3651 = vpop.f32.mrf.mxu0
    %3652 = vdwg.mxu0
    %3653 = vmatpush.bf16.msra.mxu0 %v3370
    %3654 = vmatpush.bf16.msra.mxu0 %v3360
    %3655 = vmatpush.bf16.msra.mxu0 %v3350
    %3656 = vmatpush.bf16.msra.mxu0 %v3340
    %3657 = vmatpush.bf16.msra.mxu0 %v3330
    %3658 = vmatpush.bf16.msra.mxu0 %v3320
    %3659 = vmatpush.bf16.msra.mxu0 %v3310
    %3660 = vmatpush.bf16.msra.mxu0 %v3300
    %3661 = vmatmul.bf16.gmra.mxu0 0
    %v3662 = vpop.f32.mrf.mxu0
    %v3663 = vadd.f32 %v3650, %v3662
    %v3664 = vpop.f32.mrf.mxu0
    %3665 = vdwg.mxu0
    %3666 = vmatpush.bf16.msra.mxu0 %v3291
    %3667 = vmatpush.bf16.msra.mxu0 %v3281
    %3668 = vmatpush.bf16.msra.mxu0 %v3271
    %3669 = vmatpush.bf16.msra.mxu0 %v3261
    %3670 = vmatpush.bf16.msra.mxu0 %v3251
    %3671 = vmatpush.bf16.msra.mxu0 %v3241
    %3672 = vmatpush.bf16.msra.mxu0 %v3231
    %3673 = vmatpush.bf16.msra.mxu0 %v3221
    %3674 = vmatmul.bf16.gmra.mxu0 0
    %v3675 = vpop.f32.mrf.mxu0
    %v3676 = vadd.f32 0.0, %v3675
    %v3677 = vpop.f32.mrf.mxu0
    %3678 = vdwg.mxu0
    %3679 = vmatpush.bf16.msra.mxu0 %v3371
    %3680 = vmatpush.bf16.msra.mxu0 %v3361
    %3681 = vmatpush.bf16.msra.mxu0 %v3351
    %3682 = vmatpush.bf16.msra.mxu0 %v3341
    %3683 = vmatpush.bf16.msra.mxu0 %v3331
    %3684 = vmatpush.bf16.msra.mxu0 %v3321
    %3685 = vmatpush.bf16.msra.mxu0 %v3311
    %3686 = vmatpush.bf16.msra.mxu0 %v3301
    %3687 = vmatmul.bf16.gmra.mxu0 0
    %v3688 = vpop.f32.mrf.mxu0
    %v3689 = vadd.f32 %v3676, %v3688
    %v3690 = vpop.f32.mrf.mxu0
    %3691 = vdwg.mxu0
    %3692 = vmatpush.bf16.msra.mxu0 %v3292
    %3693 = vmatpush.bf16.msra.mxu0 %v3282
    %3694 = vmatpush.bf16.msra.mxu0 %v3272
    %3695 = vmatpush.bf16.msra.mxu0 %v3262
    %3696 = vmatpush.bf16.msra.mxu0 %v3252
    %3697 = vmatpush.bf16.msra.mxu0 %v3242
    %3698 = vmatpush.bf16.msra.mxu0 %v3232
    %3699 = vmatpush.bf16.msra.mxu0 %v3222
    %3700 = vmatmul.bf16.gmra.mxu0 0
    %v3701 = vpop.f32.mrf.mxu0
    %v3702 = vadd.f32 0.0, %v3701
    %v3703 = vpop.f32.mrf.mxu0
    %3704 = vdwg.mxu0
    %3705 = vmatpush.bf16.msra.mxu0 %v3372
    %3706 = vmatpush.bf16.msra.mxu0 %v3362
    %3707 = vmatpush.bf16.msra.mxu0 %v3352
    %3708 = vmatpush.bf16.msra.mxu0 %v3342
    %3709 = vmatpush.bf16.msra.mxu0 %v3332
    %3710 = vmatpush.bf16.msra.mxu0 %v3322
    %3711 = vmatpush.bf16.msra.mxu0 %v3312
    %3712 = vmatpush.bf16.msra.mxu0 %v3302
    %3713 = vmatmul.bf16.gmra.mxu0 0
    %v3714 = vpop.f32.mrf.mxu0
    %v3715 = vadd.f32 %v3702, %v3714
    %v3716 = vpop.f32.mrf.mxu0
    %3717 = vdwg.mxu0
    %3718 = vmatpush.bf16.msra.mxu0 %v3293
    %3719 = vmatpush.bf16.msra.mxu0 %v3283
    %3720 = vmatpush.bf16.msra.mxu0 %v3273
    %3721 = vmatpush.bf16.msra.mxu0 %v3263
    %3722 = vmatpush.bf16.msra.mxu0 %v3253
    %3723 = vmatpush.bf16.msra.mxu0 %v3243
    %3724 = vmatpush.bf16.msra.mxu0 %v3233
    %3725 = vmatpush.bf16.msra.mxu0 %v3223
    %3726 = vmatmul.bf16.gmra.mxu0 0
    %v3727 = vpop.f32.mrf.mxu0
    %v3728 = vadd.f32 0.0, %v3727
    %v3729 = vpop.f32.mrf.mxu0
    %3730 = vdwg.mxu0
    %3731 = vmatpush.bf16.msra.mxu0 %v3373
    %3732 = vmatpush.bf16.msra.mxu0 %v3363
    %3733 = vmatpush.bf16.msra.mxu0 %v3353
    %3734 = vmatpush.bf16.msra.mxu0 %v3343
    %3735 = vmatpush.bf16.msra.mxu0 %v3333
    %3736 = vmatpush.bf16.msra.mxu0 %v3323
    %3737 = vmatpush.bf16.msra.mxu0 %v3313
    %3738 = vmatpush.bf16.msra.mxu0 %v3303
    %3739 = vmatmul.bf16.gmra.mxu0 0
    %v3740 = vpop.f32.mrf.mxu0
    %v3741 = vadd.f32 %v3728, %v3740
    %v3742 = vpop.f32.mrf.mxu0
    %3743 = vdwg.mxu0
    %3744 = vmatpush.bf16.msra.mxu0 %v3294
    %3745 = vmatpush.bf16.msra.mxu0 %v3284
    %3746 = vmatpush.bf16.msra.mxu0 %v3274
    %3747 = vmatpush.bf16.msra.mxu0 %v3264
    %3748 = vmatpush.bf16.msra.mxu0 %v3254
    %3749 = vmatpush.bf16.msra.mxu0 %v3244
    %3750 = vmatpush.bf16.msra.mxu0 %v3234
    %3751 = vmatpush.bf16.msra.mxu0 %v3224
    %3752 = vmatmul.bf16.gmra.mxu0 0
    %v3753 = vpop.f32.mrf.mxu0
    %v3754 = vadd.f32 0.0, %v3753
    %v3755 = vpop.f32.mrf.mxu0
    %3756 = vdwg.mxu0
    %3757 = vmatpush.bf16.msra.mxu0 %v3374
    %3758 = vmatpush.bf16.msra.mxu0 %v3364
    %3759 = vmatpush.bf16.msra.mxu0 %v3354
    %3760 = vmatpush.bf16.msra.mxu0 %v3344
    %3761 = vmatpush.bf16.msra.mxu0 %v3334
    %3762 = vmatpush.bf16.msra.mxu0 %v3324
    %3763 = vmatpush.bf16.msra.mxu0 %v3314
    %3764 = vmatpush.bf16.msra.mxu0 %v3304
    %3765 = vmatmul.bf16.gmra.mxu0 0
    %v3766 = vpop.f32.mrf.mxu0
    %v3767 = vadd.f32 %v3754, %v3766
    %v3768 = vpop.f32.mrf.mxu0
    %3769 = vdwg.mxu0
    %3770 = vmatpush.bf16.msra.mxu0 %v3295
    %3771 = vmatpush.bf16.msra.mxu0 %v3285
    %3772 = vmatpush.bf16.msra.mxu0 %v3275
    %3773 = vmatpush.bf16.msra.mxu0 %v3265
    %3774 = vmatpush.bf16.msra.mxu0 %v3255
    %3775 = vmatpush.bf16.msra.mxu0 %v3245
    %3776 = vmatpush.bf16.msra.mxu0 %v3235
    %3777 = vmatpush.bf16.msra.mxu0 %v3225
    %3778 = vmatmul.bf16.gmra.mxu0 0
    %v3779 = vpop.f32.mrf.mxu0
    %v3780 = vadd.f32 0.0, %v3779
    %v3781 = vpop.f32.mrf.mxu0
    %3782 = vdwg.mxu0
    %3783 = vmatpush.bf16.msra.mxu0 %v3375
    %3784 = vmatpush.bf16.msra.mxu0 %v3365
    %3785 = vmatpush.bf16.msra.mxu0 %v3355
    %3786 = vmatpush.bf16.msra.mxu0 %v3345
    %3787 = vmatpush.bf16.msra.mxu0 %v3335
    %3788 = vmatpush.bf16.msra.mxu0 %v3325
    %3789 = vmatpush.bf16.msra.mxu0 %v3315
    %3790 = vmatpush.bf16.msra.mxu0 %v3305
    %3791 = vmatmul.bf16.gmra.mxu0 0
    %v3792 = vpop.f32.mrf.mxu0
    %v3793 = vadd.f32 %v3780, %v3792
    %v3794 = vpop.f32.mrf.mxu0
    %3795 = vdwg.mxu0
    %v3796 = vadd.f32 %v3559, %v2542
    %v3797 = vadd.f32 %v3585, %v2543
    %v3798 = vadd.f32 %v3611, %v2544
    %v3799 = vadd.f32 %v3637, %v2545
    %v3800 = vadd.f32 %v3663, %v2546
    %v3801 = vadd.f32 %v3689, %v2547
    %v3802 = vadd.f32 %v3715, %v2548
    %v3803 = vadd.f32 %v3741, %v2549
    %v3804 = vld [vmem:[#allocation16] sm:$0x3]
    %v3806 = vperm.slane %v3804, 0
    %v3807 = vperm.slane %v3804, 1
    %v3810 = vadd.f32 %v3767, %v3806
    %v3811 = vadd.f32 %v3793, %v3807
    %v3812 = vmax.f32 %v3811, 0.0
    %vm3813 = vcmp.ne.f32.partialorder %v3811, %v3811
    %v3814 = vadd.f32 %v3811, 0.0
    %v3815 = vand.u32 2147483647, %v3811
    %v3816 = vsub.f32 0.0, %v3815
    %v3817 = vmul.f32 %v3816, 1.442695
    %v3818 = vpow.pop %v3817
    %v3819 = vadd.f32 %v3818, 1.0
    %v3820 = vlog2.pop %v3819
    %v3821 = vmul.f32 %v3820, 0.6931472
    %v3822 = vmul.f32 -0.5, %v3818
    %v3823 = vadd.f32 %v3822, 1.0
    %v3824 = vmul.f32 %v3823, %v3818
    %v3825 = vand.u32 2147483647, %v3818
    %vm3826 = vcmp.lt.f32.partialorder %v3825, 0.0004427343
    %v3827 = vsel %vm3826, %v3824, %v3821
    %v3828 = vadd.f32 %v3812, %v3827
    %v3829 = vsel %vm3813, %v3814, %v3828
    %v3830 = vxor.u32 %v3796, 2147483648
    %v3831 = vxor.u32 %v3797, 2147483648
    %v3832 = vmul.f32 %v3830, 1.442695
    %v3833 = vpow.pop %v3832
    %v3834 = vmul.f32 %v3831, 1.442695
    %v3835 = vpow.pop %v3834
    %v3836 = vadd.f32 %v3833, 1.0
    %v3837 = vadd.f32 %v3835, 1.0
    %v3838 = vrcp.pop %v3836
    %v3839 = vmul.f32 %v3836, %v3838
    %v3840 = vsub.f32 1.0, %v3839
    %v3841 = vmul.f32 %v3838, %v3840
    %v3842 = vadd.f32 %v3838, %v3841
    %vm3843 = vweird.f32 %v3836
    %vm3844 = vweird.f32 %v3838
    %vm3845 = vmor %vm3843, %vm3844
    %v3846 = vsel %vm3845, %v3838, %v3842
    %v3847 = vand.u32 2147483647, %v3836
    %vm3848 = vcmp.eq.f32.partialorder %v3847, 8.507059e+37
    %v3849 = vand.u32 %v3836, 2147483648
    %v3850 = vor.u32 1.1754944e-38, %v3849
    %v3851 = vsel %vm3848, %v3850, %v3846
    %v3852 = vmul.f32 1.0, %v3851
    %v3853 = vrcp.pop %v3837
    %v3854 = vmul.f32 %v3837, %v3853
    %v3855 = vsub.f32 1.0, %v3854
    %v3856 = vmul.f32 %v3853, %v3855
    %v3857 = vadd.f32 %v3853, %v3856
    %vm3858 = vweird.f32 %v3837
    %vm3859 = vweird.f32 %v3853
    %vm3860 = vmor %vm3858, %vm3859
    %v3861 = vsel %vm3860, %v3853, %v3857
    %v3862 = vand.u32 2147483647, %v3837
    %vm3863 = vcmp.eq.f32.partialorder %v3862, 8.507059e+37
    %v3864 = vand.u32 %v3837, 2147483648
    %v3865 = vor.u32 1.1754944e-38, %v3864
    %v3866 = vsel %vm3863, %v3865, %v3861
    %v3867 = vmul.f32 1.0, %v3866
    %v3868 = vxor.u32 %v3798, 2147483648
    %v3869 = vxor.u32 %v3799, 2147483648
    %v3870 = vmul.f32 %v3868, 1.442695
    %v3871 = vpow.pop %v3870
    %v3872 = vmul.f32 %v3869, 1.442695
    %v3873 = vpow.pop %v3872
    %v3874 = vadd.f32 %v3871, 1.0
    %v3875 = vadd.f32 %v3873, 1.0
    %v3876 = vrcp.pop %v3874
    %v3877 = vmul.f32 %v3874, %v3876
    %v3878 = vsub.f32 1.0, %v3877
    %v3879 = vmul.f32 %v3876, %v3878
    %v3880 = vadd.f32 %v3876, %v3879
    %vm3881 = vweird.f32 %v3874
    %vm3882 = vweird.f32 %v3876
    %vm3883 = vmor %vm3881, %vm3882
    %v3884 = vsel %vm3883, %v3876, %v3880
    %v3885 = vand.u32 2147483647, %v3874
    %vm3886 = vcmp.eq.f32.partialorder %v3885, 8.507059e+37
    %v3887 = vand.u32 %v3874, 2147483648
    %v3888 = vor.u32 1.1754944e-38, %v3887
    %v3889 = vsel %vm3886, %v3888, %v3884
    %v3890 = vmul.f32 1.0, %v3889
    %v3891 = vrcp.pop %v3875
    %v3892 = vmul.f32 %v3875, %v3891
    %v3893 = vsub.f32 1.0, %v3892
    %v3894 = vmul.f32 %v3891, %v3893
    %v3895 = vadd.f32 %v3891, %v3894
    %vm3896 = vweird.f32 %v3875
    %vm3897 = vweird.f32 %v3891
    %vm3898 = vmor %vm3896, %vm3897
    %v3899 = vsel %vm3898, %v3891, %v3895
    %v3900 = vand.u32 2147483647, %v3875
    %vm3901 = vcmp.eq.f32.partialorder %v3900, 8.507059e+37
    %v3902 = vand.u32 %v3875, 2147483648
    %v3903 = vor.u32 1.1754944e-38, %v3902
    %v3904 = vsel %vm3901, %v3903, %v3899
    %v3905 = vmul.f32 1.0, %v3904
    %v3906 = vxor.u32 %v3800, 2147483648
    %v3907 = vxor.u32 %v3801, 2147483648
    %v3908 = vmul.f32 %v3906, 1.442695
    %v3909 = vpow.pop %v3908
    %v3910 = vmul.f32 %v3907, 1.442695
    %v3911 = vpow.pop %v3910
    %v3912 = vadd.f32 %v3909, 1.0
    %v3913 = vadd.f32 %v3911, 1.0
    %v3914 = vrcp.pop %v3912
    %v3915 = vmul.f32 %v3912, %v3914
    %v3916 = vsub.f32 1.0, %v3915
    %v3917 = vmul.f32 %v3914, %v3916
    %v3918 = vadd.f32 %v3914, %v3917
    %vm3919 = vweird.f32 %v3912
    %vm3920 = vweird.f32 %v3914
    %vm3921 = vmor %vm3919, %vm3920
    %v3922 = vsel %vm3921, %v3914, %v3918
    %v3923 = vand.u32 2147483647, %v3912
    %vm3924 = vcmp.eq.f32.partialorder %v3923, 8.507059e+37
    %v3925 = vand.u32 %v3912, 2147483648
    %v3926 = vor.u32 1.1754944e-38, %v3925
    %v3927 = vsel %vm3924, %v3926, %v3922
    %v3928 = vmul.f32 1.0, %v3927
    %v3929 = vrcp.pop %v3913
    %v3930 = vmul.f32 %v3913, %v3929
    %v3931 = vsub.f32 1.0, %v3930
    %v3932 = vmul.f32 %v3929, %v3931
    %v3933 = vadd.f32 %v3929, %v3932
    %vm3934 = vweird.f32 %v3913
    %vm3935 = vweird.f32 %v3929
    %vm3936 = vmor %vm3934, %vm3935
    %v3937 = vsel %vm3936, %v3929, %v3933
    %v3938 = vand.u32 2147483647, %v3913
    %vm3939 = vcmp.eq.f32.partialorder %v3938, 8.507059e+37
    %v3940 = vand.u32 %v3913, 2147483648
    %v3941 = vor.u32 1.1754944e-38, %v3940
    %v3942 = vsel %vm3939, %v3941, %v3937
    %v3943 = vmul.f32 1.0, %v3942
    %v3944 = vtanh.pop %v3802
    %v3945 = vtanh.pop %v3803
    %v3946 = vmul.f32 %v3852, 0.0
    %v3947 = vmul.f32 %v3867, 0.0
    %v3948 = vmul.f32 %v3890, %v3944
    %v3949 = vmul.f32 %v3905, %v3945
    %v3950 = vadd.f32 %v3946, %v3948
    %v3951 = vadd.f32 %v3947, %v3949
    %v3952 = vtanh.pop %v3950
    %v3953 = vtanh.pop %v3951
    %v3954 = vmul.f32 %v3928, %v3952
    %v3955 = vmul.f32 %v3943, %v3953
    %v3956 = vpack.c.bf16 %v3954, %v3954
    %v3957 = vpack.c.bf16 %v3955, %v3955
    %v3958 = vld [vmem:[#allocation11] sm:$0xff]
    %v3959 = vld [vmem:[#allocation11 + $0x8] sm:$0xff]
    %v3960 = vld [vmem:[#allocation11 + $0x10] sm:$0xff]
    %v3961 = vld [vmem:[#allocation11 + $0x18] sm:$0xff]
    %v3962 = vld [vmem:[#allocation11 + $0x20] sm:$0xff]
    %v3963 = vld [vmem:[#allocation11 + $0x28] sm:$0xff]
    %v3964 = vld [vmem:[#allocation11 + $0x30] sm:$0xff]
    %v3965 = vld [vmem:[#allocation11 + $0x38] sm:$0xff]
    %v3966 = vld [vmem:[#allocation11 + $0x40] sm:$0xff]
    %v3967 = vld [vmem:[#allocation11 + $0x48] sm:$0xff]
    %v3968 = vld [vmem:[#allocation11 + $0x50] sm:$0xff]
    %v3969 = vld [vmem:[#allocation11 + $0x58] sm:$0xff]
    %v3970 = vld [vmem:[#allocation11 + $0x60] sm:$0xff]
    %v3971 = vld [vmem:[#allocation11 + $0x68] sm:$0xff]
    %v3972 = vld [vmem:[#allocation11 + $0x70] sm:$0xff]
    %v3973 = vld [vmem:[#allocation11 + $0x78] sm:$0xff]
    %v3974 = vld [vmem:[#allocation11 + $0x80] sm:$0xff]
    %v3975 = vld [vmem:[#allocation11 + $0x88] sm:$0xff]
    %v3976 = vld [vmem:[#allocation11 + $0x90] sm:$0xff]
    %v3977 = vld [vmem:[#allocation11 + $0x98] sm:$0xff]
    %v3978 = vld [vmem:[#allocation11 + $0xa0] sm:$0xff]
    %v3979 = vld [vmem:[#allocation11 + $0xa8] sm:$0xff]
    %v3980 = vld [vmem:[#allocation11 + $0xb0] sm:$0xff]
    %v3981 = vld [vmem:[#allocation11 + $0xb8] sm:$0xff]
    %v3982 = vld [vmem:[#allocation11 + $0xc0] sm:$0xff]
    %v3983 = vld [vmem:[#allocation11 + $0xc8] sm:$0xff]
    %v3984 = vld [vmem:[#allocation11 + $0xd0] sm:$0xff]
    %v3985 = vld [vmem:[#allocation11 + $0xd8] sm:$0xff]
    %v3986 = vld [vmem:[#allocation11 + $0xe0] sm:$0xff]
    %v3987 = vld [vmem:[#allocation11 + $0xe8] sm:$0xff]
    %v3988 = vld [vmem:[#allocation11 + $0xf0] sm:$0xff]
    %v3989 = vld [vmem:[#allocation11 + $0xf8] sm:$0xff]
    %v3990 = vld [vmem:[#allocation17] sm:$0x3]
    %v3992 = vperm.slane %v3990, 0
    %v3993 = vperm.slane %v3990, 1
    %v4028 = vunpack.c.l.b16 %v3958
    %v4029 = vunpack.c.h.b16 %v3958
    %v4030 = vunpack.c.l.b16 %v3959
    %v4031 = vunpack.c.h.b16 %v3959
    %v4032 = vunpack.c.l.b16 %v3960
    %v4033 = vunpack.c.h.b16 %v3960
    %v4034 = vunpack.c.l.b16 %v3961
    %v4035 = vunpack.c.h.b16 %v3961
    %v4036 = vunpack.c.l.b16 %v3962
    %v4037 = vunpack.c.h.b16 %v3962
    %v4038 = vunpack.c.l.b16 %v3963
    %v4039 = vunpack.c.h.b16 %v3963
    %v4040 = vunpack.c.l.b16 %v3964
    %v4041 = vunpack.c.h.b16 %v3964
    %v4042 = vunpack.c.l.b16 %v3965
    %v4043 = vunpack.c.h.b16 %v3965
    %v4044 = vunpack.c.l.b16 %v3966
    %v4045 = vunpack.c.h.b16 %v3966
    %v4046 = vunpack.c.l.b16 %v3967
    %v4047 = vunpack.c.h.b16 %v3967
    %v4048 = vunpack.c.l.b16 %v3968
    %v4049 = vunpack.c.h.b16 %v3968
    %v4050 = vunpack.c.l.b16 %v3969
    %v4051 = vunpack.c.h.b16 %v3969
    %v4052 = vunpack.c.l.b16 %v3970
    %v4053 = vunpack.c.h.b16 %v3970
    %v4054 = vunpack.c.l.b16 %v3971
    %v4055 = vunpack.c.h.b16 %v3971
    %v4056 = vunpack.c.l.b16 %v3972
    %v4057 = vunpack.c.h.b16 %v3972
    %v4058 = vunpack.c.l.b16 %v3973
    %v4059 = vunpack.c.h.b16 %v3973
    %v4060 = vunpack.c.l.b16 %v3974
    %v4061 = vunpack.c.h.b16 %v3974
    %v4062 = vunpack.c.l.b16 %v3975
    %v4063 = vunpack.c.h.b16 %v3975
    %v4064 = vunpack.c.l.b16 %v3976
    %v4065 = vunpack.c.h.b16 %v3976
    %v4066 = vunpack.c.l.b16 %v3977
    %v4067 = vunpack.c.h.b16 %v3977
    %v4068 = vunpack.c.l.b16 %v3978
    %v4069 = vunpack.c.h.b16 %v3978
    %v4070 = vunpack.c.l.b16 %v3979
    %v4071 = vunpack.c.h.b16 %v3979
    %v4072 = vunpack.c.l.b16 %v3980
    %v4073 = vunpack.c.h.b16 %v3980
    %v4074 = vunpack.c.l.b16 %v3981
    %v4075 = vunpack.c.h.b16 %v3981
    %v4076 = vunpack.c.l.b16 %v3982
    %v4077 = vunpack.c.h.b16 %v3982
    %v4078 = vunpack.c.l.b16 %v3983
    %v4079 = vunpack.c.h.b16 %v3983
    %v4080 = vunpack.c.l.b16 %v3984
    %v4081 = vunpack.c.h.b16 %v3984
    %v4082 = vunpack.c.l.b16 %v3985
    %v4083 = vunpack.c.h.b16 %v3985
    %v4084 = vunpack.c.l.b16 %v3986
    %v4085 = vunpack.c.h.b16 %v3986
    %v4086 = vunpack.c.l.b16 %v3987
    %v4087 = vunpack.c.h.b16 %v3987
    %v4088 = vunpack.c.l.b16 %v3988
    %v4089 = vunpack.c.h.b16 %v3988
    %v4090 = vunpack.c.l.b16 %v3989
    %v4091 = vunpack.c.h.b16 %v3989
    %v4092 = vpack.c.b16 %v4030, %v4028
    %v4093 = vpack.c.b16 %v4031, %v4029
    %v4094 = vpack.c.b16 %v4034, %v4032
    %v4095 = vpack.c.b16 %v4035, %v4033
    %v4096 = vpack.c.b16 %v4038, %v4036
    %v4097 = vpack.c.b16 %v4039, %v4037
    %v4098 = vpack.c.b16 %v4042, %v4040
    %v4099 = vpack.c.b16 %v4043, %v4041
    %v4100 = vpack.c.b16 %v4046, %v4044
    %v4101 = vpack.c.b16 %v4047, %v4045
    %v4102 = vpack.c.b16 %v4050, %v4048
    %v4103 = vpack.c.b16 %v4051, %v4049
    %v4104 = vpack.c.b16 %v4054, %v4052
    %v4105 = vpack.c.b16 %v4055, %v4053
    %v4106 = vpack.c.b16 %v4058, %v4056
    %v4107 = vpack.c.b16 %v4059, %v4057
    %v4108 = vpack.c.b16 %v4062, %v4060
    %v4109 = vpack.c.b16 %v4063, %v4061
    %v4110 = vpack.c.b16 %v4066, %v4064
    %v4111 = vpack.c.b16 %v4067, %v4065
    %v4112 = vpack.c.b16 %v4070, %v4068
    %v4113 = vpack.c.b16 %v4071, %v4069
    %v4114 = vpack.c.b16 %v4074, %v4072
    %v4115 = vpack.c.b16 %v4075, %v4073
    %v4116 = vpack.c.b16 %v4078, %v4076
    %v4117 = vpack.c.b16 %v4079, %v4077
    %v4118 = vpack.c.b16 %v4082, %v4080
    %v4119 = vpack.c.b16 %v4083, %v4081
    %v4120 = vpack.c.b16 %v4086, %v4084
    %v4121 = vpack.c.b16 %v4087, %v4085
    %v4122 = vpack.c.b16 %v4090, %v4088
    %v4123 = vpack.c.b16 %v4091, %v4089
    %4156 = vmatpush.bf16.msra.mxu0 %v4106
    %4157 = vmatpush.bf16.msra.mxu0 %v4104
    %4158 = vmatpush.bf16.msra.mxu0 %v4102
    %4159 = vmatpush.bf16.msra.mxu0 %v4100
    %4160 = vmatpush.bf16.msra.mxu0 %v4098
    %4161 = vmatpush.bf16.msra.mxu0 %v4096
    %4162 = vmatpush.bf16.msra.mxu0 %v4094
    %4163 = vmatpush.bf16.msra.mxu0 %v4092
    %4164 = vmatmul.bf16.gmra.mxu0 %v3956
    %v4165 = vpop.f32.mrf.mxu0
    %v4166 = vadd.f32 %v3992, %v4165
    %v4167 = vpop.f32.mrf.mxu0
    %4168 = vdwg.mxu0
    %4169 = vmatpush.bf16.msra.mxu0 %v4122
    %4170 = vmatpush.bf16.msra.mxu0 %v4120
    %4171 = vmatpush.bf16.msra.mxu0 %v4118
    %4172 = vmatpush.bf16.msra.mxu0 %v4116
    %4173 = vmatpush.bf16.msra.mxu0 %v4114
    %4174 = vmatpush.bf16.msra.mxu0 %v4112
    %4175 = vmatpush.bf16.msra.mxu0 %v4110
    %4176 = vmatpush.bf16.msra.mxu0 %v4108
    %4177 = vmatmul.bf16.gmra.mxu0 %v3957
    %v4178 = vpop.f32.mrf.mxu0
    %v4179 = vadd.f32 %v4166, %v4178
    %v4180 = vpop.f32.mrf.mxu0
    %4181 = vdwg.mxu0
    %4182 = vmatpush.bf16.msra.mxu0 %v4107
    %4183 = vmatpush.bf16.msra.mxu0 %v4105
    %4184 = vmatpush.bf16.msra.mxu0 %v4103
    %4185 = vmatpush.bf16.msra.mxu0 %v4101
    %4186 = vmatpush.bf16.msra.mxu0 %v4099
    %4187 = vmatpush.bf16.msra.mxu0 %v4097
    %4188 = vmatpush.bf16.msra.mxu0 %v4095
    %4189 = vmatpush.bf16.msra.mxu0 %v4093
    %4190 = vmatmul.bf16.gmra.mxu0 %v3956
    %v4191 = vpop.f32.mrf.mxu0
    %v4192 = vadd.f32 %v3993, %v4191
    %v4193 = vpop.f32.mrf.mxu0
    %4194 = vdwg.mxu0
    %4195 = vmatpush.bf16.msra.mxu0 %v4123
    %4196 = vmatpush.bf16.msra.mxu0 %v4121
    %4197 = vmatpush.bf16.msra.mxu0 %v4119
    %4198 = vmatpush.bf16.msra.mxu0 %v4117
    %4199 = vmatpush.bf16.msra.mxu0 %v4115
    %4200 = vmatpush.bf16.msra.mxu0 %v4113
    %4201 = vmatpush.bf16.msra.mxu0 %v4111
    %4202 = vmatpush.bf16.msra.mxu0 %v4109
    %4203 = vmatmul.bf16.gmra.mxu0 %v3957
    %v4204 = vpop.f32.mrf.mxu0
    %v4205 = vadd.f32 %v4192, %v4204
    %v4206 = vpop.f32.mrf.mxu0
    %4207 = vdwg.mxu0
    %v4208 = vmax.f32 %v4205, 0.0
    %vm4209 = vcmp.ne.f32.partialorder %v4205, %v4205
    %v4210 = vadd.f32 %v4205, 0.0
    %v4211 = vand.u32 2147483647, %v4205
    %v4212 = vsub.f32 0.0, %v4211
    %v4213 = vmul.f32 %v4212, 1.442695
    %v4214 = vpow.pop %v4213
    %v4215 = vadd.f32 %v4214, 1.0
    %v4216 = vlog2.pop %v4215
    %v4217 = vmul.f32 %v4216, 0.6931472
    %v4218 = vmul.f32 -0.5, %v4214
    %v4219 = vadd.f32 %v4218, 1.0
    %v4220 = vmul.f32 %v4219, %v4214
    %v4221 = vand.u32 2147483647, %v4214
    %vm4222 = vcmp.lt.f32.partialorder %v4221, 0.0004427343
    %v4223 = vsel %vm4222, %v4220, %v4217
    %v4224 = vadd.f32 %v4208, %v4223
    %v4225 = vsel %vm4209, %v4210, %v4224
    %v4226 = vld [vmem:[#allocation5] sm:$0x3]
    %v4227 = vmul.f32 %v4225, %v4226
    %v4228 = vadd.f32 %v4179, %v4227
    %v4229 = vpack.c.bf16 %v4228, %v4228
    %v4230 = vld [vmem:[%s8] sm:$0xff]
    %v4231 = vld [vmem:[%s8 + $0x8] sm:$0xff]
    %v4232 = vld [vmem:[%s8 + $0x10] sm:$0xff]
    %v4233 = vld [vmem:[%s8 + $0x18] sm:$0xff]
    %v4234 = vld [vmem:[%s8 + $0x20] sm:$0xff]
    %v4235 = vld [vmem:[%s8 + $0x28] sm:$0xff]
    %v4236 = vld [vmem:[%s8 + $0x30] sm:$0xff]
    %v4237 = vld [vmem:[%s8 + $0x38] sm:$0xff]
    %v4238 = vld [vmem:[%s8 + $0x40] sm:$0xff]
    %v4239 = vld [vmem:[%s8 + $0x48] sm:$0xff]
    %v4240 = vld [vmem:[%s8 + $0x50] sm:$0xff]
    %v4241 = vld [vmem:[%s8 + $0x58] sm:$0xff]
    %v4242 = vld [vmem:[%s8 + $0x60] sm:$0xff]
    %v4243 = vld [vmem:[%s8 + $0x68] sm:$0xff]
    %v4244 = vld [vmem:[%s8 + $0x70] sm:$0xff]
    %v4245 = vld [vmem:[%s8 + $0x78] sm:$0xff]
    %v4246 = vld [vmem:[%s8 + $0x80] sm:$0xff]
    %v4247 = vld [vmem:[%s8 + $0x88] sm:$0xff]
    %v4248 = vld [vmem:[%s8 + $0x90] sm:$0xff]
    %v4249 = vld [vmem:[%s8 + $0x98] sm:$0xff]
    %v4250 = vld [vmem:[%s8 + $0xa0] sm:$0xff]
    %v4251 = vld [vmem:[%s8 + $0xa8] sm:$0xff]
    %v4252 = vld [vmem:[%s8 + $0xb0] sm:$0xff]
    %v4253 = vld [vmem:[%s8 + $0xb8] sm:$0xff]
    %v4254 = vld [vmem:[%s8 + $0xc0] sm:$0xff]
    %v4255 = vld [vmem:[%s8 + $0xc8] sm:$0xff]
    %v4256 = vld [vmem:[%s8 + $0xd0] sm:$0xff]
    %v4257 = vld [vmem:[%s8 + $0xd8] sm:$0xff]
    %v4258 = vld [vmem:[%s8 + $0xe0] sm:$0xff]
    %v4259 = vld [vmem:[%s8 + $0xe8] sm:$0xff]
    %v4260 = vld [vmem:[%s8 + $0xf0] sm:$0xff]
    %v4261 = vld [vmem:[%s8 + $0xf8] sm:$0xff]
    %v4262 = vld [vmem:[%s8 + $0x100] sm:$0xff]
    %v4263 = vld [vmem:[%s8 + $0x108] sm:$0xff]
    %v4264 = vld [vmem:[%s8 + $0x110] sm:$0xff]
    %v4265 = vld [vmem:[%s8 + $0x118] sm:$0xff]
    %v4266 = vld [vmem:[%s8 + $0x120] sm:$0xff]
    %v4267 = vld [vmem:[%s8 + $0x128] sm:$0xff]
    %v4268 = vld [vmem:[%s8 + $0x130] sm:$0xff]
    %v4269 = vld [vmem:[%s8 + $0x138] sm:$0xff]
    %v4270 = vld [vmem:[%s8 + $0x140] sm:$0xff]
    %v4271 = vld [vmem:[%s8 + $0x148] sm:$0xff]
    %v4272 = vld [vmem:[%s8 + $0x150] sm:$0xff]
    %v4273 = vld [vmem:[%s8 + $0x158] sm:$0xff]
    %v4274 = vld [vmem:[%s8 + $0x160] sm:$0xff]
    %v4275 = vld [vmem:[%s8 + $0x168] sm:$0xff]
    %v4276 = vld [vmem:[%s8 + $0x170] sm:$0xff]
    %v4277 = vld [vmem:[%s8 + $0x178] sm:$0xff]
    %v4278 = vld [vmem:[%s8 + $0x180] sm:$0xff]
    %v4279 = vld [vmem:[%s8 + $0x188] sm:$0xff]
    %v4280 = vld [vmem:[%s8 + $0x190] sm:$0xff]
    %v4281 = vld [vmem:[%s8 + $0x198] sm:$0xff]
    %v4282 = vld [vmem:[%s8 + $0x1a0] sm:$0xff]
    %v4283 = vld [vmem:[%s8 + $0x1a8] sm:$0xff]
    %v4284 = vld [vmem:[%s8 + $0x1b0] sm:$0xff]
    %v4285 = vld [vmem:[%s8 + $0x1b8] sm:$0xff]
    %v4286 = vld [vmem:[%s8 + $0x1c0] sm:$0xff]
    %v4287 = vld [vmem:[%s8 + $0x1c8] sm:$0xff]
    %v4288 = vld [vmem:[%s8 + $0x1d0] sm:$0xff]
    %v4289 = vld [vmem:[%s8 + $0x1d8] sm:$0xff]
    %v4290 = vld [vmem:[%s8 + $0x1e0] sm:$0xff]
    %v4291 = vld [vmem:[%s8 + $0x1e8] sm:$0xff]
    %v4292 = vld [vmem:[%s8 + $0x1f0] sm:$0xff]
    %v4293 = vld [vmem:[%s8 + $0x1f8] sm:$0xff]
    %v4358 = vunpack.c.l.b16 %v4230
    %v4359 = vunpack.c.h.b16 %v4230
    %v4360 = vunpack.c.l.b16 %v4231
    %v4361 = vunpack.c.h.b16 %v4231
    %v4362 = vunpack.c.l.b16 %v4232
    %v4363 = vunpack.c.h.b16 %v4232
    %v4364 = vunpack.c.l.b16 %v4233
    %v4365 = vunpack.c.h.b16 %v4233
    %v4366 = vunpack.c.l.b16 %v4234
    %v4367 = vunpack.c.h.b16 %v4234
    %v4368 = vunpack.c.l.b16 %v4235
    %v4369 = vunpack.c.h.b16 %v4235
    %v4370 = vunpack.c.l.b16 %v4236
    %v4371 = vunpack.c.h.b16 %v4236
    %v4372 = vunpack.c.l.b16 %v4237
    %v4373 = vunpack.c.h.b16 %v4237
    %v4374 = vunpack.c.l.b16 %v4238
    %v4375 = vunpack.c.h.b16 %v4238
    %v4376 = vunpack.c.l.b16 %v4239
    %v4377 = vunpack.c.h.b16 %v4239
    %v4378 = vunpack.c.l.b16 %v4240
    %v4379 = vunpack.c.h.b16 %v4240
    %v4380 = vunpack.c.l.b16 %v4241
    %v4381 = vunpack.c.h.b16 %v4241
    %v4382 = vunpack.c.l.b16 %v4242
    %v4383 = vunpack.c.h.b16 %v4242
    %v4384 = vunpack.c.l.b16 %v4243
    %v4385 = vunpack.c.h.b16 %v4243
    %v4386 = vunpack.c.l.b16 %v4244
    %v4387 = vunpack.c.h.b16 %v4244
    %v4388 = vunpack.c.l.b16 %v4245
    %v4389 = vunpack.c.h.b16 %v4245
    %v4390 = vunpack.c.l.b16 %v4246
    %v4391 = vunpack.c.h.b16 %v4246
    %v4392 = vunpack.c.l.b16 %v4247
    %v4393 = vunpack.c.h.b16 %v4247
    %v4394 = vunpack.c.l.b16 %v4248
    %v4395 = vunpack.c.h.b16 %v4248
    %v4396 = vunpack.c.l.b16 %v4249
    %v4397 = vunpack.c.h.b16 %v4249
    %v4398 = vunpack.c.l.b16 %v4250
    %v4399 = vunpack.c.h.b16 %v4250
    %v4400 = vunpack.c.l.b16 %v4251
    %v4401 = vunpack.c.h.b16 %v4251
    %v4402 = vunpack.c.l.b16 %v4252
    %v4403 = vunpack.c.h.b16 %v4252
    %v4404 = vunpack.c.l.b16 %v4253
    %v4405 = vunpack.c.h.b16 %v4253
    %v4406 = vunpack.c.l.b16 %v4254
    %v4407 = vunpack.c.h.b16 %v4254
    %v4408 = vunpack.c.l.b16 %v4255
    %v4409 = vunpack.c.h.b16 %v4255
    %v4410 = vunpack.c.l.b16 %v4256
    %v4411 = vunpack.c.h.b16 %v4256
    %v4412 = vunpack.c.l.b16 %v4257
    %v4413 = vunpack.c.h.b16 %v4257
    %v4414 = vunpack.c.l.b16 %v4258
    %v4415 = vunpack.c.h.b16 %v4258
    %v4416 = vunpack.c.l.b16 %v4259
    %v4417 = vunpack.c.h.b16 %v4259
    %v4418 = vunpack.c.l.b16 %v4260
    %v4419 = vunpack.c.h.b16 %v4260
    %v4420 = vunpack.c.l.b16 %v4261
    %v4421 = vunpack.c.h.b16 %v4261
    %v4422 = vunpack.c.l.b16 %v4262
    %v4423 = vunpack.c.h.b16 %v4262
    %v4424 = vunpack.c.l.b16 %v4263
    %v4425 = vunpack.c.h.b16 %v4263
    %v4426 = vunpack.c.l.b16 %v4264
    %v4427 = vunpack.c.h.b16 %v4264
    %v4428 = vunpack.c.l.b16 %v4265
    %v4429 = vunpack.c.h.b16 %v4265
    %v4430 = vunpack.c.l.b16 %v4266
    %v4431 = vunpack.c.h.b16 %v4266
    %v4432 = vunpack.c.l.b16 %v4267
    %v4433 = vunpack.c.h.b16 %v4267
    %v4434 = vunpack.c.l.b16 %v4268
    %v4435 = vunpack.c.h.b16 %v4268
    %v4436 = vunpack.c.l.b16 %v4269
    %v4437 = vunpack.c.h.b16 %v4269
    %v4438 = vunpack.c.l.b16 %v4270
    %v4439 = vunpack.c.h.b16 %v4270
    %v4440 = vunpack.c.l.b16 %v4271
    %v4441 = vunpack.c.h.b16 %v4271
    %v4442 = vunpack.c.l.b16 %v4272
    %v4443 = vunpack.c.h.b16 %v4272
    %v4444 = vunpack.c.l.b16 %v4273
    %v4445 = vunpack.c.h.b16 %v4273
    %v4446 = vunpack.c.l.b16 %v4274
    %v4447 = vunpack.c.h.b16 %v4274
    %v4448 = vunpack.c.l.b16 %v4275
    %v4449 = vunpack.c.h.b16 %v4275
    %v4450 = vunpack.c.l.b16 %v4276
    %v4451 = vunpack.c.h.b16 %v4276
    %v4452 = vunpack.c.l.b16 %v4277
    %v4453 = vunpack.c.h.b16 %v4277
    %v4454 = vunpack.c.l.b16 %v4278
    %v4455 = vunpack.c.h.b16 %v4278
    %v4456 = vunpack.c.l.b16 %v4279
    %v4457 = vunpack.c.h.b16 %v4279
    %v4458 = vunpack.c.l.b16 %v4280
    %v4459 = vunpack.c.h.b16 %v4280
    %v4460 = vunpack.c.l.b16 %v4281
    %v4461 = vunpack.c.h.b16 %v4281
    %v4462 = vunpack.c.l.b16 %v4282
    %v4463 = vunpack.c.h.b16 %v4282
    %v4464 = vunpack.c.l.b16 %v4283
    %v4465 = vunpack.c.h.b16 %v4283
    %v4466 = vunpack.c.l.b16 %v4284
    %v4467 = vunpack.c.h.b16 %v4284
    %v4468 = vunpack.c.l.b16 %v4285
    %v4469 = vunpack.c.h.b16 %v4285
    %v4470 = vunpack.c.l.b16 %v4286
    %v4471 = vunpack.c.h.b16 %v4286
    %v4472 = vunpack.c.l.b16 %v4287
    %v4473 = vunpack.c.h.b16 %v4287
    %v4474 = vunpack.c.l.b16 %v4288
    %v4475 = vunpack.c.h.b16 %v4288
    %v4476 = vunpack.c.l.b16 %v4289
    %v4477 = vunpack.c.h.b16 %v4289
    %v4478 = vunpack.c.l.b16 %v4290
    %v4479 = vunpack.c.h.b16 %v4290
    %v4480 = vunpack.c.l.b16 %v4291
    %v4481 = vunpack.c.h.b16 %v4291
    %v4482 = vunpack.c.l.b16 %v4292
    %v4483 = vunpack.c.h.b16 %v4292
    %v4484 = vunpack.c.l.b16 %v4293
    %v4485 = vunpack.c.h.b16 %v4293
    %v4486 = vpack.c.b16 %v4366, %v4358
    %v4487 = vpack.c.b16 %v4367, %v4359
    %v4488 = vpack.c.b16 %v4368, %v4360
    %v4489 = vpack.c.b16 %v4369, %v4361
    %v4490 = vpack.c.b16 %v4370, %v4362
    %v4491 = vpack.c.b16 %v4371, %v4363
    %v4492 = vpack.c.b16 %v4372, %v4364
    %v4493 = vpack.c.b16 %v4373, %v4365
    %v4494 = vpack.c.b16 %v4382, %v4374
    %v4495 = vpack.c.b16 %v4383, %v4375
    %v4496 = vpack.c.b16 %v4384, %v4376
    %v4497 = vpack.c.b16 %v4385, %v4377
    %v4498 = vpack.c.b16 %v4386, %v4378
    %v4499 = vpack.c.b16 %v4387, %v4379
    %v4500 = vpack.c.b16 %v4388, %v4380
    %v4501 = vpack.c.b16 %v4389, %v4381
    %v4502 = vpack.c.b16 %v4398, %v4390
    %v4503 = vpack.c.b16 %v4399, %v4391
    %v4504 = vpack.c.b16 %v4400, %v4392
    %v4505 = vpack.c.b16 %v4401, %v4393
    %v4506 = vpack.c.b16 %v4402, %v4394
    %v4507 = vpack.c.b16 %v4403, %v4395
    %v4508 = vpack.c.b16 %v4404, %v4396
    %v4509 = vpack.c.b16 %v4405, %v4397
    %v4510 = vpack.c.b16 %v4414, %v4406
    %v4511 = vpack.c.b16 %v4415, %v4407
    %v4512 = vpack.c.b16 %v4416, %v4408
    %v4513 = vpack.c.b16 %v4417, %v4409
    %v4514 = vpack.c.b16 %v4418, %v4410
    %v4515 = vpack.c.b16 %v4419, %v4411
    %v4516 = vpack.c.b16 %v4420, %v4412
    %v4517 = vpack.c.b16 %v4421, %v4413
    %v4518 = vpack.c.b16 %v4430, %v4422
    %v4519 = vpack.c.b16 %v4431, %v4423
    %v4520 = vpack.c.b16 %v4432, %v4424
    %v4521 = vpack.c.b16 %v4433, %v4425
    %v4522 = vpack.c.b16 %v4434, %v4426
    %v4523 = vpack.c.b16 %v4435, %v4427
    %v4524 = vpack.c.b16 %v4436, %v4428
    %v4525 = vpack.c.b16 %v4437, %v4429
    %v4526 = vpack.c.b16 %v4446, %v4438
    %v4527 = vpack.c.b16 %v4447, %v4439
    %v4528 = vpack.c.b16 %v4448, %v4440
    %v4529 = vpack.c.b16 %v4449, %v4441
    %v4530 = vpack.c.b16 %v4450, %v4442
    %v4531 = vpack.c.b16 %v4451, %v4443
    %v4532 = vpack.c.b16 %v4452, %v4444
    %v4533 = vpack.c.b16 %v4453, %v4445
    %v4534 = vpack.c.b16 %v4462, %v4454
    %v4535 = vpack.c.b16 %v4463, %v4455
    %v4536 = vpack.c.b16 %v4464, %v4456
    %v4537 = vpack.c.b16 %v4465, %v4457
    %v4538 = vpack.c.b16 %v4466, %v4458
    %v4539 = vpack.c.b16 %v4467, %v4459
    %v4540 = vpack.c.b16 %v4468, %v4460
    %v4541 = vpack.c.b16 %v4469, %v4461
    %v4542 = vpack.c.b16 %v4478, %v4470
    %v4543 = vpack.c.b16 %v4479, %v4471
    %v4544 = vpack.c.b16 %v4480, %v4472
    %v4545 = vpack.c.b16 %v4481, %v4473
    %v4546 = vpack.c.b16 %v4482, %v4474
    %v4547 = vpack.c.b16 %v4483, %v4475
    %v4548 = vpack.c.b16 %v4484, %v4476
    %v4549 = vpack.c.b16 %v4485, %v4477
    %4614 = vmatpush.bf16.msra.mxu0 %v4542
    %4615 = vmatpush.bf16.msra.mxu0 %v4534
    %4616 = vmatpush.bf16.msra.mxu0 %v4526
    %4617 = vmatpush.bf16.msra.mxu0 %v4518
    %4618 = vmatpush.bf16.msra.mxu0 %v4510
    %4619 = vmatpush.bf16.msra.mxu0 %v4502
    %4620 = vmatpush.bf16.msra.mxu0 %v4494
    %4621 = vmatpush.bf16.msra.mxu0 %v4486
    %4622 = vmatmul.bf16.gmra.mxu0 %v4229
    %v4623 = vpop.f32.mrf.mxu0
    %v4624 = vadd.f32 %v2568, %v4623
    %v4625 = vpop.f32.mrf.mxu0
    %4626 = vdwg.mxu0
    %4627 = vmatpush.bf16.msra.mxu0 %v4543
    %4628 = vmatpush.bf16.msra.mxu0 %v4535
    %4629 = vmatpush.bf16.msra.mxu0 %v4527
    %4630 = vmatpush.bf16.msra.mxu0 %v4519
    %4631 = vmatpush.bf16.msra.mxu0 %v4511
    %4632 = vmatpush.bf16.msra.mxu0 %v4503
    %4633 = vmatpush.bf16.msra.mxu0 %v4495
    %4634 = vmatpush.bf16.msra.mxu0 %v4487
    %4635 = vmatmul.bf16.gmra.mxu0 %v4229
    %v4636 = vpop.f32.mrf.mxu0
    %v4637 = vadd.f32 %v2569, %v4636
    %v4638 = vpop.f32.mrf.mxu0
    %4639 = vdwg.mxu0
    %4640 = vmatpush.bf16.msra.mxu0 %v4544
    %4641 = vmatpush.bf16.msra.mxu0 %v4536
    %4642 = vmatpush.bf16.msra.mxu0 %v4528
    %4643 = vmatpush.bf16.msra.mxu0 %v4520
    %4644 = vmatpush.bf16.msra.mxu0 %v4512
    %4645 = vmatpush.bf16.msra.mxu0 %v4504
    %4646 = vmatpush.bf16.msra.mxu0 %v4496
    %4647 = vmatpush.bf16.msra.mxu0 %v4488
    %4648 = vmatmul.bf16.gmra.mxu0 %v4229
    %v4649 = vpop.f32.mrf.mxu0
    %v4650 = vadd.f32 %v2570, %v4649
    %v4651 = vpop.f32.mrf.mxu0
    %4652 = vdwg.mxu0
    %4653 = vmatpush.bf16.msra.mxu0 %v4545
    %4654 = vmatpush.bf16.msra.mxu0 %v4537
    %4655 = vmatpush.bf16.msra.mxu0 %v4529
    %4656 = vmatpush.bf16.msra.mxu0 %v4521
    %4657 = vmatpush.bf16.msra.mxu0 %v4513
    %4658 = vmatpush.bf16.msra.mxu0 %v4505
    %4659 = vmatpush.bf16.msra.mxu0 %v4497
    %4660 = vmatpush.bf16.msra.mxu0 %v4489
    %4661 = vmatmul.bf16.gmra.mxu0 %v4229
    %v4662 = vpop.f32.mrf.mxu0
    %v4663 = vadd.f32 %v2571, %v4662
    %v4664 = vpop.f32.mrf.mxu0
    %4665 = vdwg.mxu0
    %4666 = vmatpush.bf16.msra.mxu0 %v4546
    %4667 = vmatpush.bf16.msra.mxu0 %v4538
    %4668 = vmatpush.bf16.msra.mxu0 %v4530
    %4669 = vmatpush.bf16.msra.mxu0 %v4522
    %4670 = vmatpush.bf16.msra.mxu0 %v4514
    %4671 = vmatpush.bf16.msra.mxu0 %v4506
    %4672 = vmatpush.bf16.msra.mxu0 %v4498
    %4673 = vmatpush.bf16.msra.mxu0 %v4490
    %4674 = vmatmul.bf16.gmra.mxu0 %v4229
    %v4675 = vpop.f32.mrf.mxu0
    %v4676 = vadd.f32 %v2572, %v4675
    %v4677 = vpop.f32.mrf.mxu0
    %4678 = vdwg.mxu0
    %4679 = vmatpush.bf16.msra.mxu0 %v4547
    %4680 = vmatpush.bf16.msra.mxu0 %v4539
    %4681 = vmatpush.bf16.msra.mxu0 %v4531
    %4682 = vmatpush.bf16.msra.mxu0 %v4523
    %4683 = vmatpush.bf16.msra.mxu0 %v4515
    %4684 = vmatpush.bf16.msra.mxu0 %v4507
    %4685 = vmatpush.bf16.msra.mxu0 %v4499
    %4686 = vmatpush.bf16.msra.mxu0 %v4491
    %4687 = vmatmul.bf16.gmra.mxu0 %v4229
    %v4688 = vpop.f32.mrf.mxu0
    %v4689 = vadd.f32 %v2573, %v4688
    %v4690 = vpop.f32.mrf.mxu0
    %4691 = vdwg.mxu0
    %4692 = vmatpush.bf16.msra.mxu0 %v4548
    %4693 = vmatpush.bf16.msra.mxu0 %v4540
    %4694 = vmatpush.bf16.msra.mxu0 %v4532
    %4695 = vmatpush.bf16.msra.mxu0 %v4524
    %4696 = vmatpush.bf16.msra.mxu0 %v4516
    %4697 = vmatpush.bf16.msra.mxu0 %v4508
    %4698 = vmatpush.bf16.msra.mxu0 %v4500
    %4699 = vmatpush.bf16.msra.mxu0 %v4492
    %4700 = vmatmul.bf16.gmra.mxu0 %v4229
    %v4701 = vpop.f32.mrf.mxu0
    %v4702 = vadd.f32 %v2574, %v4701
    %v4703 = vpop.f32.mrf.mxu0
    %4704 = vdwg.mxu0
    %4705 = vmatpush.bf16.msra.mxu0 %v4549
    %4706 = vmatpush.bf16.msra.mxu0 %v4541
    %4707 = vmatpush.bf16.msra.mxu0 %v4533
    %4708 = vmatpush.bf16.msra.mxu0 %v4525
    %4709 = vmatpush.bf16.msra.mxu0 %v4517
    %4710 = vmatpush.bf16.msra.mxu0 %v4509
    %4711 = vmatpush.bf16.msra.mxu0 %v4501
    %4712 = vmatpush.bf16.msra.mxu0 %v4493
    %4713 = vmatmul.bf16.gmra.mxu0 %v4229
    %v4714 = vpop.f32.mrf.mxu0
    %v4715 = vadd.f32 %v2575, %v4714
    %v4716 = vpop.f32.mrf.mxu0
    %4717 = vdwg.mxu0
    %v4718 = vxor.u32 %v4624, 2147483648
    %v4719 = vxor.u32 %v4637, 2147483648
    %v4720 = vmul.f32 %v4718, 1.442695
    %v4721 = vpow.pop %v4720
    %v4722 = vmul.f32 %v4719, 1.442695
    %v4723 = vpow.pop %v4722
    %v4724 = vadd.f32 %v4721, 1.0
    %v4725 = vadd.f32 %v4723, 1.0
    %v4726 = vrcp.pop %v4724
    %v4727 = vmul.f32 %v4724, %v4726
    %v4728 = vsub.f32 1.0, %v4727
    %v4729 = vmul.f32 %v4726, %v4728
    %v4730 = vadd.f32 %v4726, %v4729
    %vm4731 = vweird.f32 %v4724
    %vm4732 = vweird.f32 %v4726
    %vm4733 = vmor %vm4731, %vm4732
    %v4734 = vsel %vm4733, %v4726, %v4730
    %v4735 = vand.u32 2147483647, %v4724
    %vm4736 = vcmp.eq.f32.partialorder %v4735, 8.507059e+37
    %v4737 = vand.u32 %v4724, 2147483648
    %v4738 = vor.u32 1.1754944e-38, %v4737
    %v4739 = vsel %vm4736, %v4738, %v4734
    %v4740 = vmul.f32 1.0, %v4739
    %v4741 = vrcp.pop %v4725
    %v4742 = vmul.f32 %v4725, %v4741
    %v4743 = vsub.f32 1.0, %v4742
    %v4744 = vmul.f32 %v4741, %v4743
    %v4745 = vadd.f32 %v4741, %v4744
    %vm4746 = vweird.f32 %v4725
    %vm4747 = vweird.f32 %v4741
    %vm4748 = vmor %vm4746, %vm4747
    %v4749 = vsel %vm4748, %v4741, %v4745
    %v4750 = vand.u32 2147483647, %v4725
    %vm4751 = vcmp.eq.f32.partialorder %v4750, 8.507059e+37
    %v4752 = vand.u32 %v4725, 2147483648
    %v4753 = vor.u32 1.1754944e-38, %v4752
    %v4754 = vsel %vm4751, %v4753, %v4749
    %v4755 = vmul.f32 1.0, %v4754
    %v4756 = vxor.u32 %v4650, 2147483648
    %v4757 = vxor.u32 %v4663, 2147483648
    %v4758 = vmul.f32 %v4756, 1.442695
    %v4759 = vpow.pop %v4758
    %v4760 = vmul.f32 %v4757, 1.442695
    %v4761 = vpow.pop %v4760
    %v4762 = vadd.f32 %v4759, 1.0
    %v4763 = vadd.f32 %v4761, 1.0
    %v4764 = vrcp.pop %v4762
    %v4765 = vmul.f32 %v4762, %v4764
    %v4766 = vsub.f32 1.0, %v4765
    %v4767 = vmul.f32 %v4764, %v4766
    %v4768 = vadd.f32 %v4764, %v4767
    %vm4769 = vweird.f32 %v4762
    %vm4770 = vweird.f32 %v4764
    %vm4771 = vmor %vm4769, %vm4770
    %v4772 = vsel %vm4771, %v4764, %v4768
    %v4773 = vand.u32 2147483647, %v4762
    %vm4774 = vcmp.eq.f32.partialorder %v4773, 8.507059e+37
    %v4775 = vand.u32 %v4762, 2147483648
    %v4776 = vor.u32 1.1754944e-38, %v4775
    %v4777 = vsel %vm4774, %v4776, %v4772
    %v4778 = vmul.f32 1.0, %v4777
    %v4779 = vrcp.pop %v4763
    %v4780 = vmul.f32 %v4763, %v4779
    %v4781 = vsub.f32 1.0, %v4780
    %v4782 = vmul.f32 %v4779, %v4781
    %v4783 = vadd.f32 %v4779, %v4782
    %vm4784 = vweird.f32 %v4763
    %vm4785 = vweird.f32 %v4779
    %vm4786 = vmor %vm4784, %vm4785
    %v4787 = vsel %vm4786, %v4779, %v4783
    %v4788 = vand.u32 2147483647, %v4763
    %vm4789 = vcmp.eq.f32.partialorder %v4788, 8.507059e+37
    %v4790 = vand.u32 %v4763, 2147483648
    %v4791 = vor.u32 1.1754944e-38, %v4790
    %v4792 = vsel %vm4789, %v4791, %v4787
    %v4793 = vmul.f32 1.0, %v4792
    %v4794 = vxor.u32 %v4676, 2147483648
    %v4795 = vxor.u32 %v4689, 2147483648
    %v4796 = vmul.f32 %v4794, 1.442695
    %v4797 = vpow.pop %v4796
    %v4798 = vmul.f32 %v4795, 1.442695
    %v4799 = vpow.pop %v4798
    %v4800 = vadd.f32 %v4797, 1.0
    %v4801 = vadd.f32 %v4799, 1.0
    %v4802 = vrcp.pop %v4800
    %v4803 = vmul.f32 %v4800, %v4802
    %v4804 = vsub.f32 1.0, %v4803
    %v4805 = vmul.f32 %v4802, %v4804
    %v4806 = vadd.f32 %v4802, %v4805
    %vm4807 = vweird.f32 %v4800
    %vm4808 = vweird.f32 %v4802
    %vm4809 = vmor %vm4807, %vm4808
    %v4810 = vsel %vm4809, %v4802, %v4806
    %v4811 = vand.u32 2147483647, %v4800
    %vm4812 = vcmp.eq.f32.partialorder %v4811, 8.507059e+37
    %v4813 = vand.u32 %v4800, 2147483648
    %v4814 = vor.u32 1.1754944e-38, %v4813
    %v4815 = vsel %vm4812, %v4814, %v4810
    %v4816 = vmul.f32 1.0, %v4815
    %v4817 = vrcp.pop %v4801
    %v4818 = vmul.f32 %v4801, %v4817
    %v4819 = vsub.f32 1.0, %v4818
    %v4820 = vmul.f32 %v4817, %v4819
    %v4821 = vadd.f32 %v4817, %v4820
    %vm4822 = vweird.f32 %v4801
    %vm4823 = vweird.f32 %v4817
    %vm4824 = vmor %vm4822, %vm4823
    %v4825 = vsel %vm4824, %v4817, %v4821
    %v4826 = vand.u32 2147483647, %v4801
    %vm4827 = vcmp.eq.f32.partialorder %v4826, 8.507059e+37
    %v4828 = vand.u32 %v4801, 2147483648
    %v4829 = vor.u32 1.1754944e-38, %v4828
    %v4830 = vsel %vm4827, %v4829, %v4825
    %v4831 = vmul.f32 1.0, %v4830
    %v4832 = vtanh.pop %v4702
    %v4833 = vtanh.pop %v4715
    %v4834 = vmul.f32 %v4740, 0.0
    %v4835 = vmul.f32 %v4755, 0.0
    %v4836 = vmul.f32 %v4778, %v4832
    %v4837 = vmul.f32 %v4793, %v4833
    %v4838 = vadd.f32 %v4834, %v4836
    %v4839 = vadd.f32 %v4835, %v4837
    %v4840 = vtanh.pop %v4838
    %v4841 = vtanh.pop %v4839
    %v4842 = vmul.f32 %v4816, %v4840
    %v4843 = vmul.f32 %v4831, %v4841
    %v4844 = vadd.f32 %v4842, 0.0
    %v4845 = vadd.f32 %v4843, 0.0
    %v4846 = vlog2.pop %v3829
    %v4847 = vmul.f32 %v4846, 0.6931472
    %v4848 = vlog2.pop %v4225
    %v4849 = vmul.f32 %v4848, 0.6931472
    %v4850 = vsub.f32 %v4847, %v4849
    %v4851 = vmul.f32 %v4225, %v4225
    %v4852 = vsub.f32 %v4179, %v3810
    %v4853 = vmul.f32 %v4852, %v4852
    %v4854 = vadd.f32 %v4851, %v4853
    %v4855 = vmul.f32 %v3829, 2.0
    %v4856 = vmul.f32 %v4855, %v3829
    %v4857 = vrcp.pop %v4856
    %v4858 = vmul.f32 %v4856, %v4857
    %v4859 = vsub.f32 1.0, %v4858
    %v4860 = vmul.f32 %v4857, %v4859
    %v4861 = vadd.f32 %v4857, %v4860
    %vm4862 = vweird.f32 %v4856
    %vm4863 = vweird.f32 %v4857
    %vm4864 = vmor %vm4862, %vm4863
    %v4865 = vsel %vm4864, %v4857, %v4861
    %v4866 = vand.u32 2147483647, %v4856
    %vm4867 = vcmp.eq.f32.partialorder %v4866, 8.507059e+37
    %v4868 = vand.u32 %v4856, 2147483648
    %v4869 = vor.u32 1.1754944e-38, %v4868
    %v4870 = vsel %vm4867, %v4869, %v4865
    %v4871 = vmul.f32 %v4854, %v4870
    %v4872 = vadd.f32 %v4850, %v4871
    %v4873 = vsub.f32 %v4872, 0.5
    %v4874 = vadd.f32 %v4873, 0.0
    %v4875 = vpack.c.bf16 %v4842, %v4842
    %v4876 = vpack.c.bf16 %v4843, %v4843
    %4877 = vmatpush.bf16.msra.mxu0 %v3286
    %4878 = vmatpush.bf16.msra.mxu0 %v3276
    %4879 = vmatpush.bf16.msra.mxu0 %v3266
    %4880 = vmatpush.bf16.msra.mxu0 %v3256
    %4881 = vmatpush.bf16.msra.mxu0 %v3246
    %4882 = vmatpush.bf16.msra.mxu0 %v3236
    %4883 = vmatpush.bf16.msra.mxu0 %v3226
    %4884 = vmatpush.bf16.msra.mxu0 %v3216
    %4885 = vmatmul.bf16.gmra.mxu0 %v4875
    %v4886 = vpop.f32.mrf.mxu0
    %v4887 = vadd.f32 0.0, %v4886
    %v4888 = vpop.f32.mrf.mxu0
    %4889 = vdwg.mxu0
    %4890 = vmatpush.bf16.msra.mxu0 %v3366
    %4891 = vmatpush.bf16.msra.mxu0 %v3356
    %4892 = vmatpush.bf16.msra.mxu0 %v3346
    %4893 = vmatpush.bf16.msra.mxu0 %v3336
    %4894 = vmatpush.bf16.msra.mxu0 %v3326
    %4895 = vmatpush.bf16.msra.mxu0 %v3316
    %4896 = vmatpush.bf16.msra.mxu0 %v3306
    %4897 = vmatpush.bf16.msra.mxu0 %v3296
    %4898 = vmatmul.bf16.gmra.mxu0 %v4876
    %v4899 = vpop.f32.mrf.mxu0
    %v4900 = vadd.f32 %v4887, %v4899
    %v4901 = vpop.f32.mrf.mxu0
    %4902 = vdwg.mxu0
    %4903 = vmatpush.bf16.msra.mxu0 %v3287
    %4904 = vmatpush.bf16.msra.mxu0 %v3277
    %4905 = vmatpush.bf16.msra.mxu0 %v3267
    %4906 = vmatpush.bf16.msra.mxu0 %v3257
    %4907 = vmatpush.bf16.msra.mxu0 %v3247
    %4908 = vmatpush.bf16.msra.mxu0 %v3237
    %4909 = vmatpush.bf16.msra.mxu0 %v3227
    %4910 = vmatpush.bf16.msra.mxu0 %v3217
    %4911 = vmatmul.bf16.gmra.mxu0 %v4875
    %v4912 = vpop.f32.mrf.mxu0
    %v4913 = vadd.f32 0.0, %v4912
    %v4914 = vpop.f32.mrf.mxu0
    %4915 = vdwg.mxu0
    %4916 = vmatpush.bf16.msra.mxu0 %v3367
    %4917 = vmatpush.bf16.msra.mxu0 %v3357
    %4918 = vmatpush.bf16.msra.mxu0 %v3347
    %4919 = vmatpush.bf16.msra.mxu0 %v3337
    %4920 = vmatpush.bf16.msra.mxu0 %v3327
    %4921 = vmatpush.bf16.msra.mxu0 %v3317
    %4922 = vmatpush.bf16.msra.mxu0 %v3307
    %4923 = vmatpush.bf16.msra.mxu0 %v3297
    %4924 = vmatmul.bf16.gmra.mxu0 %v4876
    %v4925 = vpop.f32.mrf.mxu0
    %v4926 = vadd.f32 %v4913, %v4925
    %v4927 = vpop.f32.mrf.mxu0
    %4928 = vdwg.mxu0
    %4929 = vmatpush.bf16.msra.mxu0 %v3288
    %4930 = vmatpush.bf16.msra.mxu0 %v3278
    %4931 = vmatpush.bf16.msra.mxu0 %v3268
    %4932 = vmatpush.bf16.msra.mxu0 %v3258
    %4933 = vmatpush.bf16.msra.mxu0 %v3248
    %4934 = vmatpush.bf16.msra.mxu0 %v3238
    %4935 = vmatpush.bf16.msra.mxu0 %v3228
    %4936 = vmatpush.bf16.msra.mxu0 %v3218
    %4937 = vmatmul.bf16.gmra.mxu0 %v4875
    %v4938 = vpop.f32.mrf.mxu0
    %v4939 = vadd.f32 0.0, %v4938
    %v4940 = vpop.f32.mrf.mxu0
    %4941 = vdwg.mxu0
    %4942 = vmatpush.bf16.msra.mxu0 %v3368
    %4943 = vmatpush.bf16.msra.mxu0 %v3358
    %4944 = vmatpush.bf16.msra.mxu0 %v3348
    %4945 = vmatpush.bf16.msra.mxu0 %v3338
    %4946 = vmatpush.bf16.msra.mxu0 %v3328
    %4947 = vmatpush.bf16.msra.mxu0 %v3318
    %4948 = vmatpush.bf16.msra.mxu0 %v3308
    %4949 = vmatpush.bf16.msra.mxu0 %v3298
    %4950 = vmatmul.bf16.gmra.mxu0 %v4876
    %v4951 = vpop.f32.mrf.mxu0
    %v4952 = vadd.f32 %v4939, %v4951
    %v4953 = vpop.f32.mrf.mxu0
    %4954 = vdwg.mxu0
    %4955 = vmatpush.bf16.msra.mxu0 %v3289
    %4956 = vmatpush.bf16.msra.mxu0 %v3279
    %4957 = vmatpush.bf16.msra.mxu0 %v3269
    %4958 = vmatpush.bf16.msra.mxu0 %v3259
    %4959 = vmatpush.bf16.msra.mxu0 %v3249
    %4960 = vmatpush.bf16.msra.mxu0 %v3239
    %4961 = vmatpush.bf16.msra.mxu0 %v3229
    %4962 = vmatpush.bf16.msra.mxu0 %v3219
    %4963 = vmatmul.bf16.gmra.mxu0 %v4875
    %v4964 = vpop.f32.mrf.mxu0
    %v4965 = vadd.f32 0.0, %v4964
    %v4966 = vpop.f32.mrf.mxu0
    %4967 = vdwg.mxu0
    %4968 = vmatpush.bf16.msra.mxu0 %v3369
    %4969 = vmatpush.bf16.msra.mxu0 %v3359
    %4970 = vmatpush.bf16.msra.mxu0 %v3349
    %4971 = vmatpush.bf16.msra.mxu0 %v3339
    %4972 = vmatpush.bf16.msra.mxu0 %v3329
    %4973 = vmatpush.bf16.msra.mxu0 %v3319
    %4974 = vmatpush.bf16.msra.mxu0 %v3309
    %4975 = vmatpush.bf16.msra.mxu0 %v3299
    %4976 = vmatmul.bf16.gmra.mxu0 %v4876
    %v4977 = vpop.f32.mrf.mxu0
    %v4978 = vadd.f32 %v4965, %v4977
    %v4979 = vpop.f32.mrf.mxu0
    %4980 = vdwg.mxu0
    %4981 = vmatpush.bf16.msra.mxu0 %v3290
    %4982 = vmatpush.bf16.msra.mxu0 %v3280
    %4983 = vmatpush.bf16.msra.mxu0 %v3270
    %4984 = vmatpush.bf16.msra.mxu0 %v3260
    %4985 = vmatpush.bf16.msra.mxu0 %v3250
    %4986 = vmatpush.bf16.msra.mxu0 %v3240
    %4987 = vmatpush.bf16.msra.mxu0 %v3230
    %4988 = vmatpush.bf16.msra.mxu0 %v3220
    %4989 = vmatmul.bf16.gmra.mxu0 %v4875
    %v4990 = vpop.f32.mrf.mxu0
    %v4991 = vadd.f32 0.0, %v4990
    %v4992 = vpop.f32.mrf.mxu0
    %4993 = vdwg.mxu0
    %4994 = vmatpush.bf16.msra.mxu0 %v3370
    %4995 = vmatpush.bf16.msra.mxu0 %v3360
    %4996 = vmatpush.bf16.msra.mxu0 %v3350
    %4997 = vmatpush.bf16.msra.mxu0 %v3340
    %4998 = vmatpush.bf16.msra.mxu0 %v3330
    %4999 = vmatpush.bf16.msra.mxu0 %v3320
    %5000 = vmatpush.bf16.msra.mxu0 %v3310
    %5001 = vmatpush.bf16.msra.mxu0 %v3300
    %5002 = vmatmul.bf16.gmra.mxu0 %v4876
    %v5003 = vpop.f32.mrf.mxu0
    %v5004 = vadd.f32 %v4991, %v5003
    %v5005 = vpop.f32.mrf.mxu0
    %5006 = vdwg.mxu0
    %5007 = vmatpush.bf16.msra.mxu0 %v3291
    %5008 = vmatpush.bf16.msra.mxu0 %v3281
    %5009 = vmatpush.bf16.msra.mxu0 %v3271
    %5010 = vmatpush.bf16.msra.mxu0 %v3261
    %5011 = vmatpush.bf16.msra.mxu0 %v3251
    %5012 = vmatpush.bf16.msra.mxu0 %v3241
    %5013 = vmatpush.bf16.msra.mxu0 %v3231
    %5014 = vmatpush.bf16.msra.mxu0 %v3221
    %5015 = vmatmul.bf16.gmra.mxu0 %v4875
    %v5016 = vpop.f32.mrf.mxu0
    %v5017 = vadd.f32 0.0, %v5016
    %v5018 = vpop.f32.mrf.mxu0
    %5019 = vdwg.mxu0
    %5020 = vmatpush.bf16.msra.mxu0 %v3371
    %5021 = vmatpush.bf16.msra.mxu0 %v3361
    %5022 = vmatpush.bf16.msra.mxu0 %v3351
    %5023 = vmatpush.bf16.msra.mxu0 %v3341
    %5024 = vmatpush.bf16.msra.mxu0 %v3331
    %5025 = vmatpush.bf16.msra.mxu0 %v3321
    %5026 = vmatpush.bf16.msra.mxu0 %v3311
    %5027 = vmatpush.bf16.msra.mxu0 %v3301
    %5028 = vmatmul.bf16.gmra.mxu0 %v4876
    %v5029 = vpop.f32.mrf.mxu0
    %v5030 = vadd.f32 %v5017, %v5029
    %v5031 = vpop.f32.mrf.mxu0
    %5032 = vdwg.mxu0
    %5033 = vmatpush.bf16.msra.mxu0 %v3292
    %5034 = vmatpush.bf16.msra.mxu0 %v3282
    %5035 = vmatpush.bf16.msra.mxu0 %v3272
    %5036 = vmatpush.bf16.msra.mxu0 %v3262
    %5037 = vmatpush.bf16.msra.mxu0 %v3252
    %5038 = vmatpush.bf16.msra.mxu0 %v3242
    %5039 = vmatpush.bf16.msra.mxu0 %v3232
    %5040 = vmatpush.bf16.msra.mxu0 %v3222
    %5041 = vmatmul.bf16.gmra.mxu0 %v4875
    %v5042 = vpop.f32.mrf.mxu0
    %v5043 = vadd.f32 0.0, %v5042
    %v5044 = vpop.f32.mrf.mxu0
    %5045 = vdwg.mxu0
    %5046 = vmatpush.bf16.msra.mxu0 %v3372
    %5047 = vmatpush.bf16.msra.mxu0 %v3362
    %5048 = vmatpush.bf16.msra.mxu0 %v3352
    %5049 = vmatpush.bf16.msra.mxu0 %v3342
    %5050 = vmatpush.bf16.msra.mxu0 %v3332
    %5051 = vmatpush.bf16.msra.mxu0 %v3322
    %5052 = vmatpush.bf16.msra.mxu0 %v3312
    %5053 = vmatpush.bf16.msra.mxu0 %v3302
    %5054 = vmatmul.bf16.gmra.mxu0 %v4876
    %v5055 = vpop.f32.mrf.mxu0
    %v5056 = vadd.f32 %v5043, %v5055
    %v5057 = vpop.f32.mrf.mxu0
    %5058 = vdwg.mxu0
    %5059 = vmatpush.bf16.msra.mxu0 %v3293
    %5060 = vmatpush.bf16.msra.mxu0 %v3283
    %5061 = vmatpush.bf16.msra.mxu0 %v3273
    %5062 = vmatpush.bf16.msra.mxu0 %v3263
    %5063 = vmatpush.bf16.msra.mxu0 %v3253
    %5064 = vmatpush.bf16.msra.mxu0 %v3243
    %5065 = vmatpush.bf16.msra.mxu0 %v3233
    %5066 = vmatpush.bf16.msra.mxu0 %v3223
    %5067 = vmatmul.bf16.gmra.mxu0 %v4875
    %v5068 = vpop.f32.mrf.mxu0
    %v5069 = vadd.f32 0.0, %v5068
    %v5070 = vpop.f32.mrf.mxu0
    %5071 = vdwg.mxu0
    %5072 = vmatpush.bf16.msra.mxu0 %v3373
    %5073 = vmatpush.bf16.msra.mxu0 %v3363
    %5074 = vmatpush.bf16.msra.mxu0 %v3353
    %5075 = vmatpush.bf16.msra.mxu0 %v3343
    %5076 = vmatpush.bf16.msra.mxu0 %v3333
    %5077 = vmatpush.bf16.msra.mxu0 %v3323
    %5078 = vmatpush.bf16.msra.mxu0 %v3313
    %5079 = vmatpush.bf16.msra.mxu0 %v3303
    %5080 = vmatmul.bf16.gmra.mxu0 %v4876
    %v5081 = vpop.f32.mrf.mxu0
    %v5082 = vadd.f32 %v5069, %v5081
    %v5083 = vpop.f32.mrf.mxu0
    %5084 = vdwg.mxu0
    %5085 = vmatpush.bf16.msra.mxu0 %v3294
    %5086 = vmatpush.bf16.msra.mxu0 %v3284
    %5087 = vmatpush.bf16.msra.mxu0 %v3274
    %5088 = vmatpush.bf16.msra.mxu0 %v3264
    %5089 = vmatpush.bf16.msra.mxu0 %v3254
    %5090 = vmatpush.bf16.msra.mxu0 %v3244
    %5091 = vmatpush.bf16.msra.mxu0 %v3234
    %5092 = vmatpush.bf16.msra.mxu0 %v3224
    %5093 = vmatmul.bf16.gmra.mxu0 %v4875
    %v5094 = vpop.f32.mrf.mxu0
    %v5095 = vadd.f32 0.0, %v5094
    %v5096 = vpop.f32.mrf.mxu0
    %5097 = vdwg.mxu0
    %5098 = vmatpush.bf16.msra.mxu0 %v3374
    %5099 = vmatpush.bf16.msra.mxu0 %v3364
    %5100 = vmatpush.bf16.msra.mxu0 %v3354
    %5101 = vmatpush.bf16.msra.mxu0 %v3344
    %5102 = vmatpush.bf16.msra.mxu0 %v3334
    %5103 = vmatpush.bf16.msra.mxu0 %v3324
    %5104 = vmatpush.bf16.msra.mxu0 %v3314
    %5105 = vmatpush.bf16.msra.mxu0 %v3304
    %5106 = vmatmul.bf16.gmra.mxu0 %v4876
    %v5107 = vpop.f32.mrf.mxu0
    %v5108 = vadd.f32 %v5095, %v5107
    %v5109 = vpop.f32.mrf.mxu0
    %5110 = vdwg.mxu0
    %5111 = vmatpush.bf16.msra.mxu0 %v3295
    %5112 = vmatpush.bf16.msra.mxu0 %v3285
    %5113 = vmatpush.bf16.msra.mxu0 %v3275
    %5114 = vmatpush.bf16.msra.mxu0 %v3265
    %5115 = vmatpush.bf16.msra.mxu0 %v3255
    %5116 = vmatpush.bf16.msra.mxu0 %v3245
    %5117 = vmatpush.bf16.msra.mxu0 %v3235
    %5118 = vmatpush.bf16.msra.mxu0 %v3225
    %5119 = vmatmul.bf16.gmra.mxu0 %v4875
    %v5120 = vpop.f32.mrf.mxu0
    %v5121 = vadd.f32 0.0, %v5120
    %v5122 = vpop.f32.mrf.mxu0
    %5123 = vdwg.mxu0
    %5124 = vmatpush.bf16.msra.mxu0 %v3375
    %5125 = vmatpush.bf16.msra.mxu0 %v3365
    %5126 = vmatpush.bf16.msra.mxu0 %v3355
    %5127 = vmatpush.bf16.msra.mxu0 %v3345
    %5128 = vmatpush.bf16.msra.mxu0 %v3335
    %5129 = vmatpush.bf16.msra.mxu0 %v3325
    %5130 = vmatpush.bf16.msra.mxu0 %v3315
    %5131 = vmatpush.bf16.msra.mxu0 %v3305
    %5132 = vmatmul.bf16.gmra.mxu0 %v4876
    %v5133 = vpop.f32.mrf.mxu0
    %v5134 = vadd.f32 %v5121, %v5133
    %v5135 = vpop.f32.mrf.mxu0
    %5136 = vdwg.mxu0
    %v5137 = vadd.f32 %v4900, %v2542
    %v5138 = vadd.f32 %v4926, %v2543
    %v5139 = vadd.f32 %v4952, %v2544
    %v5140 = vadd.f32 %v4978, %v2545
    %v5141 = vadd.f32 %v5004, %v2546
    %v5142 = vadd.f32 %v5030, %v2547
    %v5143 = vadd.f32 %v5056, %v2548
    %v5144 = vadd.f32 %v5082, %v2549
    %v5145 = vadd.f32 %v5108, %v3806
    %v5146 = vadd.f32 %v5134, %v3807
    %v5147 = vmax.f32 %v5146, 0.0
    %vm5148 = vcmp.ne.f32.partialorder %v5146, %v5146
    %v5149 = vadd.f32 %v5146, 0.0
    %v5150 = vand.u32 2147483647, %v5146
    %v5151 = vsub.f32 0.0, %v5150
    %v5152 = vmul.f32 %v5151, 1.442695
    %v5153 = vpow.pop %v5152
    %v5154 = vadd.f32 %v5153, 1.0
    %v5155 = vlog2.pop %v5154
    %v5156 = vmul.f32 %v5155, 0.6931472
    %v5157 = vmul.f32 -0.5, %v5153
    %v5158 = vadd.f32 %v5157, 1.0
    %v5159 = vmul.f32 %v5158, %v5153
    %v5160 = vand.u32 2147483647, %v5153
    %vm5161 = vcmp.lt.f32.partialorder %v5160, 0.0004427343
    %v5162 = vsel %vm5161, %v5159, %v5156
    %v5163 = vadd.f32 %v5147, %v5162
    %v5164 = vsel %vm5148, %v5149, %v5163
    %v5165 = vxor.u32 %v5137, 2147483648
    %v5166 = vxor.u32 %v5138, 2147483648
    %v5167 = vmul.f32 %v5165, 1.442695
    %v5168 = vpow.pop %v5167
    %v5169 = vmul.f32 %v5166, 1.442695
    %v5170 = vpow.pop %v5169
    %v5171 = vadd.f32 %v5168, 1.0
    %v5172 = vadd.f32 %v5170, 1.0
    %v5173 = vrcp.pop %v5171
    %v5174 = vmul.f32 %v5171, %v5173
    %v5175 = vsub.f32 1.0, %v5174
    %v5176 = vmul.f32 %v5173, %v5175
    %v5177 = vadd.f32 %v5173, %v5176
    %vm5178 = vweird.f32 %v5171
    %vm5179 = vweird.f32 %v5173
    %vm5180 = vmor %vm5178, %vm5179
    %v5181 = vsel %vm5180, %v5173, %v5177
    %v5182 = vand.u32 2147483647, %v5171
    %vm5183 = vcmp.eq.f32.partialorder %v5182, 8.507059e+37
    %v5184 = vand.u32 %v5171, 2147483648
    %v5185 = vor.u32 1.1754944e-38, %v5184
    %v5186 = vsel %vm5183, %v5185, %v5181
    %v5187 = vmul.f32 1.0, %v5186
    %v5188 = vrcp.pop %v5172
    %v5189 = vmul.f32 %v5172, %v5188
    %v5190 = vsub.f32 1.0, %v5189
    %v5191 = vmul.f32 %v5188, %v5190
    %v5192 = vadd.f32 %v5188, %v5191
    %vm5193 = vweird.f32 %v5172
    %vm5194 = vweird.f32 %v5188
    %vm5195 = vmor %vm5193, %vm5194
    %v5196 = vsel %vm5195, %v5188, %v5192
    %v5197 = vand.u32 2147483647, %v5172
    %vm5198 = vcmp.eq.f32.partialorder %v5197, 8.507059e+37
    %v5199 = vand.u32 %v5172, 2147483648
    %v5200 = vor.u32 1.1754944e-38, %v5199
    %v5201 = vsel %vm5198, %v5200, %v5196
    %v5202 = vmul.f32 1.0, %v5201
    %v5203 = vxor.u32 %v5139, 2147483648
    %v5204 = vxor.u32 %v5140, 2147483648
    %v5205 = vmul.f32 %v5203, 1.442695
    %v5206 = vpow.pop %v5205
    %v5207 = vmul.f32 %v5204, 1.442695
    %v5208 = vpow.pop %v5207
    %v5209 = vadd.f32 %v5206, 1.0
    %v5210 = vadd.f32 %v5208, 1.0
    %v5211 = vrcp.pop %v5209
    %v5212 = vmul.f32 %v5209, %v5211
    %v5213 = vsub.f32 1.0, %v5212
    %v5214 = vmul.f32 %v5211, %v5213
    %v5215 = vadd.f32 %v5211, %v5214
    %vm5216 = vweird.f32 %v5209
    %vm5217 = vweird.f32 %v5211
    %vm5218 = vmor %vm5216, %vm5217
    %v5219 = vsel %vm5218, %v5211, %v5215
    %v5220 = vand.u32 2147483647, %v5209
    %vm5221 = vcmp.eq.f32.partialorder %v5220, 8.507059e+37
    %v5222 = vand.u32 %v5209, 2147483648
    %v5223 = vor.u32 1.1754944e-38, %v5222
    %v5224 = vsel %vm5221, %v5223, %v5219
    %v5225 = vmul.f32 1.0, %v5224
    %v5226 = vrcp.pop %v5210
    %v5227 = vmul.f32 %v5210, %v5226
    %v5228 = vsub.f32 1.0, %v5227
    %v5229 = vmul.f32 %v5226, %v5228
    %v5230 = vadd.f32 %v5226, %v5229
    %vm5231 = vweird.f32 %v5210
    %vm5232 = vweird.f32 %v5226
    %vm5233 = vmor %vm5231, %vm5232
    %v5234 = vsel %vm5233, %v5226, %v5230
    %v5235 = vand.u32 2147483647, %v5210
    %vm5236 = vcmp.eq.f32.partialorder %v5235, 8.507059e+37
    %v5237 = vand.u32 %v5210, 2147483648
    %v5238 = vor.u32 1.1754944e-38, %v5237
    %v5239 = vsel %vm5236, %v5238, %v5234
    %v5240 = vmul.f32 1.0, %v5239
    %v5241 = vxor.u32 %v5141, 2147483648
    %v5242 = vxor.u32 %v5142, 2147483648
    %v5243 = vmul.f32 %v5241, 1.442695
    %v5244 = vpow.pop %v5243
    %v5245 = vmul.f32 %v5242, 1.442695
    %v5246 = vpow.pop %v5245
    %v5247 = vadd.f32 %v5244, 1.0
    %v5248 = vadd.f32 %v5246, 1.0
    %v5249 = vrcp.pop %v5247
    %v5250 = vmul.f32 %v5247, %v5249
    %v5251 = vsub.f32 1.0, %v5250
    %v5252 = vmul.f32 %v5249, %v5251
    %v5253 = vadd.f32 %v5249, %v5252
    %vm5254 = vweird.f32 %v5247
    %vm5255 = vweird.f32 %v5249
    %vm5256 = vmor %vm5254, %vm5255
    %v5257 = vsel %vm5256, %v5249, %v5253
    %v5258 = vand.u32 2147483647, %v5247
    %vm5259 = vcmp.eq.f32.partialorder %v5258, 8.507059e+37
    %v5260 = vand.u32 %v5247, 2147483648
    %v5261 = vor.u32 1.1754944e-38, %v5260
    %v5262 = vsel %vm5259, %v5261, %v5257
    %v5263 = vmul.f32 1.0, %v5262
    %v5264 = vrcp.pop %v5248
    %v5265 = vmul.f32 %v5248, %v5264
    %v5266 = vsub.f32 1.0, %v5265
    %v5267 = vmul.f32 %v5264, %v5266
    %v5268 = vadd.f32 %v5264, %v5267
    %vm5269 = vweird.f32 %v5248
    %vm5270 = vweird.f32 %v5264
    %vm5271 = vmor %vm5269, %vm5270
    %v5272 = vsel %vm5271, %v5264, %v5268
    %v5273 = vand.u32 2147483647, %v5248
    %vm5274 = vcmp.eq.f32.partialorder %v5273, 8.507059e+37
    %v5275 = vand.u32 %v5248, 2147483648
    %v5276 = vor.u32 1.1754944e-38, %v5275
    %v5277 = vsel %vm5274, %v5276, %v5272
    %v5278 = vmul.f32 1.0, %v5277
    %v5279 = vtanh.pop %v5143
    %v5280 = vtanh.pop %v5144
    %v5281 = vmul.f32 %v5187, %v3950
    %v5282 = vmul.f32 %v5202, %v3951
    %v5283 = vmul.f32 %v5225, %v5279
    %v5284 = vmul.f32 %v5240, %v5280
    %v5285 = vadd.f32 %v5281, %v5283
    %v5286 = vadd.f32 %v5282, %v5284
    %v5287 = vtanh.pop %v5285
    %v5288 = vtanh.pop %v5286
    %v5289 = vmul.f32 %v5263, %v5287
    %v5290 = vmul.f32 %v5278, %v5288
    %v5291 = vpack.c.bf16 %v5289, %v5289
    %v5292 = vpack.c.bf16 %v5290, %v5290
    %5293 = vmatpush.bf16.msra.mxu0 %v4106
    %5294 = vmatpush.bf16.msra.mxu0 %v4104
    %5295 = vmatpush.bf16.msra.mxu0 %v4102
    %5296 = vmatpush.bf16.msra.mxu0 %v4100
    %5297 = vmatpush.bf16.msra.mxu0 %v4098
    %5298 = vmatpush.bf16.msra.mxu0 %v4096
    %5299 = vmatpush.bf16.msra.mxu0 %v4094
    %5300 = vmatpush.bf16.msra.mxu0 %v4092
    %5301 = vmatmul.bf16.gmra.mxu0 %v5291
    %v5302 = vpop.f32.mrf.mxu0
    %v5303 = vadd.f32 %v3992, %v5302
    %v5304 = vpop.f32.mrf.mxu0
    %5305 = vdwg.mxu0
    %5306 = vmatpush.bf16.msra.mxu0 %v4122
    %5307 = vmatpush.bf16.msra.mxu0 %v4120
    %5308 = vmatpush.bf16.msra.mxu0 %v4118
    %5309 = vmatpush.bf16.msra.mxu0 %v4116
    %5310 = vmatpush.bf16.msra.mxu0 %v4114
    %5311 = vmatpush.bf16.msra.mxu0 %v4112
    %5312 = vmatpush.bf16.msra.mxu0 %v4110
    %5313 = vmatpush.bf16.msra.mxu0 %v4108
    %5314 = vmatmul.bf16.gmra.mxu0 %v5292
    %v5315 = vpop.f32.mrf.mxu0
    %v5316 = vadd.f32 %v5303, %v5315
    %v5317 = vpop.f32.mrf.mxu0
    %5318 = vdwg.mxu0
    %5319 = vmatpush.bf16.msra.mxu0 %v4107
    %5320 = vmatpush.bf16.msra.mxu0 %v4105
    %5321 = vmatpush.bf16.msra.mxu0 %v4103
    %5322 = vmatpush.bf16.msra.mxu0 %v4101
    %5323 = vmatpush.bf16.msra.mxu0 %v4099
    %5324 = vmatpush.bf16.msra.mxu0 %v4097
    %5325 = vmatpush.bf16.msra.mxu0 %v4095
    %5326 = vmatpush.bf16.msra.mxu0 %v4093
    %5327 = vmatmul.bf16.gmra.mxu0 %v5291
    %v5328 = vpop.f32.mrf.mxu0
    %v5329 = vadd.f32 %v3993, %v5328
    %v5330 = vpop.f32.mrf.mxu0
    %5331 = vdwg.mxu0
    %5332 = vmatpush.bf16.msra.mxu0 %v4123
    %5333 = vmatpush.bf16.msra.mxu0 %v4121
    %5334 = vmatpush.bf16.msra.mxu0 %v4119
    %5335 = vmatpush.bf16.msra.mxu0 %v4117
    %5336 = vmatpush.bf16.msra.mxu0 %v4115
    %5337 = vmatpush.bf16.msra.mxu0 %v4113
    %5338 = vmatpush.bf16.msra.mxu0 %v4111
    %5339 = vmatpush.bf16.msra.mxu0 %v4109
    %5340 = vmatmul.bf16.gmra.mxu0 %v5292
    %v5341 = vpop.f32.mrf.mxu0
    %v5342 = vadd.f32 %v5329, %v5341
    %v5343 = vpop.f32.mrf.mxu0
    %5344 = vdwg.mxu0
    %v5345 = vmax.f32 %v5342, 0.0
    %vm5346 = vcmp.ne.f32.partialorder %v5342, %v5342
    %v5347 = vadd.f32 %v5342, 0.0
    %v5348 = vand.u32 2147483647, %v5342
    %v5349 = vsub.f32 0.0, %v5348
    %v5350 = vmul.f32 %v5349, 1.442695
    %v5351 = vpow.pop %v5350
    %v5352 = vadd.f32 %v5351, 1.0
    %v5353 = vlog2.pop %v5352
    %v5354 = vmul.f32 %v5353, 0.6931472
    %v5355 = vmul.f32 -0.5, %v5351
    %v5356 = vadd.f32 %v5355, 1.0
    %v5357 = vmul.f32 %v5356, %v5351
    %v5358 = vand.u32 2147483647, %v5351
    %vm5359 = vcmp.lt.f32.partialorder %v5358, 0.0004427343
    %v5360 = vsel %vm5359, %v5357, %v5354
    %v5361 = vadd.f32 %v5345, %v5360
    %v5362 = vsel %vm5346, %v5347, %v5361
    %s5363 = scalar_lea.vmem [#allocation5], 2
    %v5364 = vld [vmem:[%s5363] sm:$0x3]
    %v5365 = vmul.f32 %v5362, %v5364
    %v5366 = vadd.f32 %v5316, %v5365
    %v5367 = vpack.c.bf16 %v5366, %v5366
    %5368 = vmatpush.bf16.msra.mxu0 %v4542
    %5369 = vmatpush.bf16.msra.mxu0 %v4534
    %5370 = vmatpush.bf16.msra.mxu0 %v4526
    %5371 = vmatpush.bf16.msra.mxu0 %v4518
    %5372 = vmatpush.bf16.msra.mxu0 %v4510
    %5373 = vmatpush.bf16.msra.mxu0 %v4502
    %5374 = vmatpush.bf16.msra.mxu0 %v4494
    %5375 = vmatpush.bf16.msra.mxu0 %v4486
    %5376 = vmatmul.bf16.gmra.mxu0 %v5367
    %v5377 = vpop.f32.mrf.mxu0
    %v5378 = vadd.f32 %v2568, %v5377
    %v5379 = vpop.f32.mrf.mxu0
    %5380 = vdwg.mxu0
    %5381 = vmatpush.bf16.msra.mxu0 %v4543
    %5382 = vmatpush.bf16.msra.mxu0 %v4535
    %5383 = vmatpush.bf16.msra.mxu0 %v4527
    %5384 = vmatpush.bf16.msra.mxu0 %v4519
    %5385 = vmatpush.bf16.msra.mxu0 %v4511
    %5386 = vmatpush.bf16.msra.mxu0 %v4503
    %5387 = vmatpush.bf16.msra.mxu0 %v4495
    %5388 = vmatpush.bf16.msra.mxu0 %v4487
    %5389 = vmatmul.bf16.gmra.mxu0 %v5367
    %v5390 = vpop.f32.mrf.mxu0
    %v5391 = vadd.f32 %v2569, %v5390
    %v5392 = vpop.f32.mrf.mxu0
    %5393 = vdwg.mxu0
    %5394 = vmatpush.bf16.msra.mxu0 %v4544
    %5395 = vmatpush.bf16.msra.mxu0 %v4536
    %5396 = vmatpush.bf16.msra.mxu0 %v4528
    %5397 = vmatpush.bf16.msra.mxu0 %v4520
    %5398 = vmatpush.bf16.msra.mxu0 %v4512
    %5399 = vmatpush.bf16.msra.mxu0 %v4504
    %5400 = vmatpush.bf16.msra.mxu0 %v4496
    %5401 = vmatpush.bf16.msra.mxu0 %v4488
    %5402 = vmatmul.bf16.gmra.mxu0 %v5367
    %v5403 = vpop.f32.mrf.mxu0
    %v5404 = vadd.f32 %v2570, %v5403
    %v5405 = vpop.f32.mrf.mxu0
    %5406 = vdwg.mxu0
    %5407 = vmatpush.bf16.msra.mxu0 %v4545
    %5408 = vmatpush.bf16.msra.mxu0 %v4537
    %5409 = vmatpush.bf16.msra.mxu0 %v4529
    %5410 = vmatpush.bf16.msra.mxu0 %v4521
    %5411 = vmatpush.bf16.msra.mxu0 %v4513
    %5412 = vmatpush.bf16.msra.mxu0 %v4505
    %5413 = vmatpush.bf16.msra.mxu0 %v4497
    %5414 = vmatpush.bf16.msra.mxu0 %v4489
    %5415 = vmatmul.bf16.gmra.mxu0 %v5367
    %v5416 = vpop.f32.mrf.mxu0
    %v5417 = vadd.f32 %v2571, %v5416
    %v5418 = vpop.f32.mrf.mxu0
    %5419 = vdwg.mxu0
    %5420 = vmatpush.bf16.msra.mxu0 %v4546
    %5421 = vmatpush.bf16.msra.mxu0 %v4538
    %5422 = vmatpush.bf16.msra.mxu0 %v4530
    %5423 = vmatpush.bf16.msra.mxu0 %v4522
    %5424 = vmatpush.bf16.msra.mxu0 %v4514
    %5425 = vmatpush.bf16.msra.mxu0 %v4506
    %5426 = vmatpush.bf16.msra.mxu0 %v4498
    %5427 = vmatpush.bf16.msra.mxu0 %v4490
    %5428 = vmatmul.bf16.gmra.mxu0 %v5367
    %v5429 = vpop.f32.mrf.mxu0
    %v5430 = vadd.f32 %v2572, %v5429
    %v5431 = vpop.f32.mrf.mxu0
    %5432 = vdwg.mxu0
    %5433 = vmatpush.bf16.msra.mxu0 %v4547
    %5434 = vmatpush.bf16.msra.mxu0 %v4539
    %5435 = vmatpush.bf16.msra.mxu0 %v4531
    %5436 = vmatpush.bf16.msra.mxu0 %v4523
    %5437 = vmatpush.bf16.msra.mxu0 %v4515
    %5438 = vmatpush.bf16.msra.mxu0 %v4507
    %5439 = vmatpush.bf16.msra.mxu0 %v4499
    %5440 = vmatpush.bf16.msra.mxu0 %v4491
    %5441 = vmatmul.bf16.gmra.mxu0 %v5367
    %v5442 = vpop.f32.mrf.mxu0
    %v5443 = vadd.f32 %v2573, %v5442
    %v5444 = vpop.f32.mrf.mxu0
    %5445 = vdwg.mxu0
    %5446 = vmatpush.bf16.msra.mxu0 %v4548
    %5447 = vmatpush.bf16.msra.mxu0 %v4540
    %5448 = vmatpush.bf16.msra.mxu0 %v4532
    %5449 = vmatpush.bf16.msra.mxu0 %v4524
    %5450 = vmatpush.bf16.msra.mxu0 %v4516
    %5451 = vmatpush.bf16.msra.mxu0 %v4508
    %5452 = vmatpush.bf16.msra.mxu0 %v4500
    %5453 = vmatpush.bf16.msra.mxu0 %v4492
    %5454 = vmatmul.bf16.gmra.mxu0 %v5367
    %v5455 = vpop.f32.mrf.mxu0
    %v5456 = vadd.f32 %v2574, %v5455
    %v5457 = vpop.f32.mrf.mxu0
    %5458 = vdwg.mxu0
    %5459 = vmatpush.bf16.msra.mxu0 %v4549
    %5460 = vmatpush.bf16.msra.mxu0 %v4541
    %5461 = vmatpush.bf16.msra.mxu0 %v4533
    %5462 = vmatpush.bf16.msra.mxu0 %v4525
    %5463 = vmatpush.bf16.msra.mxu0 %v4517
    %5464 = vmatpush.bf16.msra.mxu0 %v4509
    %5465 = vmatpush.bf16.msra.mxu0 %v4501
    %5466 = vmatpush.bf16.msra.mxu0 %v4493
    %5467 = vmatmul.bf16.gmra.mxu0 %v5367
    %v5468 = vpop.f32.mrf.mxu0
    %v5469 = vadd.f32 %v2575, %v5468
    %v5470 = vpop.f32.mrf.mxu0
    %5471 = vdwg.mxu0
    %v5472 = vxor.u32 %v5378, 2147483648
    %v5473 = vxor.u32 %v5391, 2147483648
    %v5474 = vmul.f32 %v5472, 1.442695
    %v5475 = vpow.pop %v5474
    %v5476 = vmul.f32 %v5473, 1.442695
    %v5477 = vpow.pop %v5476
    %v5478 = vadd.f32 %v5475, 1.0
    %v5479 = vadd.f32 %v5477, 1.0
    %v5480 = vrcp.pop %v5478
    %v5481 = vmul.f32 %v5478, %v5480
    %v5482 = vsub.f32 1.0, %v5481
    %v5483 = vmul.f32 %v5480, %v5482
    %v5484 = vadd.f32 %v5480, %v5483
    %vm5485 = vweird.f32 %v5478
    %vm5486 = vweird.f32 %v5480
    %vm5487 = vmor %vm5485, %vm5486
    %v5488 = vsel %vm5487, %v5480, %v5484
    %v5489 = vand.u32 2147483647, %v5478
    %vm5490 = vcmp.eq.f32.partialorder %v5489, 8.507059e+37
    %v5491 = vand.u32 %v5478, 2147483648
    %v5492 = vor.u32 1.1754944e-38, %v5491
    %v5493 = vsel %vm5490, %v5492, %v5488
    %v5494 = vmul.f32 1.0, %v5493
    %v5495 = vrcp.pop %v5479
    %v5496 = vmul.f32 %v5479, %v5495
    %v5497 = vsub.f32 1.0, %v5496
    %v5498 = vmul.f32 %v5495, %v5497
    %v5499 = vadd.f32 %v5495, %v5498
    %vm5500 = vweird.f32 %v5479
    %vm5501 = vweird.f32 %v5495
    %vm5502 = vmor %vm5500, %vm5501
    %v5503 = vsel %vm5502, %v5495, %v5499
    %v5504 = vand.u32 2147483647, %v5479
    %vm5505 = vcmp.eq.f32.partialorder %v5504, 8.507059e+37
    %v5506 = vand.u32 %v5479, 2147483648
    %v5507 = vor.u32 1.1754944e-38, %v5506
    %v5508 = vsel %vm5505, %v5507, %v5503
    %v5509 = vmul.f32 1.0, %v5508
    %v5510 = vxor.u32 %v5404, 2147483648
    %v5511 = vxor.u32 %v5417, 2147483648
    %v5512 = vmul.f32 %v5510, 1.442695
    %v5513 = vpow.pop %v5512
    %v5514 = vmul.f32 %v5511, 1.442695
    %v5515 = vpow.pop %v5514
    %v5516 = vadd.f32 %v5513, 1.0
    %v5517 = vadd.f32 %v5515, 1.0
    %v5518 = vrcp.pop %v5516
    %v5519 = vmul.f32 %v5516, %v5518
    %v5520 = vsub.f32 1.0, %v5519
    %v5521 = vmul.f32 %v5518, %v5520
    %v5522 = vadd.f32 %v5518, %v5521
    %vm5523 = vweird.f32 %v5516
    %vm5524 = vweird.f32 %v5518
    %vm5525 = vmor %vm5523, %vm5524
    %v5526 = vsel %vm5525, %v5518, %v5522
    %v5527 = vand.u32 2147483647, %v5516
    %vm5528 = vcmp.eq.f32.partialorder %v5527, 8.507059e+37
    %v5529 = vand.u32 %v5516, 2147483648
    %v5530 = vor.u32 1.1754944e-38, %v5529
    %v5531 = vsel %vm5528, %v5530, %v5526
    %v5532 = vmul.f32 1.0, %v5531
    %v5533 = vrcp.pop %v5517
    %v5534 = vmul.f32 %v5517, %v5533
    %v5535 = vsub.f32 1.0, %v5534
    %v5536 = vmul.f32 %v5533, %v5535
    %v5537 = vadd.f32 %v5533, %v5536
    %vm5538 = vweird.f32 %v5517
    %vm5539 = vweird.f32 %v5533
    %vm5540 = vmor %vm5538, %vm5539
    %v5541 = vsel %vm5540, %v5533, %v5537
    %v5542 = vand.u32 2147483647, %v5517
    %vm5543 = vcmp.eq.f32.partialorder %v5542, 8.507059e+37
    %v5544 = vand.u32 %v5517, 2147483648
    %v5545 = vor.u32 1.1754944e-38, %v5544
    %v5546 = vsel %vm5543, %v5545, %v5541
    %v5547 = vmul.f32 1.0, %v5546
    %v5548 = vxor.u32 %v5430, 2147483648
    %v5549 = vxor.u32 %v5443, 2147483648
    %v5550 = vmul.f32 %v5548, 1.442695
    %v5551 = vpow.pop %v5550
    %v5552 = vmul.f32 %v5549, 1.442695
    %v5553 = vpow.pop %v5552
    %v5554 = vadd.f32 %v5551, 1.0
    %v5555 = vadd.f32 %v5553, 1.0
    %v5556 = vrcp.pop %v5554
    %v5557 = vmul.f32 %v5554, %v5556
    %v5558 = vsub.f32 1.0, %v5557
    %v5559 = vmul.f32 %v5556, %v5558
    %v5560 = vadd.f32 %v5556, %v5559
    %vm5561 = vweird.f32 %v5554
    %vm5562 = vweird.f32 %v5556
    %vm5563 = vmor %vm5561, %vm5562
    %v5564 = vsel %vm5563, %v5556, %v5560
    %v5565 = vand.u32 2147483647, %v5554
    %vm5566 = vcmp.eq.f32.partialorder %v5565, 8.507059e+37
    %v5567 = vand.u32 %v5554, 2147483648
    %v5568 = vor.u32 1.1754944e-38, %v5567
    %v5569 = vsel %vm5566, %v5568, %v5564
    %v5570 = vmul.f32 1.0, %v5569
    %v5571 = vrcp.pop %v5555
    %v5572 = vmul.f32 %v5555, %v5571
    %v5573 = vsub.f32 1.0, %v5572
    %v5574 = vmul.f32 %v5571, %v5573
    %v5575 = vadd.f32 %v5571, %v5574
    %vm5576 = vweird.f32 %v5555
    %vm5577 = vweird.f32 %v5571
    %vm5578 = vmor %vm5576, %vm5577
    %v5579 = vsel %vm5578, %v5571, %v5575
    %v5580 = vand.u32 2147483647, %v5555
    %vm5581 = vcmp.eq.f32.partialorder %v5580, 8.507059e+37
    %v5582 = vand.u32 %v5555, 2147483648
    %v5583 = vor.u32 1.1754944e-38, %v5582
    %v5584 = vsel %vm5581, %v5583, %v5579
    %v5585 = vmul.f32 1.0, %v5584
    %v5586 = vtanh.pop %v5456
    %v5587 = vtanh.pop %v5469
    %v5588 = vmul.f32 %v5494, %v4838
    %v5589 = vmul.f32 %v5509, %v4839
    %v5590 = vmul.f32 %v5532, %v5586
    %v5591 = vmul.f32 %v5547, %v5587
    %v5592 = vadd.f32 %v5588, %v5590
    %v5593 = vadd.f32 %v5589, %v5591
    %v5594 = vtanh.pop %v5592
    %v5595 = vtanh.pop %v5593
    %v5596 = vmul.f32 %v5570, %v5594
    %v5597 = vmul.f32 %v5585, %v5595
    %v5598 = vadd.f32 %v4844, %v5596
    %v5599 = vadd.f32 %v4845, %v5597
    %v5600 = vlog2.pop %v5164
    %v5601 = vmul.f32 %v5600, 0.6931472
    %v5602 = vlog2.pop %v5362
    %v5603 = vmul.f32 %v5602, 0.6931472
    %v5604 = vsub.f32 %v5601, %v5603
    %v5605 = vmul.f32 %v5362, %v5362
    %v5606 = vsub.f32 %v5316, %v5145
    %v5607 = vmul.f32 %v5606, %v5606
    %v5608 = vadd.f32 %v5605, %v5607
    %v5609 = vmul.f32 %v5164, 2.0
    %v5610 = vmul.f32 %v5609, %v5164
    %v5611 = vrcp.pop %v5610
    %v5612 = vmul.f32 %v5610, %v5611
    %v5613 = vsub.f32 1.0, %v5612
    %v5614 = vmul.f32 %v5611, %v5613
    %v5615 = vadd.f32 %v5611, %v5614
    %vm5616 = vweird.f32 %v5610
    %vm5617 = vweird.f32 %v5611
    %vm5618 = vmor %vm5616, %vm5617
    %v5619 = vsel %vm5618, %v5611, %v5615
    %v5620 = vand.u32 2147483647, %v5610
    %vm5621 = vcmp.eq.f32.partialorder %v5620, 8.507059e+37
    %v5622 = vand.u32 %v5610, 2147483648
    %v5623 = vor.u32 1.1754944e-38, %v5622
    %v5624 = vsel %vm5621, %v5623, %v5619
    %v5625 = vmul.f32 %v5608, %v5624
    %v5626 = vadd.f32 %v5604, %v5625
    %v5627 = vsub.f32 %v5626, 0.5
    %v5628 = vadd.f32 %v4874, %v5627
    %v5629 = vpack.c.bf16 %v5596, %v5596
    %v5630 = vpack.c.bf16 %v5597, %v5597
    %5631 = vmatpush.bf16.msra.mxu0 %v3286
    %5632 = vmatpush.bf16.msra.mxu0 %v3276
    %5633 = vmatpush.bf16.msra.mxu0 %v3266
    %5634 = vmatpush.bf16.msra.mxu0 %v3256
    %5635 = vmatpush.bf16.msra.mxu0 %v3246
    %5636 = vmatpush.bf16.msra.mxu0 %v3236
    %5637 = vmatpush.bf16.msra.mxu0 %v3226
    %5638 = vmatpush.bf16.msra.mxu0 %v3216
    %5639 = vmatmul.bf16.gmra.mxu0 %v5629
    %v5640 = vpop.f32.mrf.mxu0
    %v5641 = vadd.f32 0.0, %v5640
    %v5642 = vpop.f32.mrf.mxu0
    %5643 = vdwg.mxu0
    %5644 = vmatpush.bf16.msra.mxu0 %v3366
    %5645 = vmatpush.bf16.msra.mxu0 %v3356
    %5646 = vmatpush.bf16.msra.mxu0 %v3346
    %5647 = vmatpush.bf16.msra.mxu0 %v3336
    %5648 = vmatpush.bf16.msra.mxu0 %v3326
    %5649 = vmatpush.bf16.msra.mxu0 %v3316
    %5650 = vmatpush.bf16.msra.mxu0 %v3306
    %5651 = vmatpush.bf16.msra.mxu0 %v3296
    %5652 = vmatmul.bf16.gmra.mxu0 %v5630
    %v5653 = vpop.f32.mrf.mxu0
    %v5654 = vadd.f32 %v5641, %v5653
    %v5655 = vpop.f32.mrf.mxu0
    %5656 = vdwg.mxu0
    %5657 = vmatpush.bf16.msra.mxu0 %v3287
    %5658 = vmatpush.bf16.msra.mxu0 %v3277
    %5659 = vmatpush.bf16.msra.mxu0 %v3267
    %5660 = vmatpush.bf16.msra.mxu0 %v3257
    %5661 = vmatpush.bf16.msra.mxu0 %v3247
    %5662 = vmatpush.bf16.msra.mxu0 %v3237
    %5663 = vmatpush.bf16.msra.mxu0 %v3227
    %5664 = vmatpush.bf16.msra.mxu0 %v3217
    %5665 = vmatmul.bf16.gmra.mxu0 %v5629
    %v5666 = vpop.f32.mrf.mxu0
    %v5667 = vadd.f32 0.0, %v5666
    %v5668 = vpop.f32.mrf.mxu0
    %5669 = vdwg.mxu0
    %5670 = vmatpush.bf16.msra.mxu0 %v3367
    %5671 = vmatpush.bf16.msra.mxu0 %v3357
    %5672 = vmatpush.bf16.msra.mxu0 %v3347
    %5673 = vmatpush.bf16.msra.mxu0 %v3337
    %5674 = vmatpush.bf16.msra.mxu0 %v3327
    %5675 = vmatpush.bf16.msra.mxu0 %v3317
    %5676 = vmatpush.bf16.msra.mxu0 %v3307
    %5677 = vmatpush.bf16.msra.mxu0 %v3297
    %5678 = vmatmul.bf16.gmra.mxu0 %v5630
    %v5679 = vpop.f32.mrf.mxu0
    %v5680 = vadd.f32 %v5667, %v5679
    %v5681 = vpop.f32.mrf.mxu0
    %5682 = vdwg.mxu0
    %5683 = vmatpush.bf16.msra.mxu0 %v3288
    %5684 = vmatpush.bf16.msra.mxu0 %v3278
    %5685 = vmatpush.bf16.msra.mxu0 %v3268
    %5686 = vmatpush.bf16.msra.mxu0 %v3258
    %5687 = vmatpush.bf16.msra.mxu0 %v3248
    %5688 = vmatpush.bf16.msra.mxu0 %v3238
    %5689 = vmatpush.bf16.msra.mxu0 %v3228
    %5690 = vmatpush.bf16.msra.mxu0 %v3218
    %5691 = vmatmul.bf16.gmra.mxu0 %v5629
    %v5692 = vpop.f32.mrf.mxu0
    %v5693 = vadd.f32 0.0, %v5692
    %v5694 = vpop.f32.mrf.mxu0
    %5695 = vdwg.mxu0
    %5696 = vmatpush.bf16.msra.mxu0 %v3368
    %5697 = vmatpush.bf16.msra.mxu0 %v3358
    %5698 = vmatpush.bf16.msra.mxu0 %v3348
    %5699 = vmatpush.bf16.msra.mxu0 %v3338
    %5700 = vmatpush.bf16.msra.mxu0 %v3328
    %5701 = vmatpush.bf16.msra.mxu0 %v3318
    %5702 = vmatpush.bf16.msra.mxu0 %v3308
    %5703 = vmatpush.bf16.msra.mxu0 %v3298
    %5704 = vmatmul.bf16.gmra.mxu0 %v5630
    %v5705 = vpop.f32.mrf.mxu0
    %v5706 = vadd.f32 %v5693, %v5705
    %v5707 = vpop.f32.mrf.mxu0
    %5708 = vdwg.mxu0
    %5709 = vmatpush.bf16.msra.mxu0 %v3289
    %5710 = vmatpush.bf16.msra.mxu0 %v3279
    %5711 = vmatpush.bf16.msra.mxu0 %v3269
    %5712 = vmatpush.bf16.msra.mxu0 %v3259
    %5713 = vmatpush.bf16.msra.mxu0 %v3249
    %5714 = vmatpush.bf16.msra.mxu0 %v3239
    %5715 = vmatpush.bf16.msra.mxu0 %v3229
    %5716 = vmatpush.bf16.msra.mxu0 %v3219
    %5717 = vmatmul.bf16.gmra.mxu0 %v5629
    %v5718 = vpop.f32.mrf.mxu0
    %v5719 = vadd.f32 0.0, %v5718
    %v5720 = vpop.f32.mrf.mxu0
    %5721 = vdwg.mxu0
    %5722 = vmatpush.bf16.msra.mxu0 %v3369
    %5723 = vmatpush.bf16.msra.mxu0 %v3359
    %5724 = vmatpush.bf16.msra.mxu0 %v3349
    %5725 = vmatpush.bf16.msra.mxu0 %v3339
    %5726 = vmatpush.bf16.msra.mxu0 %v3329
    %5727 = vmatpush.bf16.msra.mxu0 %v3319
    %5728 = vmatpush.bf16.msra.mxu0 %v3309
    %5729 = vmatpush.bf16.msra.mxu0 %v3299
    %5730 = vmatmul.bf16.gmra.mxu0 %v5630
    %v5731 = vpop.f32.mrf.mxu0
    %v5732 = vadd.f32 %v5719, %v5731
    %v5733 = vpop.f32.mrf.mxu0
    %5734 = vdwg.mxu0
    %5735 = vmatpush.bf16.msra.mxu0 %v3290
    %5736 = vmatpush.bf16.msra.mxu0 %v3280
    %5737 = vmatpush.bf16.msra.mxu0 %v3270
    %5738 = vmatpush.bf16.msra.mxu0 %v3260
    %5739 = vmatpush.bf16.msra.mxu0 %v3250
    %5740 = vmatpush.bf16.msra.mxu0 %v3240
    %5741 = vmatpush.bf16.msra.mxu0 %v3230
    %5742 = vmatpush.bf16.msra.mxu0 %v3220
    %5743 = vmatmul.bf16.gmra.mxu0 %v5629
    %v5744 = vpop.f32.mrf.mxu0
    %v5745 = vadd.f32 0.0, %v5744
    %v5746 = vpop.f32.mrf.mxu0
    %5747 = vdwg.mxu0
    %5748 = vmatpush.bf16.msra.mxu0 %v3370
    %5749 = vmatpush.bf16.msra.mxu0 %v3360
    %5750 = vmatpush.bf16.msra.mxu0 %v3350
    %5751 = vmatpush.bf16.msra.mxu0 %v3340
    %5752 = vmatpush.bf16.msra.mxu0 %v3330
    %5753 = vmatpush.bf16.msra.mxu0 %v3320
    %5754 = vmatpush.bf16.msra.mxu0 %v3310
    %5755 = vmatpush.bf16.msra.mxu0 %v3300
    %5756 = vmatmul.bf16.gmra.mxu0 %v5630
    %v5757 = vpop.f32.mrf.mxu0
    %v5758 = vadd.f32 %v5745, %v5757
    %v5759 = vpop.f32.mrf.mxu0
    %5760 = vdwg.mxu0
    %5761 = vmatpush.bf16.msra.mxu0 %v3291
    %5762 = vmatpush.bf16.msra.mxu0 %v3281
    %5763 = vmatpush.bf16.msra.mxu0 %v3271
    %5764 = vmatpush.bf16.msra.mxu0 %v3261
    %5765 = vmatpush.bf16.msra.mxu0 %v3251
    %5766 = vmatpush.bf16.msra.mxu0 %v3241
    %5767 = vmatpush.bf16.msra.mxu0 %v3231
    %5768 = vmatpush.bf16.msra.mxu0 %v3221
    %5769 = vmatmul.bf16.gmra.mxu0 %v5629
    %v5770 = vpop.f32.mrf.mxu0
    %v5771 = vadd.f32 0.0, %v5770
    %v5772 = vpop.f32.mrf.mxu0
    %5773 = vdwg.mxu0
    %5774 = vmatpush.bf16.msra.mxu0 %v3371
    %5775 = vmatpush.bf16.msra.mxu0 %v3361
    %5776 = vmatpush.bf16.msra.mxu0 %v3351
    %5777 = vmatpush.bf16.msra.mxu0 %v3341
    %5778 = vmatpush.bf16.msra.mxu0 %v3331
    %5779 = vmatpush.bf16.msra.mxu0 %v3321
    %5780 = vmatpush.bf16.msra.mxu0 %v3311
    %5781 = vmatpush.bf16.msra.mxu0 %v3301
    %5782 = vmatmul.bf16.gmra.mxu0 %v5630
    %v5783 = vpop.f32.mrf.mxu0
    %v5784 = vadd.f32 %v5771, %v5783
    %v5785 = vpop.f32.mrf.mxu0
    %5786 = vdwg.mxu0
    %5787 = vmatpush.bf16.msra.mxu0 %v3292
    %5788 = vmatpush.bf16.msra.mxu0 %v3282
    %5789 = vmatpush.bf16.msra.mxu0 %v3272
    %5790 = vmatpush.bf16.msra.mxu0 %v3262
    %5791 = vmatpush.bf16.msra.mxu0 %v3252
    %5792 = vmatpush.bf16.msra.mxu0 %v3242
    %5793 = vmatpush.bf16.msra.mxu0 %v3232
    %5794 = vmatpush.bf16.msra.mxu0 %v3222
    %5795 = vmatmul.bf16.gmra.mxu0 %v5629
    %v5796 = vpop.f32.mrf.mxu0
    %v5797 = vadd.f32 0.0, %v5796
    %v5798 = vpop.f32.mrf.mxu0
    %5799 = vdwg.mxu0
    %5800 = vmatpush.bf16.msra.mxu0 %v3372
    %5801 = vmatpush.bf16.msra.mxu0 %v3362
    %5802 = vmatpush.bf16.msra.mxu0 %v3352
    %5803 = vmatpush.bf16.msra.mxu0 %v3342
    %5804 = vmatpush.bf16.msra.mxu0 %v3332
    %5805 = vmatpush.bf16.msra.mxu0 %v3322
    %5806 = vmatpush.bf16.msra.mxu0 %v3312
    %5807 = vmatpush.bf16.msra.mxu0 %v3302
    %5808 = vmatmul.bf16.gmra.mxu0 %v5630
    %v5809 = vpop.f32.mrf.mxu0
    %v5810 = vadd.f32 %v5797, %v5809
    %v5811 = vpop.f32.mrf.mxu0
    %5812 = vdwg.mxu0
    %5813 = vmatpush.bf16.msra.mxu0 %v3293
    %5814 = vmatpush.bf16.msra.mxu0 %v3283
    %5815 = vmatpush.bf16.msra.mxu0 %v3273
    %5816 = vmatpush.bf16.msra.mxu0 %v3263
    %5817 = vmatpush.bf16.msra.mxu0 %v3253
    %5818 = vmatpush.bf16.msra.mxu0 %v3243
    %5819 = vmatpush.bf16.msra.mxu0 %v3233
    %5820 = vmatpush.bf16.msra.mxu0 %v3223
    %5821 = vmatmul.bf16.gmra.mxu0 %v5629
    %v5822 = vpop.f32.mrf.mxu0
    %v5823 = vadd.f32 0.0, %v5822
    %v5824 = vpop.f32.mrf.mxu0
    %5825 = vdwg.mxu0
    %5826 = vmatpush.bf16.msra.mxu0 %v3373
    %5827 = vmatpush.bf16.msra.mxu0 %v3363
    %5828 = vmatpush.bf16.msra.mxu0 %v3353
    %5829 = vmatpush.bf16.msra.mxu0 %v3343
    %5830 = vmatpush.bf16.msra.mxu0 %v3333
    %5831 = vmatpush.bf16.msra.mxu0 %v3323
    %5832 = vmatpush.bf16.msra.mxu0 %v3313
    %5833 = vmatpush.bf16.msra.mxu0 %v3303
    %5834 = vmatmul.bf16.gmra.mxu0 %v5630
    %v5835 = vpop.f32.mrf.mxu0
    %v5836 = vadd.f32 %v5823, %v5835
    %v5837 = vpop.f32.mrf.mxu0
    %5838 = vdwg.mxu0
    %5839 = vmatpush.bf16.msra.mxu0 %v3294
    %5840 = vmatpush.bf16.msra.mxu0 %v3284
    %5841 = vmatpush.bf16.msra.mxu0 %v3274
    %5842 = vmatpush.bf16.msra.mxu0 %v3264
    %5843 = vmatpush.bf16.msra.mxu0 %v3254
    %5844 = vmatpush.bf16.msra.mxu0 %v3244
    %5845 = vmatpush.bf16.msra.mxu0 %v3234
    %5846 = vmatpush.bf16.msra.mxu0 %v3224
    %5847 = vmatmul.bf16.gmra.mxu0 %v5629
    %v5848 = vpop.f32.mrf.mxu0
    %v5849 = vadd.f32 0.0, %v5848
    %v5850 = vpop.f32.mrf.mxu0
    %5851 = vdwg.mxu0
    %5852 = vmatpush.bf16.msra.mxu0 %v3374
    %5853 = vmatpush.bf16.msra.mxu0 %v3364
    %5854 = vmatpush.bf16.msra.mxu0 %v3354
    %5855 = vmatpush.bf16.msra.mxu0 %v3344
    %5856 = vmatpush.bf16.msra.mxu0 %v3334
    %5857 = vmatpush.bf16.msra.mxu0 %v3324
    %5858 = vmatpush.bf16.msra.mxu0 %v3314
    %5859 = vmatpush.bf16.msra.mxu0 %v3304
    %5860 = vmatmul.bf16.gmra.mxu0 %v5630
    %v5861 = vpop.f32.mrf.mxu0
    %v5862 = vadd.f32 %v5849, %v5861
    %v5863 = vpop.f32.mrf.mxu0
    %5864 = vdwg.mxu0
    %5865 = vmatpush.bf16.msra.mxu0 %v3295
    %5866 = vmatpush.bf16.msra.mxu0 %v3285
    %5867 = vmatpush.bf16.msra.mxu0 %v3275
    %5868 = vmatpush.bf16.msra.mxu0 %v3265
    %5869 = vmatpush.bf16.msra.mxu0 %v3255
    %5870 = vmatpush.bf16.msra.mxu0 %v3245
    %5871 = vmatpush.bf16.msra.mxu0 %v3235
    %5872 = vmatpush.bf16.msra.mxu0 %v3225
    %5873 = vmatmul.bf16.gmra.mxu0 %v5629
    %v5874 = vpop.f32.mrf.mxu0
    %v5875 = vadd.f32 0.0, %v5874
    %v5876 = vpop.f32.mrf.mxu0
    %5877 = vdwg.mxu0
    %5878 = vmatpush.bf16.msra.mxu0 %v3375
    %5879 = vmatpush.bf16.msra.mxu0 %v3365
    %5880 = vmatpush.bf16.msra.mxu0 %v3355
    %5881 = vmatpush.bf16.msra.mxu0 %v3345
    %5882 = vmatpush.bf16.msra.mxu0 %v3335
    %5883 = vmatpush.bf16.msra.mxu0 %v3325
    %5884 = vmatpush.bf16.msra.mxu0 %v3315
    %5885 = vmatpush.bf16.msra.mxu0 %v3305
    %5886 = vmatmul.bf16.gmra.mxu0 %v5630
    %v5887 = vpop.f32.mrf.mxu0
    %v5888 = vadd.f32 %v5875, %v5887
    %v5889 = vpop.f32.mrf.mxu0
    %5890 = vdwg.mxu0
    %v5891 = vadd.f32 %v5654, %v2542
    %v5892 = vadd.f32 %v5680, %v2543
    %v5893 = vadd.f32 %v5706, %v2544
    %v5894 = vadd.f32 %v5732, %v2545
    %v5895 = vadd.f32 %v5758, %v2546
    %v5896 = vadd.f32 %v5784, %v2547
    %v5897 = vadd.f32 %v5810, %v2548
    %v5898 = vadd.f32 %v5836, %v2549
    %v5899 = vadd.f32 %v5862, %v3806
    %v5900 = vadd.f32 %v5888, %v3807
    %v5901 = vmax.f32 %v5900, 0.0
    %vm5902 = vcmp.ne.f32.partialorder %v5900, %v5900
    %v5903 = vadd.f32 %v5900, 0.0
    %v5904 = vand.u32 2147483647, %v5900
    %v5905 = vsub.f32 0.0, %v5904
    %v5906 = vmul.f32 %v5905, 1.442695
    %v5907 = vpow.pop %v5906
    %v5908 = vadd.f32 %v5907, 1.0
    %v5909 = vlog2.pop %v5908
    %v5910 = vmul.f32 %v5909, 0.6931472
    %v5911 = vmul.f32 -0.5, %v5907
    %v5912 = vadd.f32 %v5911, 1.0
    %v5913 = vmul.f32 %v5912, %v5907
    %v5914 = vand.u32 2147483647, %v5907
    %vm5915 = vcmp.lt.f32.partialorder %v5914, 0.0004427343
    %v5916 = vsel %vm5915, %v5913, %v5910
    %v5917 = vadd.f32 %v5901, %v5916
    %v5918 = vsel %vm5902, %v5903, %v5917
    %v5919 = vxor.u32 %v5891, 2147483648
    %v5920 = vxor.u32 %v5892, 2147483648
    %v5921 = vmul.f32 %v5919, 1.442695
    %v5922 = vpow.pop %v5921
    %v5923 = vmul.f32 %v5920, 1.442695
    %v5924 = vpow.pop %v5923
    %v5925 = vadd.f32 %v5922, 1.0
    %v5926 = vadd.f32 %v5924, 1.0
    %v5927 = vrcp.pop %v5925
    %v5928 = vmul.f32 %v5925, %v5927
    %v5929 = vsub.f32 1.0, %v5928
    %v5930 = vmul.f32 %v5927, %v5929
    %v5931 = vadd.f32 %v5927, %v5930
    %vm5932 = vweird.f32 %v5925
    %vm5933 = vweird.f32 %v5927
    %vm5934 = vmor %vm5932, %vm5933
    %v5935 = vsel %vm5934, %v5927, %v5931
    %v5936 = vand.u32 2147483647, %v5925
    %vm5937 = vcmp.eq.f32.partialorder %v5936, 8.507059e+37
    %v5938 = vand.u32 %v5925, 2147483648
    %v5939 = vor.u32 1.1754944e-38, %v5938
    %v5940 = vsel %vm5937, %v5939, %v5935
    %v5941 = vmul.f32 1.0, %v5940
    %v5942 = vrcp.pop %v5926
    %v5943 = vmul.f32 %v5926, %v5942
    %v5944 = vsub.f32 1.0, %v5943
    %v5945 = vmul.f32 %v5942, %v5944
    %v5946 = vadd.f32 %v5942, %v5945
    %vm5947 = vweird.f32 %v5926
    %vm5948 = vweird.f32 %v5942
    %vm5949 = vmor %vm5947, %vm5948
    %v5950 = vsel %vm5949, %v5942, %v5946
    %v5951 = vand.u32 2147483647, %v5926
    %vm5952 = vcmp.eq.f32.partialorder %v5951, 8.507059e+37
    %v5953 = vand.u32 %v5926, 2147483648
    %v5954 = vor.u32 1.1754944e-38, %v5953
    %v5955 = vsel %vm5952, %v5954, %v5950
    %v5956 = vmul.f32 1.0, %v5955
    %v5957 = vxor.u32 %v5893, 2147483648
    %v5958 = vxor.u32 %v5894, 2147483648
    %v5959 = vmul.f32 %v5957, 1.442695
    %v5960 = vpow.pop %v5959
    %v5961 = vmul.f32 %v5958, 1.442695
    %v5962 = vpow.pop %v5961
    %v5963 = vadd.f32 %v5960, 1.0
    %v5964 = vadd.f32 %v5962, 1.0
    %v5965 = vrcp.pop %v5963
    %v5966 = vmul.f32 %v5963, %v5965
    %v5967 = vsub.f32 1.0, %v5966
    %v5968 = vmul.f32 %v5965, %v5967
    %v5969 = vadd.f32 %v5965, %v5968
    %vm5970 = vweird.f32 %v5963
    %vm5971 = vweird.f32 %v5965
    %vm5972 = vmor %vm5970, %vm5971
    %v5973 = vsel %vm5972, %v5965, %v5969
    %v5974 = vand.u32 2147483647, %v5963
    %vm5975 = vcmp.eq.f32.partialorder %v5974, 8.507059e+37
    %v5976 = vand.u32 %v5963, 2147483648
    %v5977 = vor.u32 1.1754944e-38, %v5976
    %v5978 = vsel %vm5975, %v5977, %v5973
    %v5979 = vmul.f32 1.0, %v5978
    %v5980 = vrcp.pop %v5964
    %v5981 = vmul.f32 %v5964, %v5980
    %v5982 = vsub.f32 1.0, %v5981
    %v5983 = vmul.f32 %v5980, %v5982
    %v5984 = vadd.f32 %v5980, %v5983
    %vm5985 = vweird.f32 %v5964
    %vm5986 = vweird.f32 %v5980
    %vm5987 = vmor %vm5985, %vm5986
    %v5988 = vsel %vm5987, %v5980, %v5984
    %v5989 = vand.u32 2147483647, %v5964
    %vm5990 = vcmp.eq.f32.partialorder %v5989, 8.507059e+37
    %v5991 = vand.u32 %v5964, 2147483648
    %v5992 = vor.u32 1.1754944e-38, %v5991
    %v5993 = vsel %vm5990, %v5992, %v5988
    %v5994 = vmul.f32 1.0, %v5993
    %v5995 = vxor.u32 %v5895, 2147483648
    %v5996 = vxor.u32 %v5896, 2147483648
    %v5997 = vmul.f32 %v5995, 1.442695
    %v5998 = vpow.pop %v5997
    %v5999 = vmul.f32 %v5996, 1.442695
    %v6000 = vpow.pop %v5999
    %v6001 = vadd.f32 %v5998, 1.0
    %v6002 = vadd.f32 %v6000, 1.0
    %v6003 = vrcp.pop %v6001
    %v6004 = vmul.f32 %v6001, %v6003
    %v6005 = vsub.f32 1.0, %v6004
    %v6006 = vmul.f32 %v6003, %v6005
    %v6007 = vadd.f32 %v6003, %v6006
    %vm6008 = vweird.f32 %v6001
    %vm6009 = vweird.f32 %v6003
    %vm6010 = vmor %vm6008, %vm6009
    %v6011 = vsel %vm6010, %v6003, %v6007
    %v6012 = vand.u32 2147483647, %v6001
    %vm6013 = vcmp.eq.f32.partialorder %v6012, 8.507059e+37
    %v6014 = vand.u32 %v6001, 2147483648
    %v6015 = vor.u32 1.1754944e-38, %v6014
    %v6016 = vsel %vm6013, %v6015, %v6011
    %v6017 = vmul.f32 1.0, %v6016
    %v6018 = vrcp.pop %v6002
    %v6019 = vmul.f32 %v6002, %v6018
    %v6020 = vsub.f32 1.0, %v6019
    %v6021 = vmul.f32 %v6018, %v6020
    %v6022 = vadd.f32 %v6018, %v6021
    %vm6023 = vweird.f32 %v6002
    %vm6024 = vweird.f32 %v6018
    %vm6025 = vmor %vm6023, %vm6024
    %v6026 = vsel %vm6025, %v6018, %v6022
    %v6027 = vand.u32 2147483647, %v6002
    %vm6028 = vcmp.eq.f32.partialorder %v6027, 8.507059e+37
    %v6029 = vand.u32 %v6002, 2147483648
    %v6030 = vor.u32 1.1754944e-38, %v6029
    %v6031 = vsel %vm6028, %v6030, %v6026
    %v6032 = vmul.f32 1.0, %v6031
    %v6033 = vtanh.pop %v5897
    %v6034 = vtanh.pop %v5898
    %v6035 = vmul.f32 %v5941, %v5285
    %v6036 = vmul.f32 %v5956, %v5286
    %v6037 = vmul.f32 %v5979, %v6033
    %v6038 = vmul.f32 %v5994, %v6034
    %v6039 = vadd.f32 %v6035, %v6037
    %v6040 = vadd.f32 %v6036, %v6038
    %v6041 = vtanh.pop %v6039
    %v6042 = vtanh.pop %v6040
    %v6043 = vmul.f32 %v6017, %v6041
    %v6044 = vmul.f32 %v6032, %v6042
    %v6045 = vpack.c.bf16 %v6043, %v6043
    %v6046 = vpack.c.bf16 %v6044, %v6044
    %6047 = vmatpush.bf16.msra.mxu0 %v4106
    %6048 = vmatpush.bf16.msra.mxu0 %v4104
    %6049 = vmatpush.bf16.msra.mxu0 %v4102
    %6050 = vmatpush.bf16.msra.mxu0 %v4100
    %6051 = vmatpush.bf16.msra.mxu0 %v4098
    %6052 = vmatpush.bf16.msra.mxu0 %v4096
    %6053 = vmatpush.bf16.msra.mxu0 %v4094
    %6054 = vmatpush.bf16.msra.mxu0 %v4092
    %6055 = vmatmul.bf16.gmra.mxu0 %v6045
    %v6056 = vpop.f32.mrf.mxu0
    %v6057 = vadd.f32 %v3992, %v6056
    %v6058 = vpop.f32.mrf.mxu0
    %6059 = vdwg.mxu0
    %6060 = vmatpush.bf16.msra.mxu0 %v4122
    %6061 = vmatpush.bf16.msra.mxu0 %v4120
    %6062 = vmatpush.bf16.msra.mxu0 %v4118
    %6063 = vmatpush.bf16.msra.mxu0 %v4116
    %6064 = vmatpush.bf16.msra.mxu0 %v4114
    %6065 = vmatpush.bf16.msra.mxu0 %v4112
    %6066 = vmatpush.bf16.msra.mxu0 %v4110
    %6067 = vmatpush.bf16.msra.mxu0 %v4108
    %6068 = vmatmul.bf16.gmra.mxu0 %v6046
    %v6069 = vpop.f32.mrf.mxu0
    %v6070 = vadd.f32 %v6057, %v6069
    %v6071 = vpop.f32.mrf.mxu0
    %6072 = vdwg.mxu0
    %6073 = vmatpush.bf16.msra.mxu0 %v4107
    %6074 = vmatpush.bf16.msra.mxu0 %v4105
    %6075 = vmatpush.bf16.msra.mxu0 %v4103
    %6076 = vmatpush.bf16.msra.mxu0 %v4101
    %6077 = vmatpush.bf16.msra.mxu0 %v4099
    %6078 = vmatpush.bf16.msra.mxu0 %v4097
    %6079 = vmatpush.bf16.msra.mxu0 %v4095
    %6080 = vmatpush.bf16.msra.mxu0 %v4093
    %6081 = vmatmul.bf16.gmra.mxu0 %v6045
    %v6082 = vpop.f32.mrf.mxu0
    %v6083 = vadd.f32 %v3993, %v6082
    %v6084 = vpop.f32.mrf.mxu0
    %6085 = vdwg.mxu0
    %6086 = vmatpush.bf16.msra.mxu0 %v4123
    %6087 = vmatpush.bf16.msra.mxu0 %v4121
    %6088 = vmatpush.bf16.msra.mxu0 %v4119
    %6089 = vmatpush.bf16.msra.mxu0 %v4117
    %6090 = vmatpush.bf16.msra.mxu0 %v4115
    %6091 = vmatpush.bf16.msra.mxu0 %v4113
    %6092 = vmatpush.bf16.msra.mxu0 %v4111
    %6093 = vmatpush.bf16.msra.mxu0 %v4109
    %6094 = vmatmul.bf16.gmra.mxu0 %v6046
    %v6095 = vpop.f32.mrf.mxu0
    %v6096 = vadd.f32 %v6083, %v6095
    %v6097 = vpop.f32.mrf.mxu0
    %6098 = vdwg.mxu0
    %v6099 = vmax.f32 %v6096, 0.0
    %vm6100 = vcmp.ne.f32.partialorder %v6096, %v6096
    %v6101 = vadd.f32 %v6096, 0.0
    %v6102 = vand.u32 2147483647, %v6096
    %v6103 = vsub.f32 0.0, %v6102
    %v6104 = vmul.f32 %v6103, 1.442695
    %v6105 = vpow.pop %v6104
    %v6106 = vadd.f32 %v6105, 1.0
    %v6107 = vlog2.pop %v6106
    %v6108 = vmul.f32 %v6107, 0.6931472
    %v6109 = vmul.f32 -0.5, %v6105
    %v6110 = vadd.f32 %v6109, 1.0
    %v6111 = vmul.f32 %v6110, %v6105
    %v6112 = vand.u32 2147483647, %v6105
    %vm6113 = vcmp.lt.f32.partialorder %v6112, 0.0004427343
    %v6114 = vsel %vm6113, %v6111, %v6108
    %v6115 = vadd.f32 %v6099, %v6114
    %v6116 = vsel %vm6100, %v6101, %v6115
    %s6117 = scalar_lea.vmem [#allocation5], 4
    %v6118 = vld [vmem:[%s6117] sm:$0x3]
    %v6119 = vmul.f32 %v6116, %v6118
    %v6120 = vadd.f32 %v6070, %v6119
    %v6121 = vpack.c.bf16 %v6120, %v6120
    %6122 = vmatpush.bf16.msra.mxu0 %v4542
    %6123 = vmatpush.bf16.msra.mxu0 %v4534
    %6124 = vmatpush.bf16.msra.mxu0 %v4526
    %6125 = vmatpush.bf16.msra.mxu0 %v4518
    %6126 = vmatpush.bf16.msra.mxu0 %v4510
    %6127 = vmatpush.bf16.msra.mxu0 %v4502
    %6128 = vmatpush.bf16.msra.mxu0 %v4494
    %6129 = vmatpush.bf16.msra.mxu0 %v4486
    %6130 = vmatmul.bf16.gmra.mxu0 %v6121
    %v6131 = vpop.f32.mrf.mxu0
    %v6132 = vadd.f32 %v2568, %v6131
    %v6133 = vpop.f32.mrf.mxu0
    %6134 = vdwg.mxu0
    %6135 = vmatpush.bf16.msra.mxu0 %v4543
    %6136 = vmatpush.bf16.msra.mxu0 %v4535
    %6137 = vmatpush.bf16.msra.mxu0 %v4527
    %6138 = vmatpush.bf16.msra.mxu0 %v4519
    %6139 = vmatpush.bf16.msra.mxu0 %v4511
    %6140 = vmatpush.bf16.msra.mxu0 %v4503
    %6141 = vmatpush.bf16.msra.mxu0 %v4495
    %6142 = vmatpush.bf16.msra.mxu0 %v4487
    %6143 = vmatmul.bf16.gmra.mxu0 %v6121
    %v6144 = vpop.f32.mrf.mxu0
    %v6145 = vadd.f32 %v2569, %v6144
    %v6146 = vpop.f32.mrf.mxu0
    %6147 = vdwg.mxu0
    %6148 = vmatpush.bf16.msra.mxu0 %v4544
    %6149 = vmatpush.bf16.msra.mxu0 %v4536
    %6150 = vmatpush.bf16.msra.mxu0 %v4528
    %6151 = vmatpush.bf16.msra.mxu0 %v4520
    %6152 = vmatpush.bf16.msra.mxu0 %v4512
    %6153 = vmatpush.bf16.msra.mxu0 %v4504
    %6154 = vmatpush.bf16.msra.mxu0 %v4496
    %6155 = vmatpush.bf16.msra.mxu0 %v4488
    %6156 = vmatmul.bf16.gmra.mxu0 %v6121
    %v6157 = vpop.f32.mrf.mxu0
    %v6158 = vadd.f32 %v2570, %v6157
    %v6159 = vpop.f32.mrf.mxu0
    %6160 = vdwg.mxu0
    %6161 = vmatpush.bf16.msra.mxu0 %v4545
    %6162 = vmatpush.bf16.msra.mxu0 %v4537
    %6163 = vmatpush.bf16.msra.mxu0 %v4529
    %6164 = vmatpush.bf16.msra.mxu0 %v4521
    %6165 = vmatpush.bf16.msra.mxu0 %v4513
    %6166 = vmatpush.bf16.msra.mxu0 %v4505
    %6167 = vmatpush.bf16.msra.mxu0 %v4497
    %6168 = vmatpush.bf16.msra.mxu0 %v4489
    %6169 = vmatmul.bf16.gmra.mxu0 %v6121
    %v6170 = vpop.f32.mrf.mxu0
    %v6171 = vadd.f32 %v2571, %v6170
    %v6172 = vpop.f32.mrf.mxu0
    %6173 = vdwg.mxu0
    %6174 = vmatpush.bf16.msra.mxu0 %v4546
    %6175 = vmatpush.bf16.msra.mxu0 %v4538
    %6176 = vmatpush.bf16.msra.mxu0 %v4530
    %6177 = vmatpush.bf16.msra.mxu0 %v4522
    %6178 = vmatpush.bf16.msra.mxu0 %v4514
    %6179 = vmatpush.bf16.msra.mxu0 %v4506
    %6180 = vmatpush.bf16.msra.mxu0 %v4498
    %6181 = vmatpush.bf16.msra.mxu0 %v4490
    %6182 = vmatmul.bf16.gmra.mxu0 %v6121
    %v6183 = vpop.f32.mrf.mxu0
    %v6184 = vadd.f32 %v2572, %v6183
    %v6185 = vpop.f32.mrf.mxu0
    %6186 = vdwg.mxu0
    %6187 = vmatpush.bf16.msra.mxu0 %v4547
    %6188 = vmatpush.bf16.msra.mxu0 %v4539
    %6189 = vmatpush.bf16.msra.mxu0 %v4531
    %6190 = vmatpush.bf16.msra.mxu0 %v4523
    %6191 = vmatpush.bf16.msra.mxu0 %v4515
    %6192 = vmatpush.bf16.msra.mxu0 %v4507
    %6193 = vmatpush.bf16.msra.mxu0 %v4499
    %6194 = vmatpush.bf16.msra.mxu0 %v4491
    %6195 = vmatmul.bf16.gmra.mxu0 %v6121
    %v6196 = vpop.f32.mrf.mxu0
    %v6197 = vadd.f32 %v2573, %v6196
    %v6198 = vpop.f32.mrf.mxu0
    %6199 = vdwg.mxu0
    %6200 = vmatpush.bf16.msra.mxu0 %v4548
    %6201 = vmatpush.bf16.msra.mxu0 %v4540
    %6202 = vmatpush.bf16.msra.mxu0 %v4532
    %6203 = vmatpush.bf16.msra.mxu0 %v4524
    %6204 = vmatpush.bf16.msra.mxu0 %v4516
    %6205 = vmatpush.bf16.msra.mxu0 %v4508
    %6206 = vmatpush.bf16.msra.mxu0 %v4500
    %6207 = vmatpush.bf16.msra.mxu0 %v4492
    %6208 = vmatmul.bf16.gmra.mxu0 %v6121
    %v6209 = vpop.f32.mrf.mxu0
    %v6210 = vadd.f32 %v2574, %v6209
    %v6211 = vpop.f32.mrf.mxu0
    %6212 = vdwg.mxu0
    %6213 = vmatpush.bf16.msra.mxu0 %v4549
    %6214 = vmatpush.bf16.msra.mxu0 %v4541
    %6215 = vmatpush.bf16.msra.mxu0 %v4533
    %6216 = vmatpush.bf16.msra.mxu0 %v4525
    %6217 = vmatpush.bf16.msra.mxu0 %v4517
    %6218 = vmatpush.bf16.msra.mxu0 %v4509
    %6219 = vmatpush.bf16.msra.mxu0 %v4501
    %6220 = vmatpush.bf16.msra.mxu0 %v4493
    %6221 = vmatmul.bf16.gmra.mxu0 %v6121
    %v6222 = vpop.f32.mrf.mxu0
    %v6223 = vadd.f32 %v2575, %v6222
    %v6224 = vpop.f32.mrf.mxu0
    %6225 = vdwg.mxu0
    %v6226 = vxor.u32 %v6132, 2147483648
    %v6227 = vxor.u32 %v6145, 2147483648
    %v6228 = vmul.f32 %v6226, 1.442695
    %v6229 = vpow.pop %v6228
    %v6230 = vmul.f32 %v6227, 1.442695
    %v6231 = vpow.pop %v6230
    %v6232 = vadd.f32 %v6229, 1.0
    %v6233 = vadd.f32 %v6231, 1.0
    %v6234 = vrcp.pop %v6232
    %v6235 = vmul.f32 %v6232, %v6234
    %v6236 = vsub.f32 1.0, %v6235
    %v6237 = vmul.f32 %v6234, %v6236
    %v6238 = vadd.f32 %v6234, %v6237
    %vm6239 = vweird.f32 %v6232
    %vm6240 = vweird.f32 %v6234
    %vm6241 = vmor %vm6239, %vm6240
    %v6242 = vsel %vm6241, %v6234, %v6238
    %v6243 = vand.u32 2147483647, %v6232
    %vm6244 = vcmp.eq.f32.partialorder %v6243, 8.507059e+37
    %v6245 = vand.u32 %v6232, 2147483648
    %v6246 = vor.u32 1.1754944e-38, %v6245
    %v6247 = vsel %vm6244, %v6246, %v6242
    %v6248 = vmul.f32 1.0, %v6247
    %v6249 = vrcp.pop %v6233
    %v6250 = vmul.f32 %v6233, %v6249
    %v6251 = vsub.f32 1.0, %v6250
    %v6252 = vmul.f32 %v6249, %v6251
    %v6253 = vadd.f32 %v6249, %v6252
    %vm6254 = vweird.f32 %v6233
    %vm6255 = vweird.f32 %v6249
    %vm6256 = vmor %vm6254, %vm6255
    %v6257 = vsel %vm6256, %v6249, %v6253
    %v6258 = vand.u32 2147483647, %v6233
    %vm6259 = vcmp.eq.f32.partialorder %v6258, 8.507059e+37
    %v6260 = vand.u32 %v6233, 2147483648
    %v6261 = vor.u32 1.1754944e-38, %v6260
    %v6262 = vsel %vm6259, %v6261, %v6257
    %v6263 = vmul.f32 1.0, %v6262
    %v6264 = vxor.u32 %v6158, 2147483648
    %v6265 = vxor.u32 %v6171, 2147483648
    %v6266 = vmul.f32 %v6264, 1.442695
    %v6267 = vpow.pop %v6266
    %v6268 = vmul.f32 %v6265, 1.442695
    %v6269 = vpow.pop %v6268
    %v6270 = vadd.f32 %v6267, 1.0
    %v6271 = vadd.f32 %v6269, 1.0
    %v6272 = vrcp.pop %v6270
    %v6273 = vmul.f32 %v6270, %v6272
    %v6274 = vsub.f32 1.0, %v6273
    %v6275 = vmul.f32 %v6272, %v6274
    %v6276 = vadd.f32 %v6272, %v6275
    %vm6277 = vweird.f32 %v6270
    %vm6278 = vweird.f32 %v6272
    %vm6279 = vmor %vm6277, %vm6278
    %v6280 = vsel %vm6279, %v6272, %v6276
    %v6281 = vand.u32 2147483647, %v6270
    %vm6282 = vcmp.eq.f32.partialorder %v6281, 8.507059e+37
    %v6283 = vand.u32 %v6270, 2147483648
    %v6284 = vor.u32 1.1754944e-38, %v6283
    %v6285 = vsel %vm6282, %v6284, %v6280
    %v6286 = vmul.f32 1.0, %v6285
    %v6287 = vrcp.pop %v6271
    %v6288 = vmul.f32 %v6271, %v6287
    %v6289 = vsub.f32 1.0, %v6288
    %v6290 = vmul.f32 %v6287, %v6289
    %v6291 = vadd.f32 %v6287, %v6290
    %vm6292 = vweird.f32 %v6271
    %vm6293 = vweird.f32 %v6287
    %vm6294 = vmor %vm6292, %vm6293
    %v6295 = vsel %vm6294, %v6287, %v6291
    %v6296 = vand.u32 2147483647, %v6271
    %vm6297 = vcmp.eq.f32.partialorder %v6296, 8.507059e+37
    %v6298 = vand.u32 %v6271, 2147483648
    %v6299 = vor.u32 1.1754944e-38, %v6298
    %v6300 = vsel %vm6297, %v6299, %v6295
    %v6301 = vmul.f32 1.0, %v6300
    %v6302 = vxor.u32 %v6184, 2147483648
    %v6303 = vxor.u32 %v6197, 2147483648
    %v6304 = vmul.f32 %v6302, 1.442695
    %v6305 = vpow.pop %v6304
    %v6306 = vmul.f32 %v6303, 1.442695
    %v6307 = vpow.pop %v6306
    %v6308 = vadd.f32 %v6305, 1.0
    %v6309 = vadd.f32 %v6307, 1.0
    %v6310 = vrcp.pop %v6308
    %v6311 = vmul.f32 %v6308, %v6310
    %v6312 = vsub.f32 1.0, %v6311
    %v6313 = vmul.f32 %v6310, %v6312
    %v6314 = vadd.f32 %v6310, %v6313
    %vm6315 = vweird.f32 %v6308
    %vm6316 = vweird.f32 %v6310
    %vm6317 = vmor %vm6315, %vm6316
    %v6318 = vsel %vm6317, %v6310, %v6314
    %v6319 = vand.u32 2147483647, %v6308
    %vm6320 = vcmp.eq.f32.partialorder %v6319, 8.507059e+37
    %v6321 = vand.u32 %v6308, 2147483648
    %v6322 = vor.u32 1.1754944e-38, %v6321
    %v6323 = vsel %vm6320, %v6322, %v6318
    %v6324 = vmul.f32 1.0, %v6323
    %v6325 = vrcp.pop %v6309
    %v6326 = vmul.f32 %v6309, %v6325
    %v6327 = vsub.f32 1.0, %v6326
    %v6328 = vmul.f32 %v6325, %v6327
    %v6329 = vadd.f32 %v6325, %v6328
    %vm6330 = vweird.f32 %v6309
    %vm6331 = vweird.f32 %v6325
    %vm6332 = vmor %vm6330, %vm6331
    %v6333 = vsel %vm6332, %v6325, %v6329
    %v6334 = vand.u32 2147483647, %v6309
    %vm6335 = vcmp.eq.f32.partialorder %v6334, 8.507059e+37
    %v6336 = vand.u32 %v6309, 2147483648
    %v6337 = vor.u32 1.1754944e-38, %v6336
    %v6338 = vsel %vm6335, %v6337, %v6333
    %v6339 = vmul.f32 1.0, %v6338
    %v6340 = vtanh.pop %v6210
    %v6341 = vtanh.pop %v6223
    %v6342 = vmul.f32 %v6248, %v5592
    %v6343 = vmul.f32 %v6263, %v5593
    %v6344 = vmul.f32 %v6286, %v6340
    %v6345 = vmul.f32 %v6301, %v6341
    %v6346 = vadd.f32 %v6342, %v6344
    %v6347 = vadd.f32 %v6343, %v6345
    %v6348 = vtanh.pop %v6346
    %v6349 = vtanh.pop %v6347
    %v6350 = vmul.f32 %v6324, %v6348
    %v6351 = vmul.f32 %v6339, %v6349
    %v6352 = vadd.f32 %v5598, %v6350
    %v6353 = vadd.f32 %v5599, %v6351
    %v6354 = vlog2.pop %v5918
    %v6355 = vmul.f32 %v6354, 0.6931472
    %v6356 = vlog2.pop %v6116
    %v6357 = vmul.f32 %v6356, 0.6931472
    %v6358 = vsub.f32 %v6355, %v6357
    %v6359 = vmul.f32 %v6116, %v6116
    %v6360 = vsub.f32 %v6070, %v5899
    %v6361 = vmul.f32 %v6360, %v6360
    %v6362 = vadd.f32 %v6359, %v6361
    %v6363 = vmul.f32 %v5918, 2.0
    %v6364 = vmul.f32 %v6363, %v5918
    %v6365 = vrcp.pop %v6364
    %v6366 = vmul.f32 %v6364, %v6365
    %v6367 = vsub.f32 1.0, %v6366
    %v6368 = vmul.f32 %v6365, %v6367
    %v6369 = vadd.f32 %v6365, %v6368
    %vm6370 = vweird.f32 %v6364
    %vm6371 = vweird.f32 %v6365
    %vm6372 = vmor %vm6370, %vm6371
    %v6373 = vsel %vm6372, %v6365, %v6369
    %v6374 = vand.u32 2147483647, %v6364
    %vm6375 = vcmp.eq.f32.partialorder %v6374, 8.507059e+37
    %v6376 = vand.u32 %v6364, 2147483648
    %v6377 = vor.u32 1.1754944e-38, %v6376
    %v6378 = vsel %vm6375, %v6377, %v6373
    %v6379 = vmul.f32 %v6362, %v6378
    %v6380 = vadd.f32 %v6358, %v6379
    %v6381 = vsub.f32 %v6380, 0.5
    %v6382 = vadd.f32 %v5628, %v6381
    %v6383 = vpack.c.bf16 %v6352, %v6352
    %v6384 = vpack.c.bf16 %v6353, %v6353
    %v6385 = vld [vmem:[#allocation13] sm:$0xff]
    %v6386 = vld [vmem:[#allocation13 + $0x8] sm:$0xff]
    %v6387 = vld [vmem:[#allocation13 + $0x10] sm:$0xff]
    %v6388 = vld [vmem:[#allocation13 + $0x18] sm:$0xff]
    %v6389 = vld [vmem:[#allocation13 + $0x20] sm:$0xff]
    %v6390 = vld [vmem:[#allocation13 + $0x28] sm:$0xff]
    %v6391 = vld [vmem:[#allocation13 + $0x30] sm:$0xff]
    %v6392 = vld [vmem:[#allocation13 + $0x38] sm:$0xff]
    %v6393 = vld [vmem:[#allocation13 + $0x40] sm:$0xff]
    %v6394 = vld [vmem:[#allocation13 + $0x48] sm:$0xff]
    %v6395 = vld [vmem:[#allocation13 + $0x50] sm:$0xff]
    %v6396 = vld [vmem:[#allocation13 + $0x58] sm:$0xff]
    %v6397 = vld [vmem:[#allocation13 + $0x60] sm:$0xff]
    %v6398 = vld [vmem:[#allocation13 + $0x68] sm:$0xff]
    %v6399 = vld [vmem:[#allocation13 + $0x70] sm:$0xff]
    %v6400 = vld [vmem:[#allocation13 + $0x78] sm:$0xff]
    %v6401 = vld [vmem:[#allocation13 + $0x80] sm:$0xff]
    %v6402 = vld [vmem:[#allocation13 + $0x88] sm:$0xff]
    %v6403 = vld [vmem:[#allocation13 + $0x90] sm:$0xff]
    %v6404 = vld [vmem:[#allocation13 + $0x98] sm:$0xff]
    %v6405 = vld [vmem:[#allocation13 + $0xa0] sm:$0xff]
    %v6406 = vld [vmem:[#allocation13 + $0xa8] sm:$0xff]
    %v6407 = vld [vmem:[#allocation13 + $0xb0] sm:$0xff]
    %v6408 = vld [vmem:[#allocation13 + $0xb8] sm:$0xff]
    %v6409 = vld [vmem:[#allocation13 + $0xc0] sm:$0xff]
    %v6410 = vld [vmem:[#allocation13 + $0xc8] sm:$0xff]
    %v6411 = vld [vmem:[#allocation13 + $0xd0] sm:$0xff]
    %v6412 = vld [vmem:[#allocation13 + $0xd8] sm:$0xff]
    %v6413 = vld [vmem:[#allocation13 + $0xe0] sm:$0xff]
    %v6414 = vld [vmem:[#allocation13 + $0xe8] sm:$0xff]
    %v6415 = vld [vmem:[#allocation13 + $0xf0] sm:$0xff]
    %v6416 = vld [vmem:[#allocation13 + $0xf8] sm:$0xff]
    %v6417 = vld [vmem:[#allocation13 + $0x100] sm:$0xff]
    %v6418 = vld [vmem:[#allocation13 + $0x108] sm:$0xff]
    %v6419 = vld [vmem:[#allocation13 + $0x110] sm:$0xff]
    %v6420 = vld [vmem:[#allocation13 + $0x118] sm:$0xff]
    %v6421 = vld [vmem:[#allocation13 + $0x120] sm:$0xff]
    %v6422 = vld [vmem:[#allocation13 + $0x128] sm:$0xff]
    %v6423 = vld [vmem:[#allocation13 + $0x130] sm:$0xff]
    %v6424 = vld [vmem:[#allocation13 + $0x138] sm:$0xff]
    %v6425 = vld [vmem:[#allocation13 + $0x140] sm:$0xff]
    %v6426 = vld [vmem:[#allocation13 + $0x148] sm:$0xff]
    %v6427 = vld [vmem:[#allocation13 + $0x150] sm:$0xff]
    %v6428 = vld [vmem:[#allocation13 + $0x158] sm:$0xff]
    %v6429 = vld [vmem:[#allocation13 + $0x160] sm:$0xff]
    %v6430 = vld [vmem:[#allocation13 + $0x168] sm:$0xff]
    %v6431 = vld [vmem:[#allocation13 + $0x170] sm:$0xff]
    %v6432 = vld [vmem:[#allocation13 + $0x178] sm:$0xff]
    %v6433 = vld [vmem:[#allocation13 + $0x180] sm:$0xff]
    %v6434 = vld [vmem:[#allocation13 + $0x188] sm:$0xff]
    %v6435 = vld [vmem:[#allocation13 + $0x190] sm:$0xff]
    %v6436 = vld [vmem:[#allocation13 + $0x198] sm:$0xff]
    %v6437 = vld [vmem:[#allocation13 + $0x1a0] sm:$0xff]
    %v6438 = vld [vmem:[#allocation13 + $0x1a8] sm:$0xff]
    %v6439 = vld [vmem:[#allocation13 + $0x1b0] sm:$0xff]
    %v6440 = vld [vmem:[#allocation13 + $0x1b8] sm:$0xff]
    %v6441 = vld [vmem:[#allocation13 + $0x1c0] sm:$0xff]
    %v6442 = vld [vmem:[#allocation13 + $0x1c8] sm:$0xff]
    %v6443 = vld [vmem:[#allocation13 + $0x1d0] sm:$0xff]
    %v6444 = vld [vmem:[#allocation13 + $0x1d8] sm:$0xff]
    %v6445 = vld [vmem:[#allocation13 + $0x1e0] sm:$0xff]
    %v6446 = vld [vmem:[#allocation13 + $0x1e8] sm:$0xff]
    %v6447 = vld [vmem:[#allocation13 + $0x1f0] sm:$0xff]
    %v6448 = vld [vmem:[#allocation13 + $0x1f8] sm:$0xff]
    %v6449 = vld [vmem:[#allocation13 + $0x200] sm:$0xff]
    %v6450 = vld [vmem:[#allocation13 + $0x208] sm:$0xff]
    %v6451 = vld [vmem:[#allocation13 + $0x210] sm:$0xff]
    %v6452 = vld [vmem:[#allocation13 + $0x218] sm:$0xff]
    %v6453 = vld [vmem:[#allocation13 + $0x220] sm:$0xff]
    %v6454 = vld [vmem:[#allocation13 + $0x228] sm:$0xff]
    %v6455 = vld [vmem:[#allocation13 + $0x230] sm:$0xff]
    %v6456 = vld [vmem:[#allocation13 + $0x238] sm:$0xff]
    %v6457 = vld [vmem:[#allocation13 + $0x240] sm:$0xff]
    %v6458 = vld [vmem:[#allocation13 + $0x248] sm:$0xff]
    %v6459 = vld [vmem:[#allocation13 + $0x250] sm:$0xff]
    %v6460 = vld [vmem:[#allocation13 + $0x258] sm:$0xff]
    %v6461 = vld [vmem:[#allocation13 + $0x260] sm:$0xff]
    %v6462 = vld [vmem:[#allocation13 + $0x268] sm:$0xff]
    %v6463 = vld [vmem:[#allocation13 + $0x270] sm:$0xff]
    %v6464 = vld [vmem:[#allocation13 + $0x278] sm:$0xff]
    %v6465 = vld [vmem:[#allocation13 + $0x280] sm:$0xff]
    %v6466 = vld [vmem:[#allocation13 + $0x288] sm:$0xff]
    %v6467 = vld [vmem:[#allocation13 + $0x290] sm:$0xff]
    %v6468 = vld [vmem:[#allocation13 + $0x298] sm:$0xff]
    %v6469 = vld [vmem:[#allocation13 + $0x2a0] sm:$0xff]
    %v6470 = vld [vmem:[#allocation13 + $0x2a8] sm:$0xff]
    %v6471 = vld [vmem:[#allocation13 + $0x2b0] sm:$0xff]
    %v6472 = vld [vmem:[#allocation13 + $0x2b8] sm:$0xff]
    %v6473 = vld [vmem:[#allocation13 + $0x2c0] sm:$0xff]
    %v6474 = vld [vmem:[#allocation13 + $0x2c8] sm:$0xff]
    %v6475 = vld [vmem:[#allocation13 + $0x2d0] sm:$0xff]
    %v6476 = vld [vmem:[#allocation13 + $0x2d8] sm:$0xff]
    %v6477 = vld [vmem:[#allocation13 + $0x2e0] sm:$0xff]
    %v6478 = vld [vmem:[#allocation13 + $0x2e8] sm:$0xff]
    %v6479 = vld [vmem:[#allocation13 + $0x2f0] sm:$0xff]
    %v6480 = vld [vmem:[#allocation13 + $0x2f8] sm:$0xff]
    %v6481 = vld [vmem:[%s14] sm:$0x3f]
    %v6483 = vperm.slane %v6481, 0
    %v6484 = vperm.slane %v6481, 1
    %v6485 = vperm.slane %v6481, 2
    %v6486 = vperm.slane %v6481, 3
    %v6487 = vperm.slane %v6481, 4
    %v6488 = vperm.slane %v6481, 5
    %v6591 = vunpack.c.l.b16 %v6385
    %v6592 = vunpack.c.h.b16 %v6385
    %v6593 = vunpack.c.l.b16 %v6386
    %v6594 = vunpack.c.h.b16 %v6386
    %v6595 = vunpack.c.l.b16 %v6387
    %v6596 = vunpack.c.h.b16 %v6387
    %v6597 = vunpack.c.l.b16 %v6388
    %v6598 = vunpack.c.h.b16 %v6388
    %v6599 = vunpack.c.l.b16 %v6389
    %v6600 = vunpack.c.h.b16 %v6389
    %v6601 = vunpack.c.l.b16 %v6390
    %v6602 = vunpack.c.h.b16 %v6390
    %v6603 = vunpack.c.l.b16 %v6391
    %v6604 = vunpack.c.h.b16 %v6391
    %v6605 = vunpack.c.l.b16 %v6392
    %v6606 = vunpack.c.h.b16 %v6392
    %v6607 = vunpack.c.l.b16 %v6393
    %v6608 = vunpack.c.h.b16 %v6393
    %v6609 = vunpack.c.l.b16 %v6394
    %v6610 = vunpack.c.h.b16 %v6394
    %v6611 = vunpack.c.l.b16 %v6395
    %v6612 = vunpack.c.h.b16 %v6395
    %v6613 = vunpack.c.l.b16 %v6396
    %v6614 = vunpack.c.h.b16 %v6396
    %v6615 = vunpack.c.l.b16 %v6397
    %v6616 = vunpack.c.h.b16 %v6397
    %v6617 = vunpack.c.l.b16 %v6398
    %v6618 = vunpack.c.h.b16 %v6398
    %v6619 = vunpack.c.l.b16 %v6399
    %v6620 = vunpack.c.h.b16 %v6399
    %v6621 = vunpack.c.l.b16 %v6400
    %v6622 = vunpack.c.h.b16 %v6400
    %v6623 = vunpack.c.l.b16 %v6401
    %v6624 = vunpack.c.h.b16 %v6401
    %v6625 = vunpack.c.l.b16 %v6402
    %v6626 = vunpack.c.h.b16 %v6402
    %v6627 = vunpack.c.l.b16 %v6403
    %v6628 = vunpack.c.h.b16 %v6403
    %v6629 = vunpack.c.l.b16 %v6404
    %v6630 = vunpack.c.h.b16 %v6404
    %v6631 = vunpack.c.l.b16 %v6405
    %v6632 = vunpack.c.h.b16 %v6405
    %v6633 = vunpack.c.l.b16 %v6406
    %v6634 = vunpack.c.h.b16 %v6406
    %v6635 = vunpack.c.l.b16 %v6407
    %v6636 = vunpack.c.h.b16 %v6407
    %v6637 = vunpack.c.l.b16 %v6408
    %v6638 = vunpack.c.h.b16 %v6408
    %v6639 = vunpack.c.l.b16 %v6409
    %v6640 = vunpack.c.h.b16 %v6409
    %v6641 = vunpack.c.l.b16 %v6410
    %v6642 = vunpack.c.h.b16 %v6410
    %v6643 = vunpack.c.l.b16 %v6411
    %v6644 = vunpack.c.h.b16 %v6411
    %v6645 = vunpack.c.l.b16 %v6412
    %v6646 = vunpack.c.h.b16 %v6412
    %v6647 = vunpack.c.l.b16 %v6413
    %v6648 = vunpack.c.h.b16 %v6413
    %v6649 = vunpack.c.l.b16 %v6414
    %v6650 = vunpack.c.h.b16 %v6414
    %v6651 = vunpack.c.l.b16 %v6415
    %v6652 = vunpack.c.h.b16 %v6415
    %v6653 = vunpack.c.l.b16 %v6416
    %v6654 = vunpack.c.h.b16 %v6416
    %v6655 = vunpack.c.l.b16 %v6417
    %v6656 = vunpack.c.h.b16 %v6417
    %v6657 = vunpack.c.l.b16 %v6418
    %v6658 = vunpack.c.h.b16 %v6418
    %v6659 = vunpack.c.l.b16 %v6419
    %v6660 = vunpack.c.h.b16 %v6419
    %v6661 = vunpack.c.l.b16 %v6420
    %v6662 = vunpack.c.h.b16 %v6420
    %v6663 = vunpack.c.l.b16 %v6421
    %v6664 = vunpack.c.h.b16 %v6421
    %v6665 = vunpack.c.l.b16 %v6422
    %v6666 = vunpack.c.h.b16 %v6422
    %v6667 = vunpack.c.l.b16 %v6423
    %v6668 = vunpack.c.h.b16 %v6423
    %v6669 = vunpack.c.l.b16 %v6424
    %v6670 = vunpack.c.h.b16 %v6424
    %v6671 = vunpack.c.l.b16 %v6425
    %v6672 = vunpack.c.h.b16 %v6425
    %v6673 = vunpack.c.l.b16 %v6426
    %v6674 = vunpack.c.h.b16 %v6426
    %v6675 = vunpack.c.l.b16 %v6427
    %v6676 = vunpack.c.h.b16 %v6427
    %v6677 = vunpack.c.l.b16 %v6428
    %v6678 = vunpack.c.h.b16 %v6428
    %v6679 = vunpack.c.l.b16 %v6429
    %v6680 = vunpack.c.h.b16 %v6429
    %v6681 = vunpack.c.l.b16 %v6430
    %v6682 = vunpack.c.h.b16 %v6430
    %v6683 = vunpack.c.l.b16 %v6431
    %v6684 = vunpack.c.h.b16 %v6431
    %v6685 = vunpack.c.l.b16 %v6432
    %v6686 = vunpack.c.h.b16 %v6432
    %v6687 = vunpack.c.l.b16 %v6433
    %v6688 = vunpack.c.h.b16 %v6433
    %v6689 = vunpack.c.l.b16 %v6434
    %v6690 = vunpack.c.h.b16 %v6434
    %v6691 = vunpack.c.l.b16 %v6435
    %v6692 = vunpack.c.h.b16 %v6435
    %v6693 = vunpack.c.l.b16 %v6436
    %v6694 = vunpack.c.h.b16 %v6436
    %v6695 = vunpack.c.l.b16 %v6437
    %v6696 = vunpack.c.h.b16 %v6437
    %v6697 = vunpack.c.l.b16 %v6438
    %v6698 = vunpack.c.h.b16 %v6438
    %v6699 = vunpack.c.l.b16 %v6439
    %v6700 = vunpack.c.h.b16 %v6439
    %v6701 = vunpack.c.l.b16 %v6440
    %v6702 = vunpack.c.h.b16 %v6440
    %v6703 = vunpack.c.l.b16 %v6441
    %v6704 = vunpack.c.h.b16 %v6441
    %v6705 = vunpack.c.l.b16 %v6442
    %v6706 = vunpack.c.h.b16 %v6442
    %v6707 = vunpack.c.l.b16 %v6443
    %v6708 = vunpack.c.h.b16 %v6443
    %v6709 = vunpack.c.l.b16 %v6444
    %v6710 = vunpack.c.h.b16 %v6444
    %v6711 = vunpack.c.l.b16 %v6445
    %v6712 = vunpack.c.h.b16 %v6445
    %v6713 = vunpack.c.l.b16 %v6446
    %v6714 = vunpack.c.h.b16 %v6446
    %v6715 = vunpack.c.l.b16 %v6447
    %v6716 = vunpack.c.h.b16 %v6447
    %v6717 = vunpack.c.l.b16 %v6448
    %v6718 = vunpack.c.h.b16 %v6448
    %v6719 = vunpack.c.l.b16 %v6449
    %v6720 = vunpack.c.h.b16 %v6449
    %v6721 = vunpack.c.l.b16 %v6450
    %v6722 = vunpack.c.h.b16 %v6450
    %v6723 = vunpack.c.l.b16 %v6451
    %v6724 = vunpack.c.h.b16 %v6451
    %v6725 = vunpack.c.l.b16 %v6452
    %v6726 = vunpack.c.h.b16 %v6452
    %v6727 = vunpack.c.l.b16 %v6453
    %v6728 = vunpack.c.h.b16 %v6453
    %v6729 = vunpack.c.l.b16 %v6454
    %v6730 = vunpack.c.h.b16 %v6454
    %v6731 = vunpack.c.l.b16 %v6455
    %v6732 = vunpack.c.h.b16 %v6455
    %v6733 = vunpack.c.l.b16 %v6456
    %v6734 = vunpack.c.h.b16 %v6456
    %v6735 = vunpack.c.l.b16 %v6457
    %v6736 = vunpack.c.h.b16 %v6457
    %v6737 = vunpack.c.l.b16 %v6458
    %v6738 = vunpack.c.h.b16 %v6458
    %v6739 = vunpack.c.l.b16 %v6459
    %v6740 = vunpack.c.h.b16 %v6459
    %v6741 = vunpack.c.l.b16 %v6460
    %v6742 = vunpack.c.h.b16 %v6460
    %v6743 = vunpack.c.l.b16 %v6461
    %v6744 = vunpack.c.h.b16 %v6461
    %v6745 = vunpack.c.l.b16 %v6462
    %v6746 = vunpack.c.h.b16 %v6462
    %v6747 = vunpack.c.l.b16 %v6463
    %v6748 = vunpack.c.h.b16 %v6463
    %v6749 = vunpack.c.l.b16 %v6464
    %v6750 = vunpack.c.h.b16 %v6464
    %v6751 = vunpack.c.l.b16 %v6465
    %v6752 = vunpack.c.h.b16 %v6465
    %v6753 = vunpack.c.l.b16 %v6466
    %v6754 = vunpack.c.h.b16 %v6466
    %v6755 = vunpack.c.l.b16 %v6467
    %v6756 = vunpack.c.h.b16 %v6467
    %v6757 = vunpack.c.l.b16 %v6468
    %v6758 = vunpack.c.h.b16 %v6468
    %v6759 = vunpack.c.l.b16 %v6469
    %v6760 = vunpack.c.h.b16 %v6469
    %v6761 = vunpack.c.l.b16 %v6470
    %v6762 = vunpack.c.h.b16 %v6470
    %v6763 = vunpack.c.l.b16 %v6471
    %v6764 = vunpack.c.h.b16 %v6471
    %v6765 = vunpack.c.l.b16 %v6472
    %v6766 = vunpack.c.h.b16 %v6472
    %v6767 = vunpack.c.l.b16 %v6473
    %v6768 = vunpack.c.h.b16 %v6473
    %v6769 = vunpack.c.l.b16 %v6474
    %v6770 = vunpack.c.h.b16 %v6474
    %v6771 = vunpack.c.l.b16 %v6475
    %v6772 = vunpack.c.h.b16 %v6475
    %v6773 = vunpack.c.l.b16 %v6476
    %v6774 = vunpack.c.h.b16 %v6476
    %v6775 = vunpack.c.l.b16 %v6477
    %v6776 = vunpack.c.h.b16 %v6477
    %v6777 = vunpack.c.l.b16 %v6478
    %v6778 = vunpack.c.h.b16 %v6478
    %v6779 = vunpack.c.l.b16 %v6479
    %v6780 = vunpack.c.h.b16 %v6479
    %v6781 = vunpack.c.l.b16 %v6480
    %v6782 = vunpack.c.h.b16 %v6480
    %v6783 = vpack.c.b16 %v6597, %v6591
    %v6784 = vpack.c.b16 %v6598, %v6592
    %v6785 = vpack.c.b16 %v6599, %v6593
    %v6786 = vpack.c.b16 %v6600, %v6594
    %v6787 = vpack.c.b16 %v6601, %v6595
    %v6788 = vpack.c.b16 %v6602, %v6596
    %v6789 = vpack.c.b16 %v6609, %v6603
    %v6790 = vpack.c.b16 %v6610, %v6604
    %v6791 = vpack.c.b16 %v6611, %v6605
    %v6792 = vpack.c.b16 %v6612, %v6606
    %v6793 = vpack.c.b16 %v6613, %v6607
    %v6794 = vpack.c.b16 %v6614, %v6608
    %v6795 = vpack.c.b16 %v6621, %v6615
    %v6796 = vpack.c.b16 %v6622, %v6616
    %v6797 = vpack.c.b16 %v6623, %v6617
    %v6798 = vpack.c.b16 %v6624, %v6618
    %v6799 = vpack.c.b16 %v6625, %v6619
    %v6800 = vpack.c.b16 %v6626, %v6620
    %v6801 = vpack.c.b16 %v6633, %v6627
    %v6802 = vpack.c.b16 %v6634, %v6628
    %v6803 = vpack.c.b16 %v6635, %v6629
    %v6804 = vpack.c.b16 %v6636, %v6630
    %v6805 = vpack.c.b16 %v6637, %v6631
    %v6806 = vpack.c.b16 %v6638, %v6632
    %v6807 = vpack.c.b16 %v6645, %v6639
    %v6808 = vpack.c.b16 %v6646, %v6640
    %v6809 = vpack.c.b16 %v6647, %v6641
    %v6810 = vpack.c.b16 %v6648, %v6642
    %v6811 = vpack.c.b16 %v6649, %v6643
    %v6812 = vpack.c.b16 %v6650, %v6644
    %v6813 = vpack.c.b16 %v6657, %v6651
    %v6814 = vpack.c.b16 %v6658, %v6652
    %v6815 = vpack.c.b16 %v6659, %v6653
    %v6816 = vpack.c.b16 %v6660, %v6654
    %v6817 = vpack.c.b16 %v6661, %v6655
    %v6818 = vpack.c.b16 %v6662, %v6656
    %v6819 = vpack.c.b16 %v6669, %v6663
    %v6820 = vpack.c.b16 %v6670, %v6664
    %v6821 = vpack.c.b16 %v6671, %v6665
    %v6822 = vpack.c.b16 %v6672, %v6666
    %v6823 = vpack.c.b16 %v6673, %v6667
    %v6824 = vpack.c.b16 %v6674, %v6668
    %v6825 = vpack.c.b16 %v6681, %v6675
    %v6826 = vpack.c.b16 %v6682, %v6676
    %v6827 = vpack.c.b16 %v6683, %v6677
    %v6828 = vpack.c.b16 %v6684, %v6678
    %v6829 = vpack.c.b16 %v6685, %v6679
    %v6830 = vpack.c.b16 %v6686, %v6680
    %v6831 = vpack.c.b16 %v6693, %v6687
    %v6832 = vpack.c.b16 %v6694, %v6688
    %v6833 = vpack.c.b16 %v6695, %v6689
    %v6834 = vpack.c.b16 %v6696, %v6690
    %v6835 = vpack.c.b16 %v6697, %v6691
    %v6836 = vpack.c.b16 %v6698, %v6692
    %v6837 = vpack.c.b16 %v6705, %v6699
    %v6838 = vpack.c.b16 %v6706, %v6700
    %v6839 = vpack.c.b16 %v6707, %v6701
    %v6840 = vpack.c.b16 %v6708, %v6702
    %v6841 = vpack.c.b16 %v6709, %v6703
    %v6842 = vpack.c.b16 %v6710, %v6704
    %v6843 = vpack.c.b16 %v6717, %v6711
    %v6844 = vpack.c.b16 %v6718, %v6712
    %v6845 = vpack.c.b16 %v6719, %v6713
    %v6846 = vpack.c.b16 %v6720, %v6714
    %v6847 = vpack.c.b16 %v6721, %v6715
    %v6848 = vpack.c.b16 %v6722, %v6716
    %v6849 = vpack.c.b16 %v6729, %v6723
    %v6850 = vpack.c.b16 %v6730, %v6724
    %v6851 = vpack.c.b16 %v6731, %v6725
    %v6852 = vpack.c.b16 %v6732, %v6726
    %v6853 = vpack.c.b16 %v6733, %v6727
    %v6854 = vpack.c.b16 %v6734, %v6728
    %v6855 = vpack.c.b16 %v6741, %v6735
    %v6856 = vpack.c.b16 %v6742, %v6736
    %v6857 = vpack.c.b16 %v6743, %v6737
    %v6858 = vpack.c.b16 %v6744, %v6738
    %v6859 = vpack.c.b16 %v6745, %v6739
    %v6860 = vpack.c.b16 %v6746, %v6740
    %v6861 = vpack.c.b16 %v6753, %v6747
    %v6862 = vpack.c.b16 %v6754, %v6748
    %v6863 = vpack.c.b16 %v6755, %v6749
    %v6864 = vpack.c.b16 %v6756, %v6750
    %v6865 = vpack.c.b16 %v6757, %v6751
    %v6866 = vpack.c.b16 %v6758, %v6752
    %v6867 = vpack.c.b16 %v6765, %v6759
    %v6868 = vpack.c.b16 %v6766, %v6760
    %v6869 = vpack.c.b16 %v6767, %v6761
    %v6870 = vpack.c.b16 %v6768, %v6762
    %v6871 = vpack.c.b16 %v6769, %v6763
    %v6872 = vpack.c.b16 %v6770, %v6764
    %v6873 = vpack.c.b16 %v6777, %v6771
    %v6874 = vpack.c.b16 %v6778, %v6772
    %v6875 = vpack.c.b16 %v6779, %v6773
    %v6876 = vpack.c.b16 %v6780, %v6774
    %v6877 = vpack.c.b16 %v6781, %v6775
    %v6878 = vpack.c.b16 %v6782, %v6776
    %6975 = vmatpush.bf16.msra.mxu0 %v6825
    %6976 = vmatpush.bf16.msra.mxu0 %v6819
    %6977 = vmatpush.bf16.msra.mxu0 %v6813
    %6978 = vmatpush.bf16.msra.mxu0 %v6807
    %6979 = vmatpush.bf16.msra.mxu0 %v6801
    %6980 = vmatpush.bf16.msra.mxu0 %v6795
    %6981 = vmatpush.bf16.msra.mxu0 %v6789
    %6982 = vmatpush.bf16.msra.mxu0 %v6783
    %6983 = vmatmul.bf16.gmra.mxu0 %v6383
    %v6984 = vpop.f32.mrf.mxu0
    %v6985 = vadd.f32 %v6483, %v6984
    %v6986 = vpop.f32.mrf.mxu0
    %6987 = vdwg.mxu0
    %6988 = vmatpush.bf16.msra.mxu0 %v6873
    %6989 = vmatpush.bf16.msra.mxu0 %v6867
    %6990 = vmatpush.bf16.msra.mxu0 %v6861
    %6991 = vmatpush.bf16.msra.mxu0 %v6855
    %6992 = vmatpush.bf16.msra.mxu0 %v6849
    %6993 = vmatpush.bf16.msra.mxu0 %v6843
    %6994 = vmatpush.bf16.msra.mxu0 %v6837
    %6995 = vmatpush.bf16.msra.mxu0 %v6831
    %6996 = vmatmul.bf16.gmra.mxu0 %v6384
    %v6997 = vpop.f32.mrf.mxu0
    %v6998 = vadd.f32 %v6985, %v6997
    %v6999 = vpop.f32.mrf.mxu0
    %7000 = vdwg.mxu0
    %7001 = vmatpush.bf16.msra.mxu0 %v6826
    %7002 = vmatpush.bf16.msra.mxu0 %v6820
    %7003 = vmatpush.bf16.msra.mxu0 %v6814
    %7004 = vmatpush.bf16.msra.mxu0 %v6808
    %7005 = vmatpush.bf16.msra.mxu0 %v6802
    %7006 = vmatpush.bf16.msra.mxu0 %v6796
    %7007 = vmatpush.bf16.msra.mxu0 %v6790
    %7008 = vmatpush.bf16.msra.mxu0 %v6784
    %7009 = vmatmul.bf16.gmra.mxu0 %v6383
    %v7010 = vpop.f32.mrf.mxu0
    %v7011 = vadd.f32 %v6484, %v7010
    %v7012 = vpop.f32.mrf.mxu0
    %7013 = vdwg.mxu0
    %7014 = vmatpush.bf16.msra.mxu0 %v6874
    %7015 = vmatpush.bf16.msra.mxu0 %v6868
    %7016 = vmatpush.bf16.msra.mxu0 %v6862
    %7017 = vmatpush.bf16.msra.mxu0 %v6856
    %7018 = vmatpush.bf16.msra.mxu0 %v6850
    %7019 = vmatpush.bf16.msra.mxu0 %v6844
    %7020 = vmatpush.bf16.msra.mxu0 %v6838
    %7021 = vmatpush.bf16.msra.mxu0 %v6832
    %7022 = vmatmul.bf16.gmra.mxu0 %v6384
    %v7023 = vpop.f32.mrf.mxu0
    %v7024 = vadd.f32 %v7011, %v7023
    %v7025 = vpop.f32.mrf.mxu0
    %7026 = vdwg.mxu0
    %7027 = vmatpush.bf16.msra.mxu0 %v6827
    %7028 = vmatpush.bf16.msra.mxu0 %v6821
    %7029 = vmatpush.bf16.msra.mxu0 %v6815
    %7030 = vmatpush.bf16.msra.mxu0 %v6809
    %7031 = vmatpush.bf16.msra.mxu0 %v6803
    %7032 = vmatpush.bf16.msra.mxu0 %v6797
    %7033 = vmatpush.bf16.msra.mxu0 %v6791
    %7034 = vmatpush.bf16.msra.mxu0 %v6785
    %7035 = vmatmul.bf16.gmra.mxu0 %v6383
    %v7036 = vpop.f32.mrf.mxu0
    %v7037 = vadd.f32 %v6485, %v7036
    %v7038 = vpop.f32.mrf.mxu0
    %7039 = vdwg.mxu0
    %7040 = vmatpush.bf16.msra.mxu0 %v6875
    %7041 = vmatpush.bf16.msra.mxu0 %v6869
    %7042 = vmatpush.bf16.msra.mxu0 %v6863
    %7043 = vmatpush.bf16.msra.mxu0 %v6857
    %7044 = vmatpush.bf16.msra.mxu0 %v6851
    %7045 = vmatpush.bf16.msra.mxu0 %v6845
    %7046 = vmatpush.bf16.msra.mxu0 %v6839
    %7047 = vmatpush.bf16.msra.mxu0 %v6833
    %7048 = vmatmul.bf16.gmra.mxu0 %v6384
    %v7049 = vpop.f32.mrf.mxu0
    %v7050 = vadd.f32 %v7037, %v7049
    %v7051 = vpop.f32.mrf.mxu0
    %7052 = vdwg.mxu0
    %7053 = vmatpush.bf16.msra.mxu0 %v6828
    %7054 = vmatpush.bf16.msra.mxu0 %v6822
    %7055 = vmatpush.bf16.msra.mxu0 %v6816
    %7056 = vmatpush.bf16.msra.mxu0 %v6810
    %7057 = vmatpush.bf16.msra.mxu0 %v6804
    %7058 = vmatpush.bf16.msra.mxu0 %v6798
    %7059 = vmatpush.bf16.msra.mxu0 %v6792
    %7060 = vmatpush.bf16.msra.mxu0 %v6786
    %7061 = vmatmul.bf16.gmra.mxu0 %v6383
    %v7062 = vpop.f32.mrf.mxu0
    %v7063 = vadd.f32 %v6486, %v7062
    %v7064 = vpop.f32.mrf.mxu0
    %7065 = vdwg.mxu0
    %7066 = vmatpush.bf16.msra.mxu0 %v6876
    %7067 = vmatpush.bf16.msra.mxu0 %v6870
    %7068 = vmatpush.bf16.msra.mxu0 %v6864
    %7069 = vmatpush.bf16.msra.mxu0 %v6858
    %7070 = vmatpush.bf16.msra.mxu0 %v6852
    %7071 = vmatpush.bf16.msra.mxu0 %v6846
    %7072 = vmatpush.bf16.msra.mxu0 %v6840
    %7073 = vmatpush.bf16.msra.mxu0 %v6834
    %7074 = vmatmul.bf16.gmra.mxu0 %v6384
    %v7075 = vpop.f32.mrf.mxu0
    %v7076 = vadd.f32 %v7063, %v7075
    %v7077 = vpop.f32.mrf.mxu0
    %7078 = vdwg.mxu0
    %7079 = vmatpush.bf16.msra.mxu0 %v6829
    %7080 = vmatpush.bf16.msra.mxu0 %v6823
    %7081 = vmatpush.bf16.msra.mxu0 %v6817
    %7082 = vmatpush.bf16.msra.mxu0 %v6811
    %7083 = vmatpush.bf16.msra.mxu0 %v6805
    %7084 = vmatpush.bf16.msra.mxu0 %v6799
    %7085 = vmatpush.bf16.msra.mxu0 %v6793
    %7086 = vmatpush.bf16.msra.mxu0 %v6787
    %7087 = vmatmul.bf16.gmra.mxu0 %v6383
    %v7088 = vpop.f32.mrf.mxu0
    %v7089 = vadd.f32 %v6487, %v7088
    %v7090 = vpop.f32.mrf.mxu0
    %7091 = vdwg.mxu0
    %7092 = vmatpush.bf16.msra.mxu0 %v6877
    %7093 = vmatpush.bf16.msra.mxu0 %v6871
    %7094 = vmatpush.bf16.msra.mxu0 %v6865
    %7095 = vmatpush.bf16.msra.mxu0 %v6859
    %7096 = vmatpush.bf16.msra.mxu0 %v6853
    %7097 = vmatpush.bf16.msra.mxu0 %v6847
    %7098 = vmatpush.bf16.msra.mxu0 %v6841
    %7099 = vmatpush.bf16.msra.mxu0 %v6835
    %7100 = vmatmul.bf16.gmra.mxu0 %v6384
    %v7101 = vpop.f32.mrf.mxu0
    %v7102 = vadd.f32 %v7089, %v7101
    %v7103 = vpop.f32.mrf.mxu0
    %7104 = vdwg.mxu0
    %7105 = vmatpush.bf16.msra.mxu0 %v6830
    %7106 = vmatpush.bf16.msra.mxu0 %v6824
    %7107 = vmatpush.bf16.msra.mxu0 %v6818
    %7108 = vmatpush.bf16.msra.mxu0 %v6812
    %7109 = vmatpush.bf16.msra.mxu0 %v6806
    %7110 = vmatpush.bf16.msra.mxu0 %v6800
    %7111 = vmatpush.bf16.msra.mxu0 %v6794
    %7112 = vmatpush.bf16.msra.mxu0 %v6788
    %7113 = vmatmul.bf16.gmra.mxu0 %v6383
    %v7114 = vpop.f32.mrf.mxu0
    %v7115 = vadd.f32 %v6488, %v7114
    %v7116 = vpop.f32.mrf.mxu0
    %7117 = vdwg.mxu0
    %7118 = vmatpush.bf16.msra.mxu0 %v6878
    %7119 = vmatpush.bf16.msra.mxu0 %v6872
    %7120 = vmatpush.bf16.msra.mxu0 %v6866
    %7121 = vmatpush.bf16.msra.mxu0 %v6860
    %7122 = vmatpush.bf16.msra.mxu0 %v6854
    %7123 = vmatpush.bf16.msra.mxu0 %v6848
    %7124 = vmatpush.bf16.msra.mxu0 %v6842
    %7125 = vmatpush.bf16.msra.mxu0 %v6836
    %7126 = vmatmul.bf16.gmra.mxu0 %v6384
    %v7127 = vpop.f32.mrf.mxu0
    %v7128 = vadd.f32 %v7115, %v7127
    %v7129 = vpop.f32.mrf.mxu0
    %7130 = vdwg.mxu0
    %v7131 = vxor.u32 %v6998, 2147483648
    %v7132 = vxor.u32 %v7024, 2147483648
    %v7133 = vxor.u32 %v7050, 2147483648
    %v7134 = vxor.u32 %v7076, 2147483648
    %v7135 = vxor.u32 %v7102, 2147483648
    %v7136 = vxor.u32 %v7128, 2147483648
    %v7137 = vmul.f32 %v7131, 1.442695
    %v7138 = vpow.pop %v7137
    %v7139 = vmul.f32 %v7132, 1.442695
    %v7140 = vpow.pop %v7139
    %v7141 = vmul.f32 %v7133, 1.442695
    %v7142 = vpow.pop %v7141
    %v7143 = vmul.f32 %v7134, 1.442695
    %v7144 = vpow.pop %v7143
    %v7145 = vmul.f32 %v7135, 1.442695
    %v7146 = vpow.pop %v7145
    %v7147 = vmul.f32 %v7136, 1.442695
    %v7148 = vpow.pop %v7147
    %v7149 = vadd.f32 %v7138, 1.0
    %v7150 = vadd.f32 %v7140, 1.0
    %v7151 = vadd.f32 %v7142, 1.0
    %v7152 = vadd.f32 %v7144, 1.0
    %v7153 = vadd.f32 %v7146, 1.0
    %v7154 = vadd.f32 %v7148, 1.0
    %v7155 = vrcp.pop %v7149
    %v7156 = vmul.f32 %v7149, %v7155
    %v7157 = vsub.f32 1.0, %v7156
    %v7158 = vmul.f32 %v7155, %v7157
    %v7159 = vadd.f32 %v7155, %v7158
    %vm7160 = vweird.f32 %v7149
    %vm7161 = vweird.f32 %v7155
    %vm7162 = vmor %vm7160, %vm7161
    %v7163 = vsel %vm7162, %v7155, %v7159
    %v7164 = vand.u32 2147483647, %v7149
    %vm7165 = vcmp.eq.f32.partialorder %v7164, 8.507059e+37
    %v7166 = vand.u32 %v7149, 2147483648
    %v7167 = vor.u32 1.1754944e-38, %v7166
    %v7168 = vsel %vm7165, %v7167, %v7163
    %v7169 = vmul.f32 1.0, %v7168
    %v7170 = vrcp.pop %v7150
    %v7171 = vmul.f32 %v7150, %v7170
    %v7172 = vsub.f32 1.0, %v7171
    %v7173 = vmul.f32 %v7170, %v7172
    %v7174 = vadd.f32 %v7170, %v7173
    %vm7175 = vweird.f32 %v7150
    %vm7176 = vweird.f32 %v7170
    %vm7177 = vmor %vm7175, %vm7176
    %v7178 = vsel %vm7177, %v7170, %v7174
    %v7179 = vand.u32 2147483647, %v7150
    %vm7180 = vcmp.eq.f32.partialorder %v7179, 8.507059e+37
    %v7181 = vand.u32 %v7150, 2147483648
    %v7182 = vor.u32 1.1754944e-38, %v7181
    %v7183 = vsel %vm7180, %v7182, %v7178
    %v7184 = vmul.f32 1.0, %v7183
    %v7185 = vrcp.pop %v7151
    %v7186 = vmul.f32 %v7151, %v7185
    %v7187 = vsub.f32 1.0, %v7186
    %v7188 = vmul.f32 %v7185, %v7187
    %v7189 = vadd.f32 %v7185, %v7188
    %vm7190 = vweird.f32 %v7151
    %vm7191 = vweird.f32 %v7185
    %vm7192 = vmor %vm7190, %vm7191
    %v7193 = vsel %vm7192, %v7185, %v7189
    %v7194 = vand.u32 2147483647, %v7151
    %vm7195 = vcmp.eq.f32.partialorder %v7194, 8.507059e+37
    %v7196 = vand.u32 %v7151, 2147483648
    %v7197 = vor.u32 1.1754944e-38, %v7196
    %v7198 = vsel %vm7195, %v7197, %v7193
    %v7199 = vmul.f32 1.0, %v7198
    %v7200 = vrcp.pop %v7152
    %v7201 = vmul.f32 %v7152, %v7200
    %v7202 = vsub.f32 1.0, %v7201
    %v7203 = vmul.f32 %v7200, %v7202
    %v7204 = vadd.f32 %v7200, %v7203
    %vm7205 = vweird.f32 %v7152
    %vm7206 = vweird.f32 %v7200
    %vm7207 = vmor %vm7205, %vm7206
    %v7208 = vsel %vm7207, %v7200, %v7204
    %v7209 = vand.u32 2147483647, %v7152
    %vm7210 = vcmp.eq.f32.partialorder %v7209, 8.507059e+37
    %v7211 = vand.u32 %v7152, 2147483648
    %v7212 = vor.u32 1.1754944e-38, %v7211
    %v7213 = vsel %vm7210, %v7212, %v7208
    %v7214 = vmul.f32 1.0, %v7213
    %v7215 = vrcp.pop %v7153
    %v7216 = vmul.f32 %v7153, %v7215
    %v7217 = vsub.f32 1.0, %v7216
    %v7218 = vmul.f32 %v7215, %v7217
    %v7219 = vadd.f32 %v7215, %v7218
    %vm7220 = vweird.f32 %v7153
    %vm7221 = vweird.f32 %v7215
    %vm7222 = vmor %vm7220, %vm7221
    %v7223 = vsel %vm7222, %v7215, %v7219
    %v7224 = vand.u32 2147483647, %v7153
    %vm7225 = vcmp.eq.f32.partialorder %v7224, 8.507059e+37
    %v7226 = vand.u32 %v7153, 2147483648
    %v7227 = vor.u32 1.1754944e-38, %v7226
    %v7228 = vsel %vm7225, %v7227, %v7223
    %v7229 = vmul.f32 1.0, %v7228
    %v7230 = vrcp.pop %v7154
    %v7231 = vmul.f32 %v7154, %v7230
    %v7232 = vsub.f32 1.0, %v7231
    %v7233 = vmul.f32 %v7230, %v7232
    %v7234 = vadd.f32 %v7230, %v7233
    %vm7235 = vweird.f32 %v7154
    %vm7236 = vweird.f32 %v7230
    %vm7237 = vmor %vm7235, %vm7236
    %v7238 = vsel %vm7237, %v7230, %v7234
    %v7239 = vand.u32 2147483647, %v7154
    %vm7240 = vcmp.eq.f32.partialorder %v7239, 8.507059e+37
    %v7241 = vand.u32 %v7154, 2147483648
    %v7242 = vor.u32 1.1754944e-38, %v7241
    %v7243 = vsel %vm7240, %v7242, %v7238
    %v7244 = vmul.f32 1.0, %v7243
    %v7251 = vrot.slane %v7184, 6
    %v7252 = vrot.slane %v7199, 4
    %v7253 = vrot.slane %v7214, 2
    %v7254 = vrot.slane %v7244, 6
    %vm7255 = vcmask 1041408
    %v7256 = vsel %vm7255, %v7169, %v7251
    %vm7257 = vcmask 1045508
    %v7258 = vsel %vm7257, %v7252, %v7253
    %vm7259 = vcmask 1043456
    %v7260 = vsel %vm7259, %v7256, %v7258
    %v7261 = vsel %vm7255, %v7229, %v7254
    %7264 = vst [vmem:[#allocation19] sm:$0xff] %v7260
    %7265 = vst [vmem:[#allocation19 + $0x8] sm:$0xf] %v7261
    %7266 = vst [vmem:[#allocation20] sm:$0x3] %v6382
    // Predicated region
    $region102: #{tpu_custom_call.1} parent=1 // pred_check
      _
    $region103: #{tpu_custom_call.1} parent=1 // pred_check_branch
      %7268 = sbr.rel (0) target = $region105
    $region104: #{tpu_custom_call.1} parent=1 // pred_region
      %7270 = vsyncadd [#allocation4], 0
      %s7272 = sshll.u32 [#allocation19], 4
      %s7273 = int_to_ptr.vmem [resolvable:$true] %s7272
      %s7274 = sshll.u32 %s15, 4
      %s7275 = int_to_ptr.hbm [resolvable:$true] %s7274
      %7277 = dma.vmem_to_hbm [thread:$0]  %s7273, 192, %s7275, [#allocation4]
    $region105: #{tpu_custom_call.1} parent=1 // pred_fallthru
      _
    // Predicated region
    $region106: #{tpu_custom_call.1} parent=1 // pred_check
      _
    $region107: #{tpu_custom_call.1} parent=1 // pred_check_branch
      %7279 = sbr.rel (0) target = $region109
    $region108: #{tpu_custom_call.1} parent=1 // pred_region
      %7281 = vsyncadd [#allocation21], 0
      %s7283 = sshll.u32 [#allocation20], 4
      %s7284 = int_to_ptr.vmem [resolvable:$true] %s7283
      %s7285 = sshll.u32 %s16, 4
      %s7286 = int_to_ptr.hbm [resolvable:$true] %s7285
      %7288 = dma.vmem_to_hbm [thread:$0]  %s7284, 32, %s7286, [#allocation21]
    $region109: #{tpu_custom_call.1} parent=1 // pred_fallthru
      _
    // Predicated region
    $region110: #{tpu_custom_call.1} parent=1 // pred_check
      _
    $region111: #{tpu_custom_call.1} parent=1 // pred_check_branch
      %7290 = sbr.rel (0) target = $region113
    $region112: #{tpu_custom_call.1} parent=1 // pred_region
      %7292 = dma.done [#allocation4], 192
    $region113: #{tpu_custom_call.1} parent=1 // pred_fallthru
      _
    // Predicated region
    $region114: #{tpu_custom_call.1} parent=1 // pred_check
      _
    $region115: #{tpu_custom_call.1} parent=1 // pred_check_branch
      %7294 = sbr.rel (0) target = $region117
    $region116: #{tpu_custom_call.1} parent=1 // pred_region
      %7296 = dma.done [#allocation21], 32
    $region117: #{tpu_custom_call.1} parent=1 // pred_fallthru
      _
    %7297 = vsyncpa [#allocation3], 1
    %7298 = vsyncpa [#allocation6], 1
    %7299 = vsyncpa [#allocation9], 1
    %7300 = vsyncpa [#allocation12], 1
    %7301 = vsyncpa [#allocation15], 1
    %7302 = vsyncpa [#allocation18], 1
    %7303 = vsyncpa [#allocation4], 1
    %7304 = vsyncpa [#allocation21], 1

</llo_original>
